<compile_context>
chip_gen: v7x
topology: tpu7x:2x2x1
jax: 0.10.0
libtpu: 0.0.40
codegen_flags: <defaults>
</compile_context>

<pallas_src>
import math
from functools import partial

import jax
import jax.numpy as jnp
from jax.experimental import pallas as pl
from jax.experimental.pallas import tpu as pltpu

BN_SCALE = 1.0 / math.sqrt(1.0 + 1e-5)   # eval-mode BatchNorm with default buffers
LN_EPS = 1e-6
NEG_INF = -1e30


def _round_up(x, m):
    return ((x + m - 1) // m) * m


def _pick_tile(m):
    for t in (512, 256, 128, 64):
        if m >= t and m % t == 0:
            return t
    return m


def _full_spec(a, grid_rank=1):
    nd = a.ndim
    return pl.BlockSpec(a.shape, lambda *g, _nd=nd: (0,) * _nd)


# ============================ Pallas kernels ================================

def _embed_kernel(x6_ref, cn_ref,
                  c1w0_ref, c1w1_ref, c1b1_ref,
                  c2t_ref, c2b_ref, c2w1_ref,
                  pw_ref, pb_ref,
                  pe1w_ref, pe1b_ref, pe2w_ref, pe2b_ref,
                  xp_ref, pe_ref, *, k):
    """P3Embed conv stack + ViT projection + positional MLP, fully fused."""
    f32, bf16 = jnp.float32, jnp.bfloat16
    w0 = c1w0_ref[...]          # (6, E)   bf16
    w1 = c1w1_ref[...]          # (E, E)   bf16 (BN folded)
    b1 = c1b1_ref[...]          # (1, E)   f32  (BN folded)
    wt = c2t_ref[...]           # (E, 2E)  bf16 rows acting on pooled features
    wb = c2b_ref[...]           # (E, 2E)  bf16 rows acting on per-point features
    w2 = c2w1_ref[...]          # (2E, E)  bf16

    # conv1 per neighbour (k is small and static -> unrolled 2-D matmuls).
    xs = []
    for j in range(k):
        xj = x6_ref[j].astype(bf16)                                   # (TS, 6)
        h = jnp.dot(xj, w0, preferred_element_type=f32)               # (TS, E)
        h = jnp.dot(h.astype(bf16), w1, preferred_element_type=f32) + b1
        xs.append(jnp.maximum(h, 0.0))
    pooled = xs[0]
    for j in range(1, k):
        pooled = jnp.maximum(pooled, xs[j])                           # (TS, E)

    # conv2 with the [pooled | x] channel concat expressed as split weights.
    a = jnp.dot(pooled.astype(bf16), wt, preferred_element_type=f32)  # (TS, 2E)
    feat = None
    for j in range(k):
        h2 = jnp.maximum(
            a + jnp.dot(xs[j].astype(bf16), wb, preferred_element_type=f32), 0.0)
        y = jnp.maximum(
            jnp.dot(h2.astype(bf16), w2, preferred_element_type=f32), 0.0)
        feat = y if feat is None else jnp.maximum(feat, y)            # (TS, E)

    # ViT input projection.
    xp = jnp.dot(feat.astype(bf16), pw_ref[...],
                 preferred_element_type=f32) + pb_ref[...]            # (TS, D)

    # positional MLP on the centroid coordinates.
    pe = jnp.dot(cn_ref[...].astype(bf16), pe1w_ref[...],
                 preferred_element_type=f32) + pe1b_ref[...]
    # TODO(synk): torch nn.GELU default is erf-exact; tanh approx differs ~1e-3.
    pe = jax.nn.gelu(pe, approximate=True)
    pe = jnp.dot(pe.astype(bf16), pe2w_ref[...],
                 preferred_element_type=f32) + pe2b_ref[...]          # (TS, D)

    xp_ref[...] = xp
    pe_ref[...] = pe


def _vit_block_kernel(x_ref, pos_ref,
                      ln1g_ref, ln1b_ref,
                      qkvw_ref, qkvb_ref,       # (3H, D, Dh) bf16, (3H, 1, Dh) f32
                      projw_ref, projb_ref,     # (H, Dh, D)  bf16, (1, D) f32
                      ln2g_ref, ln2b_ref,
                      fc1w_ref, fc1b_ref, fc2w_ref, fc2b_ref,
                      o_ref, *, num_heads, t_real, eps):
    """One full (pre-LN) ViT block for a single batch element."""
    f32, bf16 = jnp.float32, jnp.bfloat16
    x = x_ref[...][0] + pos_ref[...][0]          # (T, D) f32 (pos added every block)
    T, D = x.shape
    H = num_heads
    Dh = D // H
    scale = 1.0 / math.sqrt(Dh)

    def ln(v, g, b):
        mu = jnp.mean(v, axis=-1, keepdims=True)
        var = jnp.mean((v - mu) ** 2, axis=-1, keepdims=True)
        return (v - mu) * jax.lax.rsqrt(var + eps) * g + b

    h = ln(x, ln1g_ref[...], ln1b_ref[...]).astype(bf16)

    # key-padding mask (static token count).
    kidx = jax.lax.broadcasted_iota(jnp.int32, (T, T), 1)
    kbias = jnp.where(kidx < t_real, 0.0, NEG_INF).astype(f32)

    attn = jnp.zeros((T, D), f32)
    for hh in range(H):
        q = jnp.dot(h, qkvw_ref[hh], preferred_element_type=f32) + qkvb_ref[hh]
        k = jnp.dot(h, qkvw_ref[H + hh], preferred_element_type=f32) + qkvb_ref[H + hh]
        v = jnp.dot(h, qkvw_ref[2 * H + hh], preferred_element_type=f32) + qkvb_ref[2 * H + hh]
        s = jax.lax.dot_general(q.astype(bf16), k.astype(bf16),
                                (((1,), (1,)), ((), ())),
                                preferred_element_type=f32) * scale + kbias
        s = s - jnp.max(s, axis=-1, keepdims=True)
        p = jnp.exp(s)
        p = p * pl.reciprocal(jnp.sum(p, axis=-1, keepdims=True), approx=True)
        oh = jnp.dot(p.astype(bf16), v.astype(bf16), preferred_element_type=f32)
        attn = attn + jnp.dot(oh.astype(bf16), projw_ref[hh],
                              preferred_element_type=f32)
    x = x + attn + projb_ref[...]

    h2 = ln(x, ln2g_ref[...], ln2b_ref[...]).astype(bf16)
    m = jnp.dot(h2, fc1w_ref[...], preferred_element_type=f32) + fc1b_ref[...]
    # TODO(synk): torch nn.GELU default is erf-exact; tanh approx differs ~1e-3.
    m = jax.nn.gelu(m, approximate=True)
    x = x + jnp.dot(m.astype(bf16), fc2w_ref[...],
                    preferred_element_type=f32) + fc2b_ref[...]
    o_ref[...] = x[None]


def _head_kernel(x_ref, ng_ref, nb_ref,
                 w0a_ref, w0b_ref, b0_ref, w1_ref, b1_ref, w2_ref, b2_ref,
                 o_ref, *, t_real, eps):
    """Final LayerNorm + [max | cls] pooling + ClsHead (widths padded to 128)."""
    f32, bf16 = jnp.float32, jnp.bfloat16
    x = x_ref[...]                                # (B, T, D) f32
    _, T, D = x.shape
    mu = jnp.mean(x, axis=-1, keepdims=True)
    var = jnp.mean((x - mu) ** 2, axis=-1, keepdims=True)
    xn = (x - mu) * jax.lax.rsqrt(var + eps) * ng_ref[...] + nb_ref[...]

    ridx = jax.lax.broadcasted_iota(jnp.int32, (T, D), 0)
    tok_valid = jnp.logical_and(ridx >= 1, ridx < t_real)[None, :, :]
    cls_sel = (ridx == 0)[None, :, :]
    maxf = jnp.max(jnp.where(tok_valid, xn, NEG_INF), axis=1)      # (B, D)
    cls = jnp.max(jnp.where(cls_sel, xn, NEG_INF), axis=1)         # (B, D)

    # global feature = [max, cls]; the concat is expressed as split weights.
    y = jnp.maximum(
        jnp.dot(maxf.astype(bf16), w0a_ref[...], preferred_element_type=f32)
        + jnp.dot(cls.astype(bf16), w0b_ref[...], preferred_element_type=f32)
        + b0_ref[...], 0.0)
    y = jnp.maximum(
        jnp.dot(y.astype(bf16), w1_ref[...], preferred_element_type=f32)
        + b1_ref[...], 0.0)
    o_ref[...] = jnp.dot(y.astype(bf16), w2_ref[...],
                         preferred_element_type=f32) + b2_ref[...]


# ============================ pallas_call wrappers ==========================

def embed_call(x6, cn, p, *, k):
    """x6: (k, B*S, 6) f32, cn: (B*S, 3) f32 -> (B*S, D) tokens, (B*S, D) pos."""
    M = x6.shape[1]
    D = p["proj_w"].shape[1]
    TS = _pick_tile(M)
    G = M // TS
    weights = [p["c1_w0"], p["c1_w1"], p["c1_b1"],
               p["c2_w0_top"], p["c2_w0_bot"], p["c2_w1"],
               p["proj_w"], p["proj_b"],
               p["pe_w1"], p["pe_b1"], p["pe_w2"], p["pe_b2"]]
    wspecs = [_full_spec(a) for a in weights]
    row_spec = pl.BlockSpec((TS, D), lambda i: (i, 0))
    xp, pe = pl.pallas_call(
        partial(_embed_kernel, k=k),
        grid=(G,),
        in_specs=[pl.BlockSpec((k, TS, 6), lambda i: (0, i, 0)),
                  pl.BlockSpec((TS, 3), lambda i: (i, 0))] + wspecs,
        out_specs=[row_spec, pl.BlockSpec((TS, D), lambda i: (i, 0))],
        out_shape=[jax.ShapeDtypeStruct((M, D), jnp.float32),
                   jax.ShapeDtypeStruct((M, D), jnp.float32)],
        compiler_params=pltpu.CompilerParams(dimension_semantics=("parallel",)),
    )(x6, cn, *weights)
    return xp, pe


def vit_block_call(feats, pos, blk, *, num_heads, t_real):
    B, T, D = feats.shape
    warr = [blk["ln1_g"], blk["ln1_b"], blk["qkv_wh"], blk["qkv_bh"],
            blk["proj_wh"], blk["proj_b"], blk["ln2_g"], blk["ln2_b"],
            blk["fc1_w"], blk["fc1_b"], blk["fc2_w"], blk["fc2_b"]]
    wspecs = [_full_spec(a) for a in warr]
    tok_spec = pl.BlockSpec((1, T, D), lambda b: (b, 0, 0))
    return pl.pallas_call(
        partial(_vit_block_kernel, num_heads=num_heads, t_real=t_real, eps=LN_EPS),
        grid=(B,),
        in_specs=[tok_spec, pl.BlockSpec((1, T, D), lambda b: (b, 0, 0))] + wspecs,
        out_specs=pl.BlockSpec((1, T, D), lambda b: (b, 0, 0)),
        out_shape=jax.ShapeDtypeStruct((B, T, D), jnp.float32),
        compiler_params=pltpu.CompilerParams(dimension_semantics=("parallel",)),
    )(feats, pos, *warr)


def head_call(feats, p, *, t_real):
    B = feats.shape[0]
    nc_pad = p["h_b2"].shape[1]
    vm = pl.BlockSpec(memory_space=pltpu.MemorySpace.VMEM)
    args = [feats, p["norm_g"], p["norm_b"],
            p["h_w0_max"], p["h_w0_cls"], p["h_b0"],
            p["h_w1"], p["h_b1"], p["h_w2"], p["h_b2"]]
    return pl.pallas_call(
        partial(_head_kernel, t_real=t_real, eps=LN_EPS),
        in_specs=[vm] * len(args),
        out_specs=vm,
        out_shape=jax.ShapeDtypeStruct((B, nc_pad), jnp.float32),
    )(*args)


# ---------------------- plain-JAX glue (data-dependent) ---------------------

def farthest_point_sampling(points, n_samples):
    B, N, D = points.shape

    def body(i, carry):
        centroids, distance, farthest = carry
        centroids = centroids.at[:, i].set(farthest)
        idx = jnp.broadcast_to(farthest[:, None, None], (B, 1, D))
        centroid_pts = jnp.take_along_axis(points, idx, axis=1)
        dist = jnp.sum((points - centroid_pts) ** 2, axis=2)
        distance = jnp.minimum(distance, dist)
        farthest = jnp.argmax(distance, axis=1).astype(jnp.int32)
        return centroids, distance, farthest

    centroids = jnp.zeros((B, n_samples), dtype=jnp.int32)
    distance = jnp.full((B, N), 1e10, dtype=jnp.float32)
    # TODO(synk): torch version starts FPS from a random index; use 0 deterministically.
    farthest = jnp.zeros((B,), dtype=jnp.int32)
    centroids, _, _ = jax.lax.fori_loop(0, n_samples, body,
                                        (centroids, distance, farthest))
    return centroids


def group_knn(pnts, cntrds, feats, k):
    d = jnp.sum((cntrds[:, :, None, :] - pnts[:, None, :, :]) ** 2, axis=-1)  # (B,S,N)
    _, idx = jax.lax.top_k(-d, k)   # k nearest, sorted by increasing distance
    gather = jax.vmap(lambda xb, ib: xb[ib])
    return gather(pnts, idx), gather(feats, idx)


# ------------------------------- forward pass -------------------------------

def pix4point_forward(params, points, *, k_neighbors, num_heads, num_classes):
    B, N, _ = points.shape
    S = N // 4
    D = params["proj_w"].shape[1]

    # P3Embed sampling + grouping (data-dependent, plain JAX).
    idx = farthest_point_sampling(points, S)                           # (B, S)
    cidx = jnp.broadcast_to(idx[:, :, None], (B, S, 3))
    cntrd = jnp.take_along_axis(points, cidx, axis=1)                  # (B, S, 3)
    dp, fj = group_knn(points, cntrd, points, k_neighbors)             # (B,S,k,3) x2
    x6 = jnp.concatenate([dp, fj], axis=-1)                            # (B,S,k,6)
    x6 = jnp.transpose(x6.reshape(B * S, k_neighbors, 6), (1, 0, 2))   # (k,B*S,6)
    cn = cntrd.reshape(B * S, 3)

    # fused P3Embed conv stack + projection + positional MLP.
    x_flat, pe_flat = embed_call(x6, cn, params, k=k_neighbors)        # (B*S,D) x2
    x_tok = x_flat.reshape(B, S, D)
    pe = pe_flat.reshape(B, S, D)

    cls_tok = jnp.broadcast_to(params["cls_token"], (B, 1, D))
    cls_pos = jnp.broadcast_to(params["cls_pos"], (B, 1, D))
    tokens = jnp.concatenate([cls_tok, x_tok], axis=1)                 # (B, T, D)
    pos = jnp.concatenate([cls_pos, pe], axis=1)
    T = S + 1
    T_pad = _round_up(T, 8)
    if T_pad != T:
        padw = ((0, 0), (0, T_pad - T), (0, 0))
        tokens = jnp.pad(tokens, padw)
        pos = jnp.pad(pos, padw)

    feats = tokens
    for blk in params["blocks"]:
        feats = vit_block_call(feats, pos, blk, num_heads=num_heads, t_real=T)

    logits_pad = head_call(feats, params, t_real=T)                    # (B, >=128)
    return logits_pad[:, :num_classes]


# ------------------------------ parameter init ------------------------------

def init_params(key, *, p3_dim, embed_dim, depth, num_classes, head_mlps):
    keys = iter(jax.random.split(key, 64))

    def xavier(shape):
        fan_in, fan_out = shape
        lim = math.sqrt(6.0 / (fan_in + fan_out))
        return jax.random.uniform(next(keys), shape, jnp.float32, -lim, lim)

    def zeros(shape):
        return jnp.zeros(shape, jnp.float32)

    E, D = p3_dim, embed_dim
    p3 = dict(
        c1_w0=xavier((6, E)),
        c1_w1=xavier((E, E)), c1_b1=zeros((E,)),
        c2_w0=xavier((2 * E, 2 * E)),
        c2_w1=xavier((2 * E, E)),
    )
    blocks = []
    for _ in range(depth):
        blocks.append(dict(
            ln1_g=jnp.ones((D,)), ln1_b=zeros((D,)),
            qkv_w=xavier((D, 3 * D)), qkv_b=zeros((3 * D,)),
            proj_w=xavier((D, D)), proj_b=zeros((D,)),
            ln2_g=jnp.ones((D,)), ln2_b=zeros((D,)),
            fc1_w=xavier((D, 4 * D)), fc1_b=zeros((4 * D,)),
            fc2_w=xavier((4 * D, D)), fc2_b=zeros((D,)),
        ))
    m0, m1 = head_mlps
    return dict(
        p3=p3,
        proj_w=xavier((E, D)), proj_b=zeros((D,)),
        pe_w1=xavier((3, 128)), pe_b1=zeros((128,)),
        pe_w2=xavier((128, D)), pe_b2=zeros((D,)),
        cls_token=0.02 * jax.random.normal(next(keys), (1, 1, D), jnp.float32),
        cls_pos=0.02 * jax.random.normal(next(keys), (1, 1, D), jnp.float32),
        blocks=blocks,
        norm_g=jnp.ones((D,)), norm_b=zeros((D,)),
        h_w0=xavier((2 * D, m0)), h_b0=zeros((m0,)),
        h_w1=xavier((m0, m1)), h_b1=zeros((m1,)),
        h_w2=xavier((m1, num_classes)), h_b2=zeros((num_classes,)),
    )


def prepare_params(p, *, num_heads):
    """One-time (outside jit) folding of BN, bf16 casts, per-head weight
    stacking, and zero-padding of the ClsHead widths to 128 lanes (exact)."""
    f32, bf16 = jnp.float32, jnp.bfloat16
    bn = BN_SCALE
    E = p["p3"]["c1_w0"].shape[1]
    D = p["proj_w"].shape[1]

    def row(b):
        return b.reshape(1, -1).astype(f32)

    c2w0 = (p["p3"]["c2_w0"] * bn).astype(f32)
    out = dict(
        c1_w0=p["p3"]["c1_w0"].astype(bf16),
        c1_w1=(p["p3"]["c1_w1"] * bn).astype(bf16),
        c1_b1=row(p["p3"]["c1_b1"] * bn),
        c2_w0_top=c2w0[:E].astype(bf16),        # rows acting on pooled features
        c2_w0_bot=c2w0[E:].astype(bf16),        # rows acting on per-point features
        c2_w1=(p["p3"]["c2_w1"] * bn).astype(bf16),
        proj_w=p["proj_w"].astype(bf16), proj_b=row(p["proj_b"]),
        pe_w1=p["pe_w1"].astype(bf16), pe_b1=row(p["pe_b1"]),
        pe_w2=p["pe_w2"].astype(bf16), pe_b2=row(p["pe_b2"]),
        cls_token=p["cls_token"].astype(f32),
        cls_pos=p["cls_pos"].astype(f32),
        norm_g=row(p["norm_g"]), norm_b=row(p["norm_b"]),
    )

    H = num_heads
    Dh = D // H
    blocks = []
    for blk in p["blocks"]:
        def per(mat):  # (D, D) -> (H, D, Dh)
            return mat.reshape(D, H, Dh).transpose(1, 0, 2)
        qkv_w, qkv_b = blk["qkv_w"], blk["qkv_b"]
        qkv_wh = jnp.concatenate(
            [per(qkv_w[:, :D]), per(qkv_w[:, D:2 * D]), per(qkv_w[:, 2 * D:])],
            axis=0).astype(bf16)                                     # (3H, D, Dh)
        qkv_bh = jnp.concatenate(
            [qkv_b[:D].reshape(H, 1, Dh), qkv_b[D:2 * D].reshape(H, 1, Dh),
             qkv_b[2 * D:].reshape(H, 1, Dh)], axis=0).astype(f32)   # (3H, 1, Dh)
        blocks.append(dict(
            ln1_g=row(blk["ln1_g"]), ln1_b=row(blk["ln1_b"]),
            qkv_wh=qkv_wh, qkv_bh=qkv_bh,
            proj_wh=blk["proj_w"].reshape(H, Dh, D).astype(bf16),
            proj_b=row(blk["proj_b"]),
            ln2_g=row(blk["ln2_g"]), ln2_b=row(blk["ln2_b"]),
            fc1_w=blk["fc1_w"].astype(bf16), fc1_b=row(blk["fc1_b"]),
            fc2_w=blk["fc2_w"].astype(bf16), fc2_b=row(blk["fc2_b"]),
        ))
    out["blocks"] = blocks

    # ClsHead: fold BN, pad widths to 128 lanes (exact: relu(0)=0, zero rows).
    m0 = p["h_w0"].shape[1]
    m1 = p["h_w1"].shape[1]
    nc = p["h_w2"].shape[1]
    M0, M1, NC = _round_up(m0, 128), _round_up(m1, 128), _round_up(nc, 128)
    w0 = jnp.zeros((2 * D, M0), f32).at[:, :m0].set(p["h_w0"] * bn)
    b0 = jnp.zeros((1, M0), f32).at[:, :m0].set(p["h_b0"] * bn)
    w1 = jnp.zeros((M0, M1), f32).at[:m0, :m1].set(p["h_w1"] * bn)
    b1 = jnp.zeros((1, M1), f32).at[:, :m1].set(p["h_b1"] * bn)
    w2 = jnp.zeros((M1, NC), f32).at[:m1, :nc].set(p["h_w2"])
    b2 = jnp.zeros((1, NC), f32).at[:, :nc].set(p["h_b2"])
    out.update(h_w0_max=w0[:D].astype(bf16), h_w0_cls=w0[D:].astype(bf16),
               h_b0=b0, h_w1=w1.astype(bf16), h_b1=b1,
               h_w2=w2.astype(bf16), h_b2=b2)
    return out


# ----------------------------------- main -----------------------------------

if __name__ == "__main__":
    B, N = 2, 64             # B point clouds of N points (xyz)
    K_NEIGH = 8              # kNN group size
    NUM_HEADS = 4
    NUM_CLASSES = 15

    key = jax.random.PRNGKey(0)
    pkey, dkey = jax.random.split(key)
    raw = init_params(pkey, p3_dim=32, embed_dim=64, depth=2,
                      num_classes=NUM_CLASSES, head_mlps=(32, 32))
    params = prepare_params(raw, num_heads=NUM_HEADS)   # fold/cast/pad once, outside jit
    points = jax.random.normal(dkey, (B, N, 3), jnp.float32)

    fwd = jax.jit(partial(pix4point_forward, k_neighbors=K_NEIGH,
                          num_heads=NUM_HEADS, num_classes=NUM_CLASSES))
    logits = jax.block_until_ready(fwd(params, points))
    assert logits.shape == (B, NUM_CLASSES), logits.shape
    assert bool(jnp.all(jnp.isfinite(logits)))
    print("KERNEL_OK")
</pallas_src>

<mosaic_0001>
module attributes {stable_mosaic.version = 11 : i64} {
  func.func @_embed_kernel(%arg0: i32, %arg1: memref<8x32x6xf32, #tpu.memory_space<vmem>>, %arg2: memref<32x3xf32, #tpu.memory_space<vmem>>, %arg3: memref<6x32xbf16, #tpu.memory_space<vmem>>, %arg4: memref<32x32xbf16, #tpu.memory_space<vmem>>, %arg5: memref<1x32xf32, #tpu.memory_space<vmem>>, %arg6: memref<32x64xbf16, #tpu.memory_space<vmem>>, %arg7: memref<32x64xbf16, #tpu.memory_space<vmem>>, %arg8: memref<64x32xbf16, #tpu.memory_space<vmem>>, %arg9: memref<32x64xbf16, #tpu.memory_space<vmem>>, %arg10: memref<1x64xf32, #tpu.memory_space<vmem>>, %arg11: memref<3x128xbf16, #tpu.memory_space<vmem>>, %arg12: memref<1x128xf32, #tpu.memory_space<vmem>>, %arg13: memref<128x64xbf16, #tpu.memory_space<vmem>>, %arg14: memref<1x64xf32, #tpu.memory_space<vmem>>, %arg15: memref<32x64xf32, #tpu.memory_space<vmem>>, %arg16: memref<32x64xf32, #tpu.memory_space<vmem>>) attributes {dimension_semantics = [#tpu.dimension_semantics<parallel>], iteration_bounds = array<i64: 1>, scalar_prefetch = 0 : i64, scratch_operands = 0 : i64, tpu.core_type = #tpu.core_type<tc>, window_params = [{transform_indices = @transform_0, window_bounds = array<i64: 8, 32, 6>}, {transform_indices = @transform_1, window_bounds = array<i64: 32, 3>}, {pipeline_mode = #tpu.pipeline_mode<synchronous>, transform_indices = @transform_2, window_bounds = array<i64: 6, 32>}, {pipeline_mode = #tpu.pipeline_mode<synchronous>, transform_indices = @transform_3, window_bounds = array<i64: 32, 32>}, {pipeline_mode = #tpu.pipeline_mode<synchronous>, transform_indices = @transform_4, window_bounds = array<i64: 1, 32>}, {pipeline_mode = #tpu.pipeline_mode<synchronous>, transform_indices = @transform_5, window_bounds = array<i64: 32, 64>}, {pipeline_mode = #tpu.pipeline_mode<synchronous>, transform_indices = @transform_6, window_bounds = array<i64: 32, 64>}, {pipeline_mode = #tpu.pipeline_mode<synchronous>, transform_indices = @transform_7, window_bounds = array<i64: 64, 32>}, {pipeline_mode = #tpu.pipeline_mode<synchronous>, transform_indices = @transform_8, window_bounds = array<i64: 32, 64>}, {pipeline_mode = #tpu.pipeline_mode<synchronous>, transform_indices = @transform_9, window_bounds = array<i64: 1, 64>}, {pipeline_mode = #tpu.pipeline_mode<synchronous>, transform_indices = @transform_10, window_bounds = array<i64: 3, 128>}, {pipeline_mode = #tpu.pipeline_mode<synchronous>, transform_indices = @transform_11, window_bounds = array<i64: 1, 128>}, {pipeline_mode = #tpu.pipeline_mode<synchronous>, transform_indices = @transform_12, window_bounds = array<i64: 128, 64>}, {pipeline_mode = #tpu.pipeline_mode<synchronous>, transform_indices = @transform_13, window_bounds = array<i64: 1, 64>}, {transform_indices = @transform_14, window_bounds = array<i64: 32, 64>}, {transform_indices = @transform_15, window_bounds = array<i64: 32, 64>}]} {
    %c0 = arith.constant 0 : index
    %c0_0 = arith.constant 0 : index
    %0 = vector.load %arg3[%c0, %c0_0] : memref<6x32xbf16, #tpu.memory_space<vmem>>, vector<6x32xbf16>
    %c0_1 = arith.constant 0 : index
    %c0_2 = arith.constant 0 : index
    %1 = vector.load %arg4[%c0_1, %c0_2] : memref<32x32xbf16, #tpu.memory_space<vmem>>, vector<32x32xbf16>
    %c0_3 = arith.constant 0 : index
    %c0_4 = arith.constant 0 : index
    %2 = vector.load %arg5[%c0_3, %c0_4] : memref<1x32xf32, #tpu.memory_space<vmem>>, vector<1x32xf32>
    %c0_5 = arith.constant 0 : index
    %c0_6 = arith.constant 0 : index
    %3 = vector.load %arg6[%c0_5, %c0_6] : memref<32x64xbf16, #tpu.memory_space<vmem>>, vector<32x64xbf16>
    %c0_7 = arith.constant 0 : index
    %c0_8 = arith.constant 0 : index
    %4 = vector.load %arg7[%c0_7, %c0_8] : memref<32x64xbf16, #tpu.memory_space<vmem>>, vector<32x64xbf16>
    %c0_9 = arith.constant 0 : index
    %c0_10 = arith.constant 0 : index
    %5 = vector.load %arg8[%c0_9, %c0_10] : memref<64x32xbf16, #tpu.memory_space<vmem>>, vector<64x32xbf16>
    %c0_11 = arith.constant 0 : index
    %c0_12 = arith.constant 0 : index
    %c0_13 = arith.constant 0 : index
    %6 = vector.load %arg1[%c0_11, %c0_12, %c0_13] : memref<8x32x6xf32, #tpu.memory_space<vmem>>, vector<1x32x6xf32>
    %7 = vector.shape_cast %6 : vector<1x32x6xf32> to vector<32x6xf32>
    %8 = arith.truncf %7 : vector<32x6xf32> to vector<32x6xbf16>
    %cst = arith.constant dense<0.000000e+00> : vector<32x32xf32>
    %9 = tpu.matmul %8, %0, %cst {dimension_numbers = #tpu.dot_dimension_numbers<[1], [0], [0], [1], [0, 0, 1, 1], [], []>} : vector<32x6xbf16>, vector<6x32xbf16>, vector<32x32xf32> -> vector<32x32xf32>
    %10 = arith.truncf %9 : vector<32x32xf32> to vector<32x32xbf16>
    %cst_14 = arith.constant dense<0.000000e+00> : vector<32x32xf32>
    %11 = tpu.matmul %10, %1, %cst_14 {dimension_numbers = #tpu.dot_dimension_numbers<[1], [0], [0], [1], [0, 0, 1, 1], [], []>} : vector<32x32xbf16>, vector<32x32xbf16>, vector<32x32xf32> -> vector<32x32xf32>
    %12 = vector.broadcast %2 : vector<1x32xf32> to vector<32x32xf32>
    %13 = arith.addf %11, %12 : vector<32x32xf32>
    %cst_15 = arith.constant 0.000000e+00 : f32
    %14 = vector.broadcast %cst_15 : f32 to vector<32x32xf32>
    %15 = arith.maximumf %13, %14 : vector<32x32xf32>
    %c1 = arith.constant 1 : index
    %c0_16 = arith.constant 0 : index
    %c0_17 = arith.constant 0 : index
    %16 = vector.load %arg1[%c1, %c0_16, %c0_17] : memref<8x32x6xf32, #tpu.memory_space<vmem>>, vector<1x32x6xf32>
    %17 = vector.shape_cast %16 : vector<1x32x6xf32> to vector<32x6xf32>
    %18 = arith.truncf %17 : vector<32x6xf32> to vector<32x6xbf16>
    %cst_18 = arith.constant dense<0.000000e+00> : vector<32x32xf32>
    %19 = tpu.matmul %18, %0, %cst_18 {dimension_numbers = #tpu.dot_dimension_numbers<[1], [0], [0], [1], [0, 0, 1, 1], [], []>} : vector<32x6xbf16>, vector<6x32xbf16>, vector<32x32xf32> -> vector<32x32xf32>
    %20 = arith.truncf %19 : vector<32x32xf32> to vector<32x32xbf16>
    %cst_19 = arith.constant dense<0.000000e+00> : vector<32x32xf32>
    %21 = tpu.matmul %20, %1, %cst_19 {dimension_numbers = #tpu.dot_dimension_numbers<[1], [0], [0], [1], [0, 0, 1, 1], [], []>} : vector<32x32xbf16>, vector<32x32xbf16>, vector<32x32xf32> -> vector<32x32xf32>
    %22 = vector.broadcast %2 : vector<1x32xf32> to vector<32x32xf32>
    %23 = arith.addf %21, %22 : vector<32x32xf32>
    %cst_20 = arith.constant 0.000000e+00 : f32
    %24 = vector.broadcast %cst_20 : f32 to vector<32x32xf32>
    %25 = arith.maximumf %23, %24 : vector<32x32xf32>
    %c2 = arith.constant 2 : index
    %c0_21 = arith.constant 0 : index
    %c0_22 = arith.constant 0 : index
    %26 = vector.load %arg1[%c2, %c0_21, %c0_22] : memref<8x32x6xf32, #tpu.memory_space<vmem>>, vector<1x32x6xf32>
    %27 = vector.shape_cast %26 : vector<1x32x6xf32> to vector<32x6xf32>
    %28 = arith.truncf %27 : vector<32x6xf32> to vector<32x6xbf16>
    %cst_23 = arith.constant dense<0.000000e+00> : vector<32x32xf32>
    %29 = tpu.matmul %28, %0, %cst_23 {dimension_numbers = #tpu.dot_dimension_numbers<[1], [0], [0], [1], [0, 0, 1, 1], [], []>} : vector<32x6xbf16>, vector<6x32xbf16>, vector<32x32xf32> -> vector<32x32xf32>
    %30 = arith.truncf %29 : vector<32x32xf32> to vector<32x32xbf16>
    %cst_24 = arith.constant dense<0.000000e+00> : vector<32x32xf32>
    %31 = tpu.matmul %30, %1, %cst_24 {dimension_numbers = #tpu.dot_dimension_numbers<[1], [0], [0], [1], [0, 0, 1, 1], [], []>} : vector<32x32xbf16>, vector<32x32xbf16>, vector<32x32xf32> -> vector<32x32xf32>
    %32 = vector.broadcast %2 : vector<1x32xf32> to vector<32x32xf32>
    %33 = arith.addf %31, %32 : vector<32x32xf32>
    %cst_25 = arith.constant 0.000000e+00 : f32
    %34 = vector.broadcast %cst_25 : f32 to vector<32x32xf32>
    %35 = arith.maximumf %33, %34 : vector<32x32xf32>
    %c3 = arith.constant 3 : index
    %c0_26 = arith.constant 0 : index
    %c0_27 = arith.constant 0 : index
    %36 = vector.load %arg1[%c3, %c0_26, %c0_27] : memref<8x32x6xf32, #tpu.memory_space<vmem>>, vector<1x32x6xf32>
    %37 = vector.shape_cast %36 : vector<1x32x6xf32> to vector<32x6xf32>
    %38 = arith.truncf %37 : vector<32x6xf32> to vector<32x6xbf16>
    %cst_28 = arith.constant dense<0.000000e+00> : vector<32x32xf32>
    %39 = tpu.matmul %38, %0, %cst_28 {dimension_numbers = #tpu.dot_dimension_numbers<[1], [0], [0], [1], [0, 0, 1, 1], [], []>} : vector<32x6xbf16>, vector<6x32xbf16>, vector<32x32xf32> -> vector<32x32xf32>
    %40 = arith.truncf %39 : vector<32x32xf32> to vector<32x32xbf16>
    %cst_29 = arith.constant dense<0.000000e+00> : vector<32x32xf32>
    %41 = tpu.matmul %40, %1, %cst_29 {dimension_numbers = #tpu.dot_dimension_numbers<[1], [0], [0], [1], [0, 0, 1, 1], [], []>} : vector<32x32xbf16>, vector<32x32xbf16>, vector<32x32xf32> -> vector<32x32xf32>
    %42 = vector.broadcast %2 : vector<1x32xf32> to vector<32x32xf32>
    %43 = arith.addf %41, %42 : vector<32x32xf32>
    %cst_30 = arith.constant 0.000000e+00 : f32
    %44 = vector.broadcast %cst_30 : f32 to vector<32x32xf32>
    %45 = arith.maximumf %43, %44 : vector<32x32xf32>
    %c4 = arith.constant 4 : index
    %c0_31 = arith.constant 0 : index
    %c0_32 = arith.constant 0 : index
    %46 = vector.load %arg1[%c4, %c0_31, %c0_32] : memref<8x32x6xf32, #tpu.memory_space<vmem>>, vector<1x32x6xf32>
    %47 = vector.shape_cast %46 : vector<1x32x6xf32> to vector<32x6xf32>
    %48 = arith.truncf %47 : vector<32x6xf32> to vector<32x6xbf16>
    %cst_33 = arith.constant dense<0.000000e+00> : vector<32x32xf32>
    %49 = tpu.matmul %48, %0, %cst_33 {dimension_numbers = #tpu.dot_dimension_numbers<[1], [0], [0], [1], [0, 0, 1, 1], [], []>} : vector<32x6xbf16>, vector<6x32xbf16>, vector<32x32xf32> -> vector<32x32xf32>
    %50 = arith.truncf %49 : vector<32x32xf32> to vector<32x32xbf16>
    %cst_34 = arith.constant dense<0.000000e+00> : vector<32x32xf32>
    %51 = tpu.matmul %50, %1, %cst_34 {dimension_numbers = #tpu.dot_dimension_numbers<[1], [0], [0], [1], [0, 0, 1, 1], [], []>} : vector<32x32xbf16>, vector<32x32xbf16>, vector<32x32xf32> -> vector<32x32xf32>
    %52 = vector.broadcast %2 : vector<1x32xf32> to vector<32x32xf32>
    %53 = arith.addf %51, %52 : vector<32x32xf32>
    %cst_35 = arith.constant 0.000000e+00 : f32
    %54 = vector.broadcast %cst_35 : f32 to vector<32x32xf32>
    %55 = arith.maximumf %53, %54 : vector<32x32xf32>
    %c5 = arith.constant 5 : index
    %c0_36 = arith.constant 0 : index
    %c0_37 = arith.constant 0 : index
    %56 = vector.load %arg1[%c5, %c0_36, %c0_37] : memref<8x32x6xf32, #tpu.memory_space<vmem>>, vector<1x32x6xf32>
    %57 = vector.shape_cast %56 : vector<1x32x6xf32> to vector<32x6xf32>
    %58 = arith.truncf %57 : vector<32x6xf32> to vector<32x6xbf16>
    %cst_38 = arith.constant dense<0.000000e+00> : vector<32x32xf32>
    %59 = tpu.matmul %58, %0, %cst_38 {dimension_numbers = #tpu.dot_dimension_numbers<[1], [0], [0], [1], [0, 0, 1, 1], [], []>} : vector<32x6xbf16>, vector<6x32xbf16>, vector<32x32xf32> -> vector<32x32xf32>
    %60 = arith.truncf %59 : vector<32x32xf32> to vector<32x32xbf16>
    %cst_39 = arith.constant dense<0.000000e+00> : vector<32x32xf32>
    %61 = tpu.matmul %60, %1, %cst_39 {dimension_numbers = #tpu.dot_dimension_numbers<[1], [0], [0], [1], [0, 0, 1, 1], [], []>} : vector<32x32xbf16>, vector<32x32xbf16>, vector<32x32xf32> -> vector<32x32xf32>
    %62 = vector.broadcast %2 : vector<1x32xf32> to vector<32x32xf32>
    %63 = arith.addf %61, %62 : vector<32x32xf32>
    %cst_40 = arith.constant 0.000000e+00 : f32
    %64 = vector.broadcast %cst_40 : f32 to vector<32x32xf32>
    %65 = arith.maximumf %63, %64 : vector<32x32xf32>
    %c6 = arith.constant 6 : index
    %c0_41 = arith.constant 0 : index
    %c0_42 = arith.constant 0 : index
    %66 = vector.load %arg1[%c6, %c0_41, %c0_42] : memref<8x32x6xf32, #tpu.memory_space<vmem>>, vector<1x32x6xf32>
    %67 = vector.shape_cast %66 : vector<1x32x6xf32> to vector<32x6xf32>
    %68 = arith.truncf %67 : vector<32x6xf32> to vector<32x6xbf16>
    %cst_43 = arith.constant dense<0.000000e+00> : vector<32x32xf32>
    %69 = tpu.matmul %68, %0, %cst_43 {dimension_numbers = #tpu.dot_dimension_numbers<[1], [0], [0], [1], [0, 0, 1, 1], [], []>} : vector<32x6xbf16>, vector<6x32xbf16>, vector<32x32xf32> -> vector<32x32xf32>
    %70 = arith.truncf %69 : vector<32x32xf32> to vector<32x32xbf16>
    %cst_44 = arith.constant dense<0.000000e+00> : vector<32x32xf32>
    %71 = tpu.matmul %70, %1, %cst_44 {dimension_numbers = #tpu.dot_dimension_numbers<[1], [0], [0], [1], [0, 0, 1, 1], [], []>} : vector<32x32xbf16>, vector<32x32xbf16>, vector<32x32xf32> -> vector<32x32xf32>
    %72 = vector.broadcast %2 : vector<1x32xf32> to vector<32x32xf32>
    %73 = arith.addf %71, %72 : vector<32x32xf32>
    %cst_45 = arith.constant 0.000000e+00 : f32
    %74 = vector.broadcast %cst_45 : f32 to vector<32x32xf32>
    %75 = arith.maximumf %73, %74 : vector<32x32xf32>
    %c7 = arith.constant 7 : index
    %c0_46 = arith.constant 0 : index
    %c0_47 = arith.constant 0 : index
    %76 = vector.load %arg1[%c7, %c0_46, %c0_47] : memref<8x32x6xf32, #tpu.memory_space<vmem>>, vector<1x32x6xf32>
    %77 = vector.shape_cast %76 : vector<1x32x6xf32> to vector<32x6xf32>
    %78 = arith.truncf %77 : vector<32x6xf32> to vector<32x6xbf16>
    %cst_48 = arith.constant dense<0.000000e+00> : vector<32x32xf32>
    %79 = tpu.matmul %78, %0, %cst_48 {dimension_numbers = #tpu.dot_dimension_numbers<[1], [0], [0], [1], [0, 0, 1, 1], [], []>} : vector<32x6xbf16>, vector<6x32xbf16>, vector<32x32xf32> -> vector<32x32xf32>
    %80 = arith.truncf %79 : vector<32x32xf32> to vector<32x32xbf16>
    %cst_49 = arith.constant dense<0.000000e+00> : vector<32x32xf32>
    %81 = tpu.matmul %80, %1, %cst_49 {dimension_numbers = #tpu.dot_dimension_numbers<[1], [0], [0], [1], [0, 0, 1, 1], [], []>} : vector<32x32xbf16>, vector<32x32xbf16>, vector<32x32xf32> -> vector<32x32xf32>
    %82 = vector.broadcast %2 : vector<1x32xf32> to vector<32x32xf32>
    %83 = arith.addf %81, %82 : vector<32x32xf32>
    %cst_50 = arith.constant 0.000000e+00 : f32
    %84 = vector.broadcast %cst_50 : f32 to vector<32x32xf32>
    %85 = arith.maximumf %83, %84 : vector<32x32xf32>
    %86 = arith.maximumf %15, %25 : vector<32x32xf32>
    %87 = arith.maximumf %86, %35 : vector<32x32xf32>
    %88 = arith.maximumf %87, %45 : vector<32x32xf32>
    %89 = arith.maximumf %88, %55 : vector<32x32xf32>
    %90 = arith.maximumf %89, %65 : vector<32x32xf32>
    %91 = arith.maximumf %90, %75 : vector<32x32xf32>
    %92 = arith.maximumf %91, %85 : vector<32x32xf32>
    %93 = arith.truncf %92 : vector<32x32xf32> to vector<32x32xbf16>
    %cst_51 = arith.constant dense<0.000000e+00> : vector<32x64xf32>
    %94 = tpu.matmul %93, %3, %cst_51 {dimension_numbers = #tpu.dot_dimension_numbers<[1], [0], [0], [1], [0, 0, 1, 1], [], []>} : vector<32x32xbf16>, vector<32x64xbf16>, vector<32x64xf32> -> vector<32x64xf32>
    %95 = arith.truncf %15 : vector<32x32xf32> to vector<32x32xbf16>
    %cst_52 = arith.constant dense<0.000000e+00> : vector<32x64xf32>
    %96 = tpu.matmul %95, %4, %cst_52 {dimension_numbers = #tpu.dot_dimension_numbers<[1], [0], [0], [1], [0, 0, 1, 1], [], []>} : vector<32x32xbf16>, vector<32x64xbf16>, vector<32x64xf32> -> vector<32x64xf32>
    %97 = arith.addf %94, %96 : vector<32x64xf32>
    %cst_53 = arith.constant 0.000000e+00 : f32
    %98 = vector.broadcast %cst_53 : f32 to vector<32x64xf32>
    %99 = arith.maximumf %97, %98 : vector<32x64xf32>
    %100 = arith.truncf %99 : vector<32x64xf32> to vector<32x64xbf16>
    %cst_54 = arith.constant dense<0.000000e+00> : vector<32x32xf32>
    %101 = tpu.matmul %100, %5, %cst_54 {dimension_numbers = #tpu.dot_dimension_numbers<[1], [0], [0], [1], [0, 0, 1, 1], [], []>} : vector<32x64xbf16>, vector<64x32xbf16>, vector<32x32xf32> -> vector<32x32xf32>
    %cst_55 = arith.constant 0.000000e+00 : f32
    %102 = vector.broadcast %cst_55 : f32 to vector<32x32xf32>
    %103 = arith.maximumf %101, %102 : vector<32x32xf32>
    %104 = arith.truncf %25 : vector<32x32xf32> to vector<32x32xbf16>
    %cst_56 = arith.constant dense<0.000000e+00> : vector<32x64xf32>
    %105 = tpu.matmul %104, %4, %cst_56 {dimension_numbers = #tpu.dot_dimension_numbers<[1], [0], [0], [1], [0, 0, 1, 1], [], []>} : vector<32x32xbf16>, vector<32x64xbf16>, vector<32x64xf32> -> vector<32x64xf32>
    %106 = arith.addf %94, %105 : vector<32x64xf32>
    %cst_57 = arith.constant 0.000000e+00 : f32
    %107 = vector.broadcast %cst_57 : f32 to vector<32x64xf32>
    %108 = arith.maximumf %106, %107 : vector<32x64xf32>
    %109 = arith.truncf %108 : vector<32x64xf32> to vector<32x64xbf16>
    %cst_58 = arith.constant dense<0.000000e+00> : vector<32x32xf32>
    %110 = tpu.matmul %109, %5, %cst_58 {dimension_numbers = #tpu.dot_dimension_numbers<[1], [0], [0], [1], [0, 0, 1, 1], [], []>} : vector<32x64xbf16>, vector<64x32xbf16>, vector<32x32xf32> -> vector<32x32xf32>
    %cst_59 = arith.constant 0.000000e+00 : f32
    %111 = vector.broadcast %cst_59 : f32 to vector<32x32xf32>
    %112 = arith.maximumf %110, %111 : vector<32x32xf32>
    %113 = arith.maximumf %103, %112 : vector<32x32xf32>
    %114 = arith.truncf %35 : vector<32x32xf32> to vector<32x32xbf16>
    %cst_60 = arith.constant dense<0.000000e+00> : vector<32x64xf32>
    %115 = tpu.matmul %114, %4, %cst_60 {dimension_numbers = #tpu.dot_dimension_numbers<[1], [0], [0], [1], [0, 0, 1, 1], [], []>} : vector<32x32xbf16>, vector<32x64xbf16>, vector<32x64xf32> -> vector<32x64xf32>
    %116 = arith.addf %94, %115 : vector<32x64xf32>
    %cst_61 = arith.constant 0.000000e+00 : f32
    %117 = vector.broadcast %cst_61 : f32 to vector<32x64xf32>
    %118 = arith.maximumf %116, %117 : vector<32x64xf32>
    %119 = arith.truncf %118 : vector<32x64xf32> to vector<32x64xbf16>
    %cst_62 = arith.constant dense<0.000000e+00> : vector<32x32xf32>
    %120 = tpu.matmul %119, %5, %cst_62 {dimension_numbers = #tpu.dot_dimension_numbers<[1], [0], [0], [1], [0, 0, 1, 1], [], []>} : vector<32x64xbf16>, vector<64x32xbf16>, vector<32x32xf32> -> vector<32x32xf32>
    %cst_63 = arith.constant 0.000000e+00 : f32
    %121 = vector.broadcast %cst_63 : f32 to vector<32x32xf32>
    %122 = arith.maximumf %120, %121 : vector<32x32xf32>
    %123 = arith.maximumf %113, %122 : vector<32x32xf32>
    %124 = arith.truncf %45 : vector<32x32xf32> to vector<32x32xbf16>
    %cst_64 = arith.constant dense<0.000000e+00> : vector<32x64xf32>
    %125 = tpu.matmul %124, %4, %cst_64 {dimension_numbers = #tpu.dot_dimension_numbers<[1], [0], [0], [1], [0, 0, 1, 1], [], []>} : vector<32x32xbf16>, vector<32x64xbf16>, vector<32x64xf32> -> vector<32x64xf32>
    %126 = arith.addf %94, %125 : vector<32x64xf32>
    %cst_65 = arith.constant 0.000000e+00 : f32
    %127 = vector.broadcast %cst_65 : f32 to vector<32x64xf32>
    %128 = arith.maximumf %126, %127 : vector<32x64xf32>
    %129 = arith.truncf %128 : vector<32x64xf32> to vector<32x64xbf16>
    %cst_66 = arith.constant dense<0.000000e+00> : vector<32x32xf32>
    %130 = tpu.matmul %129, %5, %cst_66 {dimension_numbers = #tpu.dot_dimension_numbers<[1], [0], [0], [1], [0, 0, 1, 1], [], []>} : vector<32x64xbf16>, vector<64x32xbf16>, vector<32x32xf32> -> vector<32x32xf32>
    %cst_67 = arith.constant 0.000000e+00 : f32
    %131 = vector.broadcast %cst_67 : f32 to vector<32x32xf32>
    %132 = arith.maximumf %130, %131 : vector<32x32xf32>
    %133 = arith.maximumf %123, %132 : vector<32x32xf32>
    %134 = arith.truncf %55 : vector<32x32xf32> to vector<32x32xbf16>
    %cst_68 = arith.constant dense<0.000000e+00> : vector<32x64xf32>
    %135 = tpu.matmul %134, %4, %cst_68 {dimension_numbers = #tpu.dot_dimension_numbers<[1], [0], [0], [1], [0, 0, 1, 1], [], []>} : vector<32x32xbf16>, vector<32x64xbf16>, vector<32x64xf32> -> vector<32x64xf32>
    %136 = arith.addf %94, %135 : vector<32x64xf32>
    %cst_69 = arith.constant 0.000000e+00 : f32
    %137 = vector.broadcast %cst_69 : f32 to vector<32x64xf32>
    %138 = arith.maximumf %136, %137 : vector<32x64xf32>
    %139 = arith.truncf %138 : vector<32x64xf32> to vector<32x64xbf16>
    %cst_70 = arith.constant dense<0.000000e+00> : vector<32x32xf32>
    %140 = tpu.matmul %139, %5, %cst_70 {dimension_numbers = #tpu.dot_dimension_numbers<[1], [0], [0], [1], [0, 0, 1, 1], [], []>} : vector<32x64xbf16>, vector<64x32xbf16>, vector<32x32xf32> -> vector<32x32xf32>
    %cst_71 = arith.constant 0.000000e+00 : f32
    %141 = vector.broadcast %cst_71 : f32 to vector<32x32xf32>
    %142 = arith.maximumf %140, %141 : vector<32x32xf32>
    %143 = arith.maximumf %133, %142 : vector<32x32xf32>
    %144 = arith.truncf %65 : vector<32x32xf32> to vector<32x32xbf16>
    %cst_72 = arith.constant dense<0.000000e+00> : vector<32x64xf32>
    %145 = tpu.matmul %144, %4, %cst_72 {dimension_numbers = #tpu.dot_dimension_numbers<[1], [0], [0], [1], [0, 0, 1, 1], [], []>} : vector<32x32xbf16>, vector<32x64xbf16>, vector<32x64xf32> -> vector<32x64xf32>
    %146 = arith.addf %94, %145 : vector<32x64xf32>
    %cst_73 = arith.constant 0.000000e+00 : f32
    %147 = vector.broadcast %cst_73 : f32 to vector<32x64xf32>
    %148 = arith.maximumf %146, %147 : vector<32x64xf32>
    %149 = arith.truncf %148 : vector<32x64xf32> to vector<32x64xbf16>
    %cst_74 = arith.constant dense<0.000000e+00> : vector<32x32xf32>
    %150 = tpu.matmul %149, %5, %cst_74 {dimension_numbers = #tpu.dot_dimension_numbers<[1], [0], [0], [1], [0, 0, 1, 1], [], []>} : vector<32x64xbf16>, vector<64x32xbf16>, vector<32x32xf32> -> vector<32x32xf32>
    %cst_75 = arith.constant 0.000000e+00 : f32
    %151 = vector.broadcast %cst_75 : f32 to vector<32x32xf32>
    %152 = arith.maximumf %150, %151 : vector<32x32xf32>
    %153 = arith.maximumf %143, %152 : vector<32x32xf32>
    %154 = arith.truncf %75 : vector<32x32xf32> to vector<32x32xbf16>
    %cst_76 = arith.constant dense<0.000000e+00> : vector<32x64xf32>
    %155 = tpu.matmul %154, %4, %cst_76 {dimension_numbers = #tpu.dot_dimension_numbers<[1], [0], [0], [1], [0, 0, 1, 1], [], []>} : vector<32x32xbf16>, vector<32x64xbf16>, vector<32x64xf32> -> vector<32x64xf32>
    %156 = arith.addf %94, %155 : vector<32x64xf32>
    %cst_77 = arith.constant 0.000000e+00 : f32
    %157 = vector.broadcast %cst_77 : f32 to vector<32x64xf32>
    %158 = arith.maximumf %156, %157 : vector<32x64xf32>
    %159 = arith.truncf %158 : vector<32x64xf32> to vector<32x64xbf16>
    %cst_78 = arith.constant dense<0.000000e+00> : vector<32x32xf32>
    %160 = tpu.matmul %159, %5, %cst_78 {dimension_numbers = #tpu.dot_dimension_numbers<[1], [0], [0], [1], [0, 0, 1, 1], [], []>} : vector<32x64xbf16>, vector<64x32xbf16>, vector<32x32xf32> -> vector<32x32xf32>
    %cst_79 = arith.constant 0.000000e+00 : f32
    %161 = vector.broadcast %cst_79 : f32 to vector<32x32xf32>
    %162 = arith.maximumf %160, %161 : vector<32x32xf32>
    %163 = arith.maximumf %153, %162 : vector<32x32xf32>
    %164 = arith.truncf %85 : vector<32x32xf32> to vector<32x32xbf16>
    %cst_80 = arith.constant dense<0.000000e+00> : vector<32x64xf32>
    %165 = tpu.matmul %164, %4, %cst_80 {dimension_numbers = #tpu.dot_dimension_numbers<[1], [0], [0], [1], [0, 0, 1, 1], [], []>} : vector<32x32xbf16>, vector<32x64xbf16>, vector<32x64xf32> -> vector<32x64xf32>
    %166 = arith.addf %94, %165 : vector<32x64xf32>
    %cst_81 = arith.constant 0.000000e+00 : f32
    %167 = vector.broadcast %cst_81 : f32 to vector<32x64xf32>
    %168 = arith.maximumf %166, %167 : vector<32x64xf32>
    %169 = arith.truncf %168 : vector<32x64xf32> to vector<32x64xbf16>
    %cst_82 = arith.constant dense<0.000000e+00> : vector<32x32xf32>
    %170 = tpu.matmul %169, %5, %cst_82 {dimension_numbers = #tpu.dot_dimension_numbers<[1], [0], [0], [1], [0, 0, 1, 1], [], []>} : vector<32x64xbf16>, vector<64x32xbf16>, vector<32x32xf32> -> vector<32x32xf32>
    %cst_83 = arith.constant 0.000000e+00 : f32
    %171 = vector.broadcast %cst_83 : f32 to vector<32x32xf32>
    %172 = arith.maximumf %170, %171 : vector<32x32xf32>
    %173 = arith.maximumf %163, %172 : vector<32x32xf32>
    %174 = arith.truncf %173 : vector<32x32xf32> to vector<32x32xbf16>
    %c0_84 = arith.constant 0 : index
    %c0_85 = arith.constant 0 : index
    %175 = vector.load %arg9[%c0_84, %c0_85] : memref<32x64xbf16, #tpu.memory_space<vmem>>, vector<32x64xbf16>
    %cst_86 = arith.constant dense<0.000000e+00> : vector<32x64xf32>
    %176 = tpu.matmul %174, %175, %cst_86 {dimension_numbers = #tpu.dot_dimension_numbers<[1], [0], [0], [1], [0, 0, 1, 1], [], []>} : vector<32x32xbf16>, vector<32x64xbf16>, vector<32x64xf32> -> vector<32x64xf32>
    %c0_87 = arith.constant 0 : index
    %c0_88 = arith.constant 0 : index
    %177 = vector.load %arg10[%c0_87, %c0_88] : memref<1x64xf32, #tpu.memory_space<vmem>>, vector<1x64xf32>
    %178 = vector.broadcast %177 : vector<1x64xf32> to vector<32x64xf32>
    %179 = arith.addf %176, %178 : vector<32x64xf32>
    %c0_89 = arith.constant 0 : index
    %c0_90 = arith.constant 0 : index
    %180 = vector.load %arg2[%c0_89, %c0_90] : memref<32x3xf32, #tpu.memory_space<vmem>>, vector<32x3xf32>
    %181 = arith.truncf %180 : vector<32x3xf32> to vector<32x3xbf16>
    %c0_91 = arith.constant 0 : index
    %c0_92 = arith.constant 0 : index
    %182 = vector.load %arg11[%c0_91, %c0_92] : memref<3x128xbf16, #tpu.memory_space<vmem>>, vector<3x128xbf16>
    %cst_93 = arith.constant dense<0.000000e+00> : vector<32x128xf32>
    %183 = tpu.matmul %181, %182, %cst_93 {dimension_numbers = #tpu.dot_dimension_numbers<[1], [0], [0], [1], [0, 0, 1, 1], [], []>} : vector<32x3xbf16>, vector<3x128xbf16>, vector<32x128xf32> -> vector<32x128xf32>
    %c0_94 = arith.constant 0 : index
    %c0_95 = arith.constant 0 : index
    %184 = vector.load %arg12[%c0_94, %c0_95] : memref<1x128xf32, #tpu.memory_space<vmem>>, vector<1x128xf32>
    %185 = vector.broadcast %184 : vector<1x128xf32> to vector<32x128xf32>
    %186 = arith.addf %183, %185 : vector<32x128xf32>
    %187 = arith.mulf %186, %186 : vector<32x128xf32>
    %188 = arith.mulf %186, %187 : vector<32x128xf32>
    %cst_96 = arith.constant 4.471500e-02 : f32
    %189 = vector.broadcast %cst_96 : f32 to vector<32x128xf32>
    %190 = arith.mulf %189, %188 : vector<32x128xf32>
    %191 = arith.addf %186, %190 : vector<32x128xf32>
    %cst_97 = arith.constant 0.797884583 : f32
    %192 = vector.broadcast %cst_97 : f32 to vector<32x128xf32>
    %193 = arith.mulf %192, %191 : vector<32x128xf32>
    %194 = math.tanh %193 : vector<32x128xf32>
    %cst_98 = arith.constant 1.000000e+00 : f32
    %195 = vector.broadcast %cst_98 : f32 to vector<32x128xf32>
    %196 = arith.addf %195, %194 : vector<32x128xf32>
    %cst_99 = arith.constant 5.000000e-01 : f32
    %197 = vector.broadcast %cst_99 : f32 to vector<32x128xf32>
    %198 = arith.mulf %197, %196 : vector<32x128xf32>
    %199 = arith.mulf %186, %198 : vector<32x128xf32>
    %200 = arith.truncf %199 : vector<32x128xf32> to vector<32x128xbf16>
    %c0_100 = arith.constant 0 : index
    %c0_101 = arith.constant 0 : index
    %201 = vector.load %arg13[%c0_100, %c0_101] : memref<128x64xbf16, #tpu.memory_space<vmem>>, vector<128x64xbf16>
    %cst_102 = arith.constant dense<0.000000e+00> : vector<32x64xf32>
    %202 = tpu.matmul %200, %201, %cst_102 {dimension_numbers = #tpu.dot_dimension_numbers<[1], [0], [0], [1], [0, 0, 1, 1], [], []>} : vector<32x128xbf16>, vector<128x64xbf16>, vector<32x64xf32> -> vector<32x64xf32>
    %c0_103 = arith.constant 0 : index
    %c0_104 = arith.constant 0 : index
    %203 = vector.load %arg14[%c0_103, %c0_104] : memref<1x64xf32, #tpu.memory_space<vmem>>, vector<1x64xf32>
    %204 = vector.broadcast %203 : vector<1x64xf32> to vector<32x64xf32>
    %205 = arith.addf %202, %204 : vector<32x64xf32>
    %c0_105 = arith.constant 0 : index
    %c0_106 = arith.constant 0 : index
    %206 = vector.load %arg15[%c0_105, %c0_106] : memref<32x64xf32, #tpu.memory_space<vmem>>, vector<32x64xf32>
    tpu.vector_store %arg15[%c0_105, %c0_106], %179 {strides = array<i32>} : memref<32x64xf32, #tpu.memory_space<vmem>>, vector<32x64xf32>,
    %c0_107 = arith.constant 0 : index
    %c0_108 = arith.constant 0 : index
    %207 = vector.load %arg16[%c0_107, %c0_108] : memref<32x64xf32, #tpu.memory_space<vmem>>, vector<32x64xf32>
    tpu.vector_store %arg16[%c0_107, %c0_108], %205 {strides = array<i32>} : memref<32x64xf32, #tpu.memory_space<vmem>>, vector<32x64xf32>,
    return
  }
  func.func @transform_0(%arg0: i32) -> (i32, i32, i32) {
    %c0_i32 = arith.constant 0 : i32
    %c0_i32_0 = arith.constant 0 : i32
    %c0_i32_1 = arith.constant 0 : i32
    return %c0_i32, %arg0, %c0_i32_0 : i32, i32, i32
  }
  func.func @transform_1(%arg0: i32) -> (i32, i32) {
    %c0_i32 = arith.constant 0 : i32
    %c0_i32_0 = arith.constant 0 : i32
    return %arg0, %c0_i32 : i32, i32
  }
  func.func @transform_2(%arg0: i32) -> (i32, i32) {
    %c0_i32 = arith.constant 0 : i32
    %c0_i32_0 = arith.constant 0 : i32
    %c0_i32_1 = arith.constant 0 : i32
    return %c0_i32, %c0_i32_0 : i32, i32
  }
  func.func @transform_3(%arg0: i32) -> (i32, i32) {
    %c0_i32 = arith.constant 0 : i32
    %c0_i32_0 = arith.constant 0 : i32
    %c0_i32_1 = arith.constant 0 : i32
    return %c0_i32, %c0_i32_0 : i32, i32
  }
  func.func @transform_4(%arg0: i32) -> (i32, i32) {
    %c0_i32 = arith.constant 0 : i32
    %c0_i32_0 = arith.constant 0 : i32
    %c0_i32_1 = arith.constant 0 : i32
    return %c0_i32, %c0_i32_0 : i32, i32
  }
  func.func @transform_5(%arg0: i32) -> (i32, i32) {
    %c0_i32 = arith.constant 0 : i32
    %c0_i32_0 = arith.constant 0 : i32
    %c0_i32_1 = arith.constant 0 : i32
    return %c0_i32, %c0_i32_0 : i32, i32
  }
  func.func @transform_6(%arg0: i32) -> (i32, i32) {
    %c0_i32 = arith.constant 0 : i32
    %c0_i32_0 = arith.constant 0 : i32
    %c0_i32_1 = arith.constant 0 : i32
    return %c0_i32, %c0_i32_0 : i32, i32
  }
  func.func @transform_7(%arg0: i32) -> (i32, i32) {
    %c0_i32 = arith.constant 0 : i32
    %c0_i32_0 = arith.constant 0 : i32
    %c0_i32_1 = arith.constant 0 : i32
    return %c0_i32, %c0_i32_0 : i32, i32
  }
  func.func @transform_8(%arg0: i32) -> (i32, i32) {
    %c0_i32 = arith.constant 0 : i32
    %c0_i32_0 = arith.constant 0 : i32
    %c0_i32_1 = arith.constant 0 : i32
    return %c0_i32, %c0_i32_0 : i32, i32
  }
  func.func @transform_9(%arg0: i32) -> (i32, i32) {
    %c0_i32 = arith.constant 0 : i32
    %c0_i32_0 = arith.constant 0 : i32
    %c0_i32_1 = arith.constant 0 : i32
    return %c0_i32, %c0_i32_0 : i32, i32
  }
  func.func @transform_10(%arg0: i32) -> (i32, i32) {
    %c0_i32 = arith.constant 0 : i32
    %c0_i32_0 = arith.constant 0 : i32
    %c0_i32_1 = arith.constant 0 : i32
    return %c0_i32, %c0_i32_0 : i32, i32
  }
  func.func @transform_11(%arg0: i32) -> (i32, i32) {
    %c0_i32 = arith.constant 0 : i32
    %c0_i32_0 = arith.constant 0 : i32
    %c0_i32_1 = arith.constant 0 : i32
    return %c0_i32, %c0_i32_0 : i32, i32
  }
  func.func @transform_12(%arg0: i32) -> (i32, i32) {
    %c0_i32 = arith.constant 0 : i32
    %c0_i32_0 = arith.constant 0 : i32
    %c0_i32_1 = arith.constant 0 : i32
    return %c0_i32, %c0_i32_0 : i32, i32
  }
  func.func @transform_13(%arg0: i32) -> (i32, i32) {
    %c0_i32 = arith.constant 0 : i32
    %c0_i32_0 = arith.constant 0 : i32
    %c0_i32_1 = arith.constant 0 : i32
    return %c0_i32, %c0_i32_0 : i32, i32
  }
  func.func @transform_14(%arg0: i32) -> (i32, i32) {
    %c0_i32 = arith.constant 0 : i32
    %c0_i32_0 = arith.constant 0 : i32
    return %arg0, %c0_i32 : i32, i32
  }
  func.func @transform_15(%arg0: i32) -> (i32, i32) {
    %c0_i32 = arith.constant 0 : i32
    %c0_i32_0 = arith.constant 0 : i32
    return %arg0, %c0_i32 : i32, i32
  }
}

module attributes {stable_mosaic.version = 11 : i64} {
  func.func @_vit_block_kernel(%arg0: i32, %arg1: memref<1x24x64xf32, #tpu.memory_space<vmem>>, %arg2: memref<1x24x64xf32, #tpu.memory_space<vmem>>, %arg3: memref<1x64xf32, #tpu.memory_space<vmem>>, %arg4: memref<1x64xf32, #tpu.memory_space<vmem>>, %arg5: memref<12x64x16xbf16, #tpu.memory_space<vmem>>, %arg6: memref<12x1x16xf32, #tpu.memory_space<vmem>>, %arg7: memref<4x16x64xbf16, #tpu.memory_space<vmem>>, %arg8: memref<1x64xf32, #tpu.memory_space<vmem>>, %arg9: memref<1x64xf32, #tpu.memory_space<vmem>>, %arg10: memref<1x64xf32, #tpu.memory_space<vmem>>, %arg11: memref<64x256xbf16, #tpu.memory_space<vmem>>, %arg12: memref<1x256xf32, #tpu.memory_space<vmem>>, %arg13: memref<256x64xbf16, #tpu.memory_space<vmem>>, %arg14: memref<1x64xf32, #tpu.memory_space<vmem>>, %arg15: memref<1x24x64xf32, #tpu.memory_space<vmem>>) attributes {dimension_semantics = [#tpu.dimension_semantics<parallel>], iteration_bounds = array<i64: 2>, scalar_prefetch = 0 : i64, scratch_operands = 0 : i64, tpu.core_type = #tpu.core_type<tc>, window_params = [{transform_indices = @transform_0, window_bounds = array<i64: 1, 24, 64>}, {transform_indices = @transform_1, window_bounds = array<i64: 1, 24, 64>}, {pipeline_mode = #tpu.pipeline_mode<synchronous>, transform_indices = @transform_2, window_bounds = array<i64: 1, 64>}, {pipeline_mode = #tpu.pipeline_mode<synchronous>, transform_indices = @transform_3, window_bounds = array<i64: 1, 64>}, {pipeline_mode = #tpu.pipeline_mode<synchronous>, transform_indices = @transform_4, window_bounds = array<i64: 12, 64, 16>}, {pipeline_mode = #tpu.pipeline_mode<synchronous>, transform_indices = @transform_5, window_bounds = array<i64: 12, 1, 16>}, {pipeline_mode = #tpu.pipeline_mode<synchronous>, transform_indices = @transform_6, window_bounds = array<i64: 4, 16, 64>}, {pipeline_mode = #tpu.pipeline_mode<synchronous>, transform_indices = @transform_7, window_bounds = array<i64: 1, 64>}, {pipeline_mode = #tpu.pipeline_mode<synchronous>, transform_indices = @transform_8, window_bounds = array<i64: 1, 64>}, {pipeline_mode = #tpu.pipeline_mode<synchronous>, transform_indices = @transform_9, window_bounds = array<i64: 1, 64>}, {pipeline_mode = #tpu.pipeline_mode<synchronous>, transform_indices = @transform_10, window_bounds = array<i64: 64, 256>}, {pipeline_mode = #tpu.pipeline_mode<synchronous>, transform_indices = @transform_11, window_bounds = array<i64: 1, 256>}, {pipeline_mode = #tpu.pipeline_mode<synchronous>, transform_indices = @transform_12, window_bounds = array<i64: 256, 64>}, {pipeline_mode = #tpu.pipeline_mode<synchronous>, transform_indices = @transform_13, window_bounds = array<i64: 1, 64>}, {transform_indices = @transform_14, window_bounds = array<i64: 1, 24, 64>}]} {
    %c0 = arith.constant 0 : index
    %c0_0 = arith.constant 0 : index
    %c0_1 = arith.constant 0 : index
    %0 = vector.load %arg1[%c0, %c0_0, %c0_1] : memref<1x24x64xf32, #tpu.memory_space<vmem>>, vector<1x24x64xf32>
    %1 = vector.shape_cast %0 : vector<1x24x64xf32> to vector<24x64xf32>
    %c0_2 = arith.constant 0 : index
    %c0_3 = arith.constant 0 : index
    %c0_4 = arith.constant 0 : index
    %2 = vector.load %arg2[%c0_2, %c0_3, %c0_4] : memref<1x24x64xf32, #tpu.memory_space<vmem>>, vector<1x24x64xf32>
    %3 = vector.shape_cast %2 : vector<1x24x64xf32> to vector<24x64xf32>
    %4 = arith.addf %1, %3 : vector<24x64xf32>
    %c0_5 = arith.constant 0 : index
    %c0_6 = arith.constant 0 : index
    %5 = vector.load %arg3[%c0_5, %c0_6] : memref<1x64xf32, #tpu.memory_space<vmem>>, vector<1x64xf32>
    %c0_7 = arith.constant 0 : index
    %c0_8 = arith.constant 0 : index
    %6 = vector.load %arg4[%c0_7, %c0_8] : memref<1x64xf32, #tpu.memory_space<vmem>>, vector<1x64xf32>
    %cst = arith.constant dense<0.000000e+00> : vector<24xf32>
    %7 = vector.multi_reduction <add>, %4, %cst [1] : vector<24x64xf32> to vector<24xf32>
    %8 = vector.shape_cast %7 : vector<24xf32> to vector<24x1xf32>
    %cst_9 = arith.constant 6.400000e+01 : f32
    %9 = vector.broadcast %cst_9 : f32 to vector<24x1xf32>
    %10 = arith.divf %8, %9 : vector<24x1xf32>
    %11 = vector.broadcast %10 : vector<24x1xf32> to vector<24x64xf32>
    %12 = arith.subf %4, %11 : vector<24x64xf32>
    %13 = arith.mulf %12, %12 : vector<24x64xf32>
    %cst_10 = arith.constant dense<0.000000e+00> : vector<24xf32>
    %14 = vector.multi_reduction <add>, %13, %cst_10 [1] : vector<24x64xf32> to vector<24xf32>
    %15 = vector.shape_cast %14 : vector<24xf32> to vector<24x1xf32>
    %cst_11 = arith.constant 6.400000e+01 : f32
    %16 = vector.broadcast %cst_11 : f32 to vector<24x1xf32>
    %17 = arith.divf %15, %16 : vector<24x1xf32>
    %18 = vector.broadcast %10 : vector<24x1xf32> to vector<24x64xf32>
    %19 = arith.subf %4, %18 : vector<24x64xf32>
    %cst_12 = arith.constant 9.99999997E-7 : f32
    %20 = vector.broadcast %cst_12 : f32 to vector<24x1xf32>
    %21 = arith.addf %17, %20 : vector<24x1xf32>
    %22 = math.rsqrt %21 : vector<24x1xf32>
    %23 = vector.broadcast %22 : vector<24x1xf32> to vector<24x64xf32>
    %24 = arith.mulf %19, %23 : vector<24x64xf32>
    %25 = vector.broadcast %5 : vector<1x64xf32> to vector<24x64xf32>
    %26 = arith.mulf %24, %25 : vector<24x64xf32>
    %27 = vector.broadcast %6 : vector<1x64xf32> to vector<24x64xf32>
    %28 = arith.addf %26, %27 : vector<24x64xf32>
    %29 = arith.truncf %28 : vector<24x64xf32> to vector<24x64xbf16>
    %30 = tpu.iota {dimensions = array<i32: 1>} : vector<24x24xi32>
    %c17_i32 = arith.constant 17 : i32
    %31 = vector.broadcast %c17_i32 : i32 to vector<24x24xi32>
    %32 = arith.cmpi slt, %30, %31 : vector<24x24xi32>
    %cst_13 = arith.constant 0.000000e+00 : f32
    %cst_14 = arith.constant -1.000000e+30 : f32
    %33 = vector.broadcast %cst_13 : f32 to vector<24x24xf32>
    %34 = vector.broadcast %cst_14 : f32 to vector<24x24xf32>
    %35 = arith.select %32, %33, %34 : vector<24x24xi1>, vector<24x24xf32>
    %cst_15 = arith.constant 0.000000e+00 : f32
    %36 = vector.broadcast %cst_15 : f32 to vector<24x64xf32>
    %c0_16 = arith.constant 0 : index
    %c0_17 = arith.constant 0 : index
    %c0_18 = arith.constant 0 : index
    %37 = vector.load %arg5[%c0_16, %c0_17, %c0_18] : memref<12x64x16xbf16, #tpu.memory_space<vmem>>, vector<1x64x16xbf16>
    %38 = vector.shape_cast %37 : vector<1x64x16xbf16> to vector<64x16xbf16>
    %cst_19 = arith.constant dense<0.000000e+00> : vector<24x16xf32>
    %39 = tpu.matmul %29, %38, %cst_19 {dimension_numbers = #tpu.dot_dimension_numbers<[1], [0], [0], [1], [0, 0, 1, 1], [], []>} : vector<24x64xbf16>, vector<64x16xbf16>, vector<24x16xf32> -> vector<24x16xf32>
    %c0_20 = arith.constant 0 : index
    %c0_21 = arith.constant 0 : index
    %c0_22 = arith.constant 0 : index
    %40 = vector.load %arg6[%c0_20, %c0_21, %c0_22] : memref<12x1x16xf32, #tpu.memory_space<vmem>>, vector<1x1x16xf32>
    %41 = vector.shape_cast %40 : vector<1x1x16xf32> to vector<1x16xf32>
    %42 = vector.broadcast %41 : vector<1x16xf32> to vector<24x16xf32>
    %43 = arith.addf %39, %42 : vector<24x16xf32>
    %c4 = arith.constant 4 : index
    %c0_23 = arith.constant 0 : index
    %c0_24 = arith.constant 0 : index
    %44 = vector.load %arg5[%c4, %c0_23, %c0_24] : memref<12x64x16xbf16, #tpu.memory_space<vmem>>, vector<1x64x16xbf16>
    %45 = vector.shape_cast %44 : vector<1x64x16xbf16> to vector<64x16xbf16>
    %cst_25 = arith.constant dense<0.000000e+00> : vector<24x16xf32>
    %46 = tpu.matmul %29, %45, %cst_25 {dimension_numbers = #tpu.dot_dimension_numbers<[1], [0], [0], [1], [0, 0, 1, 1], [], []>} : vector<24x64xbf16>, vector<64x16xbf16>, vector<24x16xf32> -> vector<24x16xf32>
    %c4_26 = arith.constant 4 : index
    %c0_27 = arith.constant 0 : index
    %c0_28 = arith.constant 0 : index
    %47 = vector.load %arg6[%c4_26, %c0_27, %c0_28] : memref<12x1x16xf32, #tpu.memory_space<vmem>>, vector<1x1x16xf32>
    %48 = vector.shape_cast %47 : vector<1x1x16xf32> to vector<1x16xf32>
    %49 = vector.broadcast %48 : vector<1x16xf32> to vector<24x16xf32>
    %50 = arith.addf %46, %49 : vector<24x16xf32>
    %c8 = arith.constant 8 : index
    %c0_29 = arith.constant 0 : index
    %c0_30 = arith.constant 0 : index
    %51 = vector.load %arg5[%c8, %c0_29, %c0_30] : memref<12x64x16xbf16, #tpu.memory_space<vmem>>, vector<1x64x16xbf16>
    %52 = vector.shape_cast %51 : vector<1x64x16xbf16> to vector<64x16xbf16>
    %cst_31 = arith.constant dense<0.000000e+00> : vector<24x16xf32>
    %53 = tpu.matmul %29, %52, %cst_31 {dimension_numbers = #tpu.dot_dimension_numbers<[1], [0], [0], [1], [0, 0, 1, 1], [], []>} : vector<24x64xbf16>, vector<64x16xbf16>, vector<24x16xf32> -> vector<24x16xf32>
    %c8_32 = arith.constant 8 : index
    %c0_33 = arith.constant 0 : index
    %c0_34 = arith.constant 0 : index
    %54 = vector.load %arg6[%c8_32, %c0_33, %c0_34] : memref<12x1x16xf32, #tpu.memory_space<vmem>>, vector<1x1x16xf32>
    %55 = vector.shape_cast %54 : vector<1x1x16xf32> to vector<1x16xf32>
    %56 = vector.broadcast %55 : vector<1x16xf32> to vector<24x16xf32>
    %57 = arith.addf %53, %56 : vector<24x16xf32>
    %58 = arith.truncf %43 : vector<24x16xf32> to vector<24x16xbf16>
    %59 = arith.truncf %50 : vector<24x16xf32> to vector<24x16xbf16>
    %cst_35 = arith.constant dense<0.000000e+00> : vector<24x24xf32>
    %60 = tpu.matmul %58, %59, %cst_35 {dimension_numbers = #tpu.dot_dimension_numbers<[1], [1], [0], [0], [0, 0, 1, 0], [], []>} : vector<24x16xbf16>, vector<24x16xbf16>, vector<24x24xf32> -> vector<24x24xf32>
    %cst_36 = arith.constant 2.500000e-01 : f32
    %61 = vector.broadcast %cst_36 : f32 to vector<24x24xf32>
    %62 = arith.mulf %60, %61 : vector<24x24xf32>
    %63 = arith.addf %62, %35 : vector<24x24xf32>
    %cst_37 = arith.constant dense<0xFF800000> : vector<24xf32>
    %64 = vector.multi_reduction <maximumf>, %63, %cst_37 [1] : vector<24x24xf32> to vector<24xf32>
    %65 = vector.shape_cast %64 : vector<24xf32> to vector<24x1xf32>
    %66 = vector.broadcast %65 : vector<24x1xf32> to vector<24x24xf32>
    %67 = arith.subf %63, %66 : vector<24x24xf32>
    %68 = math.exp %67 : vector<24x24xf32>
    %cst_38 = arith.constant dense<0.000000e+00> : vector<24xf32>
    %69 = vector.multi_reduction <add>, %68, %cst_38 [1] : vector<24x24xf32> to vector<24xf32>
    %70 = vector.shape_cast %69 : vector<24xf32> to vector<24x1xf32>
    %71 = tpu.reciprocal %70 {approx = true} : vector<24x1xf32> -> vector<24x1xf32>
    %72 = vector.broadcast %71 : vector<24x1xf32> to vector<24x24xf32>
    %73 = arith.mulf %68, %72 : vector<24x24xf32>
    %74 = arith.truncf %73 : vector<24x24xf32> to vector<24x24xbf16>
    %75 = arith.truncf %57 : vector<24x16xf32> to vector<24x16xbf16>
    %cst_39 = arith.constant dense<0.000000e+00> : vector<24x16xf32>
    %76 = tpu.matmul %74, %75, %cst_39 {dimension_numbers = #tpu.dot_dimension_numbers<[1], [0], [0], [1], [0, 0, 1, 1], [], []>} : vector<24x24xbf16>, vector<24x16xbf16>, vector<24x16xf32> -> vector<24x16xf32>
    %77 = arith.truncf %76 : vector<24x16xf32> to vector<24x16xbf16>
    %c0_40 = arith.constant 0 : index
    %c0_41 = arith.constant 0 : index
    %c0_42 = arith.constant 0 : index
    %78 = vector.load %arg7[%c0_40, %c0_41, %c0_42] : memref<4x16x64xbf16, #tpu.memory_space<vmem>>, vector<1x16x64xbf16>
    %79 = vector.shape_cast %78 : vector<1x16x64xbf16> to vector<16x64xbf16>
    %cst_43 = arith.constant dense<0.000000e+00> : vector<24x64xf32>
    %80 = tpu.matmul %77, %79, %cst_43 {dimension_numbers = #tpu.dot_dimension_numbers<[1], [0], [0], [1], [0, 0, 1, 1], [], []>} : vector<24x16xbf16>, vector<16x64xbf16>, vector<24x64xf32> -> vector<24x64xf32>
    %81 = arith.addf %36, %80 : vector<24x64xf32>
    %c1 = arith.constant 1 : index
    %c0_44 = arith.constant 0 : index
    %c0_45 = arith.constant 0 : index
    %82 = vector.load %arg5[%c1, %c0_44, %c0_45] : memref<12x64x16xbf16, #tpu.memory_space<vmem>>, vector<1x64x16xbf16>
    %83 = vector.shape_cast %82 : vector<1x64x16xbf16> to vector<64x16xbf16>
    %cst_46 = arith.constant dense<0.000000e+00> : vector<24x16xf32>
    %84 = tpu.matmul %29, %83, %cst_46 {dimension_numbers = #tpu.dot_dimension_numbers<[1], [0], [0], [1], [0, 0, 1, 1], [], []>} : vector<24x64xbf16>, vector<64x16xbf16>, vector<24x16xf32> -> vector<24x16xf32>
    %c1_47 = arith.constant 1 : index
    %c0_48 = arith.constant 0 : index
    %c0_49 = arith.constant 0 : index
    %85 = vector.load %arg6[%c1_47, %c0_48, %c0_49] : memref<12x1x16xf32, #tpu.memory_space<vmem>>, vector<1x1x16xf32>
    %86 = vector.shape_cast %85 : vector<1x1x16xf32> to vector<1x16xf32>
    %87 = vector.broadcast %86 : vector<1x16xf32> to vector<24x16xf32>
    %88 = arith.addf %84, %87 : vector<24x16xf32>
    %c5 = arith.constant 5 : index
    %c0_50 = arith.constant 0 : index
    %c0_51 = arith.constant 0 : index
    %89 = vector.load %arg5[%c5, %c0_50, %c0_51] : memref<12x64x16xbf16, #tpu.memory_space<vmem>>, vector<1x64x16xbf16>
    %90 = vector.shape_cast %89 : vector<1x64x16xbf16> to vector<64x16xbf16>
    %cst_52 = arith.constant dense<0.000000e+00> : vector<24x16xf32>
    %91 = tpu.matmul %29, %90, %cst_52 {dimension_numbers = #tpu.dot_dimension_numbers<[1], [0], [0], [1], [0, 0, 1, 1], [], []>} : vector<24x64xbf16>, vector<64x16xbf16>, vector<24x16xf32> -> vector<24x16xf32>
    %c5_53 = arith.constant 5 : index
    %c0_54 = arith.constant 0 : index
    %c0_55 = arith.constant 0 : index
    %92 = vector.load %arg6[%c5_53, %c0_54, %c0_55] : memref<12x1x16xf32, #tpu.memory_space<vmem>>, vector<1x1x16xf32>
    %93 = vector.shape_cast %92 : vector<1x1x16xf32> to vector<1x16xf32>
    %94 = vector.broadcast %93 : vector<1x16xf32> to vector<24x16xf32>
    %95 = arith.addf %91, %94 : vector<24x16xf32>
    %c9 = arith.constant 9 : index
    %c0_56 = arith.constant 0 : index
    %c0_57 = arith.constant 0 : index
    %96 = vector.load %arg5[%c9, %c0_56, %c0_57] : memref<12x64x16xbf16, #tpu.memory_space<vmem>>, vector<1x64x16xbf16>
    %97 = vector.shape_cast %96 : vector<1x64x16xbf16> to vector<64x16xbf16>
    %cst_58 = arith.constant dense<0.000000e+00> : vector<24x16xf32>
    %98 = tpu.matmul %29, %97, %cst_58 {dimension_numbers = #tpu.dot_dimension_numbers<[1], [0], [0], [1], [0, 0, 1, 1], [], []>} : vector<24x64xbf16>, vector<64x16xbf16>, vector<24x16xf32> -> vector<24x16xf32>
    %c9_59 = arith.constant 9 : index
    %c0_60 = arith.constant 0 : index
    %c0_61 = arith.constant 0 : index
    %99 = vector.load %arg6[%c9_59, %c0_60, %c0_61] : memref<12x1x16xf32, #tpu.memory_space<vmem>>, vector<1x1x16xf32>
    %100 = vector.shape_cast %99 : vector<1x1x16xf32> to vector<1x16xf32>
    %101 = vector.broadcast %100 : vector<1x16xf32> to vector<24x16xf32>
    %102 = arith.addf %98, %101 : vector<24x16xf32>
    %103 = arith.truncf %88 : vector<24x16xf32> to vector<24x16xbf16>
    %104 = arith.truncf %95 : vector<24x16xf32> to vector<24x16xbf16>
    %cst_62 = arith.constant dense<0.000000e+00> : vector<24x24xf32>
    %105 = tpu.matmul %103, %104, %cst_62 {dimension_numbers = #tpu.dot_dimension_numbers<[1], [1], [0], [0], [0, 0, 1, 0], [], []>} : vector<24x16xbf16>, vector<24x16xbf16>, vector<24x24xf32> -> vector<24x24xf32>
    %cst_63 = arith.constant 2.500000e-01 : f32
    %106 = vector.broadcast %cst_63 : f32 to vector<24x24xf32>
    %107 = arith.mulf %105, %106 : vector<24x24xf32>
    %108 = arith.addf %107, %35 : vector<24x24xf32>
    %cst_64 = arith.constant dense<0xFF800000> : vector<24xf32>
    %109 = vector.multi_reduction <maximumf>, %108, %cst_64 [1] : vector<24x24xf32> to vector<24xf32>
    %110 = vector.shape_cast %109 : vector<24xf32> to vector<24x1xf32>
    %111 = vector.broadcast %110 : vector<24x1xf32> to vector<24x24xf32>
    %112 = arith.subf %108, %111 : vector<24x24xf32>
    %113 = math.exp %112 : vector<24x24xf32>
    %cst_65 = arith.constant dense<0.000000e+00> : vector<24xf32>
    %114 = vector.multi_reduction <add>, %113, %cst_65 [1] : vector<24x24xf32> to vector<24xf32>
    %115 = vector.shape_cast %114 : vector<24xf32> to vector<24x1xf32>
    %116 = tpu.reciprocal %115 {approx = true} : vector<24x1xf32> -> vector<24x1xf32>
    %117 = vector.broadcast %116 : vector<24x1xf32> to vector<24x24xf32>
    %118 = arith.mulf %113, %117 : vector<24x24xf32>
    %119 = arith.truncf %118 : vector<24x24xf32> to vector<24x24xbf16>
    %120 = arith.truncf %102 : vector<24x16xf32> to vector<24x16xbf16>
    %cst_66 = arith.constant dense<0.000000e+00> : vector<24x16xf32>
    %121 = tpu.matmul %119, %120, %cst_66 {dimension_numbers = #tpu.dot_dimension_numbers<[1], [0], [0], [1], [0, 0, 1, 1], [], []>} : vector<24x24xbf16>, vector<24x16xbf16>, vector<24x16xf32> -> vector<24x16xf32>
    %122 = arith.truncf %121 : vector<24x16xf32> to vector<24x16xbf16>
    %c1_67 = arith.constant 1 : index
    %c0_68 = arith.constant 0 : index
    %c0_69 = arith.constant 0 : index
    %123 = vector.load %arg7[%c1_67, %c0_68, %c0_69] : memref<4x16x64xbf16, #tpu.memory_space<vmem>>, vector<1x16x64xbf16>
    %124 = vector.shape_cast %123 : vector<1x16x64xbf16> to vector<16x64xbf16>
    %cst_70 = arith.constant dense<0.000000e+00> : vector<24x64xf32>
    %125 = tpu.matmul %122, %124, %cst_70 {dimension_numbers = #tpu.dot_dimension_numbers<[1], [0], [0], [1], [0, 0, 1, 1], [], []>} : vector<24x16xbf16>, vector<16x64xbf16>, vector<24x64xf32> -> vector<24x64xf32>
    %126 = arith.addf %81, %125 : vector<24x64xf32>
    %c2 = arith.constant 2 : index
    %c0_71 = arith.constant 0 : index
    %c0_72 = arith.constant 0 : index
    %127 = vector.load %arg5[%c2, %c0_71, %c0_72] : memref<12x64x16xbf16, #tpu.memory_space<vmem>>, vector<1x64x16xbf16>
    %128 = vector.shape_cast %127 : vector<1x64x16xbf16> to vector<64x16xbf16>
    %cst_73 = arith.constant dense<0.000000e+00> : vector<24x16xf32>
    %129 = tpu.matmul %29, %128, %cst_73 {dimension_numbers = #tpu.dot_dimension_numbers<[1], [0], [0], [1], [0, 0, 1, 1], [], []>} : vector<24x64xbf16>, vector<64x16xbf16>, vector<24x16xf32> -> vector<24x16xf32>
    %c2_74 = arith.constant 2 : index
    %c0_75 = arith.constant 0 : index
    %c0_76 = arith.constant 0 : index
    %130 = vector.load %arg6[%c2_74, %c0_75, %c0_76] : memref<12x1x16xf32, #tpu.memory_space<vmem>>, vector<1x1x16xf32>
    %131 = vector.shape_cast %130 : vector<1x1x16xf32> to vector<1x16xf32>
    %132 = vector.broadcast %131 : vector<1x16xf32> to vector<24x16xf32>
    %133 = arith.addf %129, %132 : vector<24x16xf32>
    %c6 = arith.constant 6 : index
    %c0_77 = arith.constant 0 : index
    %c0_78 = arith.constant 0 : index
    %134 = vector.load %arg5[%c6, %c0_77, %c0_78] : memref<12x64x16xbf16, #tpu.memory_space<vmem>>, vector<1x64x16xbf16>
    %135 = vector.shape_cast %134 : vector<1x64x16xbf16> to vector<64x16xbf16>
    %cst_79 = arith.constant dense<0.000000e+00> : vector<24x16xf32>
    %136 = tpu.matmul %29, %135, %cst_79 {dimension_numbers = #tpu.dot_dimension_numbers<[1], [0], [0], [1], [0, 0, 1, 1], [], []>} : vector<24x64xbf16>, vector<64x16xbf16>, vector<24x16xf32> -> vector<24x16xf32>
    %c6_80 = arith.constant 6 : index
    %c0_81 = arith.constant 0 : index
    %c0_82 = arith.constant 0 : index
    %137 = vector.load %arg6[%c6_80, %c0_81, %c0_82] : memref<12x1x16xf32, #tpu.memory_space<vmem>>, vector<1x1x16xf32>
    %138 = vector.shape_cast %137 : vector<1x1x16xf32> to vector<1x16xf32>
    %139 = vector.broadcast %138 : vector<1x16xf32> to vector<24x16xf32>
    %140 = arith.addf %136, %139 : vector<24x16xf32>
    %c10 = arith.constant 10 : index
    %c0_83 = arith.constant 0 : index
    %c0_84 = arith.constant 0 : index
    %141 = vector.load %arg5[%c10, %c0_83, %c0_84] : memref<12x64x16xbf16, #tpu.memory_space<vmem>>, vector<1x64x16xbf16>
    %142 = vector.shape_cast %141 : vector<1x64x16xbf16> to vector<64x16xbf16>
    %cst_85 = arith.constant dense<0.000000e+00> : vector<24x16xf32>
    %143 = tpu.matmul %29, %142, %cst_85 {dimension_numbers = #tpu.dot_dimension_numbers<[1], [0], [0], [1], [0, 0, 1, 1], [], []>} : vector<24x64xbf16>, vector<64x16xbf16>, vector<24x16xf32> -> vector<24x16xf32>
    %c10_86 = arith.constant 10 : index
    %c0_87 = arith.constant 0 : index
    %c0_88 = arith.constant 0 : index
    %144 = vector.load %arg6[%c10_86, %c0_87, %c0_88] : memref<12x1x16xf32, #tpu.memory_space<vmem>>, vector<1x1x16xf32>
    %145 = vector.shape_cast %144 : vector<1x1x16xf32> to vector<1x16xf32>
    %146 = vector.broadcast %145 : vector<1x16xf32> to vector<24x16xf32>
    %147 = arith.addf %143, %146 : vector<24x16xf32>
    %148 = arith.truncf %133 : vector<24x16xf32> to vector<24x16xbf16>
    %149 = arith.truncf %140 : vector<24x16xf32> to vector<24x16xbf16>
    %cst_89 = arith.constant dense<0.000000e+00> : vector<24x24xf32>
    %150 = tpu.matmul %148, %149, %cst_89 {dimension_numbers = #tpu.dot_dimension_numbers<[1], [1], [0], [0], [0, 0, 1, 0], [], []>} : vector<24x16xbf16>, vector<24x16xbf16>, vector<24x24xf32> -> vector<24x24xf32>
    %cst_90 = arith.constant 2.500000e-01 : f32
    %151 = vector.broadcast %cst_90 : f32 to vector<24x24xf32>
    %152 = arith.mulf %150, %151 : vector<24x24xf32>
    %153 = arith.addf %152, %35 : vector<24x24xf32>
    %cst_91 = arith.constant dense<0xFF800000> : vector<24xf32>
    %154 = vector.multi_reduction <maximumf>, %153, %cst_91 [1] : vector<24x24xf32> to vector<24xf32>
    %155 = vector.shape_cast %154 : vector<24xf32> to vector<24x1xf32>
    %156 = vector.broadcast %155 : vector<24x1xf32> to vector<24x24xf32>
    %157 = arith.subf %153, %156 : vector<24x24xf32>
    %158 = math.exp %157 : vector<24x24xf32>
    %cst_92 = arith.constant dense<0.000000e+00> : vector<24xf32>
    %159 = vector.multi_reduction <add>, %158, %cst_92 [1] : vector<24x24xf32> to vector<24xf32>
    %160 = vector.shape_cast %159 : vector<24xf32> to vector<24x1xf32>
    %161 = tpu.reciprocal %160 {approx = true} : vector<24x1xf32> -> vector<24x1xf32>
    %162 = vector.broadcast %161 : vector<24x1xf32> to vector<24x24xf32>
    %163 = arith.mulf %158, %162 : vector<24x24xf32>
    %164 = arith.truncf %163 : vector<24x24xf32> to vector<24x24xbf16>
    %165 = arith.truncf %147 : vector<24x16xf32> to vector<24x16xbf16>
    %cst_93 = arith.constant dense<0.000000e+00> : vector<24x16xf32>
    %166 = tpu.matmul %164, %165, %cst_93 {dimension_numbers = #tpu.dot_dimension_numbers<[1], [0], [0], [1], [0, 0, 1, 1], [], []>} : vector<24x24xbf16>, vector<24x16xbf16>, vector<24x16xf32> -> vector<24x16xf32>
    %167 = arith.truncf %166 : vector<24x16xf32> to vector<24x16xbf16>
    %c2_94 = arith.constant 2 : index
    %c0_95 = arith.constant 0 : index
    %c0_96 = arith.constant 0 : index
    %168 = vector.load %arg7[%c2_94, %c0_95, %c0_96] : memref<4x16x64xbf16, #tpu.memory_space<vmem>>, vector<1x16x64xbf16>
    %169 = vector.shape_cast %168 : vector<1x16x64xbf16> to vector<16x64xbf16>
    %cst_97 = arith.constant dense<0.000000e+00> : vector<24x64xf32>
    %170 = tpu.matmul %167, %169, %cst_97 {dimension_numbers = #tpu.dot_dimension_numbers<[1], [0], [0], [1], [0, 0, 1, 1], [], []>} : vector<24x16xbf16>, vector<16x64xbf16>, vector<24x64xf32> -> vector<24x64xf32>
    %171 = arith.addf %126, %170 : vector<24x64xf32>
    %c3 = arith.constant 3 : index
    %c0_98 = arith.constant 0 : index
    %c0_99 = arith.constant 0 : index
    %172 = vector.load %arg5[%c3, %c0_98, %c0_99] : memref<12x64x16xbf16, #tpu.memory_space<vmem>>, vector<1x64x16xbf16>
    %173 = vector.shape_cast %172 : vector<1x64x16xbf16> to vector<64x16xbf16>
    %cst_100 = arith.constant dense<0.000000e+00> : vector<24x16xf32>
    %174 = tpu.matmul %29, %173, %cst_100 {dimension_numbers = #tpu.dot_dimension_numbers<[1], [0], [0], [1], [0, 0, 1, 1], [], []>} : vector<24x64xbf16>, vector<64x16xbf16>, vector<24x16xf32> -> vector<24x16xf32>
    %c3_101 = arith.constant 3 : index
    %c0_102 = arith.constant 0 : index
    %c0_103 = arith.constant 0 : index
    %175 = vector.load %arg6[%c3_101, %c0_102, %c0_103] : memref<12x1x16xf32, #tpu.memory_space<vmem>>, vector<1x1x16xf32>
    %176 = vector.shape_cast %175 : vector<1x1x16xf32> to vector<1x16xf32>
    %177 = vector.broadcast %176 : vector<1x16xf32> to vector<24x16xf32>
    %178 = arith.addf %174, %177 : vector<24x16xf32>
    %c7 = arith.constant 7 : index
    %c0_104 = arith.constant 0 : index
    %c0_105 = arith.constant 0 : index
    %179 = vector.load %arg5[%c7, %c0_104, %c0_105] : memref<12x64x16xbf16, #tpu.memory_space<vmem>>, vector<1x64x16xbf16>
    %180 = vector.shape_cast %179 : vector<1x64x16xbf16> to vector<64x16xbf16>
    %cst_106 = arith.constant dense<0.000000e+00> : vector<24x16xf32>
    %181 = tpu.matmul %29, %180, %cst_106 {dimension_numbers = #tpu.dot_dimension_numbers<[1], [0], [0], [1], [0, 0, 1, 1], [], []>} : vector<24x64xbf16>, vector<64x16xbf16>, vector<24x16xf32> -> vector<24x16xf32>
    %c7_107 = arith.constant 7 : index
    %c0_108 = arith.constant 0 : index
    %c0_109 = arith.constant 0 : index
    %182 = vector.load %arg6[%c7_107, %c0_108, %c0_109] : memref<12x1x16xf32, #tpu.memory_space<vmem>>, vector<1x1x16xf32>
    %183 = vector.shape_cast %182 : vector<1x1x16xf32> to vector<1x16xf32>
    %184 = vector.broadcast %183 : vector<1x16xf32> to vector<24x16xf32>
    %185 = arith.addf %181, %184 : vector<24x16xf32>
    %c11 = arith.constant 11 : index
    %c0_110 = arith.constant 0 : index
    %c0_111 = arith.constant 0 : index
    %186 = vector.load %arg5[%c11, %c0_110, %c0_111] : memref<12x64x16xbf16, #tpu.memory_space<vmem>>, vector<1x64x16xbf16>
    %187 = vector.shape_cast %186 : vector<1x64x16xbf16> to vector<64x16xbf16>
    %cst_112 = arith.constant dense<0.000000e+00> : vector<24x16xf32>
    %188 = tpu.matmul %29, %187, %cst_112 {dimension_numbers = #tpu.dot_dimension_numbers<[1], [0], [0], [1], [0, 0, 1, 1], [], []>} : vector<24x64xbf16>, vector<64x16xbf16>, vector<24x16xf32> -> vector<24x16xf32>
    %c11_113 = arith.constant 11 : index
    %c0_114 = arith.constant 0 : index
    %c0_115 = arith.constant 0 : index
    %189 = vector.load %arg6[%c11_113, %c0_114, %c0_115] : memref<12x1x16xf32, #tpu.memory_space<vmem>>, vector<1x1x16xf32>
    %190 = vector.shape_cast %189 : vector<1x1x16xf32> to vector<1x16xf32>
    %191 = vector.broadcast %190 : vector<1x16xf32> to vector<24x16xf32>
    %192 = arith.addf %188, %191 : vector<24x16xf32>
    %193 = arith.truncf %178 : vector<24x16xf32> to vector<24x16xbf16>
    %194 = arith.truncf %185 : vector<24x16xf32> to vector<24x16xbf16>
    %cst_116 = arith.constant dense<0.000000e+00> : vector<24x24xf32>
    %195 = tpu.matmul %193, %194, %cst_116 {dimension_numbers = #tpu.dot_dimension_numbers<[1], [1], [0], [0], [0, 0, 1, 0], [], []>} : vector<24x16xbf16>, vector<24x16xbf16>, vector<24x24xf32> -> vector<24x24xf32>
    %cst_117 = arith.constant 2.500000e-01 : f32
    %196 = vector.broadcast %cst_117 : f32 to vector<24x24xf32>
    %197 = arith.mulf %195, %196 : vector<24x24xf32>
    %198 = arith.addf %197, %35 : vector<24x24xf32>
    %cst_118 = arith.constant dense<0xFF800000> : vector<24xf32>
    %199 = vector.multi_reduction <maximumf>, %198, %cst_118 [1] : vector<24x24xf32> to vector<24xf32>
    %200 = vector.shape_cast %199 : vector<24xf32> to vector<24x1xf32>
    %201 = vector.broadcast %200 : vector<24x1xf32> to vector<24x24xf32>
    %202 = arith.subf %198, %201 : vector<24x24xf32>
    %203 = math.exp %202 : vector<24x24xf32>
    %cst_119 = arith.constant dense<0.000000e+00> : vector<24xf32>
    %204 = vector.multi_reduction <add>, %203, %cst_119 [1] : vector<24x24xf32> to vector<24xf32>
    %205 = vector.shape_cast %204 : vector<24xf32> to vector<24x1xf32>
    %206 = tpu.reciprocal %205 {approx = true} : vector<24x1xf32> -> vector<24x1xf32>
    %207 = vector.broadcast %206 : vector<24x1xf32> to vector<24x24xf32>
    %208 = arith.mulf %203, %207 : vector<24x24xf32>
    %209 = arith.truncf %208 : vector<24x24xf32> to vector<24x24xbf16>
    %210 = arith.truncf %192 : vector<24x16xf32> to vector<24x16xbf16>
    %cst_120 = arith.constant dense<0.000000e+00> : vector<24x16xf32>
    %211 = tpu.matmul %209, %210, %cst_120 {dimension_numbers = #tpu.dot_dimension_numbers<[1], [0], [0], [1], [0, 0, 1, 1], [], []>} : vector<24x24xbf16>, vector<24x16xbf16>, vector<24x16xf32> -> vector<24x16xf32>
    %212 = arith.truncf %211 : vector<24x16xf32> to vector<24x16xbf16>
    %c3_121 = arith.constant 3 : index
    %c0_122 = arith.constant 0 : index
    %c0_123 = arith.constant 0 : index
    %213 = vector.load %arg7[%c3_121, %c0_122, %c0_123] : memref<4x16x64xbf16, #tpu.memory_space<vmem>>, vector<1x16x64xbf16>
    %214 = vector.shape_cast %213 : vector<1x16x64xbf16> to vector<16x64xbf16>
    %cst_124 = arith.constant dense<0.000000e+00> : vector<24x64xf32>
    %215 = tpu.matmul %212, %214, %cst_124 {dimension_numbers = #tpu.dot_dimension_numbers<[1], [0], [0], [1], [0, 0, 1, 1], [], []>} : vector<24x16xbf16>, vector<16x64xbf16>, vector<24x64xf32> -> vector<24x64xf32>
    %216 = arith.addf %171, %215 : vector<24x64xf32>
    %217 = arith.addf %4, %216 : vector<24x64xf32>
    %c0_125 = arith.constant 0 : index
    %c0_126 = arith.constant 0 : index
    %218 = vector.load %arg8[%c0_125, %c0_126] : memref<1x64xf32, #tpu.memory_space<vmem>>, vector<1x64xf32>
    %219 = vector.broadcast %218 : vector<1x64xf32> to vector<24x64xf32>
    %220 = arith.addf %217, %219 : vector<24x64xf32>
    %c0_127 = arith.constant 0 : index
    %c0_128 = arith.constant 0 : index
    %221 = vector.load %arg9[%c0_127, %c0_128] : memref<1x64xf32, #tpu.memory_space<vmem>>, vector<1x64xf32>
    %c0_129 = arith.constant 0 : index
    %c0_130 = arith.constant 0 : index
    %222 = vector.load %arg10[%c0_129, %c0_130] : memref<1x64xf32, #tpu.memory_space<vmem>>, vector<1x64xf32>
    %cst_131 = arith.constant dense<0.000000e+00> : vector<24xf32>
    %223 = vector.multi_reduction <add>, %220, %cst_131 [1] : vector<24x64xf32> to vector<24xf32>
    %224 = vector.shape_cast %223 : vector<24xf32> to vector<24x1xf32>
    %cst_132 = arith.constant 6.400000e+01 : f32
    %225 = vector.broadcast %cst_132 : f32 to vector<24x1xf32>
    %226 = arith.divf %224, %225 : vector<24x1xf32>
    %227 = vector.broadcast %226 : vector<24x1xf32> to vector<24x64xf32>
    %228 = arith.subf %220, %227 : vector<24x64xf32>
    %229 = arith.mulf %228, %228 : vector<24x64xf32>
    %cst_133 = arith.constant dense<0.000000e+00> : vector<24xf32>
    %230 = vector.multi_reduction <add>, %229, %cst_133 [1] : vector<24x64xf32> to vector<24xf32>
    %231 = vector.shape_cast %230 : vector<24xf32> to vector<24x1xf32>
    %cst_134 = arith.constant 6.400000e+01 : f32
    %232 = vector.broadcast %cst_134 : f32 to vector<24x1xf32>
    %233 = arith.divf %231, %232 : vector<24x1xf32>
    %234 = vector.broadcast %226 : vector<24x1xf32> to vector<24x64xf32>
    %235 = arith.subf %220, %234 : vector<24x64xf32>
    %cst_135 = arith.constant 9.99999997E-7 : f32
    %236 = vector.broadcast %cst_135 : f32 to vector<24x1xf32>
    %237 = arith.addf %233, %236 : vector<24x1xf32>
    %238 = math.rsqrt %237 : vector<24x1xf32>
    %239 = vector.broadcast %238 : vector<24x1xf32> to vector<24x64xf32>
    %240 = arith.mulf %235, %239 : vector<24x64xf32>
    %241 = vector.broadcast %221 : vector<1x64xf32> to vector<24x64xf32>
    %242 = arith.mulf %240, %241 : vector<24x64xf32>
    %243 = vector.broadcast %222 : vector<1x64xf32> to vector<24x64xf32>
    %244 = arith.addf %242, %243 : vector<24x64xf32>
    %245 = arith.truncf %244 : vector<24x64xf32> to vector<24x64xbf16>
    %c0_136 = arith.constant 0 : index
    %c0_137 = arith.constant 0 : index
    %246 = vector.load %arg11[%c0_136, %c0_137] : memref<64x256xbf16, #tpu.memory_space<vmem>>, vector<64x256xbf16>
    %cst_138 = arith.constant dense<0.000000e+00> : vector<24x256xf32>
    %247 = tpu.matmul %245, %246, %cst_138 {dimension_numbers = #tpu.dot_dimension_numbers<[1], [0], [0], [1], [0, 0, 1, 1], [], []>} : vector<24x64xbf16>, vector<64x256xbf16>, vector<24x256xf32> -> vector<24x256xf32>
    %c0_139 = arith.constant 0 : index
    %c0_140 = arith.constant 0 : index
    %248 = vector.load %arg12[%c0_139, %c0_140] : memref<1x256xf32, #tpu.memory_space<vmem>>, vector<1x256xf32>
    %249 = vector.broadcast %248 : vector<1x256xf32> to vector<24x256xf32>
    %250 = arith.addf %247, %249 : vector<24x256xf32>
    %251 = arith.mulf %250, %250 : vector<24x256xf32>
    %252 = arith.mulf %250, %251 : vector<24x256xf32>
    %cst_141 = arith.constant 4.471500e-02 : f32
    %253 = vector.broadcast %cst_141 : f32 to vector<24x256xf32>
    %254 = arith.mulf %253, %252 : vector<24x256xf32>
    %255 = arith.addf %250, %254 : vector<24x256xf32>
    %cst_142 = arith.constant 0.797884583 : f32
    %256 = vector.broadcast %cst_142 : f32 to vector<24x256xf32>
    %257 = arith.mulf %256, %255 : vector<24x256xf32>
    %258 = math.tanh %257 : vector<24x256xf32>
    %cst_143 = arith.constant 1.000000e+00 : f32
    %259 = vector.broadcast %cst_143 : f32 to vector<24x256xf32>
    %260 = arith.addf %259, %258 : vector<24x256xf32>
    %cst_144 = arith.constant 5.000000e-01 : f32
    %261 = vector.broadcast %cst_144 : f32 to vector<24x256xf32>
    %262 = arith.mulf %261, %260 : vector<24x256xf32>
    %263 = arith.mulf %250, %262 : vector<24x256xf32>
    %264 = arith.truncf %263 : vector<24x256xf32> to vector<24x256xbf16>
    %c0_145 = arith.constant 0 : index
    %c0_146 = arith.constant 0 : index
    %265 = vector.load %arg13[%c0_145, %c0_146] : memref<256x64xbf16, #tpu.memory_space<vmem>>, vector<256x64xbf16>
    %cst_147 = arith.constant dense<0.000000e+00> : vector<24x64xf32>
    %266 = tpu.matmul %264, %265, %cst_147 {dimension_numbers = #tpu.dot_dimension_numbers<[1], [0], [0], [1], [0, 0, 1, 1], [], []>} : vector<24x256xbf16>, vector<256x64xbf16>, vector<24x64xf32> -> vector<24x64xf32>
    %267 = arith.addf %220, %266 : vector<24x64xf32>
    %c0_148 = arith.constant 0 : index
    %c0_149 = arith.constant 0 : index
    %268 = vector.load %arg14[%c0_148, %c0_149] : memref<1x64xf32, #tpu.memory_space<vmem>>, vector<1x64xf32>
    %269 = vector.broadcast %268 : vector<1x64xf32> to vector<24x64xf32>
    %270 = arith.addf %267, %269 : vector<24x64xf32>
    %271 = vector.shape_cast %270 : vector<24x64xf32> to vector<1x24x64xf32>
    %c0_150 = arith.constant 0 : index
    %c0_151 = arith.constant 0 : index
    %c0_152 = arith.constant 0 : index
    %272 = vector.load %arg15[%c0_150, %c0_151, %c0_152] : memref<1x24x64xf32, #tpu.memory_space<vmem>>, vector<1x24x64xf32>
    tpu.vector_store %arg15[%c0_150, %c0_151, %c0_152], %271 {strides = array<i32>} : memref<1x24x64xf32, #tpu.memory_space<vmem>>, vector<1x24x64xf32>,
    return
  }
  func.func @transform_0(%arg0: i32) -> (i32, i32, i32) {
    %c0_i32 = arith.constant 0 : i32
    %c0_i32_0 = arith.constant 0 : i32
    %c0_i32_1 = arith.constant 0 : i32
    return %arg0, %c0_i32, %c0_i32_0 : i32, i32, i32
  }
  func.func @transform_1(%arg0: i32) -> (i32, i32, i32) {
    %c0_i32 = arith.constant 0 : i32
    %c0_i32_0 = arith.constant 0 : i32
    %c0_i32_1 = arith.constant 0 : i32
    return %arg0, %c0_i32, %c0_i32_0 : i32, i32, i32
  }
  func.func @transform_2(%arg0: i32) -> (i32, i32) {
    %c0_i32 = arith.constant 0 : i32
    %c0_i32_0 = arith.constant 0 : i32
    %c0_i32_1 = arith.constant 0 : i32
    return %c0_i32, %c0_i32_0 : i32, i32
  }
  func.func @transform_3(%arg0: i32) -> (i32, i32) {
    %c0_i32 = arith.constant 0 : i32
    %c0_i32_0 = arith.constant 0 : i32
    %c0_i32_1 = arith.constant 0 : i32
    return %c0_i32, %c0_i32_0 : i32, i32
  }
  func.func @transform_4(%arg0: i32) -> (i32, i32, i32) {
    %c0_i32 = arith.constant 0 : i32
    %c0_i32_0 = arith.constant 0 : i32
    %c0_i32_1 = arith.constant 0 : i32
    %c0_i32_2 = arith.constant 0 : i32
    return %c0_i32, %c0_i32_0, %c0_i32_1 : i32, i32, i32
  }
  func.func @transform_5(%arg0: i32) -> (i32, i32, i32) {
    %c0_i32 = arith.constant 0 : i32
    %c0_i32_0 = arith.constant 0 : i32
    %c0_i32_1 = arith.constant 0 : i32
    %c0_i32_2 = arith.constant 0 : i32
    return %c0_i32, %c0_i32_0, %c0_i32_1 : i32, i32, i32
  }
  func.func @transform_6(%arg0: i32) -> (i32, i32, i32) {
    %c0_i32 = arith.constant 0 : i32
    %c0_i32_0 = arith.constant 0 : i32
    %c0_i32_1 = arith.constant 0 : i32
    %c0_i32_2 = arith.constant 0 : i32
    return %c0_i32, %c0_i32_0, %c0_i32_1 : i32, i32, i32
  }
  func.func @transform_7(%arg0: i32) -> (i32, i32) {
    %c0_i32 = arith.constant 0 : i32
    %c0_i32_0 = arith.constant 0 : i32
    %c0_i32_1 = arith.constant 0 : i32
    return %c0_i32, %c0_i32_0 : i32, i32
  }
  func.func @transform_8(%arg0: i32) -> (i32, i32) {
    %c0_i32 = arith.constant 0 : i32
    %c0_i32_0 = arith.constant 0 : i32
    %c0_i32_1 = arith.constant 0 : i32
    return %c0_i32, %c0_i32_0 : i32, i32
  }
  func.func @transform_9(%arg0: i32) -> (i32, i32) {
    %c0_i32 = arith.constant 0 : i32
    %c0_i32_0 = arith.constant 0 : i32
    %c0_i32_1 = arith.constant 0 : i32
    return %c0_i32, %c0_i32_0 : i32, i32
  }
  func.func @transform_10(%arg0: i32) -> (i32, i32) {
    %c0_i32 = arith.constant 0 : i32
    %c0_i32_0 = arith.constant 0 : i32
    %c0_i32_1 = arith.constant 0 : i32
    return %c0_i32, %c0_i32_0 : i32, i32
  }
  func.func @transform_11(%arg0: i32) -> (i32, i32) {
    %c0_i32 = arith.constant 0 : i32
    %c0_i32_0 = arith.constant 0 : i32
    %c0_i32_1 = arith.constant 0 : i32
    return %c0_i32, %c0_i32_0 : i32, i32
  }
  func.func @transform_12(%arg0: i32) -> (i32, i32) {
    %c0_i32 = arith.constant 0 : i32
    %c0_i32_0 = arith.constant 0 : i32
    %c0_i32_1 = arith.constant 0 : i32
    return %c0_i32, %c0_i32_0 : i32, i32
  }
  func.func @transform_13(%arg0: i32) -> (i32, i32) {
    %c0_i32 = arith.constant 0 : i32
    %c0_i32_0 = arith.constant 0 : i32
    %c0_i32_1 = arith.constant 0 : i32
    return %c0_i32, %c0_i32_0 : i32, i32
  }
  func.func @transform_14(%arg0: i32) -> (i32, i32, i32) {
    %c0_i32 = arith.constant 0 : i32
    %c0_i32_0 = arith.constant 0 : i32
    %c0_i32_1 = arith.constant 0 : i32
    return %arg0, %c0_i32, %c0_i32_0 : i32, i32, i32
  }
}

module attributes {stable_mosaic.version = 11 : i64} {
  func.func @_head_kernel(%arg0: memref<2x24x64xf32, #tpu.memory_space<vmem>>, %arg1: memref<1x64xf32, #tpu.memory_space<vmem>>, %arg2: memref<1x64xf32, #tpu.memory_space<vmem>>, %arg3: memref<64x128xbf16, #tpu.memory_space<vmem>>, %arg4: memref<64x128xbf16, #tpu.memory_space<vmem>>, %arg5: memref<1x128xf32, #tpu.memory_space<vmem>>, %arg6: memref<128x128xbf16, #tpu.memory_space<vmem>>, %arg7: memref<1x128xf32, #tpu.memory_space<vmem>>, %arg8: memref<128x128xbf16, #tpu.memory_space<vmem>>, %arg9: memref<1x128xf32, #tpu.memory_space<vmem>>, %arg10: memref<2x128xf32, #tpu.memory_space<vmem>>) attributes {dimension_semantics = [], scalar_prefetch = 0 : i64, scratch_operands = 0 : i64, tpu.core_type = #tpu.core_type<tc>} {
    %c0 = arith.constant 0 : index
    %c0_0 = arith.constant 0 : index
    %c0_1 = arith.constant 0 : index
    %0 = vector.load %arg0[%c0, %c0_0, %c0_1] : memref<2x24x64xf32, #tpu.memory_space<vmem>>, vector<2x24x64xf32>
    %cst = arith.constant dense<0.000000e+00> : vector<2x24xf32>
    %1 = vector.multi_reduction <add>, %0, %cst [2] : vector<2x24x64xf32> to vector<2x24xf32>
    %2 = vector.shape_cast %1 : vector<2x24xf32> to vector<2x24x1xf32>
    %cst_2 = arith.constant 6.400000e+01 : f32
    %3 = vector.broadcast %cst_2 : f32 to vector<2x24x1xf32>
    %4 = arith.divf %2, %3 : vector<2x24x1xf32>
    %5 = vector.broadcast %4 : vector<2x24x1xf32> to vector<2x24x64xf32>
    %6 = arith.subf %0, %5 : vector<2x24x64xf32>
    %7 = arith.mulf %6, %6 : vector<2x24x64xf32>
    %cst_3 = arith.constant dense<0.000000e+00> : vector<2x24xf32>
    %8 = vector.multi_reduction <add>, %7, %cst_3 [2] : vector<2x24x64xf32> to vector<2x24xf32>
    %9 = vector.shape_cast %8 : vector<2x24xf32> to vector<2x24x1xf32>
    %cst_4 = arith.constant 6.400000e+01 : f32
    %10 = vector.broadcast %cst_4 : f32 to vector<2x24x1xf32>
    %11 = arith.divf %9, %10 : vector<2x24x1xf32>
    %12 = vector.broadcast %4 : vector<2x24x1xf32> to vector<2x24x64xf32>
    %13 = arith.subf %0, %12 : vector<2x24x64xf32>
    %cst_5 = arith.constant 9.99999997E-7 : f32
    %14 = vector.broadcast %cst_5 : f32 to vector<2x24x1xf32>
    %15 = arith.addf %11, %14 : vector<2x24x1xf32>
    %16 = math.rsqrt %15 : vector<2x24x1xf32>
    %17 = vector.broadcast %16 : vector<2x24x1xf32> to vector<2x24x64xf32>
    %18 = arith.mulf %13, %17 : vector<2x24x64xf32>
    %c0_6 = arith.constant 0 : index
    %c0_7 = arith.constant 0 : index
    %19 = vector.load %arg1[%c0_6, %c0_7] : memref<1x64xf32, #tpu.memory_space<vmem>>, vector<1x64xf32>
    %20 = vector.shape_cast %19 : vector<1x64xf32> to vector<1x1x64xf32>
    %21 = vector.broadcast %20 : vector<1x1x64xf32> to vector<2x24x64xf32>
    %22 = arith.mulf %18, %21 : vector<2x24x64xf32>
    %c0_8 = arith.constant 0 : index
    %c0_9 = arith.constant 0 : index
    %23 = vector.load %arg2[%c0_8, %c0_9] : memref<1x64xf32, #tpu.memory_space<vmem>>, vector<1x64xf32>
    %24 = vector.shape_cast %23 : vector<1x64xf32> to vector<1x1x64xf32>
    %25 = vector.broadcast %24 : vector<1x1x64xf32> to vector<2x24x64xf32>
    %26 = arith.addf %22, %25 : vector<2x24x64xf32>
    %27 = tpu.iota {dimensions = array<i32: 0>} : vector<24x64xi32>
    %c1_i32 = arith.constant 1 : i32
    %28 = vector.broadcast %c1_i32 : i32 to vector<24x64xi32>
    %29 = arith.cmpi sge, %27, %28 : vector<24x64xi32>
    %c17_i32 = arith.constant 17 : i32
    %30 = vector.broadcast %c17_i32 : i32 to vector<24x64xi32>
    %31 = arith.cmpi slt, %27, %30 : vector<24x64xi32>
    %32 = arith.andi %29, %31 : vector<24x64xi1>
    %33 = vector.shape_cast %32 : vector<24x64xi1> to vector<1x24x64xi1>
    %c0_i32 = arith.constant 0 : i32
    %34 = vector.broadcast %c0_i32 : i32 to vector<24x64xi32>
    %35 = arith.cmpi eq, %27, %34 : vector<24x64xi32>
    %36 = vector.shape_cast %35 : vector<24x64xi1> to vector<1x24x64xi1>
    %cst_10 = arith.constant -1.000000e+30 : f32
    %37 = vector.shape_cast %33 : vector<1x24x64xi1> to vector<1x24x64xi1>
    %38 = vector.broadcast %37 : vector<1x24x64xi1> to vector<2x24x64xi1>
    %39 = vector.broadcast %cst_10 : f32 to vector<2x24x64xf32>
    %40 = arith.select %38, %26, %39 : vector<2x24x64xi1>, vector<2x24x64xf32>
    %cst_11 = arith.constant dense<0xFF800000> : vector<2x64xf32>
    %41 = vector.multi_reduction <maximumf>, %40, %cst_11 [1] : vector<2x24x64xf32> to vector<2x64xf32>
    %cst_12 = arith.constant -1.000000e+30 : f32
    %42 = vector.shape_cast %36 : vector<1x24x64xi1> to vector<1x24x64xi1>
    %43 = vector.broadcast %42 : vector<1x24x64xi1> to vector<2x24x64xi1>
    %44 = vector.broadcast %cst_12 : f32 to vector<2x24x64xf32>
    %45 = arith.select %43, %26, %44 : vector<2x24x64xi1>, vector<2x24x64xf32>
    %cst_13 = arith.constant dense<0xFF800000> : vector<2x64xf32>
    %46 = vector.multi_reduction <maximumf>, %45, %cst_13 [1] : vector<2x24x64xf32> to vector<2x64xf32>
    %47 = arith.truncf %41 : vector<2x64xf32> to vector<2x64xbf16>
    %c0_14 = arith.constant 0 : index
    %c0_15 = arith.constant 0 : index
    %48 = vector.load %arg3[%c0_14, %c0_15] : memref<64x128xbf16, #tpu.memory_space<vmem>>, vector<64x128xbf16>
    %cst_16 = arith.constant dense<0.000000e+00> : vector<2x128xf32>
    %49 = tpu.matmul %47, %48, %cst_16 {dimension_numbers = #tpu.dot_dimension_numbers<[1], [0], [0], [1], [0, 0, 1, 1], [], []>} : vector<2x64xbf16>, vector<64x128xbf16>, vector<2x128xf32> -> vector<2x128xf32>
    %50 = arith.truncf %46 : vector<2x64xf32> to vector<2x64xbf16>
    %c0_17 = arith.constant 0 : index
    %c0_18 = arith.constant 0 : index
    %51 = vector.load %arg4[%c0_17, %c0_18] : memref<64x128xbf16, #tpu.memory_space<vmem>>, vector<64x128xbf16>
    %cst_19 = arith.constant dense<0.000000e+00> : vector<2x128xf32>
    %52 = tpu.matmul %50, %51, %cst_19 {dimension_numbers = #tpu.dot_dimension_numbers<[1], [0], [0], [1], [0, 0, 1, 1], [], []>} : vector<2x64xbf16>, vector<64x128xbf16>, vector<2x128xf32> -> vector<2x128xf32>
    %53 = arith.addf %49, %52 : vector<2x128xf32>
    %c0_20 = arith.constant 0 : index
    %c0_21 = arith.constant 0 : index
    %54 = vector.load %arg5[%c0_20, %c0_21] : memref<1x128xf32, #tpu.memory_space<vmem>>, vector<1x128xf32>
    %55 = vector.broadcast %54 : vector<1x128xf32> to vector<2x128xf32>
    %56 = arith.addf %53, %55 : vector<2x128xf32>
    %cst_22 = arith.constant 0.000000e+00 : f32
    %57 = vector.broadcast %cst_22 : f32 to vector<2x128xf32>
    %58 = arith.maximumf %56, %57 : vector<2x128xf32>
    %59 = arith.truncf %58 : vector<2x128xf32> to vector<2x128xbf16>
    %c0_23 = arith.constant 0 : index
    %c0_24 = arith.constant 0 : index
    %60 = vector.load %arg6[%c0_23, %c0_24] : memref<128x128xbf16, #tpu.memory_space<vmem>>, vector<128x128xbf16>
    %cst_25 = arith.constant dense<0.000000e+00> : vector<2x128xf32>
    %61 = tpu.matmul %59, %60, %cst_25 {dimension_numbers = #tpu.dot_dimension_numbers<[1], [0], [0], [1], [0, 0, 1, 1], [], []>} : vector<2x128xbf16>, vector<128x128xbf16>, vector<2x128xf32> -> vector<2x128xf32>
    %c0_26 = arith.constant 0 : index
    %c0_27 = arith.constant 0 : index
    %62 = vector.load %arg7[%c0_26, %c0_27] : memref<1x128xf32, #tpu.memory_space<vmem>>, vector<1x128xf32>
    %63 = vector.broadcast %62 : vector<1x128xf32> to vector<2x128xf32>
    %64 = arith.addf %61, %63 : vector<2x128xf32>
    %cst_28 = arith.constant 0.000000e+00 : f32
    %65 = vector.broadcast %cst_28 : f32 to vector<2x128xf32>
    %66 = arith.maximumf %64, %65 : vector<2x128xf32>
    %67 = arith.truncf %66 : vector<2x128xf32> to vector<2x128xbf16>
    %c0_29 = arith.constant 0 : index
    %c0_30 = arith.constant 0 : index
    %68 = vector.load %arg8[%c0_29, %c0_30] : memref<128x128xbf16, #tpu.memory_space<vmem>>, vector<128x128xbf16>
    %cst_31 = arith.constant dense<0.000000e+00> : vector<2x128xf32>
    %69 = tpu.matmul %67, %68, %cst_31 {dimension_numbers = #tpu.dot_dimension_numbers<[1], [0], [0], [1], [0, 0, 1, 1], [], []>} : vector<2x128xbf16>, vector<128x128xbf16>, vector<2x128xf32> -> vector<2x128xf32>
    %c0_32 = arith.constant 0 : index
    %c0_33 = arith.constant 0 : index
    %70 = vector.load %arg9[%c0_32, %c0_33] : memref<1x128xf32, #tpu.memory_space<vmem>>, vector<1x128xf32>
    %71 = vector.broadcast %70 : vector<1x128xf32> to vector<2x128xf32>
    %72 = arith.addf %69, %71 : vector<2x128xf32>
    %c0_34 = arith.constant 0 : index
    %c0_35 = arith.constant 0 : index
    %73 = vector.load %arg10[%c0_34, %c0_35] : memref<2x128xf32, #tpu.memory_space<vmem>>, vector<2x128xf32>
    tpu.vector_store %arg10[%c0_34, %c0_35], %72 {strides = array<i32>} : memref<2x128xf32, #tpu.memory_space<vmem>>, vector<2x128xf32>,
    return
  }
}

</mosaic_0001>

<llo_original>
// kernel: custom-call.6
$region0: #{custom-call.6}
  %s0 = inlined_call_operand.vmem [shape: f32[2,64], index: 0, kind: output, shape index: {}]

// kernel: neg.1
$region0: #{neg.1}
  #allocation0 [shape = 's32[1]{0}', space=sflag, size = 0x4, scoped, tag = 'scoped memory for neg.1']
  %s0 = inlined_call_operand.vmem [shape: f32[2,16,64], index: 0, kind: input, shape index: {}]
  %s1 = inlined_call_operand.vmem [shape: f32[2,16,64], index: 1, kind: output, shape index: {}]
  %v2 = vld [vmem:[%s0] sm:$0xff]
  %3 = xla_tuple %v2
  %4 = xla_tuple %3
  %v5 = vxor.u32 %v2, 2147483648
  %6 = xla_tuple %v5
  %7 = vst [vmem:[%s1] sm:$0xff] %v5
  %s8 = scalar_lea.vmem %s0, 16
  %v9 = vld [vmem:[%s8] sm:$0xff]
  %10 = xla_tuple %v9
  %11 = xla_tuple %10
  %v12 = vxor.u32 %v9, 2147483648
  %13 = xla_tuple %v12
  %s14 = scalar_lea.vmem %s1, 16
  %15 = vst [vmem:[%s14] sm:$0xff] %v12
  %s16 = scalar_lea.vmem %s0, 8
  %v17 = vld [vmem:[%s16] sm:$0xff]
  %18 = xla_tuple %v17
  %19 = xla_tuple %18
  %v20 = vxor.u32 %v17, 2147483648
  %21 = xla_tuple %v20
  %s22 = scalar_lea.vmem %s1, 8
  %23 = vst [vmem:[%s22] sm:$0xff] %v20
  %s24 = scalar_lea.vmem %s0, 24
  %v25 = vld [vmem:[%s24] sm:$0xff]
  %26 = xla_tuple %v25
  %27 = xla_tuple %26
  %v28 = vxor.u32 %v25, 2147483648
  %29 = xla_tuple %v28
  %s30 = scalar_lea.vmem %s1, 24
  %31 = vst [vmem:[%s30] sm:$0xff] %v28

// kernel: pix4point_forward.4
$region0: #{pix4point_forward.4}
  #allocation0 [shape = 'u32[]', space=smem, size = 0x4, offset = 0x4, fixed_abs, tag = 'smem constant byte address 0x4 - core index']
  #allocation1 [shape = 'u32[144,128]{1,0:T(1,128)}', space=vmem, size = 0x12000, scoped, tag = 'internal scratch']
  %s0 = inlined_call_operand.vmem [shape: f32[8,32,6], index: 0, kind: input, shape index: {}]
  %s1 = inlined_call_operand.vmem [shape: f32[32,3], index: 1, kind: input, shape index: {}]
  %s2 = inlined_call_operand.vmem [shape: bf16[6,32], index: 2, kind: input, shape index: {}]
  %s3 = inlined_call_operand.vmem [shape: bf16[32,32], index: 3, kind: input, shape index: {}]
  %s4 = inlined_call_operand.vmem [shape: f32[1,32], index: 4, kind: input, shape index: {}]
  %s5 = inlined_call_operand.vmem [shape: bf16[32,64], index: 5, kind: input, shape index: {}]
  %s6 = inlined_call_operand.vmem [shape: bf16[32,64], index: 6, kind: input, shape index: {}]
  %s7 = inlined_call_operand.vmem [shape: bf16[64,32], index: 7, kind: input, shape index: {}]
  %s8 = inlined_call_operand.vmem [shape: bf16[32,64], index: 8, kind: input, shape index: {}]
  %s9 = inlined_call_operand.vmem [shape: f32[1,64], index: 9, kind: input, shape index: {}]
  %s10 = inlined_call_operand.vmem [shape: bf16[3,128], index: 10, kind: input, shape index: {}]
  %s11 = inlined_call_operand.vmem [shape: f32[1,128], index: 11, kind: input, shape index: {}]
  %s12 = inlined_call_operand.vmem [shape: bf16[128,64], index: 12, kind: input, shape index: {}]
  %s13 = inlined_call_operand.vmem [shape: f32[1,64], index: 13, kind: input, shape index: {}]
  %s14 = inlined_call_operand.vmem [shape: f32[32,64], index: 14, kind: output, shape index: {0}]
  %s15 = inlined_call_operand.vmem [shape: f32[32,64], index: 15, kind: output, shape index: {1}]
  %16 = xla_tuple %s14, %s15
  %s17 = sld [smem:[#allocation0]]
  $region74: #{pix4point_forward.4} parent=0
    _
  %s19 = ssub.s32 1, %s17
  %s20 = scalar_select 0, %s19, %s17
  // Predicated region
  $region2: #{pix4point_forward.4} parent=0 // pred_check
    _
  $region3: #{pix4point_forward.4} parent=0 // pred_check_branch
    %22 = sbr.rel (0) target = $region5
  $region4: #{pix4point_forward.4} parent=0 // pred_region
    _
  $region5: #{pix4point_forward.4} parent=0 // pred_fallthru
    _
  // Predicated region
  $region6: #{pix4point_forward.4} parent=0 // pred_check
    _
  $region7: #{pix4point_forward.4} parent=0 // pred_check_branch
    %24 = sbr.rel (0) target = $region9
  $region8: #{pix4point_forward.4} parent=0 // pred_region
    _
  $region9: #{pix4point_forward.4} parent=0 // pred_fallthru
    _
  // Predicated region
  $region10: #{pix4point_forward.4} parent=0 // pred_check
    _
  $region11: #{pix4point_forward.4} parent=0 // pred_check_branch
    %26 = sbr.rel (0) target = $region13
  $region12: #{pix4point_forward.4} parent=0 // pred_region
    _
  $region13: #{pix4point_forward.4} parent=0 // pred_fallthru
    _
  // Predicated region
  $region14: #{pix4point_forward.4} parent=0 // pred_check
    _
  $region15: #{pix4point_forward.4} parent=0 // pred_check_branch
    %28 = sbr.rel (0) target = $region17
  $region16: #{pix4point_forward.4} parent=0 // pred_region
    _
  $region17: #{pix4point_forward.4} parent=0 // pred_fallthru
    _
  // Predicated region
  $region18: #{pix4point_forward.4} parent=0 // pred_check
    _
  $region19: #{pix4point_forward.4} parent=0 // pred_check_branch
    %30 = sbr.rel (0) target = $region21
  $region20: #{pix4point_forward.4} parent=0 // pred_region
    _
  $region21: #{pix4point_forward.4} parent=0 // pred_fallthru
    _
  // Predicated region
  $region22: #{pix4point_forward.4} parent=0 // pred_check
    _
  $region23: #{pix4point_forward.4} parent=0 // pred_check_branch
    %32 = sbr.rel (0) target = $region25
  $region24: #{pix4point_forward.4} parent=0 // pred_region
    _
  $region25: #{pix4point_forward.4} parent=0 // pred_fallthru
    _
  // Predicated region
  $region26: #{pix4point_forward.4} parent=0 // pred_check
    _
  $region27: #{pix4point_forward.4} parent=0 // pred_check_branch
    %34 = sbr.rel (0) target = $region29
  $region28: #{pix4point_forward.4} parent=0 // pred_region
    _
  $region29: #{pix4point_forward.4} parent=0 // pred_fallthru
    _
  // Predicated region
  $region30: #{pix4point_forward.4} parent=0 // pred_check
    _
  $region31: #{pix4point_forward.4} parent=0 // pred_check_branch
    %36 = sbr.rel (0) target = $region33
  $region32: #{pix4point_forward.4} parent=0 // pred_region
    _
  $region33: #{pix4point_forward.4} parent=0 // pred_fallthru
    _
  // Predicated region
  $region34: #{pix4point_forward.4} parent=0 // pred_check
    _
  $region35: #{pix4point_forward.4} parent=0 // pred_check_branch
    %38 = sbr.rel (0) target = $region37
  $region36: #{pix4point_forward.4} parent=0 // pred_region
    _
  $region37: #{pix4point_forward.4} parent=0 // pred_fallthru
    _
  // Predicated region
  $region38: #{pix4point_forward.4} parent=0 // pred_check
    _
  $region39: #{pix4point_forward.4} parent=0 // pred_check_branch
    %40 = sbr.rel (0) target = $region41
  $region40: #{pix4point_forward.4} parent=0 // pred_region
    _
  $region41: #{pix4point_forward.4} parent=0 // pred_fallthru
    _
  // Predicated region
  $region42: #{pix4point_forward.4} parent=0 // pred_check
    _
  $region43: #{pix4point_forward.4} parent=0 // pred_check_branch
    %42 = sbr.rel (0) target = $region45
  $region44: #{pix4point_forward.4} parent=0 // pred_region
    _
  $region45: #{pix4point_forward.4} parent=0 // pred_fallthru
    _
  // Predicated region
  $region46: #{pix4point_forward.4} parent=0 // pred_check
    _
  $region47: #{pix4point_forward.4} parent=0 // pred_check_branch
    %44 = sbr.rel (0) target = $region49
  $region48: #{pix4point_forward.4} parent=0 // pred_region
    _
  $region49: #{pix4point_forward.4} parent=0 // pred_fallthru
    _
  // Predicated region
  $region50: #{pix4point_forward.4} parent=0 // pred_check
    _
  $region51: #{pix4point_forward.4} parent=0 // pred_check_branch
    %46 = sbr.rel (0) target = $region53
  $region52: #{pix4point_forward.4} parent=0 // pred_region
    _
  $region53: #{pix4point_forward.4} parent=0 // pred_fallthru
    _
  // Predicated region
  $region54: #{pix4point_forward.4} parent=0 // pred_check
    _
  $region55: #{pix4point_forward.4} parent=0 // pred_check_branch
    %48 = sbr.rel (0) target = $region57
  $region56: #{pix4point_forward.4} parent=0 // pred_region
    _
  $region57: #{pix4point_forward.4} parent=0 // pred_fallthru
    _
  %v50 = vld [vmem:[%s2] sm:$0x7]
  %v51 = vld [vmem:[%s3] sm:$0xf]
  %v52 = vld [vmem:[%s3 + $0x4] sm:$0xf]
  %v53 = vld [vmem:[%s3 + $0x8] sm:$0xf]
  %v54 = vld [vmem:[%s3 + $0xc] sm:$0xf]
  %v55 = vld [vmem:[%s4] sm:$0x1]
  %v56 = vld [vmem:[%s5] sm:$0xf]
  %v57 = vld [vmem:[%s5 + $0x4] sm:$0xf]
  %v58 = vld [vmem:[%s5 + $0x8] sm:$0xf]
  %v59 = vld [vmem:[%s5 + $0xc] sm:$0xf]
  %v60 = vld [vmem:[%s6] sm:$0xf]
  %v61 = vld [vmem:[%s6 + $0x4] sm:$0xf]
  %v62 = vld [vmem:[%s6 + $0x8] sm:$0xf]
  %v63 = vld [vmem:[%s6 + $0xc] sm:$0xf]
  %v64 = vld [vmem:[%s7] sm:$0xf]
  %v65 = vld [vmem:[%s7 + $0x4] sm:$0xf]
  %v66 = vld [vmem:[%s7 + $0x8] sm:$0xf]
  %v67 = vld [vmem:[%s7 + $0xc] sm:$0xf]
  %v68 = vld [vmem:[%s7 + $0x10] sm:$0xf]
  %v69 = vld [vmem:[%s7 + $0x14] sm:$0xf]
  %v70 = vld [vmem:[%s7 + $0x18] sm:$0xf]
  %v71 = vld [vmem:[%s7 + $0x1c] sm:$0xf]
  %v72 = vld [vmem:[%s0] sm:$0xff]
  %v73 = vld [vmem:[%s0 + $0x8] sm:$0xff]
  %v74 = vld [vmem:[%s0 + $0x10] sm:$0xff]
  %v75 = vld [vmem:[%s0 + $0x18] sm:$0xff]
  %v76 = vpack.c.bf16 %v73, %v72
  %v77 = vpack.c.bf16 %v75, %v74
  %vm78 = vcmask 48128
  %v80 = vsel %vm78, %v76, 0
  %v83 = vsel %vm78, %v77, 0
  %vm85 = vcmask 1042432
  %v87 = vsel %vm85, %v50, 0
  %89 = vmatprep.subr.bf16.mxu0 0
  %90 = vmatpush1.bf16.msra.mxu0 %v87
  %91 = vmatprep.subr.bf16.mxu0 0
  %92 = vmatpush1.bf16.msra.mxu0 0
  %93 = vmatprep.subr.bf16.mxu0 0
  %94 = vmatpush1.bf16.msra.mxu0 0
  %95 = vmatprep.subr.bf16.mxu0 0
  %96 = vmatpush1.bf16.msra.mxu0 0
  %97 = vmatprep.subr.bf16.mxu0 0
  %98 = vmatpush1.bf16.msra.mxu0 0
  %99 = vmatprep.subr.bf16.mxu0 0
  %100 = vmatpush1.bf16.msra.mxu0 0
  %101 = vmatprep.subr.bf16.mxu0 0
  %102 = vmatpush1.bf16.msra.mxu0 0
  %103 = vmatprep.subr.bf16.mxu0 0
  %104 = vmatpush1.bf16.msra.mxu0 0
  %105 = vmatprep.subr.bf16.mxu0 0
  %106 = vmatpush1.bf16.msra.mxu0 0
  %107 = vmatprep.subr.bf16.mxu0 0
  %108 = vmatpush1.bf16.msra.mxu0 0
  %109 = vmatprep.subr.bf16.mxu0 0
  %110 = vmatpush1.bf16.msra.mxu0 0
  %111 = vmatprep.subr.bf16.mxu0 0
  %112 = vmatpush1.bf16.msra.mxu0 0
  %113 = vmatprep.subr.bf16.mxu0 0
  %114 = vmatpush1.bf16.msra.mxu0 0
  %115 = vmatprep.subr.bf16.mxu0 0
  %116 = vmatpush1.bf16.msra.mxu0 0
  %117 = vmatprep.subr.bf16.mxu0 0
  %118 = vmatpush1.bf16.msra.mxu0 0
  %119 = vmatprep.subr.bf16.mxu0 0
  %120 = vmatpush1.bf16.msra.mxu0 0
  %121 = vmatprep.mubr.bf16.mxu0 0
  %122 = vmatmul.mubr.bf16.gmra.mrb[0].mxu0 %v80
  %v123 = vpop.f32.mrb[0].mxu0
  %v124 = vadd.f32 0.0, %v123
  %v125 = vpop.f32.mrb[0].mxu0
  %v126 = vpop.f32.mrb[0].mxu0
  %v127 = vadd.f32 0.0, %v126
  %v128 = vpop.f32.mrb[0].mxu0
  %129 = vmatprep.mubr.bf16.mxu0 0
  %130 = vmatmul.mubr.bf16.gmra.mrb[0].mxu0 %v83
  %v131 = vpop.f32.mrb[0].mxu0
  %v132 = vadd.f32 0.0, %v131
  %v133 = vpop.f32.mrb[0].mxu0
  %v134 = vpop.f32.mrb[0].mxu0
  %v135 = vadd.f32 0.0, %v134
  %v136 = vpop.f32.mrb[0].mxu0
  %137 = vdwg.mxu0
  %v138 = vpack.c.bf16 %v127, %v124
  %v139 = vpack.c.bf16 %v135, %v132
  %v141 = vlaneseq
  %v142 = vshrl.u32 %v141, 7
  %v143 = vsub.s32 0, %v142
  %v144 = vrot.slane %v55, %v143
  %v150 = vunpack.c.l.b16 %v51
  %v151 = vunpack.c.l.b16 %v52
  %v152 = vunpack.c.l.b16 %v53
  %v153 = vunpack.c.l.b16 %v54
  %v154 = vpack.c.b16 %v151, %v150
  %v155 = vpack.c.b16 %v153, %v152
  %vm158 = vcmask 261120
  %v160 = vsel %vm158, %v138, 0
  %v163 = vsel %vm158, %v139, 0
  %165 = vmatprep.subr.bf16.mxu0 0
  %166 = vmatpush1.bf16.msra.mxu0 %v154
  %167 = vmatprep.subr.bf16.mxu0 0
  %168 = vmatpush1.bf16.msra.mxu0 %v155
  %169 = vmatprep.subr.bf16.mxu0 0
  %170 = vmatpush1.bf16.msra.mxu0 0
  %171 = vmatprep.subr.bf16.mxu0 0
  %172 = vmatpush1.bf16.msra.mxu0 0
  %173 = vmatprep.subr.bf16.mxu0 0
  %174 = vmatpush1.bf16.msra.mxu0 0
  %175 = vmatprep.subr.bf16.mxu0 0
  %176 = vmatpush1.bf16.msra.mxu0 0
  %177 = vmatprep.subr.bf16.mxu0 0
  %178 = vmatpush1.bf16.msra.mxu0 0
  %179 = vmatprep.subr.bf16.mxu0 0
  %180 = vmatpush1.bf16.msra.mxu0 0
  %181 = vmatprep.subr.bf16.mxu0 0
  %182 = vmatpush1.bf16.msra.mxu0 0
  %183 = vmatprep.subr.bf16.mxu0 0
  %184 = vmatpush1.bf16.msra.mxu0 0
  %185 = vmatprep.subr.bf16.mxu0 0
  %186 = vmatpush1.bf16.msra.mxu0 0
  %187 = vmatprep.subr.bf16.mxu0 0
  %188 = vmatpush1.bf16.msra.mxu0 0
  %189 = vmatprep.subr.bf16.mxu0 0
  %190 = vmatpush1.bf16.msra.mxu0 0
  %191 = vmatprep.subr.bf16.mxu0 0
  %192 = vmatpush1.bf16.msra.mxu0 0
  %193 = vmatprep.subr.bf16.mxu0 0
  %194 = vmatpush1.bf16.msra.mxu0 0
  %195 = vmatprep.subr.bf16.mxu0 0
  %196 = vmatpush1.bf16.msra.mxu0 0
  %197 = vmatprep.mubr.bf16.mxu0 0
  %198 = vmatmul.mubr.bf16.gmra.mrb[0].mxu0 %v160
  %v199 = vpop.f32.mrb[0].mxu0
  %v200 = vadd.f32 %v144, %v199
  %v201 = vpop.f32.mrb[0].mxu0
  %v202 = vpop.f32.mrb[0].mxu0
  %v203 = vadd.f32 %v144, %v202
  %v204 = vpop.f32.mrb[0].mxu0
  %205 = vmatprep.mubr.bf16.mxu0 0
  %206 = vmatmul.mubr.bf16.gmra.mrb[0].mxu0 %v163
  %v207 = vpop.f32.mrb[0].mxu0
  %v208 = vadd.f32 %v144, %v207
  %v209 = vpop.f32.mrb[0].mxu0
  %v210 = vpop.f32.mrb[0].mxu0
  %v211 = vadd.f32 %v144, %v210
  %v212 = vpop.f32.mrb[0].mxu0
  %213 = vdwg.mxu0
  %v214 = vmax.f32 %v200, 0.0
  %v215 = vmax.f32 %v203, 0.0
  %v216 = vmax.f32 %v208, 0.0
  %v217 = vmax.f32 %v211, 0.0
  %s218 = scalar_lea.vmem %s0, 32
  %v219 = vld [vmem:[%s218] sm:$0xff]
  %v220 = vld [vmem:[%s218 + $0x8] sm:$0xff]
  %v221 = vld [vmem:[%s218 + $0x10] sm:$0xff]
  %v222 = vld [vmem:[%s218 + $0x18] sm:$0xff]
  %v223 = vpack.c.bf16 %v220, %v219
  %v224 = vpack.c.bf16 %v222, %v221
  %v226 = vsel %vm78, %v223, 0
  %v229 = vsel %vm78, %v224, 0
  %231 = vmatprep.subr.bf16.mxu0 0
  %232 = vmatpush1.bf16.msra.mxu0 %v87
  %233 = vmatprep.subr.bf16.mxu0 0
  %234 = vmatpush1.bf16.msra.mxu0 0
  %235 = vmatprep.subr.bf16.mxu0 0
  %236 = vmatpush1.bf16.msra.mxu0 0
  %237 = vmatprep.subr.bf16.mxu0 0
  %238 = vmatpush1.bf16.msra.mxu0 0
  %239 = vmatprep.subr.bf16.mxu0 0
  %240 = vmatpush1.bf16.msra.mxu0 0
  %241 = vmatprep.subr.bf16.mxu0 0
  %242 = vmatpush1.bf16.msra.mxu0 0
  %243 = vmatprep.subr.bf16.mxu0 0
  %244 = vmatpush1.bf16.msra.mxu0 0
  %245 = vmatprep.subr.bf16.mxu0 0
  %246 = vmatpush1.bf16.msra.mxu0 0
  %247 = vmatprep.subr.bf16.mxu0 0
  %248 = vmatpush1.bf16.msra.mxu0 0
  %249 = vmatprep.subr.bf16.mxu0 0
  %250 = vmatpush1.bf16.msra.mxu0 0
  %251 = vmatprep.subr.bf16.mxu0 0
  %252 = vmatpush1.bf16.msra.mxu0 0
  %253 = vmatprep.subr.bf16.mxu0 0
  %254 = vmatpush1.bf16.msra.mxu0 0
  %255 = vmatprep.subr.bf16.mxu0 0
  %256 = vmatpush1.bf16.msra.mxu0 0
  %257 = vmatprep.subr.bf16.mxu0 0
  %258 = vmatpush1.bf16.msra.mxu0 0
  %259 = vmatprep.subr.bf16.mxu0 0
  %260 = vmatpush1.bf16.msra.mxu0 0
  %261 = vmatprep.subr.bf16.mxu0 0
  %262 = vmatpush1.bf16.msra.mxu0 0
  %263 = vmatprep.mubr.bf16.mxu0 0
  %264 = vmatmul.mubr.bf16.gmra.mrb[0].mxu0 %v226
  %v265 = vpop.f32.mrb[0].mxu0
  %v266 = vadd.f32 0.0, %v265
  %v267 = vpop.f32.mrb[0].mxu0
  %v268 = vpop.f32.mrb[0].mxu0
  %v269 = vadd.f32 0.0, %v268
  %v270 = vpop.f32.mrb[0].mxu0
  %271 = vmatprep.mubr.bf16.mxu0 0
  %272 = vmatmul.mubr.bf16.gmra.mrb[0].mxu0 %v229
  %v273 = vpop.f32.mrb[0].mxu0
  %v274 = vadd.f32 0.0, %v273
  %v275 = vpop.f32.mrb[0].mxu0
  %v276 = vpop.f32.mrb[0].mxu0
  %v277 = vadd.f32 0.0, %v276
  %v278 = vpop.f32.mrb[0].mxu0
  %279 = vdwg.mxu0
  %v280 = vpack.c.bf16 %v269, %v266
  %v281 = vpack.c.bf16 %v277, %v274
  %v283 = vsel %vm158, %v280, 0
  %v286 = vsel %vm158, %v281, 0
  %288 = vmatprep.subr.bf16.mxu0 0
  %289 = vmatpush1.bf16.msra.mxu0 %v154
  %290 = vmatprep.subr.bf16.mxu0 0
  %291 = vmatpush1.bf16.msra.mxu0 %v155
  %292 = vmatprep.subr.bf16.mxu0 0
  %293 = vmatpush1.bf16.msra.mxu0 0
  %294 = vmatprep.subr.bf16.mxu0 0
  %295 = vmatpush1.bf16.msra.mxu0 0
  %296 = vmatprep.subr.bf16.mxu0 0
  %297 = vmatpush1.bf16.msra.mxu0 0
  %298 = vmatprep.subr.bf16.mxu0 0
  %299 = vmatpush1.bf16.msra.mxu0 0
  %300 = vmatprep.subr.bf16.mxu0 0
  %301 = vmatpush1.bf16.msra.mxu0 0
  %302 = vmatprep.subr.bf16.mxu0 0
  %303 = vmatpush1.bf16.msra.mxu0 0
  %304 = vmatprep.subr.bf16.mxu0 0
  %305 = vmatpush1.bf16.msra.mxu0 0
  %306 = vmatprep.subr.bf16.mxu0 0
  %307 = vmatpush1.bf16.msra.mxu0 0
  %308 = vmatprep.subr.bf16.mxu0 0
  %309 = vmatpush1.bf16.msra.mxu0 0
  %310 = vmatprep.subr.bf16.mxu0 0
  %311 = vmatpush1.bf16.msra.mxu0 0
  %312 = vmatprep.subr.bf16.mxu0 0
  %313 = vmatpush1.bf16.msra.mxu0 0
  %314 = vmatprep.subr.bf16.mxu0 0
  %315 = vmatpush1.bf16.msra.mxu0 0
  %316 = vmatprep.subr.bf16.mxu0 0
  %317 = vmatpush1.bf16.msra.mxu0 0
  %318 = vmatprep.subr.bf16.mxu0 0
  %319 = vmatpush1.bf16.msra.mxu0 0
  %320 = vmatprep.mubr.bf16.mxu0 0
  %321 = vmatmul.mubr.bf16.gmra.mrb[0].mxu0 %v283
  %v322 = vpop.f32.mrb[0].mxu0
  %v323 = vadd.f32 %v144, %v322
  %v324 = vpop.f32.mrb[0].mxu0
  %v325 = vpop.f32.mrb[0].mxu0
  %v326 = vadd.f32 %v144, %v325
  %v327 = vpop.f32.mrb[0].mxu0
  %328 = vmatprep.mubr.bf16.mxu0 0
  %329 = vmatmul.mubr.bf16.gmra.mrb[0].mxu0 %v286
  %v330 = vpop.f32.mrb[0].mxu0
  %v331 = vadd.f32 %v144, %v330
  %v332 = vpop.f32.mrb[0].mxu0
  %v333 = vpop.f32.mrb[0].mxu0
  %v334 = vadd.f32 %v144, %v333
  %v335 = vpop.f32.mrb[0].mxu0
  %336 = vdwg.mxu0
  %v337 = vmax.f32 %v323, 0.0
  %v338 = vmax.f32 %v326, 0.0
  %v339 = vmax.f32 %v331, 0.0
  %v340 = vmax.f32 %v334, 0.0
  %s341 = scalar_lea.vmem %s0, 64
  %v342 = vld [vmem:[%s341] sm:$0xff]
  %v343 = vld [vmem:[%s341 + $0x8] sm:$0xff]
  %v344 = vld [vmem:[%s341 + $0x10] sm:$0xff]
  %v345 = vld [vmem:[%s341 + $0x18] sm:$0xff]
  %v346 = vpack.c.bf16 %v343, %v342
  %v347 = vpack.c.bf16 %v345, %v344
  %v349 = vsel %vm78, %v346, 0
  %v352 = vsel %vm78, %v347, 0
  %354 = vmatprep.subr.bf16.mxu0 0
  %355 = vmatpush1.bf16.msra.mxu0 %v87
  %356 = vmatprep.subr.bf16.mxu0 0
  %357 = vmatpush1.bf16.msra.mxu0 0
  %358 = vmatprep.subr.bf16.mxu0 0
  %359 = vmatpush1.bf16.msra.mxu0 0
  %360 = vmatprep.subr.bf16.mxu0 0
  %361 = vmatpush1.bf16.msra.mxu0 0
  %362 = vmatprep.subr.bf16.mxu0 0
  %363 = vmatpush1.bf16.msra.mxu0 0
  %364 = vmatprep.subr.bf16.mxu0 0
  %365 = vmatpush1.bf16.msra.mxu0 0
  %366 = vmatprep.subr.bf16.mxu0 0
  %367 = vmatpush1.bf16.msra.mxu0 0
  %368 = vmatprep.subr.bf16.mxu0 0
  %369 = vmatpush1.bf16.msra.mxu0 0
  %370 = vmatprep.subr.bf16.mxu0 0
  %371 = vmatpush1.bf16.msra.mxu0 0
  %372 = vmatprep.subr.bf16.mxu0 0
  %373 = vmatpush1.bf16.msra.mxu0 0
  %374 = vmatprep.subr.bf16.mxu0 0
  %375 = vmatpush1.bf16.msra.mxu0 0
  %376 = vmatprep.subr.bf16.mxu0 0
  %377 = vmatpush1.bf16.msra.mxu0 0
  %378 = vmatprep.subr.bf16.mxu0 0
  %379 = vmatpush1.bf16.msra.mxu0 0
  %380 = vmatprep.subr.bf16.mxu0 0
  %381 = vmatpush1.bf16.msra.mxu0 0
  %382 = vmatprep.subr.bf16.mxu0 0
  %383 = vmatpush1.bf16.msra.mxu0 0
  %384 = vmatprep.subr.bf16.mxu0 0
  %385 = vmatpush1.bf16.msra.mxu0 0
  %386 = vmatprep.mubr.bf16.mxu0 0
  %387 = vmatmul.mubr.bf16.gmra.mrb[0].mxu0 %v349
  %v388 = vpop.f32.mrb[0].mxu0
  %v389 = vadd.f32 0.0, %v388
  %v390 = vpop.f32.mrb[0].mxu0
  %v391 = vpop.f32.mrb[0].mxu0
  %v392 = vadd.f32 0.0, %v391
  %v393 = vpop.f32.mrb[0].mxu0
  %394 = vmatprep.mubr.bf16.mxu0 0
  %395 = vmatmul.mubr.bf16.gmra.mrb[0].mxu0 %v352
  %v396 = vpop.f32.mrb[0].mxu0
  %v397 = vadd.f32 0.0, %v396
  %v398 = vpop.f32.mrb[0].mxu0
  %v399 = vpop.f32.mrb[0].mxu0
  %v400 = vadd.f32 0.0, %v399
  %v401 = vpop.f32.mrb[0].mxu0
  %402 = vdwg.mxu0
  %v403 = vpack.c.bf16 %v392, %v389
  %v404 = vpack.c.bf16 %v400, %v397
  %v406 = vsel %vm158, %v403, 0
  %v409 = vsel %vm158, %v404, 0
  %411 = vmatprep.subr.bf16.mxu0 0
  %412 = vmatpush1.bf16.msra.mxu0 %v154
  %413 = vmatprep.subr.bf16.mxu0 0
  %414 = vmatpush1.bf16.msra.mxu0 %v155
  %415 = vmatprep.subr.bf16.mxu0 0
  %416 = vmatpush1.bf16.msra.mxu0 0
  %417 = vmatprep.subr.bf16.mxu0 0
  %418 = vmatpush1.bf16.msra.mxu0 0
  %419 = vmatprep.subr.bf16.mxu0 0
  %420 = vmatpush1.bf16.msra.mxu0 0
  %421 = vmatprep.subr.bf16.mxu0 0
  %422 = vmatpush1.bf16.msra.mxu0 0
  %423 = vmatprep.subr.bf16.mxu0 0
  %424 = vmatpush1.bf16.msra.mxu0 0
  %425 = vmatprep.subr.bf16.mxu0 0
  %426 = vmatpush1.bf16.msra.mxu0 0
  %427 = vmatprep.subr.bf16.mxu0 0
  %428 = vmatpush1.bf16.msra.mxu0 0
  %429 = vmatprep.subr.bf16.mxu0 0
  %430 = vmatpush1.bf16.msra.mxu0 0
  %431 = vmatprep.subr.bf16.mxu0 0
  %432 = vmatpush1.bf16.msra.mxu0 0
  %433 = vmatprep.subr.bf16.mxu0 0
  %434 = vmatpush1.bf16.msra.mxu0 0
  %435 = vmatprep.subr.bf16.mxu0 0
  %436 = vmatpush1.bf16.msra.mxu0 0
  %437 = vmatprep.subr.bf16.mxu0 0
  %438 = vmatpush1.bf16.msra.mxu0 0
  %439 = vmatprep.subr.bf16.mxu0 0
  %440 = vmatpush1.bf16.msra.mxu0 0
  %441 = vmatprep.subr.bf16.mxu0 0
  %442 = vmatpush1.bf16.msra.mxu0 0
  %443 = vmatprep.mubr.bf16.mxu0 0
  %444 = vmatmul.mubr.bf16.gmra.mrb[0].mxu0 %v406
  %v445 = vpop.f32.mrb[0].mxu0
  %v446 = vadd.f32 %v144, %v445
  %v447 = vpop.f32.mrb[0].mxu0
  %v448 = vpop.f32.mrb[0].mxu0
  %v449 = vadd.f32 %v144, %v448
  %v450 = vpop.f32.mrb[0].mxu0
  %451 = vmatprep.mubr.bf16.mxu0 0
  %452 = vmatmul.mubr.bf16.gmra.mrb[0].mxu0 %v409
  %v453 = vpop.f32.mrb[0].mxu0
  %v454 = vadd.f32 %v144, %v453
  %v455 = vpop.f32.mrb[0].mxu0
  %v456 = vpop.f32.mrb[0].mxu0
  %v457 = vadd.f32 %v144, %v456
  %v458 = vpop.f32.mrb[0].mxu0
  %459 = vdwg.mxu0
  %v460 = vmax.f32 %v446, 0.0
  %v461 = vmax.f32 %v449, 0.0
  %v462 = vmax.f32 %v454, 0.0
  %v463 = vmax.f32 %v457, 0.0
  %s464 = scalar_lea.vmem %s0, 96
  %v465 = vld [vmem:[%s464] sm:$0xff]
  %v466 = vld [vmem:[%s464 + $0x8] sm:$0xff]
  %v467 = vld [vmem:[%s464 + $0x10] sm:$0xff]
  %v468 = vld [vmem:[%s464 + $0x18] sm:$0xff]
  %v469 = vpack.c.bf16 %v466, %v465
  %v470 = vpack.c.bf16 %v468, %v467
  %v472 = vsel %vm78, %v469, 0
  %v475 = vsel %vm78, %v470, 0
  %477 = vmatprep.subr.bf16.mxu0 0
  %478 = vmatpush1.bf16.msra.mxu0 %v87
  %479 = vmatprep.subr.bf16.mxu0 0
  %480 = vmatpush1.bf16.msra.mxu0 0
  %481 = vmatprep.subr.bf16.mxu0 0
  %482 = vmatpush1.bf16.msra.mxu0 0
  %483 = vmatprep.subr.bf16.mxu0 0
  %484 = vmatpush1.bf16.msra.mxu0 0
  %485 = vmatprep.subr.bf16.mxu0 0
  %486 = vmatpush1.bf16.msra.mxu0 0
  %487 = vmatprep.subr.bf16.mxu0 0
  %488 = vmatpush1.bf16.msra.mxu0 0
  %489 = vmatprep.subr.bf16.mxu0 0
  %490 = vmatpush1.bf16.msra.mxu0 0
  %491 = vmatprep.subr.bf16.mxu0 0
  %492 = vmatpush1.bf16.msra.mxu0 0
  %493 = vmatprep.subr.bf16.mxu0 0
  %494 = vmatpush1.bf16.msra.mxu0 0
  %495 = vmatprep.subr.bf16.mxu0 0
  %496 = vmatpush1.bf16.msra.mxu0 0
  %497 = vmatprep.subr.bf16.mxu0 0
  %498 = vmatpush1.bf16.msra.mxu0 0
  %499 = vmatprep.subr.bf16.mxu0 0
  %500 = vmatpush1.bf16.msra.mxu0 0
  %501 = vmatprep.subr.bf16.mxu0 0
  %502 = vmatpush1.bf16.msra.mxu0 0
  %503 = vmatprep.subr.bf16.mxu0 0
  %504 = vmatpush1.bf16.msra.mxu0 0
  %505 = vmatprep.subr.bf16.mxu0 0
  %506 = vmatpush1.bf16.msra.mxu0 0
  %507 = vmatprep.subr.bf16.mxu0 0
  %508 = vmatpush1.bf16.msra.mxu0 0
  %509 = vmatprep.mubr.bf16.mxu0 0
  %510 = vmatmul.mubr.bf16.gmra.mrb[0].mxu0 %v472
  %v511 = vpop.f32.mrb[0].mxu0
  %v512 = vadd.f32 0.0, %v511
  %v513 = vpop.f32.mrb[0].mxu0
  %v514 = vpop.f32.mrb[0].mxu0
  %v515 = vadd.f32 0.0, %v514
  %v516 = vpop.f32.mrb[0].mxu0
  %517 = vmatprep.mubr.bf16.mxu0 0
  %518 = vmatmul.mubr.bf16.gmra.mrb[0].mxu0 %v475
  %v519 = vpop.f32.mrb[0].mxu0
  %v520 = vadd.f32 0.0, %v519
  %v521 = vpop.f32.mrb[0].mxu0
  %v522 = vpop.f32.mrb[0].mxu0
  %v523 = vadd.f32 0.0, %v522
  %v524 = vpop.f32.mrb[0].mxu0
  %525 = vdwg.mxu0
  %v526 = vpack.c.bf16 %v515, %v512
  %v527 = vpack.c.bf16 %v523, %v520
  %v529 = vsel %vm158, %v526, 0
  %v532 = vsel %vm158, %v527, 0
  %534 = vmatprep.subr.bf16.mxu0 0
  %535 = vmatpush1.bf16.msra.mxu0 %v154
  %536 = vmatprep.subr.bf16.mxu0 0
  %537 = vmatpush1.bf16.msra.mxu0 %v155
  %538 = vmatprep.subr.bf16.mxu0 0
  %539 = vmatpush1.bf16.msra.mxu0 0
  %540 = vmatprep.subr.bf16.mxu0 0
  %541 = vmatpush1.bf16.msra.mxu0 0
  %542 = vmatprep.subr.bf16.mxu0 0
  %543 = vmatpush1.bf16.msra.mxu0 0
  %544 = vmatprep.subr.bf16.mxu0 0
  %545 = vmatpush1.bf16.msra.mxu0 0
  %546 = vmatprep.subr.bf16.mxu0 0
  %547 = vmatpush1.bf16.msra.mxu0 0
  %548 = vmatprep.subr.bf16.mxu0 0
  %549 = vmatpush1.bf16.msra.mxu0 0
  %550 = vmatprep.subr.bf16.mxu0 0
  %551 = vmatpush1.bf16.msra.mxu0 0
  %552 = vmatprep.subr.bf16.mxu0 0
  %553 = vmatpush1.bf16.msra.mxu0 0
  %554 = vmatprep.subr.bf16.mxu0 0
  %555 = vmatpush1.bf16.msra.mxu0 0
  %556 = vmatprep.subr.bf16.mxu0 0
  %557 = vmatpush1.bf16.msra.mxu0 0
  %558 = vmatprep.subr.bf16.mxu0 0
  %559 = vmatpush1.bf16.msra.mxu0 0
  %560 = vmatprep.subr.bf16.mxu0 0
  %561 = vmatpush1.bf16.msra.mxu0 0
  %562 = vmatprep.subr.bf16.mxu0 0
  %563 = vmatpush1.bf16.msra.mxu0 0
  %564 = vmatprep.subr.bf16.mxu0 0
  %565 = vmatpush1.bf16.msra.mxu0 0
  %566 = vmatprep.mubr.bf16.mxu0 0
  %567 = vmatmul.mubr.bf16.gmra.mrb[0].mxu0 %v529
  %v568 = vpop.f32.mrb[0].mxu0
  %v569 = vadd.f32 %v144, %v568
  %v570 = vpop.f32.mrb[0].mxu0
  %v571 = vpop.f32.mrb[0].mxu0
  %v572 = vadd.f32 %v144, %v571
  %v573 = vpop.f32.mrb[0].mxu0
  %574 = vmatprep.mubr.bf16.mxu0 0
  %575 = vmatmul.mubr.bf16.gmra.mrb[0].mxu0 %v532
  %v576 = vpop.f32.mrb[0].mxu0
  %v577 = vadd.f32 %v144, %v576
  %v578 = vpop.f32.mrb[0].mxu0
  %v579 = vpop.f32.mrb[0].mxu0
  %v580 = vadd.f32 %v144, %v579
  %v581 = vpop.f32.mrb[0].mxu0
  %582 = vdwg.mxu0
  %v583 = vmax.f32 %v569, 0.0
  %v584 = vmax.f32 %v572, 0.0
  %v585 = vmax.f32 %v577, 0.0
  %v586 = vmax.f32 %v580, 0.0
  %s587 = scalar_lea.vmem %s0, 128
  %v588 = vld [vmem:[%s587] sm:$0xff]
  %v589 = vld [vmem:[%s587 + $0x8] sm:$0xff]
  %v590 = vld [vmem:[%s587 + $0x10] sm:$0xff]
  %v591 = vld [vmem:[%s587 + $0x18] sm:$0xff]
  %v592 = vpack.c.bf16 %v589, %v588
  %v593 = vpack.c.bf16 %v591, %v590
  %v595 = vsel %vm78, %v592, 0
  %v598 = vsel %vm78, %v593, 0
  %600 = vmatprep.subr.bf16.mxu0 0
  %601 = vmatpush1.bf16.msra.mxu0 %v87
  %602 = vmatprep.subr.bf16.mxu0 0
  %603 = vmatpush1.bf16.msra.mxu0 0
  %604 = vmatprep.subr.bf16.mxu0 0
  %605 = vmatpush1.bf16.msra.mxu0 0
  %606 = vmatprep.subr.bf16.mxu0 0
  %607 = vmatpush1.bf16.msra.mxu0 0
  %608 = vmatprep.subr.bf16.mxu0 0
  %609 = vmatpush1.bf16.msra.mxu0 0
  %610 = vmatprep.subr.bf16.mxu0 0
  %611 = vmatpush1.bf16.msra.mxu0 0
  %612 = vmatprep.subr.bf16.mxu0 0
  %613 = vmatpush1.bf16.msra.mxu0 0
  %614 = vmatprep.subr.bf16.mxu0 0
  %615 = vmatpush1.bf16.msra.mxu0 0
  %616 = vmatprep.subr.bf16.mxu0 0
  %617 = vmatpush1.bf16.msra.mxu0 0
  %618 = vmatprep.subr.bf16.mxu0 0
  %619 = vmatpush1.bf16.msra.mxu0 0
  %620 = vmatprep.subr.bf16.mxu0 0
  %621 = vmatpush1.bf16.msra.mxu0 0
  %622 = vmatprep.subr.bf16.mxu0 0
  %623 = vmatpush1.bf16.msra.mxu0 0
  %624 = vmatprep.subr.bf16.mxu0 0
  %625 = vmatpush1.bf16.msra.mxu0 0
  %626 = vmatprep.subr.bf16.mxu0 0
  %627 = vmatpush1.bf16.msra.mxu0 0
  %628 = vmatprep.subr.bf16.mxu0 0
  %629 = vmatpush1.bf16.msra.mxu0 0
  %630 = vmatprep.subr.bf16.mxu0 0
  %631 = vmatpush1.bf16.msra.mxu0 0
  %632 = vmatprep.mubr.bf16.mxu0 0
  %633 = vmatmul.mubr.bf16.gmra.mrb[0].mxu0 %v595
  %v634 = vpop.f32.mrb[0].mxu0
  %v635 = vadd.f32 0.0, %v634
  %v636 = vpop.f32.mrb[0].mxu0
  %v637 = vpop.f32.mrb[0].mxu0
  %v638 = vadd.f32 0.0, %v637
  %v639 = vpop.f32.mrb[0].mxu0
  %640 = vmatprep.mubr.bf16.mxu0 0
  %641 = vmatmul.mubr.bf16.gmra.mrb[0].mxu0 %v598
  %v642 = vpop.f32.mrb[0].mxu0
  %v643 = vadd.f32 0.0, %v642
  %v644 = vpop.f32.mrb[0].mxu0
  %v645 = vpop.f32.mrb[0].mxu0
  %v646 = vadd.f32 0.0, %v645
  %v647 = vpop.f32.mrb[0].mxu0
  %648 = vdwg.mxu0
  %v649 = vpack.c.bf16 %v638, %v635
  %v650 = vpack.c.bf16 %v646, %v643
  %v652 = vsel %vm158, %v649, 0
  %v655 = vsel %vm158, %v650, 0
  %657 = vmatprep.subr.bf16.mxu0 0
  %658 = vmatpush1.bf16.msra.mxu0 %v154
  %659 = vmatprep.subr.bf16.mxu0 0
  %660 = vmatpush1.bf16.msra.mxu0 %v155
  %661 = vmatprep.subr.bf16.mxu0 0
  %662 = vmatpush1.bf16.msra.mxu0 0
  %663 = vmatprep.subr.bf16.mxu0 0
  %664 = vmatpush1.bf16.msra.mxu0 0
  %665 = vmatprep.subr.bf16.mxu0 0
  %666 = vmatpush1.bf16.msra.mxu0 0
  %667 = vmatprep.subr.bf16.mxu0 0
  %668 = vmatpush1.bf16.msra.mxu0 0
  %669 = vmatprep.subr.bf16.mxu0 0
  %670 = vmatpush1.bf16.msra.mxu0 0
  %671 = vmatprep.subr.bf16.mxu0 0
  %672 = vmatpush1.bf16.msra.mxu0 0
  %673 = vmatprep.subr.bf16.mxu0 0
  %674 = vmatpush1.bf16.msra.mxu0 0
  %675 = vmatprep.subr.bf16.mxu0 0
  %676 = vmatpush1.bf16.msra.mxu0 0
  %677 = vmatprep.subr.bf16.mxu0 0
  %678 = vmatpush1.bf16.msra.mxu0 0
  %679 = vmatprep.subr.bf16.mxu0 0
  %680 = vmatpush1.bf16.msra.mxu0 0
  %681 = vmatprep.subr.bf16.mxu0 0
  %682 = vmatpush1.bf16.msra.mxu0 0
  %683 = vmatprep.subr.bf16.mxu0 0
  %684 = vmatpush1.bf16.msra.mxu0 0
  %685 = vmatprep.subr.bf16.mxu0 0
  %686 = vmatpush1.bf16.msra.mxu0 0
  %687 = vmatprep.subr.bf16.mxu0 0
  %688 = vmatpush1.bf16.msra.mxu0 0
  %689 = vmatprep.mubr.bf16.mxu0 0
  %690 = vmatmul.mubr.bf16.gmra.mrb[0].mxu0 %v652
  %v691 = vpop.f32.mrb[0].mxu0
  %v692 = vadd.f32 %v144, %v691
  %v693 = vpop.f32.mrb[0].mxu0
  %v694 = vpop.f32.mrb[0].mxu0
  %v695 = vadd.f32 %v144, %v694
  %v696 = vpop.f32.mrb[0].mxu0
  %697 = vmatprep.mubr.bf16.mxu0 0
  %698 = vmatmul.mubr.bf16.gmra.mrb[0].mxu0 %v655
  %v699 = vpop.f32.mrb[0].mxu0
  %v700 = vadd.f32 %v144, %v699
  %v701 = vpop.f32.mrb[0].mxu0
  %v702 = vpop.f32.mrb[0].mxu0
  %v703 = vadd.f32 %v144, %v702
  %v704 = vpop.f32.mrb[0].mxu0
  %705 = vdwg.mxu0
  %v706 = vmax.f32 %v692, 0.0
  %v707 = vmax.f32 %v695, 0.0
  %v708 = vmax.f32 %v700, 0.0
  %v709 = vmax.f32 %v703, 0.0
  %s710 = scalar_lea.vmem %s0, 160
  %v711 = vld [vmem:[%s710] sm:$0xff]
  %v712 = vld [vmem:[%s710 + $0x8] sm:$0xff]
  %v713 = vld [vmem:[%s710 + $0x10] sm:$0xff]
  %v714 = vld [vmem:[%s710 + $0x18] sm:$0xff]
  %v715 = vpack.c.bf16 %v712, %v711
  %v716 = vpack.c.bf16 %v714, %v713
  %v718 = vsel %vm78, %v715, 0
  %v721 = vsel %vm78, %v716, 0
  %723 = vmatprep.subr.bf16.mxu0 0
  %724 = vmatpush1.bf16.msra.mxu0 %v87
  %725 = vmatprep.subr.bf16.mxu0 0
  %726 = vmatpush1.bf16.msra.mxu0 0
  %727 = vmatprep.subr.bf16.mxu0 0
  %728 = vmatpush1.bf16.msra.mxu0 0
  %729 = vmatprep.subr.bf16.mxu0 0
  %730 = vmatpush1.bf16.msra.mxu0 0
  %731 = vmatprep.subr.bf16.mxu0 0
  %732 = vmatpush1.bf16.msra.mxu0 0
  %733 = vmatprep.subr.bf16.mxu0 0
  %734 = vmatpush1.bf16.msra.mxu0 0
  %735 = vmatprep.subr.bf16.mxu0 0
  %736 = vmatpush1.bf16.msra.mxu0 0
  %737 = vmatprep.subr.bf16.mxu0 0
  %738 = vmatpush1.bf16.msra.mxu0 0
  %739 = vmatprep.subr.bf16.mxu0 0
  %740 = vmatpush1.bf16.msra.mxu0 0
  %741 = vmatprep.subr.bf16.mxu0 0
  %742 = vmatpush1.bf16.msra.mxu0 0
  %743 = vmatprep.subr.bf16.mxu0 0
  %744 = vmatpush1.bf16.msra.mxu0 0
  %745 = vmatprep.subr.bf16.mxu0 0
  %746 = vmatpush1.bf16.msra.mxu0 0
  %747 = vmatprep.subr.bf16.mxu0 0
  %748 = vmatpush1.bf16.msra.mxu0 0
  %749 = vmatprep.subr.bf16.mxu0 0
  %750 = vmatpush1.bf16.msra.mxu0 0
  %751 = vmatprep.subr.bf16.mxu0 0
  %752 = vmatpush1.bf16.msra.mxu0 0
  %753 = vmatprep.subr.bf16.mxu0 0
  %754 = vmatpush1.bf16.msra.mxu0 0
  %755 = vmatprep.mubr.bf16.mxu0 0
  %756 = vmatmul.mubr.bf16.gmra.mrb[0].mxu0 %v718
  %v757 = vpop.f32.mrb[0].mxu0
  %v758 = vadd.f32 0.0, %v757
  %v759 = vpop.f32.mrb[0].mxu0
  %v760 = vpop.f32.mrb[0].mxu0
  %v761 = vadd.f32 0.0, %v760
  %v762 = vpop.f32.mrb[0].mxu0
  %763 = vmatprep.mubr.bf16.mxu0 0
  %764 = vmatmul.mubr.bf16.gmra.mrb[0].mxu0 %v721
  %v765 = vpop.f32.mrb[0].mxu0
  %v766 = vadd.f32 0.0, %v765
  %v767 = vpop.f32.mrb[0].mxu0
  %v768 = vpop.f32.mrb[0].mxu0
  %v769 = vadd.f32 0.0, %v768
  %v770 = vpop.f32.mrb[0].mxu0
  %771 = vdwg.mxu0
  %v772 = vpack.c.bf16 %v761, %v758
  %v773 = vpack.c.bf16 %v769, %v766
  %v775 = vsel %vm158, %v772, 0
  %v778 = vsel %vm158, %v773, 0
  %780 = vmatprep.subr.bf16.mxu0 0
  %781 = vmatpush1.bf16.msra.mxu0 %v154
  %782 = vmatprep.subr.bf16.mxu0 0
  %783 = vmatpush1.bf16.msra.mxu0 %v155
  %784 = vmatprep.subr.bf16.mxu0 0
  %785 = vmatpush1.bf16.msra.mxu0 0
  %786 = vmatprep.subr.bf16.mxu0 0
  %787 = vmatpush1.bf16.msra.mxu0 0
  %788 = vmatprep.subr.bf16.mxu0 0
  %789 = vmatpush1.bf16.msra.mxu0 0
  %790 = vmatprep.subr.bf16.mxu0 0
  %791 = vmatpush1.bf16.msra.mxu0 0
  %792 = vmatprep.subr.bf16.mxu0 0
  %793 = vmatpush1.bf16.msra.mxu0 0
  %794 = vmatprep.subr.bf16.mxu0 0
  %795 = vmatpush1.bf16.msra.mxu0 0
  %796 = vmatprep.subr.bf16.mxu0 0
  %797 = vmatpush1.bf16.msra.mxu0 0
  %798 = vmatprep.subr.bf16.mxu0 0
  %799 = vmatpush1.bf16.msra.mxu0 0
  %800 = vmatprep.subr.bf16.mxu0 0
  %801 = vmatpush1.bf16.msra.mxu0 0
  %802 = vmatprep.subr.bf16.mxu0 0
  %803 = vmatpush1.bf16.msra.mxu0 0
  %804 = vmatprep.subr.bf16.mxu0 0
  %805 = vmatpush1.bf16.msra.mxu0 0
  %806 = vmatprep.subr.bf16.mxu0 0
  %807 = vmatpush1.bf16.msra.mxu0 0
  %808 = vmatprep.subr.bf16.mxu0 0
  %809 = vmatpush1.bf16.msra.mxu0 0
  %810 = vmatprep.subr.bf16.mxu0 0
  %811 = vmatpush1.bf16.msra.mxu0 0
  %812 = vmatprep.mubr.bf16.mxu0 0
  %813 = vmatmul.mubr.bf16.gmra.mrb[0].mxu0 %v775
  %v814 = vpop.f32.mrb[0].mxu0
  %v815 = vadd.f32 %v144, %v814
  %v816 = vpop.f32.mrb[0].mxu0
  %v817 = vpop.f32.mrb[0].mxu0
  %v818 = vadd.f32 %v144, %v817
  %v819 = vpop.f32.mrb[0].mxu0
  %820 = vmatprep.mubr.bf16.mxu0 0
  %821 = vmatmul.mubr.bf16.gmra.mrb[0].mxu0 %v778
  %v822 = vpop.f32.mrb[0].mxu0
  %v823 = vadd.f32 %v144, %v822
  %v824 = vpop.f32.mrb[0].mxu0
  %v825 = vpop.f32.mrb[0].mxu0
  %v826 = vadd.f32 %v144, %v825
  %v827 = vpop.f32.mrb[0].mxu0
  %828 = vdwg.mxu0
  %v829 = vmax.f32 %v815, 0.0
  %v830 = vmax.f32 %v818, 0.0
  %v831 = vmax.f32 %v823, 0.0
  %v832 = vmax.f32 %v826, 0.0
  %s833 = scalar_lea.vmem %s0, 192
  %v834 = vld [vmem:[%s833] sm:$0xff]
  %v835 = vld [vmem:[%s833 + $0x8] sm:$0xff]
  %v836 = vld [vmem:[%s833 + $0x10] sm:$0xff]
  %v837 = vld [vmem:[%s833 + $0x18] sm:$0xff]
  %v838 = vpack.c.bf16 %v835, %v834
  %v839 = vpack.c.bf16 %v837, %v836
  %v841 = vsel %vm78, %v838, 0
  %v844 = vsel %vm78, %v839, 0
  %846 = vmatprep.subr.bf16.mxu0 0
  %847 = vmatpush1.bf16.msra.mxu0 %v87
  %848 = vmatprep.subr.bf16.mxu0 0
  %849 = vmatpush1.bf16.msra.mxu0 0
  %850 = vmatprep.subr.bf16.mxu0 0
  %851 = vmatpush1.bf16.msra.mxu0 0
  %852 = vmatprep.subr.bf16.mxu0 0
  %853 = vmatpush1.bf16.msra.mxu0 0
  %854 = vmatprep.subr.bf16.mxu0 0
  %855 = vmatpush1.bf16.msra.mxu0 0
  %856 = vmatprep.subr.bf16.mxu0 0
  %857 = vmatpush1.bf16.msra.mxu0 0
  %858 = vmatprep.subr.bf16.mxu0 0
  %859 = vmatpush1.bf16.msra.mxu0 0
  %860 = vmatprep.subr.bf16.mxu0 0
  %861 = vmatpush1.bf16.msra.mxu0 0
  %862 = vmatprep.subr.bf16.mxu0 0
  %863 = vmatpush1.bf16.msra.mxu0 0
  %864 = vmatprep.subr.bf16.mxu0 0
  %865 = vmatpush1.bf16.msra.mxu0 0
  %866 = vmatprep.subr.bf16.mxu0 0
  %867 = vmatpush1.bf16.msra.mxu0 0
  %868 = vmatprep.subr.bf16.mxu0 0
  %869 = vmatpush1.bf16.msra.mxu0 0
  %870 = vmatprep.subr.bf16.mxu0 0
  %871 = vmatpush1.bf16.msra.mxu0 0
  %872 = vmatprep.subr.bf16.mxu0 0
  %873 = vmatpush1.bf16.msra.mxu0 0
  %874 = vmatprep.subr.bf16.mxu0 0
  %875 = vmatpush1.bf16.msra.mxu0 0
  %876 = vmatprep.subr.bf16.mxu0 0
  %877 = vmatpush1.bf16.msra.mxu0 0
  %878 = vmatprep.mubr.bf16.mxu0 0
  %879 = vmatmul.mubr.bf16.gmra.mrb[0].mxu0 %v841
  %v880 = vpop.f32.mrb[0].mxu0
  %v881 = vadd.f32 0.0, %v880
  %v882 = vpop.f32.mrb[0].mxu0
  %v883 = vpop.f32.mrb[0].mxu0
  %v884 = vadd.f32 0.0, %v883
  %v885 = vpop.f32.mrb[0].mxu0
  %886 = vmatprep.mubr.bf16.mxu0 0
  %887 = vmatmul.mubr.bf16.gmra.mrb[0].mxu0 %v844
  %v888 = vpop.f32.mrb[0].mxu0
  %v889 = vadd.f32 0.0, %v888
  %v890 = vpop.f32.mrb[0].mxu0
  %v891 = vpop.f32.mrb[0].mxu0
  %v892 = vadd.f32 0.0, %v891
  %v893 = vpop.f32.mrb[0].mxu0
  %894 = vdwg.mxu0
  %v895 = vpack.c.bf16 %v884, %v881
  %v896 = vpack.c.bf16 %v892, %v889
  %v898 = vsel %vm158, %v895, 0
  %v901 = vsel %vm158, %v896, 0
  %903 = vmatprep.subr.bf16.mxu0 0
  %904 = vmatpush1.bf16.msra.mxu0 %v154
  %905 = vmatprep.subr.bf16.mxu0 0
  %906 = vmatpush1.bf16.msra.mxu0 %v155
  %907 = vmatprep.subr.bf16.mxu0 0
  %908 = vmatpush1.bf16.msra.mxu0 0
  %909 = vmatprep.subr.bf16.mxu0 0
  %910 = vmatpush1.bf16.msra.mxu0 0
  %911 = vmatprep.subr.bf16.mxu0 0
  %912 = vmatpush1.bf16.msra.mxu0 0
  %913 = vmatprep.subr.bf16.mxu0 0
  %914 = vmatpush1.bf16.msra.mxu0 0
  %915 = vmatprep.subr.bf16.mxu0 0
  %916 = vmatpush1.bf16.msra.mxu0 0
  %917 = vmatprep.subr.bf16.mxu0 0
  %918 = vmatpush1.bf16.msra.mxu0 0
  %919 = vmatprep.subr.bf16.mxu0 0
  %920 = vmatpush1.bf16.msra.mxu0 0
  %921 = vmatprep.subr.bf16.mxu0 0
  %922 = vmatpush1.bf16.msra.mxu0 0
  %923 = vmatprep.subr.bf16.mxu0 0
  %924 = vmatpush1.bf16.msra.mxu0 0
  %925 = vmatprep.subr.bf16.mxu0 0
  %926 = vmatpush1.bf16.msra.mxu0 0
  %927 = vmatprep.subr.bf16.mxu0 0
  %928 = vmatpush1.bf16.msra.mxu0 0
  %929 = vmatprep.subr.bf16.mxu0 0
  %930 = vmatpush1.bf16.msra.mxu0 0
  %931 = vmatprep.subr.bf16.mxu0 0
  %932 = vmatpush1.bf16.msra.mxu0 0
  %933 = vmatprep.subr.bf16.mxu0 0
  %934 = vmatpush1.bf16.msra.mxu0 0
  %935 = vmatprep.mubr.bf16.mxu0 0
  %936 = vmatmul.mubr.bf16.gmra.mrb[0].mxu0 %v898
  %v937 = vpop.f32.mrb[0].mxu0
  %v938 = vadd.f32 %v144, %v937
  %v939 = vpop.f32.mrb[0].mxu0
  %v940 = vpop.f32.mrb[0].mxu0
  %v941 = vadd.f32 %v144, %v940
  %v942 = vpop.f32.mrb[0].mxu0
  %943 = vmatprep.mubr.bf16.mxu0 0
  %944 = vmatmul.mubr.bf16.gmra.mrb[0].mxu0 %v901
  %v945 = vpop.f32.mrb[0].mxu0
  %v946 = vadd.f32 %v144, %v945
  %v947 = vpop.f32.mrb[0].mxu0
  %v948 = vpop.f32.mrb[0].mxu0
  %v949 = vadd.f32 %v144, %v948
  %v950 = vpop.f32.mrb[0].mxu0
  %951 = vdwg.mxu0
  %v952 = vmax.f32 %v938, 0.0
  %v953 = vmax.f32 %v941, 0.0
  %v954 = vmax.f32 %v946, 0.0
  %v955 = vmax.f32 %v949, 0.0
  %s956 = scalar_lea.vmem %s0, 224
  %v957 = vld [vmem:[%s956] sm:$0xff]
  %v958 = vld [vmem:[%s956 + $0x8] sm:$0xff]
  %v959 = vld [vmem:[%s956 + $0x10] sm:$0xff]
  %v960 = vld [vmem:[%s956 + $0x18] sm:$0xff]
  %v961 = vpack.c.bf16 %v958, %v957
  %v962 = vpack.c.bf16 %v960, %v959
  %v964 = vsel %vm78, %v961, 0
  %v967 = vsel %vm78, %v962, 0
  %969 = vmatprep.subr.bf16.mxu0 0
  %970 = vmatpush1.bf16.msra.mxu0 %v87
  %971 = vmatprep.subr.bf16.mxu0 0
  %972 = vmatpush1.bf16.msra.mxu0 0
  %973 = vmatprep.subr.bf16.mxu0 0
  %974 = vmatpush1.bf16.msra.mxu0 0
  %975 = vmatprep.subr.bf16.mxu0 0
  %976 = vmatpush1.bf16.msra.mxu0 0
  %977 = vmatprep.subr.bf16.mxu0 0
  %978 = vmatpush1.bf16.msra.mxu0 0
  %979 = vmatprep.subr.bf16.mxu0 0
  %980 = vmatpush1.bf16.msra.mxu0 0
  %981 = vmatprep.subr.bf16.mxu0 0
  %982 = vmatpush1.bf16.msra.mxu0 0
  %983 = vmatprep.subr.bf16.mxu0 0
  %984 = vmatpush1.bf16.msra.mxu0 0
  %985 = vmatprep.subr.bf16.mxu0 0
  %986 = vmatpush1.bf16.msra.mxu0 0
  %987 = vmatprep.subr.bf16.mxu0 0
  %988 = vmatpush1.bf16.msra.mxu0 0
  %989 = vmatprep.subr.bf16.mxu0 0
  %990 = vmatpush1.bf16.msra.mxu0 0
  %991 = vmatprep.subr.bf16.mxu0 0
  %992 = vmatpush1.bf16.msra.mxu0 0
  %993 = vmatprep.subr.bf16.mxu0 0
  %994 = vmatpush1.bf16.msra.mxu0 0
  %995 = vmatprep.subr.bf16.mxu0 0
  %996 = vmatpush1.bf16.msra.mxu0 0
  %997 = vmatprep.subr.bf16.mxu0 0
  %998 = vmatpush1.bf16.msra.mxu0 0
  %999 = vmatprep.subr.bf16.mxu0 0
  %1000 = vmatpush1.bf16.msra.mxu0 0
  %1001 = vmatprep.mubr.bf16.mxu0 0
  %1002 = vmatmul.mubr.bf16.gmra.mrb[0].mxu0 %v964
  %v1003 = vpop.f32.mrb[0].mxu0
  %v1004 = vadd.f32 0.0, %v1003
  %v1005 = vpop.f32.mrb[0].mxu0
  %v1006 = vpop.f32.mrb[0].mxu0
  %v1007 = vadd.f32 0.0, %v1006
  %v1008 = vpop.f32.mrb[0].mxu0
  %1009 = vmatprep.mubr.bf16.mxu0 0
  %1010 = vmatmul.mubr.bf16.gmra.mrb[0].mxu0 %v967
  %v1011 = vpop.f32.mrb[0].mxu0
  %v1012 = vadd.f32 0.0, %v1011
  %v1013 = vpop.f32.mrb[0].mxu0
  %v1014 = vpop.f32.mrb[0].mxu0
  %v1015 = vadd.f32 0.0, %v1014
  %v1016 = vpop.f32.mrb[0].mxu0
  %1017 = vdwg.mxu0
  %v1018 = vpack.c.bf16 %v1007, %v1004
  %v1019 = vpack.c.bf16 %v1015, %v1012
  %v1021 = vsel %vm158, %v1018, 0
  %v1024 = vsel %vm158, %v1019, 0
  %1026 = vmatprep.subr.bf16.mxu0 0
  %1027 = vmatpush1.bf16.msra.mxu0 %v154
  %1028 = vmatprep.subr.bf16.mxu0 0
  %1029 = vmatpush1.bf16.msra.mxu0 %v155
  %1030 = vmatprep.subr.bf16.mxu0 0
  %1031 = vmatpush1.bf16.msra.mxu0 0
  %1032 = vmatprep.subr.bf16.mxu0 0
  %1033 = vmatpush1.bf16.msra.mxu0 0
  %1034 = vmatprep.subr.bf16.mxu0 0
  %1035 = vmatpush1.bf16.msra.mxu0 0
  %1036 = vmatprep.subr.bf16.mxu0 0
  %1037 = vmatpush1.bf16.msra.mxu0 0
  %1038 = vmatprep.subr.bf16.mxu0 0
  %1039 = vmatpush1.bf16.msra.mxu0 0
  %1040 = vmatprep.subr.bf16.mxu0 0
  %1041 = vmatpush1.bf16.msra.mxu0 0
  %1042 = vmatprep.subr.bf16.mxu0 0
  %1043 = vmatpush1.bf16.msra.mxu0 0
  %1044 = vmatprep.subr.bf16.mxu0 0
  %1045 = vmatpush1.bf16.msra.mxu0 0
  %1046 = vmatprep.subr.bf16.mxu0 0
  %1047 = vmatpush1.bf16.msra.mxu0 0
  %1048 = vmatprep.subr.bf16.mxu0 0
  %1049 = vmatpush1.bf16.msra.mxu0 0
  %1050 = vmatprep.subr.bf16.mxu0 0
  %1051 = vmatpush1.bf16.msra.mxu0 0
  %1052 = vmatprep.subr.bf16.mxu0 0
  %1053 = vmatpush1.bf16.msra.mxu0 0
  %1054 = vmatprep.subr.bf16.mxu0 0
  %1055 = vmatpush1.bf16.msra.mxu0 0
  %1056 = vmatprep.subr.bf16.mxu0 0
  %1057 = vmatpush1.bf16.msra.mxu0 0
  %1058 = vmatprep.mubr.bf16.mxu0 0
  %1059 = vmatmul.mubr.bf16.gmra.mrb[0].mxu0 %v1021
  %v1060 = vpop.f32.mrb[0].mxu0
  %v1061 = vadd.f32 %v144, %v1060
  %v1062 = vpop.f32.mrb[0].mxu0
  %v1063 = vpop.f32.mrb[0].mxu0
  %v1064 = vadd.f32 %v144, %v1063
  %v1065 = vpop.f32.mrb[0].mxu0
  %1066 = vmatprep.mubr.bf16.mxu0 0
  %1067 = vmatmul.mubr.bf16.gmra.mrb[0].mxu0 %v1024
  %v1068 = vpop.f32.mrb[0].mxu0
  %v1069 = vadd.f32 %v144, %v1068
  %v1070 = vpop.f32.mrb[0].mxu0
  %v1071 = vpop.f32.mrb[0].mxu0
  %v1072 = vadd.f32 %v144, %v1071
  %v1073 = vpop.f32.mrb[0].mxu0
  %1074 = vdwg.mxu0
  %v1075 = vmax.f32 %v1061, 0.0
  %v1076 = vmax.f32 %v1064, 0.0
  %v1077 = vmax.f32 %v1069, 0.0
  %v1078 = vmax.f32 %v1072, 0.0
  %v1079 = vmax.f32 %v214, %v337
  %v1080 = vmax.f32 %v215, %v338
  %v1081 = vmax.f32 %v216, %v339
  %v1082 = vmax.f32 %v217, %v340
  %v1083 = vmax.f32 %v1079, %v460
  %v1084 = vmax.f32 %v1080, %v461
  %v1085 = vmax.f32 %v1081, %v462
  %v1086 = vmax.f32 %v1082, %v463
  %v1087 = vmax.f32 %v1083, %v583
  %v1088 = vmax.f32 %v1084, %v584
  %v1089 = vmax.f32 %v1085, %v585
  %v1090 = vmax.f32 %v1086, %v586
  %v1091 = vmax.f32 %v1087, %v706
  %v1092 = vmax.f32 %v1088, %v707
  %v1093 = vmax.f32 %v1089, %v708
  %v1094 = vmax.f32 %v1090, %v709
  %v1095 = vmax.f32 %v1091, %v829
  %v1096 = vmax.f32 %v1092, %v830
  %v1097 = vmax.f32 %v1093, %v831
  %v1098 = vmax.f32 %v1094, %v832
  %v1099 = vmax.f32 %v1095, %v952
  %v1100 = vmax.f32 %v1096, %v953
  %v1101 = vmax.f32 %v1097, %v954
  %v1102 = vmax.f32 %v1098, %v955
  %v1103 = vmax.f32 %v1099, %v1075
  %v1104 = vmax.f32 %v1100, %v1076
  %v1105 = vmax.f32 %v1101, %v1077
  %v1106 = vmax.f32 %v1102, %v1078
  %v1107 = vpack.c.bf16 %v1104, %v1103
  %v1108 = vpack.c.bf16 %v1106, %v1105
  %v1113 = vunpack.c.l.b16 %v56
  %v1114 = vunpack.c.l.b16 %v57
  %v1115 = vunpack.c.l.b16 %v58
  %v1116 = vunpack.c.l.b16 %v59
  %v1117 = vpack.c.b16 %v1114, %v1113
  %v1118 = vpack.c.b16 %v1116, %v1115
  %v1122 = vsel %vm158, %v1107, 0
  %v1125 = vsel %vm158, %v1108, 0
  %1127 = vmatprep.subr.bf16.mxu0 0
  %1128 = vmatpush1.bf16.msra.mxu0 %v1117
  %1129 = vmatprep.subr.bf16.mxu0 0
  %1130 = vmatpush1.bf16.msra.mxu0 %v1118
  %1131 = vmatprep.subr.bf16.mxu0 0
  %1132 = vmatpush1.bf16.msra.mxu0 0
  %1133 = vmatprep.subr.bf16.mxu0 0
  %1134 = vmatpush1.bf16.msra.mxu0 0
  %1135 = vmatprep.subr.bf16.mxu0 0
  %1136 = vmatpush1.bf16.msra.mxu0 0
  %1137 = vmatprep.subr.bf16.mxu0 0
  %1138 = vmatpush1.bf16.msra.mxu0 0
  %1139 = vmatprep.subr.bf16.mxu0 0
  %1140 = vmatpush1.bf16.msra.mxu0 0
  %1141 = vmatprep.subr.bf16.mxu0 0
  %1142 = vmatpush1.bf16.msra.mxu0 0
  %1143 = vmatprep.subr.bf16.mxu0 0
  %1144 = vmatpush1.bf16.msra.mxu0 0
  %1145 = vmatprep.subr.bf16.mxu0 0
  %1146 = vmatpush1.bf16.msra.mxu0 0
  %1147 = vmatprep.subr.bf16.mxu0 0
  %1148 = vmatpush1.bf16.msra.mxu0 0
  %1149 = vmatprep.subr.bf16.mxu0 0
  %1150 = vmatpush1.bf16.msra.mxu0 0
  %1151 = vmatprep.subr.bf16.mxu0 0
  %1152 = vmatpush1.bf16.msra.mxu0 0
  %1153 = vmatprep.subr.bf16.mxu0 0
  %1154 = vmatpush1.bf16.msra.mxu0 0
  %1155 = vmatprep.subr.bf16.mxu0 0
  %1156 = vmatpush1.bf16.msra.mxu0 0
  %1157 = vmatprep.subr.bf16.mxu0 0
  %1158 = vmatpush1.bf16.msra.mxu0 0
  %1159 = vmatprep.mubr.bf16.mxu0 0
  %1160 = vmatmul.mubr.bf16.gmra.mrb[0].mxu0 %v1122
  %v1161 = vpop.f32.mrb[0].mxu0
  %v1162 = vadd.f32 0.0, %v1161
  %v1163 = vpop.f32.mrb[0].mxu0
  %v1164 = vpop.f32.mrb[0].mxu0
  %v1165 = vadd.f32 0.0, %v1164
  %v1166 = vpop.f32.mrb[0].mxu0
  %1167 = vmatprep.mubr.bf16.mxu0 0
  %1168 = vmatmul.mubr.bf16.gmra.mrb[0].mxu0 %v1125
  %v1169 = vpop.f32.mrb[0].mxu0
  %v1170 = vadd.f32 0.0, %v1169
  %v1171 = vpop.f32.mrb[0].mxu0
  %v1172 = vpop.f32.mrb[0].mxu0
  %v1173 = vadd.f32 0.0, %v1172
  %v1174 = vpop.f32.mrb[0].mxu0
  %1175 = vdwg.mxu0
  %v1176 = vpack.c.bf16 %v215, %v214
  %v1177 = vpack.c.bf16 %v217, %v216
  %v1182 = vunpack.c.l.b16 %v60
  %v1183 = vunpack.c.l.b16 %v61
  %v1184 = vunpack.c.l.b16 %v62
  %v1185 = vunpack.c.l.b16 %v63
  %v1186 = vpack.c.b16 %v1183, %v1182
  %v1187 = vpack.c.b16 %v1185, %v1184
  %v1191 = vsel %vm158, %v1176, 0
  %v1194 = vsel %vm158, %v1177, 0
  %1196 = vmatprep.subr.bf16.mxu0 0
  %1197 = vmatpush1.bf16.msra.mxu0 %v1186
  %1198 = vmatprep.subr.bf16.mxu0 0
  %1199 = vmatpush1.bf16.msra.mxu0 %v1187
  %1200 = vmatprep.subr.bf16.mxu0 0
  %1201 = vmatpush1.bf16.msra.mxu0 0
  %1202 = vmatprep.subr.bf16.mxu0 0
  %1203 = vmatpush1.bf16.msra.mxu0 0
  %1204 = vmatprep.subr.bf16.mxu0 0
  %1205 = vmatpush1.bf16.msra.mxu0 0
  %1206 = vmatprep.subr.bf16.mxu0 0
  %1207 = vmatpush1.bf16.msra.mxu0 0
  %1208 = vmatprep.subr.bf16.mxu0 0
  %1209 = vmatpush1.bf16.msra.mxu0 0
  %1210 = vmatprep.subr.bf16.mxu0 0
  %1211 = vmatpush1.bf16.msra.mxu0 0
  %1212 = vmatprep.subr.bf16.mxu0 0
  %1213 = vmatpush1.bf16.msra.mxu0 0
  %1214 = vmatprep.subr.bf16.mxu0 0
  %1215 = vmatpush1.bf16.msra.mxu0 0
  %1216 = vmatprep.subr.bf16.mxu0 0
  %1217 = vmatpush1.bf16.msra.mxu0 0
  %1218 = vmatprep.subr.bf16.mxu0 0
  %1219 = vmatpush1.bf16.msra.mxu0 0
  %1220 = vmatprep.subr.bf16.mxu0 0
  %1221 = vmatpush1.bf16.msra.mxu0 0
  %1222 = vmatprep.subr.bf16.mxu0 0
  %1223 = vmatpush1.bf16.msra.mxu0 0
  %1224 = vmatprep.subr.bf16.mxu0 0
  %1225 = vmatpush1.bf16.msra.mxu0 0
  %1226 = vmatprep.subr.bf16.mxu0 0
  %1227 = vmatpush1.bf16.msra.mxu0 0
  %1228 = vmatprep.mubr.bf16.mxu0 0
  %1229 = vmatmul.mubr.bf16.gmra.mrb[0].mxu0 %v1191
  %v1230 = vpop.f32.mrb[0].mxu0
  %v1231 = vadd.f32 0.0, %v1230
  %v1232 = vpop.f32.mrb[0].mxu0
  %v1233 = vpop.f32.mrb[0].mxu0
  %v1234 = vadd.f32 0.0, %v1233
  %v1235 = vpop.f32.mrb[0].mxu0
  %1236 = vmatprep.mubr.bf16.mxu0 0
  %1237 = vmatmul.mubr.bf16.gmra.mrb[0].mxu0 %v1194
  %v1238 = vpop.f32.mrb[0].mxu0
  %v1239 = vadd.f32 0.0, %v1238
  %v1240 = vpop.f32.mrb[0].mxu0
  %v1241 = vpop.f32.mrb[0].mxu0
  %v1242 = vadd.f32 0.0, %v1241
  %v1243 = vpop.f32.mrb[0].mxu0
  %1244 = vdwg.mxu0
  %v1245 = vadd.f32 %v1162, %v1231
  %v1246 = vadd.f32 %v1165, %v1234
  %v1247 = vadd.f32 %v1170, %v1239
  %v1248 = vadd.f32 %v1173, %v1242
  %v1249 = vmax.f32 %v1245, 0.0
  %v1250 = vmax.f32 %v1246, 0.0
  %v1251 = vmax.f32 %v1247, 0.0
  %v1252 = vmax.f32 %v1248, 0.0
  %v1253 = vpack.c.bf16 %v1250, %v1249
  %v1254 = vpack.c.bf16 %v1252, %v1251
  %v1263 = vunpack.c.l.b16 %v64
  %v1264 = vunpack.c.l.b16 %v65
  %v1265 = vunpack.c.l.b16 %v66
  %v1266 = vunpack.c.l.b16 %v67
  %v1267 = vunpack.c.l.b16 %v68
  %v1268 = vunpack.c.l.b16 %v69
  %v1269 = vunpack.c.l.b16 %v70
  %v1270 = vunpack.c.l.b16 %v71
  %v1271 = vpack.c.b16 %v1264, %v1263
  %v1272 = vpack.c.b16 %v1266, %v1265
  %v1273 = vpack.c.b16 %v1268, %v1267
  %v1274 = vpack.c.b16 %v1270, %v1269
  %vm1279 = vcmask 523264
  %v1281 = vsel %vm1279, %v1253, 0
  %v1284 = vsel %vm1279, %v1254, 0
  %1286 = vmatprep.subr.bf16.mxu0 0
  %1287 = vmatpush1.bf16.msra.mxu0 %v1271
  %1288 = vmatprep.subr.bf16.mxu0 0
  %1289 = vmatpush1.bf16.msra.mxu0 %v1272
  %1290 = vmatprep.subr.bf16.mxu0 0
  %1291 = vmatpush1.bf16.msra.mxu0 %v1273
  %1292 = vmatprep.subr.bf16.mxu0 0
  %1293 = vmatpush1.bf16.msra.mxu0 %v1274
  %1294 = vmatprep.subr.bf16.mxu0 0
  %1295 = vmatpush1.bf16.msra.mxu0 0
  %1296 = vmatprep.subr.bf16.mxu0 0
  %1297 = vmatpush1.bf16.msra.mxu0 0
  %1298 = vmatprep.subr.bf16.mxu0 0
  %1299 = vmatpush1.bf16.msra.mxu0 0
  %1300 = vmatprep.subr.bf16.mxu0 0
  %1301 = vmatpush1.bf16.msra.mxu0 0
  %1302 = vmatprep.subr.bf16.mxu0 0
  %1303 = vmatpush1.bf16.msra.mxu0 0
  %1304 = vmatprep.subr.bf16.mxu0 0
  %1305 = vmatpush1.bf16.msra.mxu0 0
  %1306 = vmatprep.subr.bf16.mxu0 0
  %1307 = vmatpush1.bf16.msra.mxu0 0
  %1308 = vmatprep.subr.bf16.mxu0 0
  %1309 = vmatpush1.bf16.msra.mxu0 0
  %1310 = vmatprep.subr.bf16.mxu0 0
  %1311 = vmatpush1.bf16.msra.mxu0 0
  %1312 = vmatprep.subr.bf16.mxu0 0
  %1313 = vmatpush1.bf16.msra.mxu0 0
  %1314 = vmatprep.subr.bf16.mxu0 0
  %1315 = vmatpush1.bf16.msra.mxu0 0
  %1316 = vmatprep.subr.bf16.mxu0 0
  %1317 = vmatpush1.bf16.msra.mxu0 0
  %1318 = vmatprep.mubr.bf16.mxu0 0
  %1319 = vmatmul.mubr.bf16.gmra.mrb[0].mxu0 %v1281
  %v1320 = vpop.f32.mrb[0].mxu0
  %v1321 = vadd.f32 0.0, %v1320
  %v1322 = vpop.f32.mrb[0].mxu0
  %v1323 = vpop.f32.mrb[0].mxu0
  %v1324 = vadd.f32 0.0, %v1323
  %v1325 = vpop.f32.mrb[0].mxu0
  %1326 = vmatprep.mubr.bf16.mxu0 0
  %1327 = vmatmul.mubr.bf16.gmra.mrb[0].mxu0 %v1284
  %v1328 = vpop.f32.mrb[0].mxu0
  %v1329 = vadd.f32 0.0, %v1328
  %v1330 = vpop.f32.mrb[0].mxu0
  %v1331 = vpop.f32.mrb[0].mxu0
  %v1332 = vadd.f32 0.0, %v1331
  %v1333 = vpop.f32.mrb[0].mxu0
  %1334 = vdwg.mxu0
  %v1335 = vmax.f32 %v1321, 0.0
  %v1336 = vmax.f32 %v1324, 0.0
  %v1337 = vmax.f32 %v1329, 0.0
  %v1338 = vmax.f32 %v1332, 0.0
  %v1339 = vpack.c.bf16 %v338, %v337
  %v1340 = vpack.c.bf16 %v340, %v339
  %v1342 = vsel %vm158, %v1339, 0
  %v1345 = vsel %vm158, %v1340, 0
  %1347 = vmatprep.subr.bf16.mxu0 0
  %1348 = vmatpush1.bf16.msra.mxu0 %v1186
  %1349 = vmatprep.subr.bf16.mxu0 0
  %1350 = vmatpush1.bf16.msra.mxu0 %v1187
  %1351 = vmatprep.subr.bf16.mxu0 0
  %1352 = vmatpush1.bf16.msra.mxu0 0
  %1353 = vmatprep.subr.bf16.mxu0 0
  %1354 = vmatpush1.bf16.msra.mxu0 0
  %1355 = vmatprep.subr.bf16.mxu0 0
  %1356 = vmatpush1.bf16.msra.mxu0 0
  %1357 = vmatprep.subr.bf16.mxu0 0
  %1358 = vmatpush1.bf16.msra.mxu0 0
  %1359 = vmatprep.subr.bf16.mxu0 0
  %1360 = vmatpush1.bf16.msra.mxu0 0
  %1361 = vmatprep.subr.bf16.mxu0 0
  %1362 = vmatpush1.bf16.msra.mxu0 0
  %1363 = vmatprep.subr.bf16.mxu0 0
  %1364 = vmatpush1.bf16.msra.mxu0 0
  %1365 = vmatprep.subr.bf16.mxu0 0
  %1366 = vmatpush1.bf16.msra.mxu0 0
  %1367 = vmatprep.subr.bf16.mxu0 0
  %1368 = vmatpush1.bf16.msra.mxu0 0
  %1369 = vmatprep.subr.bf16.mxu0 0
  %1370 = vmatpush1.bf16.msra.mxu0 0
  %1371 = vmatprep.subr.bf16.mxu0 0
  %1372 = vmatpush1.bf16.msra.mxu0 0
  %1373 = vmatprep.subr.bf16.mxu0 0
  %1374 = vmatpush1.bf16.msra.mxu0 0
  %1375 = vmatprep.subr.bf16.mxu0 0
  %1376 = vmatpush1.bf16.msra.mxu0 0
  %1377 = vmatprep.subr.bf16.mxu0 0
  %1378 = vmatpush1.bf16.msra.mxu0 0
  %1379 = vmatprep.mubr.bf16.mxu0 0
  %1380 = vmatmul.mubr.bf16.gmra.mrb[0].mxu0 %v1342
  %v1381 = vpop.f32.mrb[0].mxu0
  %v1382 = vadd.f32 0.0, %v1381
  %v1383 = vpop.f32.mrb[0].mxu0
  %v1384 = vpop.f32.mrb[0].mxu0
  %v1385 = vadd.f32 0.0, %v1384
  %v1386 = vpop.f32.mrb[0].mxu0
  %1387 = vmatprep.mubr.bf16.mxu0 0
  %1388 = vmatmul.mubr.bf16.gmra.mrb[0].mxu0 %v1345
  %v1389 = vpop.f32.mrb[0].mxu0
  %v1390 = vadd.f32 0.0, %v1389
  %v1391 = vpop.f32.mrb[0].mxu0
  %v1392 = vpop.f32.mrb[0].mxu0
  %v1393 = vadd.f32 0.0, %v1392
  %v1394 = vpop.f32.mrb[0].mxu0
  %1395 = vdwg.mxu0
  %v1396 = vadd.f32 %v1162, %v1382
  %v1397 = vadd.f32 %v1165, %v1385
  %v1398 = vadd.f32 %v1170, %v1390
  %v1399 = vadd.f32 %v1173, %v1393
  %v1400 = vmax.f32 %v1396, 0.0
  %v1401 = vmax.f32 %v1397, 0.0
  %v1402 = vmax.f32 %v1398, 0.0
  %v1403 = vmax.f32 %v1399, 0.0
  %v1404 = vpack.c.bf16 %v1401, %v1400
  %v1405 = vpack.c.bf16 %v1403, %v1402
  %v1407 = vsel %vm1279, %v1404, 0
  %v1410 = vsel %vm1279, %v1405, 0
  %1412 = vmatprep.subr.bf16.mxu0 0
  %1413 = vmatpush1.bf16.msra.mxu0 %v1271
  %1414 = vmatprep.subr.bf16.mxu0 0
  %1415 = vmatpush1.bf16.msra.mxu0 %v1272
  %1416 = vmatprep.subr.bf16.mxu0 0
  %1417 = vmatpush1.bf16.msra.mxu0 %v1273
  %1418 = vmatprep.subr.bf16.mxu0 0
  %1419 = vmatpush1.bf16.msra.mxu0 %v1274
  %1420 = vmatprep.subr.bf16.mxu0 0
  %1421 = vmatpush1.bf16.msra.mxu0 0
  %1422 = vmatprep.subr.bf16.mxu0 0
  %1423 = vmatpush1.bf16.msra.mxu0 0
  %1424 = vmatprep.subr.bf16.mxu0 0
  %1425 = vmatpush1.bf16.msra.mxu0 0
  %1426 = vmatprep.subr.bf16.mxu0 0
  %1427 = vmatpush1.bf16.msra.mxu0 0
  %1428 = vmatprep.subr.bf16.mxu0 0
  %1429 = vmatpush1.bf16.msra.mxu0 0
  %1430 = vmatprep.subr.bf16.mxu0 0
  %1431 = vmatpush1.bf16.msra.mxu0 0
  %1432 = vmatprep.subr.bf16.mxu0 0
  %1433 = vmatpush1.bf16.msra.mxu0 0
  %1434 = vmatprep.subr.bf16.mxu0 0
  %1435 = vmatpush1.bf16.msra.mxu0 0
  %1436 = vmatprep.subr.bf16.mxu0 0
  %1437 = vmatpush1.bf16.msra.mxu0 0
  %1438 = vmatprep.subr.bf16.mxu0 0
  %1439 = vmatpush1.bf16.msra.mxu0 0
  %1440 = vmatprep.subr.bf16.mxu0 0
  %1441 = vmatpush1.bf16.msra.mxu0 0
  %1442 = vmatprep.subr.bf16.mxu0 0
  %1443 = vmatpush1.bf16.msra.mxu0 0
  %1444 = vmatprep.mubr.bf16.mxu0 0
  %1445 = vmatmul.mubr.bf16.gmra.mrb[0].mxu0 %v1407
  %v1446 = vpop.f32.mrb[0].mxu0
  %v1447 = vadd.f32 0.0, %v1446
  %v1448 = vpop.f32.mrb[0].mxu0
  %v1449 = vpop.f32.mrb[0].mxu0
  %v1450 = vadd.f32 0.0, %v1449
  %v1451 = vpop.f32.mrb[0].mxu0
  %1452 = vmatprep.mubr.bf16.mxu0 0
  %1453 = vmatmul.mubr.bf16.gmra.mrb[0].mxu0 %v1410
  %v1454 = vpop.f32.mrb[0].mxu0
  %v1455 = vadd.f32 0.0, %v1454
  %v1456 = vpop.f32.mrb[0].mxu0
  %v1457 = vpop.f32.mrb[0].mxu0
  %v1458 = vadd.f32 0.0, %v1457
  %v1459 = vpop.f32.mrb[0].mxu0
  %1460 = vdwg.mxu0
  %v1461 = vmax.f32 %v1447, 0.0
  %v1462 = vmax.f32 %v1450, 0.0
  %v1463 = vmax.f32 %v1455, 0.0
  %v1464 = vmax.f32 %v1458, 0.0
  %v1465 = vmax.f32 %v1335, %v1461
  %v1466 = vmax.f32 %v1336, %v1462
  %v1467 = vmax.f32 %v1337, %v1463
  %v1468 = vmax.f32 %v1338, %v1464
  %v1469 = vpack.c.bf16 %v461, %v460
  %v1470 = vpack.c.bf16 %v463, %v462
  %v1472 = vsel %vm158, %v1469, 0
  %v1475 = vsel %vm158, %v1470, 0
  %1477 = vmatprep.subr.bf16.mxu0 0
  %1478 = vmatpush1.bf16.msra.mxu0 %v1186
  %1479 = vmatprep.subr.bf16.mxu0 0
  %1480 = vmatpush1.bf16.msra.mxu0 %v1187
  %1481 = vmatprep.subr.bf16.mxu0 0
  %1482 = vmatpush1.bf16.msra.mxu0 0
  %1483 = vmatprep.subr.bf16.mxu0 0
  %1484 = vmatpush1.bf16.msra.mxu0 0
  %1485 = vmatprep.subr.bf16.mxu0 0
  %1486 = vmatpush1.bf16.msra.mxu0 0
  %1487 = vmatprep.subr.bf16.mxu0 0
  %1488 = vmatpush1.bf16.msra.mxu0 0
  %1489 = vmatprep.subr.bf16.mxu0 0
  %1490 = vmatpush1.bf16.msra.mxu0 0
  %1491 = vmatprep.subr.bf16.mxu0 0
  %1492 = vmatpush1.bf16.msra.mxu0 0
  %1493 = vmatprep.subr.bf16.mxu0 0
  %1494 = vmatpush1.bf16.msra.mxu0 0
  %1495 = vmatprep.subr.bf16.mxu0 0
  %1496 = vmatpush1.bf16.msra.mxu0 0
  %1497 = vmatprep.subr.bf16.mxu0 0
  %1498 = vmatpush1.bf16.msra.mxu0 0
  %1499 = vmatprep.subr.bf16.mxu0 0
  %1500 = vmatpush1.bf16.msra.mxu0 0
  %1501 = vmatprep.subr.bf16.mxu0 0
  %1502 = vmatpush1.bf16.msra.mxu0 0
  %1503 = vmatprep.subr.bf16.mxu0 0
  %1504 = vmatpush1.bf16.msra.mxu0 0
  %1505 = vmatprep.subr.bf16.mxu0 0
  %1506 = vmatpush1.bf16.msra.mxu0 0
  %1507 = vmatprep.subr.bf16.mxu0 0
  %1508 = vmatpush1.bf16.msra.mxu0 0
  %1509 = vmatprep.mubr.bf16.mxu0 0
  %1510 = vmatmul.mubr.bf16.gmra.mrb[0].mxu0 %v1472
  %v1511 = vpop.f32.mrb[0].mxu0
  %v1512 = vadd.f32 0.0, %v1511
  %v1513 = vpop.f32.mrb[0].mxu0
  %v1514 = vpop.f32.mrb[0].mxu0
  %v1515 = vadd.f32 0.0, %v1514
  %v1516 = vpop.f32.mrb[0].mxu0
  %1517 = vmatprep.mubr.bf16.mxu0 0
  %1518 = vmatmul.mubr.bf16.gmra.mrb[0].mxu0 %v1475
  %v1519 = vpop.f32.mrb[0].mxu0
  %v1520 = vadd.f32 0.0, %v1519
  %v1521 = vpop.f32.mrb[0].mxu0
  %v1522 = vpop.f32.mrb[0].mxu0
  %v1523 = vadd.f32 0.0, %v1522
  %v1524 = vpop.f32.mrb[0].mxu0
  %1525 = vdwg.mxu0
  %v1526 = vadd.f32 %v1162, %v1512
  %v1527 = vadd.f32 %v1165, %v1515
  %v1528 = vadd.f32 %v1170, %v1520
  %v1529 = vadd.f32 %v1173, %v1523
  %v1530 = vmax.f32 %v1526, 0.0
  %v1531 = vmax.f32 %v1527, 0.0
  %v1532 = vmax.f32 %v1528, 0.0
  %v1533 = vmax.f32 %v1529, 0.0
  %v1534 = vpack.c.bf16 %v1531, %v1530
  %v1535 = vpack.c.bf16 %v1533, %v1532
  %v1537 = vsel %vm1279, %v1534, 0
  %v1540 = vsel %vm1279, %v1535, 0
  %1542 = vmatprep.subr.bf16.mxu0 0
  %1543 = vmatpush1.bf16.msra.mxu0 %v1271
  %1544 = vmatprep.subr.bf16.mxu0 0
  %1545 = vmatpush1.bf16.msra.mxu0 %v1272
  %1546 = vmatprep.subr.bf16.mxu0 0
  %1547 = vmatpush1.bf16.msra.mxu0 %v1273
  %1548 = vmatprep.subr.bf16.mxu0 0
  %1549 = vmatpush1.bf16.msra.mxu0 %v1274
  %1550 = vmatprep.subr.bf16.mxu0 0
  %1551 = vmatpush1.bf16.msra.mxu0 0
  %1552 = vmatprep.subr.bf16.mxu0 0
  %1553 = vmatpush1.bf16.msra.mxu0 0
  %1554 = vmatprep.subr.bf16.mxu0 0
  %1555 = vmatpush1.bf16.msra.mxu0 0
  %1556 = vmatprep.subr.bf16.mxu0 0
  %1557 = vmatpush1.bf16.msra.mxu0 0
  %1558 = vmatprep.subr.bf16.mxu0 0
  %1559 = vmatpush1.bf16.msra.mxu0 0
  %1560 = vmatprep.subr.bf16.mxu0 0
  %1561 = vmatpush1.bf16.msra.mxu0 0
  %1562 = vmatprep.subr.bf16.mxu0 0
  %1563 = vmatpush1.bf16.msra.mxu0 0
  %1564 = vmatprep.subr.bf16.mxu0 0
  %1565 = vmatpush1.bf16.msra.mxu0 0
  %1566 = vmatprep.subr.bf16.mxu0 0
  %1567 = vmatpush1.bf16.msra.mxu0 0
  %1568 = vmatprep.subr.bf16.mxu0 0
  %1569 = vmatpush1.bf16.msra.mxu0 0
  %1570 = vmatprep.subr.bf16.mxu0 0
  %1571 = vmatpush1.bf16.msra.mxu0 0
  %1572 = vmatprep.subr.bf16.mxu0 0
  %1573 = vmatpush1.bf16.msra.mxu0 0
  %1574 = vmatprep.mubr.bf16.mxu0 0
  %1575 = vmatmul.mubr.bf16.gmra.mrb[0].mxu0 %v1537
  %v1576 = vpop.f32.mrb[0].mxu0
  %v1577 = vadd.f32 0.0, %v1576
  %v1578 = vpop.f32.mrb[0].mxu0
  %v1579 = vpop.f32.mrb[0].mxu0
  %v1580 = vadd.f32 0.0, %v1579
  %v1581 = vpop.f32.mrb[0].mxu0
  %1582 = vmatprep.mubr.bf16.mxu0 0
  %1583 = vmatmul.mubr.bf16.gmra.mrb[0].mxu0 %v1540
  %v1584 = vpop.f32.mrb[0].mxu0
  %v1585 = vadd.f32 0.0, %v1584
  %v1586 = vpop.f32.mrb[0].mxu0
  %v1587 = vpop.f32.mrb[0].mxu0
  %v1588 = vadd.f32 0.0, %v1587
  %v1589 = vpop.f32.mrb[0].mxu0
  %1590 = vdwg.mxu0
  %v1591 = vmax.f32 %v1577, 0.0
  %v1592 = vmax.f32 %v1580, 0.0
  %v1593 = vmax.f32 %v1585, 0.0
  %v1594 = vmax.f32 %v1588, 0.0
  %v1595 = vmax.f32 %v1465, %v1591
  %v1596 = vmax.f32 %v1466, %v1592
  %v1597 = vmax.f32 %v1467, %v1593
  %v1598 = vmax.f32 %v1468, %v1594
  %v1599 = vpack.c.bf16 %v584, %v583
  %v1600 = vpack.c.bf16 %v586, %v585
  %v1602 = vsel %vm158, %v1599, 0
  %v1605 = vsel %vm158, %v1600, 0
  %1607 = vmatprep.subr.bf16.mxu0 0
  %1608 = vmatpush1.bf16.msra.mxu0 %v1186
  %1609 = vmatprep.subr.bf16.mxu0 0
  %1610 = vmatpush1.bf16.msra.mxu0 %v1187
  %1611 = vmatprep.subr.bf16.mxu0 0
  %1612 = vmatpush1.bf16.msra.mxu0 0
  %1613 = vmatprep.subr.bf16.mxu0 0
  %1614 = vmatpush1.bf16.msra.mxu0 0
  %1615 = vmatprep.subr.bf16.mxu0 0
  %1616 = vmatpush1.bf16.msra.mxu0 0
  %1617 = vmatprep.subr.bf16.mxu0 0
  %1618 = vmatpush1.bf16.msra.mxu0 0
  %1619 = vmatprep.subr.bf16.mxu0 0
  %1620 = vmatpush1.bf16.msra.mxu0 0
  %1621 = vmatprep.subr.bf16.mxu0 0
  %1622 = vmatpush1.bf16.msra.mxu0 0
  %1623 = vmatprep.subr.bf16.mxu0 0
  %1624 = vmatpush1.bf16.msra.mxu0 0
  %1625 = vmatprep.subr.bf16.mxu0 0
  %1626 = vmatpush1.bf16.msra.mxu0 0
  %1627 = vmatprep.subr.bf16.mxu0 0
  %1628 = vmatpush1.bf16.msra.mxu0 0
  %1629 = vmatprep.subr.bf16.mxu0 0
  %1630 = vmatpush1.bf16.msra.mxu0 0
  %1631 = vmatprep.subr.bf16.mxu0 0
  %1632 = vmatpush1.bf16.msra.mxu0 0
  %1633 = vmatprep.subr.bf16.mxu0 0
  %1634 = vmatpush1.bf16.msra.mxu0 0
  %1635 = vmatprep.subr.bf16.mxu0 0
  %1636 = vmatpush1.bf16.msra.mxu0 0
  %1637 = vmatprep.subr.bf16.mxu0 0
  %1638 = vmatpush1.bf16.msra.mxu0 0
  %1639 = vmatprep.mubr.bf16.mxu0 0
  %1640 = vmatmul.mubr.bf16.gmra.mrb[0].mxu0 %v1602
  %v1641 = vpop.f32.mrb[0].mxu0
  %v1642 = vadd.f32 0.0, %v1641
  %v1643 = vpop.f32.mrb[0].mxu0
  %v1644 = vpop.f32.mrb[0].mxu0
  %v1645 = vadd.f32 0.0, %v1644
  %v1646 = vpop.f32.mrb[0].mxu0
  %1647 = vmatprep.mubr.bf16.mxu0 0
  %1648 = vmatmul.mubr.bf16.gmra.mrb[0].mxu0 %v1605
  %v1649 = vpop.f32.mrb[0].mxu0
  %v1650 = vadd.f32 0.0, %v1649
  %v1651 = vpop.f32.mrb[0].mxu0
  %v1652 = vpop.f32.mrb[0].mxu0
  %v1653 = vadd.f32 0.0, %v1652
  %v1654 = vpop.f32.mrb[0].mxu0
  %1655 = vdwg.mxu0
  %v1656 = vadd.f32 %v1162, %v1642
  %v1657 = vadd.f32 %v1165, %v1645
  %v1658 = vadd.f32 %v1170, %v1650
  %v1659 = vadd.f32 %v1173, %v1653
  %v1660 = vmax.f32 %v1656, 0.0
  %v1661 = vmax.f32 %v1657, 0.0
  %v1662 = vmax.f32 %v1658, 0.0
  %v1663 = vmax.f32 %v1659, 0.0
  %v1664 = vpack.c.bf16 %v1661, %v1660
  %v1665 = vpack.c.bf16 %v1663, %v1662
  %v1667 = vsel %vm1279, %v1664, 0
  %v1670 = vsel %vm1279, %v1665, 0
  %1672 = vmatprep.subr.bf16.mxu0 0
  %1673 = vmatpush1.bf16.msra.mxu0 %v1271
  %1674 = vmatprep.subr.bf16.mxu0 0
  %1675 = vmatpush1.bf16.msra.mxu0 %v1272
  %1676 = vmatprep.subr.bf16.mxu0 0
  %1677 = vmatpush1.bf16.msra.mxu0 %v1273
  %1678 = vmatprep.subr.bf16.mxu0 0
  %1679 = vmatpush1.bf16.msra.mxu0 %v1274
  %1680 = vmatprep.subr.bf16.mxu0 0
  %1681 = vmatpush1.bf16.msra.mxu0 0
  %1682 = vmatprep.subr.bf16.mxu0 0
  %1683 = vmatpush1.bf16.msra.mxu0 0
  %1684 = vmatprep.subr.bf16.mxu0 0
  %1685 = vmatpush1.bf16.msra.mxu0 0
  %1686 = vmatprep.subr.bf16.mxu0 0
  %1687 = vmatpush1.bf16.msra.mxu0 0
  %1688 = vmatprep.subr.bf16.mxu0 0
  %1689 = vmatpush1.bf16.msra.mxu0 0
  %1690 = vmatprep.subr.bf16.mxu0 0
  %1691 = vmatpush1.bf16.msra.mxu0 0
  %1692 = vmatprep.subr.bf16.mxu0 0
  %1693 = vmatpush1.bf16.msra.mxu0 0
  %1694 = vmatprep.subr.bf16.mxu0 0
  %1695 = vmatpush1.bf16.msra.mxu0 0
  %1696 = vmatprep.subr.bf16.mxu0 0
  %1697 = vmatpush1.bf16.msra.mxu0 0
  %1698 = vmatprep.subr.bf16.mxu0 0
  %1699 = vmatpush1.bf16.msra.mxu0 0
  %1700 = vmatprep.subr.bf16.mxu0 0
  %1701 = vmatpush1.bf16.msra.mxu0 0
  %1702 = vmatprep.subr.bf16.mxu0 0
  %1703 = vmatpush1.bf16.msra.mxu0 0
  %1704 = vmatprep.mubr.bf16.mxu0 0
  %1705 = vmatmul.mubr.bf16.gmra.mrb[0].mxu0 %v1667
  %v1706 = vpop.f32.mrb[0].mxu0
  %v1707 = vadd.f32 0.0, %v1706
  %v1708 = vpop.f32.mrb[0].mxu0
  %v1709 = vpop.f32.mrb[0].mxu0
  %v1710 = vadd.f32 0.0, %v1709
  %v1711 = vpop.f32.mrb[0].mxu0
  %1712 = vmatprep.mubr.bf16.mxu0 0
  %1713 = vmatmul.mubr.bf16.gmra.mrb[0].mxu0 %v1670
  %v1714 = vpop.f32.mrb[0].mxu0
  %v1715 = vadd.f32 0.0, %v1714
  %v1716 = vpop.f32.mrb[0].mxu0
  %v1717 = vpop.f32.mrb[0].mxu0
  %v1718 = vadd.f32 0.0, %v1717
  %v1719 = vpop.f32.mrb[0].mxu0
  %1720 = vdwg.mxu0
  %v1721 = vmax.f32 %v1707, 0.0
  %v1722 = vmax.f32 %v1710, 0.0
  %v1723 = vmax.f32 %v1715, 0.0
  %v1724 = vmax.f32 %v1718, 0.0
  %v1725 = vmax.f32 %v1595, %v1721
  %v1726 = vmax.f32 %v1596, %v1722
  %v1727 = vmax.f32 %v1597, %v1723
  %v1728 = vmax.f32 %v1598, %v1724
  %v1729 = vpack.c.bf16 %v707, %v706
  %v1730 = vpack.c.bf16 %v709, %v708
  %v1732 = vsel %vm158, %v1729, 0
  %v1735 = vsel %vm158, %v1730, 0
  %1737 = vmatprep.subr.bf16.mxu0 0
  %1738 = vmatpush1.bf16.msra.mxu0 %v1186
  %1739 = vmatprep.subr.bf16.mxu0 0
  %1740 = vmatpush1.bf16.msra.mxu0 %v1187
  %1741 = vmatprep.subr.bf16.mxu0 0
  %1742 = vmatpush1.bf16.msra.mxu0 0
  %1743 = vmatprep.subr.bf16.mxu0 0
  %1744 = vmatpush1.bf16.msra.mxu0 0
  %1745 = vmatprep.subr.bf16.mxu0 0
  %1746 = vmatpush1.bf16.msra.mxu0 0
  %1747 = vmatprep.subr.bf16.mxu0 0
  %1748 = vmatpush1.bf16.msra.mxu0 0
  %1749 = vmatprep.subr.bf16.mxu0 0
  %1750 = vmatpush1.bf16.msra.mxu0 0
  %1751 = vmatprep.subr.bf16.mxu0 0
  %1752 = vmatpush1.bf16.msra.mxu0 0
  %1753 = vmatprep.subr.bf16.mxu0 0
  %1754 = vmatpush1.bf16.msra.mxu0 0
  %1755 = vmatprep.subr.bf16.mxu0 0
  %1756 = vmatpush1.bf16.msra.mxu0 0
  %1757 = vmatprep.subr.bf16.mxu0 0
  %1758 = vmatpush1.bf16.msra.mxu0 0
  %1759 = vmatprep.subr.bf16.mxu0 0
  %1760 = vmatpush1.bf16.msra.mxu0 0
  %1761 = vmatprep.subr.bf16.mxu0 0
  %1762 = vmatpush1.bf16.msra.mxu0 0
  %1763 = vmatprep.subr.bf16.mxu0 0
  %1764 = vmatpush1.bf16.msra.mxu0 0
  %1765 = vmatprep.subr.bf16.mxu0 0
  %1766 = vmatpush1.bf16.msra.mxu0 0
  %1767 = vmatprep.subr.bf16.mxu0 0
  %1768 = vmatpush1.bf16.msra.mxu0 0
  %1769 = vmatprep.mubr.bf16.mxu0 0
  %1770 = vmatmul.mubr.bf16.gmra.mrb[0].mxu0 %v1732
  %v1771 = vpop.f32.mrb[0].mxu0
  %v1772 = vadd.f32 0.0, %v1771
  %v1773 = vpop.f32.mrb[0].mxu0
  %v1774 = vpop.f32.mrb[0].mxu0
  %v1775 = vadd.f32 0.0, %v1774
  %v1776 = vpop.f32.mrb[0].mxu0
  %1777 = vmatprep.mubr.bf16.mxu0 0
  %1778 = vmatmul.mubr.bf16.gmra.mrb[0].mxu0 %v1735
  %v1779 = vpop.f32.mrb[0].mxu0
  %v1780 = vadd.f32 0.0, %v1779
  %v1781 = vpop.f32.mrb[0].mxu0
  %v1782 = vpop.f32.mrb[0].mxu0
  %v1783 = vadd.f32 0.0, %v1782
  %v1784 = vpop.f32.mrb[0].mxu0
  %1785 = vdwg.mxu0
  %v1786 = vadd.f32 %v1162, %v1772
  %v1787 = vadd.f32 %v1165, %v1775
  %v1788 = vadd.f32 %v1170, %v1780
  %v1789 = vadd.f32 %v1173, %v1783
  %v1790 = vmax.f32 %v1786, 0.0
  %v1791 = vmax.f32 %v1787, 0.0
  %v1792 = vmax.f32 %v1788, 0.0
  %v1793 = vmax.f32 %v1789, 0.0
  %v1794 = vpack.c.bf16 %v1791, %v1790
  %v1795 = vpack.c.bf16 %v1793, %v1792
  %v1797 = vsel %vm1279, %v1794, 0
  %v1800 = vsel %vm1279, %v1795, 0
  %1802 = vmatprep.subr.bf16.mxu0 0
  %1803 = vmatpush1.bf16.msra.mxu0 %v1271
  %1804 = vmatprep.subr.bf16.mxu0 0
  %1805 = vmatpush1.bf16.msra.mxu0 %v1272
  %1806 = vmatprep.subr.bf16.mxu0 0
  %1807 = vmatpush1.bf16.msra.mxu0 %v1273
  %1808 = vmatprep.subr.bf16.mxu0 0
  %1809 = vmatpush1.bf16.msra.mxu0 %v1274
  %1810 = vmatprep.subr.bf16.mxu0 0
  %1811 = vmatpush1.bf16.msra.mxu0 0
  %1812 = vmatprep.subr.bf16.mxu0 0
  %1813 = vmatpush1.bf16.msra.mxu0 0
  %1814 = vmatprep.subr.bf16.mxu0 0
  %1815 = vmatpush1.bf16.msra.mxu0 0
  %1816 = vmatprep.subr.bf16.mxu0 0
  %1817 = vmatpush1.bf16.msra.mxu0 0
  %1818 = vmatprep.subr.bf16.mxu0 0
  %1819 = vmatpush1.bf16.msra.mxu0 0
  %1820 = vmatprep.subr.bf16.mxu0 0
  %1821 = vmatpush1.bf16.msra.mxu0 0
  %1822 = vmatprep.subr.bf16.mxu0 0
  %1823 = vmatpush1.bf16.msra.mxu0 0
  %1824 = vmatprep.subr.bf16.mxu0 0
  %1825 = vmatpush1.bf16.msra.mxu0 0
  %1826 = vmatprep.subr.bf16.mxu0 0
  %1827 = vmatpush1.bf16.msra.mxu0 0
  %1828 = vmatprep.subr.bf16.mxu0 0
  %1829 = vmatpush1.bf16.msra.mxu0 0
  %1830 = vmatprep.subr.bf16.mxu0 0
  %1831 = vmatpush1.bf16.msra.mxu0 0
  %1832 = vmatprep.subr.bf16.mxu0 0
  %1833 = vmatpush1.bf16.msra.mxu0 0
  %1834 = vmatprep.mubr.bf16.mxu0 0
  %1835 = vmatmul.mubr.bf16.gmra.mrb[0].mxu0 %v1797
  %v1836 = vpop.f32.mrb[0].mxu0
  %v1837 = vadd.f32 0.0, %v1836
  %v1838 = vpop.f32.mrb[0].mxu0
  %v1839 = vpop.f32.mrb[0].mxu0
  %v1840 = vadd.f32 0.0, %v1839
  %v1841 = vpop.f32.mrb[0].mxu0
  %1842 = vmatprep.mubr.bf16.mxu0 0
  %1843 = vmatmul.mubr.bf16.gmra.mrb[0].mxu0 %v1800
  %v1844 = vpop.f32.mrb[0].mxu0
  %v1845 = vadd.f32 0.0, %v1844
  %v1846 = vpop.f32.mrb[0].mxu0
  %v1847 = vpop.f32.mrb[0].mxu0
  %v1848 = vadd.f32 0.0, %v1847
  %v1849 = vpop.f32.mrb[0].mxu0
  %1850 = vdwg.mxu0
  %v1851 = vmax.f32 %v1837, 0.0
  %v1852 = vmax.f32 %v1840, 0.0
  %v1853 = vmax.f32 %v1845, 0.0
  %v1854 = vmax.f32 %v1848, 0.0
  %v1855 = vmax.f32 %v1725, %v1851
  %v1856 = vmax.f32 %v1726, %v1852
  %v1857 = vmax.f32 %v1727, %v1853
  %v1858 = vmax.f32 %v1728, %v1854
  %v1859 = vpack.c.bf16 %v830, %v829
  %v1860 = vpack.c.bf16 %v832, %v831
  %v1862 = vsel %vm158, %v1859, 0
  %v1865 = vsel %vm158, %v1860, 0
  %1867 = vmatprep.subr.bf16.mxu0 0
  %1868 = vmatpush1.bf16.msra.mxu0 %v1186
  %1869 = vmatprep.subr.bf16.mxu0 0
  %1870 = vmatpush1.bf16.msra.mxu0 %v1187
  %1871 = vmatprep.subr.bf16.mxu0 0
  %1872 = vmatpush1.bf16.msra.mxu0 0
  %1873 = vmatprep.subr.bf16.mxu0 0
  %1874 = vmatpush1.bf16.msra.mxu0 0
  %1875 = vmatprep.subr.bf16.mxu0 0
  %1876 = vmatpush1.bf16.msra.mxu0 0
  %1877 = vmatprep.subr.bf16.mxu0 0
  %1878 = vmatpush1.bf16.msra.mxu0 0
  %1879 = vmatprep.subr.bf16.mxu0 0
  %1880 = vmatpush1.bf16.msra.mxu0 0
  %1881 = vmatprep.subr.bf16.mxu0 0
  %1882 = vmatpush1.bf16.msra.mxu0 0
  %1883 = vmatprep.subr.bf16.mxu0 0
  %1884 = vmatpush1.bf16.msra.mxu0 0
  %1885 = vmatprep.subr.bf16.mxu0 0
  %1886 = vmatpush1.bf16.msra.mxu0 0
  %1887 = vmatprep.subr.bf16.mxu0 0
  %1888 = vmatpush1.bf16.msra.mxu0 0
  %1889 = vmatprep.subr.bf16.mxu0 0
  %1890 = vmatpush1.bf16.msra.mxu0 0
  %1891 = vmatprep.subr.bf16.mxu0 0
  %1892 = vmatpush1.bf16.msra.mxu0 0
  %1893 = vmatprep.subr.bf16.mxu0 0
  %1894 = vmatpush1.bf16.msra.mxu0 0
  %1895 = vmatprep.subr.bf16.mxu0 0
  %1896 = vmatpush1.bf16.msra.mxu0 0
  %1897 = vmatprep.subr.bf16.mxu0 0
  %1898 = vmatpush1.bf16.msra.mxu0 0
  %1899 = vmatprep.mubr.bf16.mxu0 0
  %1900 = vmatmul.mubr.bf16.gmra.mrb[0].mxu0 %v1862
  %v1901 = vpop.f32.mrb[0].mxu0
  %v1902 = vadd.f32 0.0, %v1901
  %v1903 = vpop.f32.mrb[0].mxu0
  %v1904 = vpop.f32.mrb[0].mxu0
  %v1905 = vadd.f32 0.0, %v1904
  %v1906 = vpop.f32.mrb[0].mxu0
  %1907 = vmatprep.mubr.bf16.mxu0 0
  %1908 = vmatmul.mubr.bf16.gmra.mrb[0].mxu0 %v1865
  %v1909 = vpop.f32.mrb[0].mxu0
  %v1910 = vadd.f32 0.0, %v1909
  %v1911 = vpop.f32.mrb[0].mxu0
  %v1912 = vpop.f32.mrb[0].mxu0
  %v1913 = vadd.f32 0.0, %v1912
  %v1914 = vpop.f32.mrb[0].mxu0
  %1915 = vdwg.mxu0
  %v1916 = vadd.f32 %v1162, %v1902
  %v1917 = vadd.f32 %v1165, %v1905
  %v1918 = vadd.f32 %v1170, %v1910
  %v1919 = vadd.f32 %v1173, %v1913
  %v1920 = vmax.f32 %v1916, 0.0
  %v1921 = vmax.f32 %v1917, 0.0
  %v1922 = vmax.f32 %v1918, 0.0
  %v1923 = vmax.f32 %v1919, 0.0
  %v1924 = vpack.c.bf16 %v1921, %v1920
  %v1925 = vpack.c.bf16 %v1923, %v1922
  %v1927 = vsel %vm1279, %v1924, 0
  %v1930 = vsel %vm1279, %v1925, 0
  %1932 = vmatprep.subr.bf16.mxu0 0
  %1933 = vmatpush1.bf16.msra.mxu0 %v1271
  %1934 = vmatprep.subr.bf16.mxu0 0
  %1935 = vmatpush1.bf16.msra.mxu0 %v1272
  %1936 = vmatprep.subr.bf16.mxu0 0
  %1937 = vmatpush1.bf16.msra.mxu0 %v1273
  %1938 = vmatprep.subr.bf16.mxu0 0
  %1939 = vmatpush1.bf16.msra.mxu0 %v1274
  %1940 = vmatprep.subr.bf16.mxu0 0
  %1941 = vmatpush1.bf16.msra.mxu0 0
  %1942 = vmatprep.subr.bf16.mxu0 0
  %1943 = vmatpush1.bf16.msra.mxu0 0
  %1944 = vmatprep.subr.bf16.mxu0 0
  %1945 = vmatpush1.bf16.msra.mxu0 0
  %1946 = vmatprep.subr.bf16.mxu0 0
  %1947 = vmatpush1.bf16.msra.mxu0 0
  %1948 = vmatprep.subr.bf16.mxu0 0
  %1949 = vmatpush1.bf16.msra.mxu0 0
  %1950 = vmatprep.subr.bf16.mxu0 0
  %1951 = vmatpush1.bf16.msra.mxu0 0
  %1952 = vmatprep.subr.bf16.mxu0 0
  %1953 = vmatpush1.bf16.msra.mxu0 0
  %1954 = vmatprep.subr.bf16.mxu0 0
  %1955 = vmatpush1.bf16.msra.mxu0 0
  %1956 = vmatprep.subr.bf16.mxu0 0
  %1957 = vmatpush1.bf16.msra.mxu0 0
  %1958 = vmatprep.subr.bf16.mxu0 0
  %1959 = vmatpush1.bf16.msra.mxu0 0
  %1960 = vmatprep.subr.bf16.mxu0 0
  %1961 = vmatpush1.bf16.msra.mxu0 0
  %1962 = vmatprep.subr.bf16.mxu0 0
  %1963 = vmatpush1.bf16.msra.mxu0 0
  %1964 = vmatprep.mubr.bf16.mxu0 0
  %1965 = vmatmul.mubr.bf16.gmra.mrb[0].mxu0 %v1927
  %v1966 = vpop.f32.mrb[0].mxu0
  %v1967 = vadd.f32 0.0, %v1966
  %v1968 = vpop.f32.mrb[0].mxu0
  %v1969 = vpop.f32.mrb[0].mxu0
  %v1970 = vadd.f32 0.0, %v1969
  %v1971 = vpop.f32.mrb[0].mxu0
  %1972 = vmatprep.mubr.bf16.mxu0 0
  %1973 = vmatmul.mubr.bf16.gmra.mrb[0].mxu0 %v1930
  %v1974 = vpop.f32.mrb[0].mxu0
  %v1975 = vadd.f32 0.0, %v1974
  %v1976 = vpop.f32.mrb[0].mxu0
  %v1977 = vpop.f32.mrb[0].mxu0
  %v1978 = vadd.f32 0.0, %v1977
  %v1979 = vpop.f32.mrb[0].mxu0
  %1980 = vdwg.mxu0
  %v1981 = vmax.f32 %v1967, 0.0
  %v1982 = vmax.f32 %v1970, 0.0
  %v1983 = vmax.f32 %v1975, 0.0
  %v1984 = vmax.f32 %v1978, 0.0
  %v1985 = vmax.f32 %v1855, %v1981
  %v1986 = vmax.f32 %v1856, %v1982
  %v1987 = vmax.f32 %v1857, %v1983
  %v1988 = vmax.f32 %v1858, %v1984
  %v1989 = vpack.c.bf16 %v953, %v952
  %v1990 = vpack.c.bf16 %v955, %v954
  %v1992 = vsel %vm158, %v1989, 0
  %v1995 = vsel %vm158, %v1990, 0
  %1997 = vmatprep.subr.bf16.mxu0 0
  %1998 = vmatpush1.bf16.msra.mxu0 %v1186
  %1999 = vmatprep.subr.bf16.mxu0 0
  %2000 = vmatpush1.bf16.msra.mxu0 %v1187
  %2001 = vmatprep.subr.bf16.mxu0 0
  %2002 = vmatpush1.bf16.msra.mxu0 0
  %2003 = vmatprep.subr.bf16.mxu0 0
  %2004 = vmatpush1.bf16.msra.mxu0 0
  %2005 = vmatprep.subr.bf16.mxu0 0
  %2006 = vmatpush1.bf16.msra.mxu0 0
  %2007 = vmatprep.subr.bf16.mxu0 0
  %2008 = vmatpush1.bf16.msra.mxu0 0
  %2009 = vmatprep.subr.bf16.mxu0 0
  %2010 = vmatpush1.bf16.msra.mxu0 0
  %2011 = vmatprep.subr.bf16.mxu0 0
  %2012 = vmatpush1.bf16.msra.mxu0 0
  %2013 = vmatprep.subr.bf16.mxu0 0
  %2014 = vmatpush1.bf16.msra.mxu0 0
  %2015 = vmatprep.subr.bf16.mxu0 0
  %2016 = vmatpush1.bf16.msra.mxu0 0
  %2017 = vmatprep.subr.bf16.mxu0 0
  %2018 = vmatpush1.bf16.msra.mxu0 0
  %2019 = vmatprep.subr.bf16.mxu0 0
  %2020 = vmatpush1.bf16.msra.mxu0 0
  %2021 = vmatprep.subr.bf16.mxu0 0
  %2022 = vmatpush1.bf16.msra.mxu0 0
  %2023 = vmatprep.subr.bf16.mxu0 0
  %2024 = vmatpush1.bf16.msra.mxu0 0
  %2025 = vmatprep.subr.bf16.mxu0 0
  %2026 = vmatpush1.bf16.msra.mxu0 0
  %2027 = vmatprep.subr.bf16.mxu0 0
  %2028 = vmatpush1.bf16.msra.mxu0 0
  %2029 = vmatprep.mubr.bf16.mxu0 0
  %2030 = vmatmul.mubr.bf16.gmra.mrb[0].mxu0 %v1992
  %v2031 = vpop.f32.mrb[0].mxu0
  %v2032 = vadd.f32 0.0, %v2031
  %v2033 = vpop.f32.mrb[0].mxu0
  %v2034 = vpop.f32.mrb[0].mxu0
  %v2035 = vadd.f32 0.0, %v2034
  %v2036 = vpop.f32.mrb[0].mxu0
  %2037 = vmatprep.mubr.bf16.mxu0 0
  %2038 = vmatmul.mubr.bf16.gmra.mrb[0].mxu0 %v1995
  %v2039 = vpop.f32.mrb[0].mxu0
  %v2040 = vadd.f32 0.0, %v2039
  %v2041 = vpop.f32.mrb[0].mxu0
  %v2042 = vpop.f32.mrb[0].mxu0
  %v2043 = vadd.f32 0.0, %v2042
  %v2044 = vpop.f32.mrb[0].mxu0
  %2045 = vdwg.mxu0
  %v2046 = vadd.f32 %v1162, %v2032
  %v2047 = vadd.f32 %v1165, %v2035
  %v2048 = vadd.f32 %v1170, %v2040
  %v2049 = vadd.f32 %v1173, %v2043
  %v2050 = vmax.f32 %v2046, 0.0
  %v2051 = vmax.f32 %v2047, 0.0
  %v2052 = vmax.f32 %v2048, 0.0
  %v2053 = vmax.f32 %v2049, 0.0
  %v2054 = vpack.c.bf16 %v2051, %v2050
  %v2055 = vpack.c.bf16 %v2053, %v2052
  %v2057 = vsel %vm1279, %v2054, 0
  %v2060 = vsel %vm1279, %v2055, 0
  %2062 = vmatprep.subr.bf16.mxu0 0
  %2063 = vmatpush1.bf16.msra.mxu0 %v1271
  %2064 = vmatprep.subr.bf16.mxu0 0
  %2065 = vmatpush1.bf16.msra.mxu0 %v1272
  %2066 = vmatprep.subr.bf16.mxu0 0
  %2067 = vmatpush1.bf16.msra.mxu0 %v1273
  %2068 = vmatprep.subr.bf16.mxu0 0
  %2069 = vmatpush1.bf16.msra.mxu0 %v1274
  %2070 = vmatprep.subr.bf16.mxu0 0
  %2071 = vmatpush1.bf16.msra.mxu0 0
  %2072 = vmatprep.subr.bf16.mxu0 0
  %2073 = vmatpush1.bf16.msra.mxu0 0
  %2074 = vmatprep.subr.bf16.mxu0 0
  %2075 = vmatpush1.bf16.msra.mxu0 0
  %2076 = vmatprep.subr.bf16.mxu0 0
  %2077 = vmatpush1.bf16.msra.mxu0 0
  %2078 = vmatprep.subr.bf16.mxu0 0
  %2079 = vmatpush1.bf16.msra.mxu0 0
  %2080 = vmatprep.subr.bf16.mxu0 0
  %2081 = vmatpush1.bf16.msra.mxu0 0
  %2082 = vmatprep.subr.bf16.mxu0 0
  %2083 = vmatpush1.bf16.msra.mxu0 0
  %2084 = vmatprep.subr.bf16.mxu0 0
  %2085 = vmatpush1.bf16.msra.mxu0 0
  %2086 = vmatprep.subr.bf16.mxu0 0
  %2087 = vmatpush1.bf16.msra.mxu0 0
  %2088 = vmatprep.subr.bf16.mxu0 0
  %2089 = vmatpush1.bf16.msra.mxu0 0
  %2090 = vmatprep.subr.bf16.mxu0 0
  %2091 = vmatpush1.bf16.msra.mxu0 0
  %2092 = vmatprep.subr.bf16.mxu0 0
  %2093 = vmatpush1.bf16.msra.mxu0 0
  %2094 = vmatprep.mubr.bf16.mxu0 0
  %2095 = vmatmul.mubr.bf16.gmra.mrb[0].mxu0 %v2057
  %v2096 = vpop.f32.mrb[0].mxu0
  %v2097 = vadd.f32 0.0, %v2096
  %v2098 = vpop.f32.mrb[0].mxu0
  %v2099 = vpop.f32.mrb[0].mxu0
  %v2100 = vadd.f32 0.0, %v2099
  %v2101 = vpop.f32.mrb[0].mxu0
  %2102 = vmatprep.mubr.bf16.mxu0 0
  %2103 = vmatmul.mubr.bf16.gmra.mrb[0].mxu0 %v2060
  %v2104 = vpop.f32.mrb[0].mxu0
  %v2105 = vadd.f32 0.0, %v2104
  %v2106 = vpop.f32.mrb[0].mxu0
  %v2107 = vpop.f32.mrb[0].mxu0
  %v2108 = vadd.f32 0.0, %v2107
  %v2109 = vpop.f32.mrb[0].mxu0
  %2110 = vdwg.mxu0
  %v2111 = vmax.f32 %v2097, 0.0
  %v2112 = vmax.f32 %v2100, 0.0
  %v2113 = vmax.f32 %v2105, 0.0
  %v2114 = vmax.f32 %v2108, 0.0
  %v2115 = vmax.f32 %v1985, %v2111
  %v2116 = vmax.f32 %v1986, %v2112
  %v2117 = vmax.f32 %v1987, %v2113
  %v2118 = vmax.f32 %v1988, %v2114
  %v2119 = vpack.c.bf16 %v1076, %v1075
  %v2120 = vpack.c.bf16 %v1078, %v1077
  %v2122 = vsel %vm158, %v2119, 0
  %v2125 = vsel %vm158, %v2120, 0
  %2127 = vmatprep.subr.bf16.mxu0 0
  %2128 = vmatpush1.bf16.msra.mxu0 %v1186
  %2129 = vmatprep.subr.bf16.mxu0 0
  %2130 = vmatpush1.bf16.msra.mxu0 %v1187
  %2131 = vmatprep.subr.bf16.mxu0 0
  %2132 = vmatpush1.bf16.msra.mxu0 0
  %2133 = vmatprep.subr.bf16.mxu0 0
  %2134 = vmatpush1.bf16.msra.mxu0 0
  %2135 = vmatprep.subr.bf16.mxu0 0
  %2136 = vmatpush1.bf16.msra.mxu0 0
  %2137 = vmatprep.subr.bf16.mxu0 0
  %2138 = vmatpush1.bf16.msra.mxu0 0
  %2139 = vmatprep.subr.bf16.mxu0 0
  %2140 = vmatpush1.bf16.msra.mxu0 0
  %2141 = vmatprep.subr.bf16.mxu0 0
  %2142 = vmatpush1.bf16.msra.mxu0 0
  %2143 = vmatprep.subr.bf16.mxu0 0
  %2144 = vmatpush1.bf16.msra.mxu0 0
  %2145 = vmatprep.subr.bf16.mxu0 0
  %2146 = vmatpush1.bf16.msra.mxu0 0
  %2147 = vmatprep.subr.bf16.mxu0 0
  %2148 = vmatpush1.bf16.msra.mxu0 0
  %2149 = vmatprep.subr.bf16.mxu0 0
  %2150 = vmatpush1.bf16.msra.mxu0 0
  %2151 = vmatprep.subr.bf16.mxu0 0
  %2152 = vmatpush1.bf16.msra.mxu0 0
  %2153 = vmatprep.subr.bf16.mxu0 0
  %2154 = vmatpush1.bf16.msra.mxu0 0
  %2155 = vmatprep.subr.bf16.mxu0 0
  %2156 = vmatpush1.bf16.msra.mxu0 0
  %2157 = vmatprep.subr.bf16.mxu0 0
  %2158 = vmatpush1.bf16.msra.mxu0 0
  %2159 = vmatprep.mubr.bf16.mxu0 0
  %2160 = vmatmul.mubr.bf16.gmra.mrb[0].mxu0 %v2122
  %v2161 = vpop.f32.mrb[0].mxu0
  %v2162 = vadd.f32 0.0, %v2161
  %v2163 = vpop.f32.mrb[0].mxu0
  %v2164 = vpop.f32.mrb[0].mxu0
  %v2165 = vadd.f32 0.0, %v2164
  %v2166 = vpop.f32.mrb[0].mxu0
  %2167 = vmatprep.mubr.bf16.mxu0 0
  %2168 = vmatmul.mubr.bf16.gmra.mrb[0].mxu0 %v2125
  %v2169 = vpop.f32.mrb[0].mxu0
  %v2170 = vadd.f32 0.0, %v2169
  %v2171 = vpop.f32.mrb[0].mxu0
  %v2172 = vpop.f32.mrb[0].mxu0
  %v2173 = vadd.f32 0.0, %v2172
  %v2174 = vpop.f32.mrb[0].mxu0
  %2175 = vdwg.mxu0
  %v2176 = vadd.f32 %v1162, %v2162
  %v2177 = vadd.f32 %v1165, %v2165
  %v2178 = vadd.f32 %v1170, %v2170
  %v2179 = vadd.f32 %v1173, %v2173
  %v2180 = vmax.f32 %v2176, 0.0
  %v2181 = vmax.f32 %v2177, 0.0
  %v2182 = vmax.f32 %v2178, 0.0
  %v2183 = vmax.f32 %v2179, 0.0
  %v2184 = vpack.c.bf16 %v2181, %v2180
  %v2185 = vpack.c.bf16 %v2183, %v2182
  %v2187 = vsel %vm1279, %v2184, 0
  %v2190 = vsel %vm1279, %v2185, 0
  %2192 = vmatprep.subr.bf16.mxu0 0
  %2193 = vmatpush1.bf16.msra.mxu0 %v1271
  %2194 = vmatprep.subr.bf16.mxu0 0
  %2195 = vmatpush1.bf16.msra.mxu0 %v1272
  %2196 = vmatprep.subr.bf16.mxu0 0
  %2197 = vmatpush1.bf16.msra.mxu0 %v1273
  %2198 = vmatprep.subr.bf16.mxu0 0
  %2199 = vmatpush1.bf16.msra.mxu0 %v1274
  %2200 = vmatprep.subr.bf16.mxu0 0
  %2201 = vmatpush1.bf16.msra.mxu0 0
  %2202 = vmatprep.subr.bf16.mxu0 0
  %2203 = vmatpush1.bf16.msra.mxu0 0
  %2204 = vmatprep.subr.bf16.mxu0 0
  %2205 = vmatpush1.bf16.msra.mxu0 0
  %2206 = vmatprep.subr.bf16.mxu0 0
  %2207 = vmatpush1.bf16.msra.mxu0 0
  %2208 = vmatprep.subr.bf16.mxu0 0
  %2209 = vmatpush1.bf16.msra.mxu0 0
  %2210 = vmatprep.subr.bf16.mxu0 0
  %2211 = vmatpush1.bf16.msra.mxu0 0
  %2212 = vmatprep.subr.bf16.mxu0 0
  %2213 = vmatpush1.bf16.msra.mxu0 0
  %2214 = vmatprep.subr.bf16.mxu0 0
  %2215 = vmatpush1.bf16.msra.mxu0 0
  %2216 = vmatprep.subr.bf16.mxu0 0
  %2217 = vmatpush1.bf16.msra.mxu0 0
  %2218 = vmatprep.subr.bf16.mxu0 0
  %2219 = vmatpush1.bf16.msra.mxu0 0
  %2220 = vmatprep.subr.bf16.mxu0 0
  %2221 = vmatpush1.bf16.msra.mxu0 0
  %2222 = vmatprep.subr.bf16.mxu0 0
  %2223 = vmatpush1.bf16.msra.mxu0 0
  %2224 = vmatprep.mubr.bf16.mxu0 0
  %2225 = vmatmul.mubr.bf16.gmra.mrb[0].mxu0 %v2187
  %v2226 = vpop.f32.mrb[0].mxu0
  %v2227 = vadd.f32 0.0, %v2226
  %v2228 = vpop.f32.mrb[0].mxu0
  %v2229 = vpop.f32.mrb[0].mxu0
  %v2230 = vadd.f32 0.0, %v2229
  %v2231 = vpop.f32.mrb[0].mxu0
  %2232 = vmatprep.mubr.bf16.mxu0 0
  %2233 = vmatmul.mubr.bf16.gmra.mrb[0].mxu0 %v2190
  %v2234 = vpop.f32.mrb[0].mxu0
  %v2235 = vadd.f32 0.0, %v2234
  %v2236 = vpop.f32.mrb[0].mxu0
  %v2237 = vpop.f32.mrb[0].mxu0
  %v2238 = vadd.f32 0.0, %v2237
  %v2239 = vpop.f32.mrb[0].mxu0
  %2240 = vdwg.mxu0
  %v2241 = vmax.f32 %v2227, 0.0
  %v2242 = vmax.f32 %v2230, 0.0
  %v2243 = vmax.f32 %v2235, 0.0
  %v2244 = vmax.f32 %v2238, 0.0
  %v2245 = vmax.f32 %v2115, %v2241
  %v2246 = vmax.f32 %v2116, %v2242
  %v2247 = vmax.f32 %v2117, %v2243
  %v2248 = vmax.f32 %v2118, %v2244
  %v2249 = vpack.c.bf16 %v2246, %v2245
  %v2250 = vpack.c.bf16 %v2248, %v2247
  %v2251 = vld [vmem:[%s8] sm:$0xf]
  %v2252 = vld [vmem:[%s8 + $0x4] sm:$0xf]
  %v2253 = vld [vmem:[%s8 + $0x8] sm:$0xf]
  %v2254 = vld [vmem:[%s8 + $0xc] sm:$0xf]
  %v2255 = vld [vmem:[%s9] sm:$0x1]
  %v2257 = vlaneseq
  %v2258 = vshrl.u32 %v2257, 7
  %v2259 = vsub.s32 0, %v2258
  %v2260 = vrot.slane %v2255, %v2259
  %v2266 = vunpack.c.l.b16 %v2251
  %v2267 = vunpack.c.l.b16 %v2252
  %v2268 = vunpack.c.l.b16 %v2253
  %v2269 = vunpack.c.l.b16 %v2254
  %v2270 = vpack.c.b16 %v2267, %v2266
  %v2271 = vpack.c.b16 %v2269, %v2268
  %v2275 = vsel %vm158, %v2249, 0
  %v2278 = vsel %vm158, %v2250, 0
  %2280 = vmatprep.subr.bf16.mxu0 0
  %2281 = vmatpush1.bf16.msra.mxu0 %v2270
  %2282 = vmatprep.subr.bf16.mxu0 0
  %2283 = vmatpush1.bf16.msra.mxu0 %v2271
  %2284 = vmatprep.subr.bf16.mxu0 0
  %2285 = vmatpush1.bf16.msra.mxu0 0
  %2286 = vmatprep.subr.bf16.mxu0 0
  %2287 = vmatpush1.bf16.msra.mxu0 0
  %2288 = vmatprep.subr.bf16.mxu0 0
  %2289 = vmatpush1.bf16.msra.mxu0 0
  %2290 = vmatprep.subr.bf16.mxu0 0
  %2291 = vmatpush1.bf16.msra.mxu0 0
  %2292 = vmatprep.subr.bf16.mxu0 0
  %2293 = vmatpush1.bf16.msra.mxu0 0
  %2294 = vmatprep.subr.bf16.mxu0 0
  %2295 = vmatpush1.bf16.msra.mxu0 0
  %2296 = vmatprep.subr.bf16.mxu0 0
  %2297 = vmatpush1.bf16.msra.mxu0 0
  %2298 = vmatprep.subr.bf16.mxu0 0
  %2299 = vmatpush1.bf16.msra.mxu0 0
  %2300 = vmatprep.subr.bf16.mxu0 0
  %2301 = vmatpush1.bf16.msra.mxu0 0
  %2302 = vmatprep.subr.bf16.mxu0 0
  %2303 = vmatpush1.bf16.msra.mxu0 0
  %2304 = vmatprep.subr.bf16.mxu0 0
  %2305 = vmatpush1.bf16.msra.mxu0 0
  %2306 = vmatprep.subr.bf16.mxu0 0
  %2307 = vmatpush1.bf16.msra.mxu0 0
  %2308 = vmatprep.subr.bf16.mxu0 0
  %2309 = vmatpush1.bf16.msra.mxu0 0
  %2310 = vmatprep.subr.bf16.mxu0 0
  %2311 = vmatpush1.bf16.msra.mxu0 0
  %2312 = vmatprep.mubr.bf16.mxu0 0
  %2313 = vmatmul.mubr.bf16.gmra.mrb[0].mxu0 %v2275
  %v2314 = vpop.f32.mrb[0].mxu0
  %v2315 = vadd.f32 %v2260, %v2314
  %v2316 = vpop.f32.mrb[0].mxu0
  %v2317 = vpop.f32.mrb[0].mxu0
  %v2318 = vadd.f32 %v2260, %v2317
  %v2319 = vpop.f32.mrb[0].mxu0
  %2320 = vmatprep.mubr.bf16.mxu0 0
  %2321 = vmatmul.mubr.bf16.gmra.mrb[0].mxu0 %v2278
  %v2322 = vpop.f32.mrb[0].mxu0
  %v2323 = vadd.f32 %v2260, %v2322
  %v2324 = vpop.f32.mrb[0].mxu0
  %v2325 = vpop.f32.mrb[0].mxu0
  %v2326 = vadd.f32 %v2260, %v2325
  %v2327 = vpop.f32.mrb[0].mxu0
  %2328 = vdwg.mxu0
  %v2329 = vld [vmem:[%s1] sm:$0xff]
  %v2330 = vld [vmem:[%s1 + $0x8] sm:$0xff]
  %v2331 = vld [vmem:[%s1 + $0x10] sm:$0xff]
  %v2332 = vld [vmem:[%s1 + $0x18] sm:$0xff]
  %v2333 = vpack.c.bf16 %v2330, %v2329
  %v2334 = vpack.c.bf16 %v2332, %v2331
  %v2335 = vld [vmem:[%s10] sm:$0x3]
  %v2336 = vld [vmem:[%s11] sm:$0x1]
  %v2338 = vlaneseq
  %v2339 = vshrl.u32 %v2338, 7
  %v2340 = vsub.s32 0, %v2339
  %v2341 = vrot.slane %v2336, %v2340
  %vm2343 = vcmask 23552
  %v2345 = vsel %vm2343, %v2333, 0
  %v2348 = vsel %vm2343, %v2334, 0
  %vm2350 = vcmask 1040384
  %vm2351 = vcmask 1041408
  %v2352 = vsel %vm2350, 4294967295, 65535
  %v2353 = vsel %vm2351, %v2352, 0
  %v2355 = vand.u32 %v2335, %v2353
  %2357 = vmatprep.subr.bf16.mxu0 0
  %2358 = vmatpush1.bf16.msra.mxu0 %v2355
  %2359 = vmatprep.subr.bf16.mxu0 0
  %2360 = vmatpush1.bf16.msra.mxu0 0
  %2361 = vmatprep.subr.bf16.mxu0 0
  %2362 = vmatpush1.bf16.msra.mxu0 0
  %2363 = vmatprep.subr.bf16.mxu0 0
  %2364 = vmatpush1.bf16.msra.mxu0 0
  %2365 = vmatprep.subr.bf16.mxu0 0
  %2366 = vmatpush1.bf16.msra.mxu0 0
  %2367 = vmatprep.subr.bf16.mxu0 0
  %2368 = vmatpush1.bf16.msra.mxu0 0
  %2369 = vmatprep.subr.bf16.mxu0 0
  %2370 = vmatpush1.bf16.msra.mxu0 0
  %2371 = vmatprep.subr.bf16.mxu0 0
  %2372 = vmatpush1.bf16.msra.mxu0 0
  %2373 = vmatprep.subr.bf16.mxu0 0
  %2374 = vmatpush1.bf16.msra.mxu0 0
  %2375 = vmatprep.subr.bf16.mxu0 0
  %2376 = vmatpush1.bf16.msra.mxu0 0
  %2377 = vmatprep.subr.bf16.mxu0 0
  %2378 = vmatpush1.bf16.msra.mxu0 0
  %2379 = vmatprep.subr.bf16.mxu0 0
  %2380 = vmatpush1.bf16.msra.mxu0 0
  %2381 = vmatprep.subr.bf16.mxu0 0
  %2382 = vmatpush1.bf16.msra.mxu0 0
  %2383 = vmatprep.subr.bf16.mxu0 0
  %2384 = vmatpush1.bf16.msra.mxu0 0
  %2385 = vmatprep.subr.bf16.mxu0 0
  %2386 = vmatpush1.bf16.msra.mxu0 0
  %2387 = vmatprep.subr.bf16.mxu0 0
  %2388 = vmatpush1.bf16.msra.mxu0 0
  %2389 = vmatprep.mubr.bf16.mxu0 0
  %2390 = vmatmul.mubr.bf16.gmra.mrb[0].mxu0 %v2345
  %v2391 = vpop.f32.mrb[0].mxu0
  %v2392 = vadd.f32 %v2341, %v2391
  %v2393 = vpop.f32.mrb[0].mxu0
  %v2394 = vpop.f32.mrb[0].mxu0
  %v2395 = vadd.f32 %v2341, %v2394
  %v2396 = vpop.f32.mrb[0].mxu0
  %2397 = vmatprep.mubr.bf16.mxu0 0
  %2398 = vmatmul.mubr.bf16.gmra.mrb[0].mxu0 %v2348
  %v2399 = vpop.f32.mrb[0].mxu0
  %v2400 = vadd.f32 %v2341, %v2399
  %v2401 = vpop.f32.mrb[0].mxu0
  %v2402 = vpop.f32.mrb[0].mxu0
  %v2403 = vadd.f32 %v2341, %v2402
  %v2404 = vpop.f32.mrb[0].mxu0
  %2405 = vdwg.mxu0
  %v2406 = vmul.f32 %v2392, %v2392
  %v2407 = vmul.f32 %v2395, %v2395
  %v2408 = vmul.f32 %v2400, %v2400
  %v2409 = vmul.f32 %v2403, %v2403
  %v2410 = vmul.f32 %v2392, %v2406
  %v2411 = vmul.f32 %v2395, %v2407
  %v2412 = vmul.f32 %v2400, %v2408
  %v2413 = vmul.f32 %v2403, %v2409
  %v2414 = vmul.f32 %v2410, 0.044715
  %v2415 = vmul.f32 %v2411, 0.044715
  %v2416 = vmul.f32 %v2412, 0.044715
  %v2417 = vmul.f32 %v2413, 0.044715
  %v2418 = vadd.f32 %v2392, %v2414
  %v2419 = vadd.f32 %v2395, %v2415
  %v2420 = vadd.f32 %v2400, %v2416
  %v2421 = vadd.f32 %v2403, %v2417
  %v2422 = vmul.f32 %v2418, 0.7978846
  %v2423 = vmul.f32 %v2419, 0.7978846
  %v2424 = vmul.f32 %v2420, 0.7978846
  %v2425 = vmul.f32 %v2421, 0.7978846
  %v2426 = vtanh.pop %v2422
  %v2427 = vtanh.pop %v2423
  %v2428 = vtanh.pop %v2424
  %v2429 = vtanh.pop %v2425
  %v2430 = vadd.f32 %v2426, 1.0
  %v2431 = vadd.f32 %v2427, 1.0
  %v2432 = vadd.f32 %v2428, 1.0
  %v2433 = vadd.f32 %v2429, 1.0
  %v2434 = vmul.f32 %v2430, 0.5
  %v2435 = vmul.f32 %v2431, 0.5
  %v2436 = vmul.f32 %v2432, 0.5
  %v2437 = vmul.f32 %v2433, 0.5
  %v2438 = vmul.f32 %v2392, %v2434
  %v2439 = vmul.f32 %v2395, %v2435
  %v2440 = vmul.f32 %v2400, %v2436
  %v2441 = vmul.f32 %v2403, %v2437
  %v2442 = vpack.c.bf16 %v2439, %v2438
  %v2443 = vpack.c.bf16 %v2441, %v2440
  %v2444 = vld [vmem:[%s12] sm:$0xf]
  %v2445 = vld [vmem:[%s12 + $0x4] sm:$0xf]
  %v2446 = vld [vmem:[%s12 + $0x8] sm:$0xf]
  %v2447 = vld [vmem:[%s12 + $0xc] sm:$0xf]
  %v2448 = vld [vmem:[%s12 + $0x10] sm:$0xf]
  %v2449 = vld [vmem:[%s12 + $0x14] sm:$0xf]
  %v2450 = vld [vmem:[%s12 + $0x18] sm:$0xf]
  %v2451 = vld [vmem:[%s12 + $0x1c] sm:$0xf]
  %v2452 = vld [vmem:[%s12 + $0x20] sm:$0xf]
  %v2453 = vld [vmem:[%s12 + $0x24] sm:$0xf]
  %v2454 = vld [vmem:[%s12 + $0x28] sm:$0xf]
  %v2455 = vld [vmem:[%s12 + $0x2c] sm:$0xf]
  %v2456 = vld [vmem:[%s12 + $0x30] sm:$0xf]
  %v2457 = vld [vmem:[%s12 + $0x34] sm:$0xf]
  %v2458 = vld [vmem:[%s12 + $0x38] sm:$0xf]
  %v2459 = vld [vmem:[%s12 + $0x3c] sm:$0xf]
  %v2460 = vld [vmem:[%s13] sm:$0x1]
  %v2462 = vlaneseq
  %v2463 = vshrl.u32 %v2462, 7
  %v2464 = vsub.s32 0, %v2463
  %v2465 = vrot.slane %v2460, %v2464
  %v2483 = vunpack.c.l.b16 %v2444
  %v2484 = vunpack.c.l.b16 %v2445
  %v2485 = vunpack.c.l.b16 %v2446
  %v2486 = vunpack.c.l.b16 %v2447
  %v2487 = vunpack.c.l.b16 %v2448
  %v2488 = vunpack.c.l.b16 %v2449
  %v2489 = vunpack.c.l.b16 %v2450
  %v2490 = vunpack.c.l.b16 %v2451
  %v2491 = vunpack.c.l.b16 %v2452
  %v2492 = vunpack.c.l.b16 %v2453
  %v2493 = vunpack.c.l.b16 %v2454
  %v2494 = vunpack.c.l.b16 %v2455
  %v2495 = vunpack.c.l.b16 %v2456
  %v2496 = vunpack.c.l.b16 %v2457
  %v2497 = vunpack.c.l.b16 %v2458
  %v2498 = vunpack.c.l.b16 %v2459
  %v2499 = vpack.c.b16 %v2484, %v2483
  %v2500 = vpack.c.b16 %v2486, %v2485
  %v2501 = vpack.c.b16 %v2488, %v2487
  %v2502 = vpack.c.b16 %v2490, %v2489
  %v2503 = vpack.c.b16 %v2492, %v2491
  %v2504 = vpack.c.b16 %v2494, %v2493
  %v2505 = vpack.c.b16 %v2496, %v2495
  %v2506 = vpack.c.b16 %v2498, %v2497
  %2515 = vmatprep.subr.bf16.mxu0 0
  %2516 = vmatpush1.bf16.msra.mxu0 %v2499
  %2517 = vmatprep.subr.bf16.mxu0 0
  %2518 = vmatpush1.bf16.msra.mxu0 %v2500
  %2519 = vmatprep.subr.bf16.mxu0 0
  %2520 = vmatpush1.bf16.msra.mxu0 %v2501
  %2521 = vmatprep.subr.bf16.mxu0 0
  %2522 = vmatpush1.bf16.msra.mxu0 %v2502
  %2523 = vmatprep.subr.bf16.mxu0 0
  %2524 = vmatpush1.bf16.msra.mxu0 %v2503
  %2525 = vmatprep.subr.bf16.mxu0 0
  %2526 = vmatpush1.bf16.msra.mxu0 %v2504
  %2527 = vmatprep.subr.bf16.mxu0 0
  %2528 = vmatpush1.bf16.msra.mxu0 %v2505
  %2529 = vmatprep.subr.bf16.mxu0 0
  %2530 = vmatpush1.bf16.msra.mxu0 %v2506
  %2531 = vmatprep.subr.bf16.mxu0 0
  %2532 = vmatpush1.bf16.msra.mxu0 0
  %2533 = vmatprep.subr.bf16.mxu0 0
  %2534 = vmatpush1.bf16.msra.mxu0 0
  %2535 = vmatprep.subr.bf16.mxu0 0
  %2536 = vmatpush1.bf16.msra.mxu0 0
  %2537 = vmatprep.subr.bf16.mxu0 0
  %2538 = vmatpush1.bf16.msra.mxu0 0
  %2539 = vmatprep.subr.bf16.mxu0 0
  %2540 = vmatpush1.bf16.msra.mxu0 0
  %2541 = vmatprep.subr.bf16.mxu0 0
  %2542 = vmatpush1.bf16.msra.mxu0 0
  %2543 = vmatprep.subr.bf16.mxu0 0
  %2544 = vmatpush1.bf16.msra.mxu0 0
  %2545 = vmatprep.subr.bf16.mxu0 0
  %2546 = vmatpush1.bf16.msra.mxu0 0
  %2547 = vmatprep.mubr.bf16.mxu0 0
  %2548 = vmatmul.mubr.bf16.gmra.mrb[0].mxu0 %v2442
  %v2549 = vpop.f32.mrb[0].mxu0
  %v2550 = vadd.f32 %v2465, %v2549
  %v2551 = vpop.f32.mrb[0].mxu0
  %v2552 = vpop.f32.mrb[0].mxu0
  %v2553 = vadd.f32 %v2465, %v2552
  %v2554 = vpop.f32.mrb[0].mxu0
  %2555 = vmatprep.mubr.bf16.mxu0 0
  %2556 = vmatmul.mubr.bf16.gmra.mrb[0].mxu0 %v2443
  %v2557 = vpop.f32.mrb[0].mxu0
  %v2558 = vadd.f32 %v2465, %v2557
  %v2559 = vpop.f32.mrb[0].mxu0
  %v2560 = vpop.f32.mrb[0].mxu0
  %v2561 = vadd.f32 %v2465, %v2560
  %v2562 = vpop.f32.mrb[0].mxu0
  %2563 = vdwg.mxu0
  %2564 = vst.msk [vmem:[%s14] sm:$0xff] %vm1279, %v2315
  %2565 = vst.msk [vmem:[%s14 + $0x8] sm:$0xff] %vm1279, %v2318
  %2566 = vst.msk [vmem:[%s14 + $0x10] sm:$0xff] %vm1279, %v2323
  %2567 = vst.msk [vmem:[%s14 + $0x18] sm:$0xff] %vm1279, %v2326
  %2568 = vst.msk [vmem:[%s15] sm:$0xff] %vm1279, %v2550
  %2569 = vst.msk [vmem:[%s15 + $0x8] sm:$0xff] %vm1279, %v2553
  %2570 = vst.msk [vmem:[%s15 + $0x10] sm:$0xff] %vm1279, %v2558
  %2571 = vst.msk [vmem:[%s15 + $0x18] sm:$0xff] %vm1279, %v2561
  // Predicated region
  $region58: #{pix4point_forward.4} parent=0 // pred_check
    _
  $region59: #{pix4point_forward.4} parent=0 // pred_check_branch
    %2573 = sbr.rel (0) target = $region61
  $region60: #{pix4point_forward.4} parent=0 // pred_region
    _
  $region61: #{pix4point_forward.4} parent=0 // pred_fallthru
    _
  // Predicated region
  $region62: #{pix4point_forward.4} parent=0 // pred_check
    _
  $region63: #{pix4point_forward.4} parent=0 // pred_check_branch
    %2575 = sbr.rel (0) target = $region65
  $region64: #{pix4point_forward.4} parent=0 // pred_region
    _
  $region65: #{pix4point_forward.4} parent=0 // pred_fallthru
    _
  // Predicated region
  $region66: #{pix4point_forward.4} parent=0 // pred_check
    _
  $region67: #{pix4point_forward.4} parent=0 // pred_check_branch
    %2577 = sbr.rel (0) target = $region69
  $region68: #{pix4point_forward.4} parent=0 // pred_region
    _
  $region69: #{pix4point_forward.4} parent=0 // pred_fallthru
    _
  // Predicated region
  $region70: #{pix4point_forward.4} parent=0 // pred_check
    _
  $region71: #{pix4point_forward.4} parent=0 // pred_check_branch
    %2579 = sbr.rel (0) target = $region73
  $region72: #{pix4point_forward.4} parent=0 // pred_region
    _
  $region73: #{pix4point_forward.4} parent=0 // pred_fallthru
    _

// kernel: pix4point_forward.7
$region0: #{pix4point_forward.7}
  #allocation0 [shape = 'u32[]', space=smem, size = 0x4, offset = 0x4, fixed_abs, tag = 'smem constant byte address 0x4 - core index']
  #allocation1 [shape = 'u32[144,128]{1,0:T(1,128)}', space=vmem, size = 0x12000, scoped, tag = 'internal scratch']
  %s0 = inlined_call_operand.vmem [shape: f32[2,24,64], index: 0, kind: input, shape index: {}]
  %s1 = inlined_call_operand.vmem [shape: f32[1,64], index: 1, kind: input, shape index: {}]
  %s2 = inlined_call_operand.vmem [shape: f32[1,64], index: 2, kind: input, shape index: {}]
  %s3 = inlined_call_operand.vmem [shape: bf16[64,128], index: 3, kind: input, shape index: {}]
  %s4 = inlined_call_operand.vmem [shape: bf16[64,128], index: 4, kind: input, shape index: {}]
  %s5 = inlined_call_operand.vmem [shape: f32[1,128], index: 5, kind: input, shape index: {}]
  %s6 = inlined_call_operand.vmem [shape: bf16[128,128], index: 6, kind: input, shape index: {}]
  %s7 = inlined_call_operand.vmem [shape: f32[1,128], index: 7, kind: input, shape index: {}]
  %s8 = inlined_call_operand.vmem [shape: bf16[128,128], index: 8, kind: input, shape index: {}]
  %s9 = inlined_call_operand.vmem [shape: f32[1,128], index: 9, kind: input, shape index: {}]
  %s10 = inlined_call_operand.hbm [shape: f32[2,128], index: 10, kind: output, shape index: {}]
  %s11 = sld [smem:[#allocation0]]
  $region50: #{pix4point_forward.7} parent=0
    _
  %s13 = ssub.s32 1, %s11
  %s14 = scalar_select 0, %s13, %s11
  $region1: #{pix4point_forward.7} parent=0
    #allocation2 [shape = 'u8[1024]{0}', space=vmem, size = 0x400, scoped, tag = 'output window, operand 0, single buffered']
    #allocation3 [shape = 's32[1]{0}', space=sflag, size = 0x4, scoped, tag = 'scoped memory for pix4point_forward.7']
    %15 = vsyncpa [#allocation3], 0
    // Predicated region
    $region2: #{pix4point_forward.7} parent=1 // pred_check
      _
    $region3: #{pix4point_forward.7} parent=1 // pred_check_branch
      %17 = sbr.rel (0) target = $region5
    $region4: #{pix4point_forward.7} parent=1 // pred_region
      _
    $region5: #{pix4point_forward.7} parent=1 // pred_fallthru
      _
    // Predicated region
    $region6: #{pix4point_forward.7} parent=1 // pred_check
      _
    $region7: #{pix4point_forward.7} parent=1 // pred_check_branch
      %19 = sbr.rel (0) target = $region9
    $region8: #{pix4point_forward.7} parent=1 // pred_region
      _
    $region9: #{pix4point_forward.7} parent=1 // pred_fallthru
      _
    // Predicated region
    $region10: #{pix4point_forward.7} parent=1 // pred_check
      _
    $region11: #{pix4point_forward.7} parent=1 // pred_check_branch
      %21 = sbr.rel (0) target = $region13
    $region12: #{pix4point_forward.7} parent=1 // pred_region
      _
    $region13: #{pix4point_forward.7} parent=1 // pred_fallthru
      _
    // Predicated region
    $region14: #{pix4point_forward.7} parent=1 // pred_check
      _
    $region15: #{pix4point_forward.7} parent=1 // pred_check_branch
      %23 = sbr.rel (0) target = $region17
    $region16: #{pix4point_forward.7} parent=1 // pred_region
      _
    $region17: #{pix4point_forward.7} parent=1 // pred_fallthru
      _
    // Predicated region
    $region18: #{pix4point_forward.7} parent=1 // pred_check
      _
    $region19: #{pix4point_forward.7} parent=1 // pred_check_branch
      %25 = sbr.rel (0) target = $region21
    $region20: #{pix4point_forward.7} parent=1 // pred_region
      _
    $region21: #{pix4point_forward.7} parent=1 // pred_fallthru
      _
    // Predicated region
    $region22: #{pix4point_forward.7} parent=1 // pred_check
      _
    $region23: #{pix4point_forward.7} parent=1 // pred_check_branch
      %27 = sbr.rel (0) target = $region25
    $region24: #{pix4point_forward.7} parent=1 // pred_region
      _
    $region25: #{pix4point_forward.7} parent=1 // pred_fallthru
      _
    // Predicated region
    $region26: #{pix4point_forward.7} parent=1 // pred_check
      _
    $region27: #{pix4point_forward.7} parent=1 // pred_check_branch
      %29 = sbr.rel (0) target = $region29
    $region28: #{pix4point_forward.7} parent=1 // pred_region
      _
    $region29: #{pix4point_forward.7} parent=1 // pred_fallthru
      _
    // Predicated region
    $region30: #{pix4point_forward.7} parent=1 // pred_check
      _
    $region31: #{pix4point_forward.7} parent=1 // pred_check_branch
      %31 = sbr.rel (0) target = $region33
    $region32: #{pix4point_forward.7} parent=1 // pred_region
      _
    $region33: #{pix4point_forward.7} parent=1 // pred_fallthru
      _
    // Predicated region
    $region34: #{pix4point_forward.7} parent=1 // pred_check
      _
    $region35: #{pix4point_forward.7} parent=1 // pred_check_branch
      %33 = sbr.rel (0) target = $region37
    $region36: #{pix4point_forward.7} parent=1 // pred_region
      _
    $region37: #{pix4point_forward.7} parent=1 // pred_fallthru
      _
    // Predicated region
    $region38: #{pix4point_forward.7} parent=1 // pred_check
      _
    $region39: #{pix4point_forward.7} parent=1 // pred_check_branch
      %35 = sbr.rel (0) target = $region41
    $region40: #{pix4point_forward.7} parent=1 // pred_region
      _
    $region41: #{pix4point_forward.7} parent=1 // pred_fallthru
      _
    %v37 = vld [vmem:[%s0] sm:$0xff]
    %v38 = vld [vmem:[%s0 + $0x8] sm:$0xff]
    %v39 = vld [vmem:[%s0 + $0x10] sm:$0xff]
    %v40 = vld [vmem:[%s0 + $0x18] sm:$0xff]
    %v41 = vld [vmem:[%s0 + $0x20] sm:$0xff]
    %v42 = vld [vmem:[%s0 + $0x28] sm:$0xff]
    %vm43 = vcmask 523264
    %v44 = vsel %vm43, %v37, 0.0
    %45 = vadd.xlane.f32.xlu0 %v44
    %v46 = vpop.xlane.xlu0 %45
    %v47 = vsel %vm43, %v38, 0.0
    %48 = vadd.xlane.f32.xlu0 %v47
    %v49 = vpop.xlane.xlu0 %48
    %v50 = vsel %vm43, %v39, 0.0
    %51 = vadd.xlane.f32.xlu0 %v50
    %v52 = vpop.xlane.xlu0 %51
    %v53 = vsel %vm43, %v40, 0.0
    %54 = vadd.xlane.f32.xlu0 %v53
    %v55 = vpop.xlane.xlu0 %54
    %v56 = vsel %vm43, %v41, 0.0
    %57 = vadd.xlane.f32.xlu0 %v56
    %v58 = vpop.xlane.xlu0 %57
    %v59 = vsel %vm43, %v42, 0.0
    %60 = vadd.xlane.f32.xlu0 %v59
    %v61 = vpop.xlane.xlu0 %60
    %v62 = vrcp.pop 64.0
    %v63 = vmul.f32 %v46, %v62
    %v64 = vmul.f32 %v49, %v62
    %v65 = vmul.f32 %v52, %v62
    %v66 = vmul.f32 %v55, %v62
    %v67 = vmul.f32 %v58, %v62
    %v68 = vmul.f32 %v61, %v62
    %v69 = vsub.f32 %v37, %v63
    %v70 = vsub.f32 %v38, %v64
    %v71 = vsub.f32 %v39, %v65
    %v72 = vsub.f32 %v40, %v66
    %v73 = vsub.f32 %v41, %v67
    %v74 = vsub.f32 %v42, %v68
    %v75 = vmul.f32 %v69, %v69
    %v76 = vmul.f32 %v70, %v70
    %v77 = vmul.f32 %v71, %v71
    %v78 = vmul.f32 %v72, %v72
    %v79 = vmul.f32 %v73, %v73
    %v80 = vmul.f32 %v74, %v74
    %v81 = vsel %vm43, %v75, 0.0
    %82 = vadd.xlane.f32.xlu0 %v81
    %v83 = vpop.xlane.xlu0 %82
    %v84 = vsel %vm43, %v76, 0.0
    %85 = vadd.xlane.f32.xlu0 %v84
    %v86 = vpop.xlane.xlu0 %85
    %v87 = vsel %vm43, %v77, 0.0
    %88 = vadd.xlane.f32.xlu0 %v87
    %v89 = vpop.xlane.xlu0 %88
    %v90 = vsel %vm43, %v78, 0.0
    %91 = vadd.xlane.f32.xlu0 %v90
    %v92 = vpop.xlane.xlu0 %91
    %v93 = vsel %vm43, %v79, 0.0
    %94 = vadd.xlane.f32.xlu0 %v93
    %v95 = vpop.xlane.xlu0 %94
    %v96 = vsel %vm43, %v80, 0.0
    %97 = vadd.xlane.f32.xlu0 %v96
    %v98 = vpop.xlane.xlu0 %97
    %v99 = vmul.f32 %v83, %v62
    %v100 = vmul.f32 %v86, %v62
    %v101 = vmul.f32 %v89, %v62
    %v102 = vmul.f32 %v92, %v62
    %v103 = vmul.f32 %v95, %v62
    %v104 = vmul.f32 %v98, %v62
    %v105 = vadd.f32 %v99, 1e-06
    %v106 = vadd.f32 %v100, 1e-06
    %v107 = vadd.f32 %v101, 1e-06
    %v108 = vadd.f32 %v102, 1e-06
    %v109 = vadd.f32 %v103, 1e-06
    %v110 = vadd.f32 %v104, 1e-06
    %v111 = vrsqrt.pop %v105
    %v112 = vrsqrt.pop %v106
    %v113 = vrsqrt.pop %v107
    %v114 = vrsqrt.pop %v108
    %v115 = vrsqrt.pop %v109
    %v116 = vrsqrt.pop %v110
    %v117 = vmul.f32 %v69, %v111
    %v118 = vmul.f32 %v70, %v112
    %v119 = vmul.f32 %v71, %v113
    %v120 = vmul.f32 %v72, %v114
    %v121 = vmul.f32 %v73, %v115
    %v122 = vmul.f32 %v74, %v116
    %v123 = vld [vmem:[%s1] sm:$0x1]
    %v125 = vlaneseq
    %v126 = vshrl.u32 %v125, 7
    %v127 = vsub.s32 0, %v126
    %v128 = vrot.slane %v123, %v127
    %v130 = vmul.f32 %v117, %v128
    %v131 = vmul.f32 %v118, %v128
    %v132 = vmul.f32 %v119, %v128
    %v133 = vmul.f32 %v120, %v128
    %v134 = vmul.f32 %v121, %v128
    %v135 = vmul.f32 %v122, %v128
    %v136 = vld [vmem:[%s2] sm:$0x1]
    %v138 = vlaneseq
    %v139 = vshrl.u32 %v138, 7
    %v140 = vsub.s32 0, %v139
    %v141 = vrot.slane %v136, %v140
    %v143 = vadd.f32 %v130, %v141
    %v144 = vadd.f32 %v131, %v141
    %v145 = vadd.f32 %v132, %v141
    %v146 = vadd.f32 %v133, %v141
    %v147 = vadd.f32 %v134, %v141
    %v148 = vadd.f32 %v135, %v141
    %v149 = vlaneseq
    %v150 = vshrl.u32 %v149, 7
    %v151 = vadd.s32 %v150, 8
    %v152 = vadd.s32 %v150, 16
    %vm153 = vcmp.ge.s32.totalorder %v150, 1
    %vm154 = vcmp.ge.s32.totalorder %v151, 1
    %vm155 = vcmp.ge.s32.totalorder %v152, 1
    %vm156 = vcmp.lt.s32.totalorder %v150, 17
    %vm157 = vcmp.lt.s32.totalorder %v151, 17
    %vm158 = vcmp.lt.s32.totalorder %v152, 17
    %vm159 = vmand %vm153, %vm156
    %vm160 = vmand %vm154, %vm157
    %vm161 = vmand %vm155, %vm158
    %vm162 = vcmp.eq.s32.totalorder %v150, 0
    %vm163 = vcmp.eq.s32.totalorder %v151, 0
    %vm164 = vcmp.eq.s32.totalorder %v152, 0
    %v165 = vsel %vm159, 1, 0
    %v166 = vsel %vm160, 1, 0
    %v167 = vsel %vm161, 1, 0
    %vm168 = vcmp.eq.s32.totalorder %v165, 1
    %vm169 = vcmp.eq.s32.totalorder %v166, 1
    %vm170 = vcmp.eq.s32.totalorder %v167, 1
    %v171 = vsel %vm168, %v143, -1e+30
    %v172 = vsel %vm169, %v144, -1e+30
    %v173 = vsel %vm170, %v145, -1e+30
    %v174 = vsel %vm168, %v146, -1e+30
    %v175 = vsel %vm169, %v147, -1e+30
    %v176 = vsel %vm170, %v148, -1e+30
    %v177 = vsel %vm43, %v171, -inf
    %v178 = vsel %vm43, %v172, -inf
    %v179 = vsel %vm43, %v173, -inf
    %v180 = vmax.f32 %v177, %v179
    %v181 = vmax.f32 %v180, %v178
    %v182 = vrot.slane %v181, 4
    %v183 = vmax.f32 %v181, %v182
    %v184 = vrot.slane %v183, 2
    %v185 = vmax.f32 %v183, %v184
    %v186 = vrot.slane %v185, 1
    %v187 = vmax.f32 %v185, %v186
    %v188 = vsel %vm43, %v174, -inf
    %v189 = vsel %vm43, %v175, -inf
    %v190 = vsel %vm43, %v176, -inf
    %v191 = vmax.f32 %v188, %v190
    %v192 = vmax.f32 %v191, %v189
    %v193 = vrot.slane %v192, 4
    %v194 = vmax.f32 %v192, %v193
    %v195 = vrot.slane %v194, 2
    %v196 = vmax.f32 %v194, %v195
    %v197 = vrot.slane %v196, 1
    %v198 = vmax.f32 %v196, %v197
    %v199 = vsel %vm162, 1, 0
    %v200 = vsel %vm163, 1, 0
    %v201 = vsel %vm164, 1, 0
    %vm202 = vcmp.eq.s32.totalorder %v199, 1
    %vm203 = vcmp.eq.s32.totalorder %v200, 1
    %vm204 = vcmp.eq.s32.totalorder %v201, 1
    %v205 = vsel %vm202, %v143, -1e+30
    %v206 = vsel %vm203, %v144, -1e+30
    %v207 = vsel %vm204, %v145, -1e+30
    %v208 = vsel %vm202, %v146, -1e+30
    %v209 = vsel %vm203, %v147, -1e+30
    %v210 = vsel %vm204, %v148, -1e+30
    %v211 = vsel %vm43, %v205, -inf
    %v212 = vsel %vm43, %v206, -inf
    %v213 = vsel %vm43, %v207, -inf
    %v214 = vmax.f32 %v211, %v213
    %v215 = vmax.f32 %v214, %v212
    %v216 = vrot.slane %v215, 4
    %v217 = vmax.f32 %v215, %v216
    %v218 = vrot.slane %v217, 2
    %v219 = vmax.f32 %v217, %v218
    %v220 = vrot.slane %v219, 1
    %v221 = vmax.f32 %v219, %v220
    %v222 = vsel %vm43, %v208, -inf
    %v223 = vsel %vm43, %v209, -inf
    %v224 = vsel %vm43, %v210, -inf
    %v225 = vmax.f32 %v222, %v224
    %v226 = vmax.f32 %v225, %v223
    %v227 = vrot.slane %v226, 4
    %v228 = vmax.f32 %v226, %v227
    %v229 = vrot.slane %v228, 2
    %v230 = vmax.f32 %v228, %v229
    %v231 = vrot.slane %v230, 1
    %v232 = vmax.f32 %v230, %v231
    %v233 = vpack.c.bf16 %v187, %v187
    %v234 = vpack.c.bf16 %v198, %v198
    %v235 = vld [vmem:[%s3] sm:$0xf]
    %v236 = vld [vmem:[%s3 + $0x4] sm:$0xf]
    %v237 = vld [vmem:[%s3 + $0x8] sm:$0xf]
    %v238 = vld [vmem:[%s3 + $0xc] sm:$0xf]
    %v239 = vld [vmem:[%s3 + $0x10] sm:$0xf]
    %v240 = vld [vmem:[%s3 + $0x14] sm:$0xf]
    %v241 = vld [vmem:[%s3 + $0x18] sm:$0xf]
    %v242 = vld [vmem:[%s3 + $0x1c] sm:$0xf]
    %v243 = vpack.c.bf16 %v221, %v221
    %v244 = vpack.c.bf16 %v232, %v232
    %v245 = vld [vmem:[%s4] sm:$0xf]
    %v246 = vld [vmem:[%s4 + $0x4] sm:$0xf]
    %v247 = vld [vmem:[%s4 + $0x8] sm:$0xf]
    %v248 = vld [vmem:[%s4 + $0xc] sm:$0xf]
    %v249 = vld [vmem:[%s4 + $0x10] sm:$0xf]
    %v250 = vld [vmem:[%s4 + $0x14] sm:$0xf]
    %v251 = vld [vmem:[%s4 + $0x18] sm:$0xf]
    %v252 = vld [vmem:[%s4 + $0x1c] sm:$0xf]
    %v255 = vunpack.c.l.b16 %v243
    %v256 = vunpack.c.l.b16 %v244
    %vm257 = vcmask 1041409
    %v258 = vsel %vm257, %v256, %v255
    %v259 = vpack.c.b16 %v258, %v258
    %v268 = vunpack.c.l.b16 %v245
    %v269 = vunpack.c.l.b16 %v246
    %v270 = vunpack.c.l.b16 %v247
    %v271 = vunpack.c.l.b16 %v248
    %v272 = vunpack.c.l.b16 %v249
    %v273 = vunpack.c.l.b16 %v250
    %v274 = vunpack.c.l.b16 %v251
    %v275 = vunpack.c.l.b16 %v252
    %v276 = vpack.c.b16 %v269, %v268
    %v277 = vpack.c.b16 %v271, %v270
    %v278 = vpack.c.b16 %v273, %v272
    %v279 = vpack.c.b16 %v275, %v274
    %v285 = vsel %vm43, %v259, 0
    %287 = vmatprep.subr.bf16.mxu0 0
    %288 = vmatpush1.bf16.msra.mxu0 %v276
    %289 = vmatprep.subr.bf16.mxu0 0
    %290 = vmatpush1.bf16.msra.mxu0 %v277
    %291 = vmatprep.subr.bf16.mxu0 0
    %292 = vmatpush1.bf16.msra.mxu0 %v278
    %293 = vmatprep.subr.bf16.mxu0 0
    %294 = vmatpush1.bf16.msra.mxu0 %v279
    %295 = vmatprep.subr.bf16.mxu0 0
    %296 = vmatpush1.bf16.msra.mxu0 0
    %297 = vmatprep.subr.bf16.mxu0 0
    %298 = vmatpush1.bf16.msra.mxu0 0
    %299 = vmatprep.subr.bf16.mxu0 0
    %300 = vmatpush1.bf16.msra.mxu0 0
    %301 = vmatprep.subr.bf16.mxu0 0
    %302 = vmatpush1.bf16.msra.mxu0 0
    %303 = vmatprep.subr.bf16.mxu0 0
    %304 = vmatpush1.bf16.msra.mxu0 0
    %305 = vmatprep.subr.bf16.mxu0 0
    %306 = vmatpush1.bf16.msra.mxu0 0
    %307 = vmatprep.subr.bf16.mxu0 0
    %308 = vmatpush1.bf16.msra.mxu0 0
    %309 = vmatprep.subr.bf16.mxu0 0
    %310 = vmatpush1.bf16.msra.mxu0 0
    %311 = vmatprep.subr.bf16.mxu0 0
    %312 = vmatpush1.bf16.msra.mxu0 0
    %313 = vmatprep.subr.bf16.mxu0 0
    %314 = vmatpush1.bf16.msra.mxu0 0
    %315 = vmatprep.subr.bf16.mxu0 0
    %316 = vmatpush1.bf16.msra.mxu0 0
    %317 = vmatprep.subr.bf16.mxu0 0
    %318 = vmatpush1.bf16.msra.mxu0 0
    %319 = vmatprep.mubr.bf16.mxu0 0
    %320 = vmatmul.mubr.bf16.gmra.mrb[0].mxu0 %v285
    %v321 = vpop.f32.mrb[0].mxu0
    %v322 = vadd.f32 0.0, %v321
    %v323 = vpop.f32.mrb[0].mxu0
    %v324 = vpop.f32.mrb[0].mxu0
    %v325 = vpop.f32.mrb[0].mxu0
    %326 = vdwg.mxu0
    %v329 = vunpack.c.l.b16 %v233
    %v330 = vunpack.c.l.b16 %v234
    %v331 = vsel %vm257, %v330, %v329
    %v332 = vpack.c.b16 %v331, %v331
    %v341 = vunpack.c.l.b16 %v235
    %v342 = vunpack.c.l.b16 %v236
    %v343 = vunpack.c.l.b16 %v237
    %v344 = vunpack.c.l.b16 %v238
    %v345 = vunpack.c.l.b16 %v239
    %v346 = vunpack.c.l.b16 %v240
    %v347 = vunpack.c.l.b16 %v241
    %v348 = vunpack.c.l.b16 %v242
    %v349 = vpack.c.b16 %v342, %v341
    %v350 = vpack.c.b16 %v344, %v343
    %v351 = vpack.c.b16 %v346, %v345
    %v352 = vpack.c.b16 %v348, %v347
    %v358 = vsel %vm43, %v332, 0
    %360 = vmatprep.subr.bf16.mxu0 0
    %361 = vmatpush1.bf16.msra.mxu0 %v349
    %362 = vmatprep.subr.bf16.mxu0 0
    %363 = vmatpush1.bf16.msra.mxu0 %v350
    %364 = vmatprep.subr.bf16.mxu0 0
    %365 = vmatpush1.bf16.msra.mxu0 %v351
    %366 = vmatprep.subr.bf16.mxu0 0
    %367 = vmatpush1.bf16.msra.mxu0 %v352
    %368 = vmatprep.subr.bf16.mxu0 0
    %369 = vmatpush1.bf16.msra.mxu0 0
    %370 = vmatprep.subr.bf16.mxu0 0
    %371 = vmatpush1.bf16.msra.mxu0 0
    %372 = vmatprep.subr.bf16.mxu0 0
    %373 = vmatpush1.bf16.msra.mxu0 0
    %374 = vmatprep.subr.bf16.mxu0 0
    %375 = vmatpush1.bf16.msra.mxu0 0
    %376 = vmatprep.subr.bf16.mxu0 0
    %377 = vmatpush1.bf16.msra.mxu0 0
    %378 = vmatprep.subr.bf16.mxu0 0
    %379 = vmatpush1.bf16.msra.mxu0 0
    %380 = vmatprep.subr.bf16.mxu0 0
    %381 = vmatpush1.bf16.msra.mxu0 0
    %382 = vmatprep.subr.bf16.mxu0 0
    %383 = vmatpush1.bf16.msra.mxu0 0
    %384 = vmatprep.subr.bf16.mxu0 0
    %385 = vmatpush1.bf16.msra.mxu0 0
    %386 = vmatprep.subr.bf16.mxu0 0
    %387 = vmatpush1.bf16.msra.mxu0 0
    %388 = vmatprep.subr.bf16.mxu0 0
    %389 = vmatpush1.bf16.msra.mxu0 0
    %390 = vmatprep.subr.bf16.mxu0 0
    %391 = vmatpush1.bf16.msra.mxu0 0
    %392 = vmatprep.mubr.bf16.mxu0 0
    %393 = vmatmul.mubr.bf16.gmra.mrb[0].mxu0 %v358
    %v394 = vpop.f32.mrb[0].mxu0
    %v395 = vadd.f32 %v322, %v394
    %v396 = vpop.f32.mrb[0].mxu0
    %v397 = vpop.f32.mrb[0].mxu0
    %v398 = vpop.f32.mrb[0].mxu0
    %399 = vdwg.mxu0
    %v400 = vld [vmem:[%s5] sm:$0x1]
    %v402 = vlaneseq
    %v403 = vshrl.u32 %v402, 7
    %v404 = vsub.s32 0, %v403
    %v405 = vrot.slane %v400, %v404
    %v407 = vadd.f32 %v395, %v405
    %v408 = vmax.f32 %v407, 0.0
    %v409 = vpack.c.bf16 %v408, %v408
    %v410 = vld [vmem:[%s6] sm:$0xf]
    %v411 = vld [vmem:[%s6 + $0x4] sm:$0xf]
    %v412 = vld [vmem:[%s6 + $0x8] sm:$0xf]
    %v413 = vld [vmem:[%s6 + $0xc] sm:$0xf]
    %v414 = vld [vmem:[%s6 + $0x10] sm:$0xf]
    %v415 = vld [vmem:[%s6 + $0x14] sm:$0xf]
    %v416 = vld [vmem:[%s6 + $0x18] sm:$0xf]
    %v417 = vld [vmem:[%s6 + $0x1c] sm:$0xf]
    %v418 = vld [vmem:[%s6 + $0x20] sm:$0xf]
    %v419 = vld [vmem:[%s6 + $0x24] sm:$0xf]
    %v420 = vld [vmem:[%s6 + $0x28] sm:$0xf]
    %v421 = vld [vmem:[%s6 + $0x2c] sm:$0xf]
    %v422 = vld [vmem:[%s6 + $0x30] sm:$0xf]
    %v423 = vld [vmem:[%s6 + $0x34] sm:$0xf]
    %v424 = vld [vmem:[%s6 + $0x38] sm:$0xf]
    %v425 = vld [vmem:[%s6 + $0x3c] sm:$0xf]
    %v426 = vld [vmem:[%s7] sm:$0x1]
    %v428 = vlaneseq
    %v429 = vshrl.u32 %v428, 7
    %v430 = vsub.s32 0, %v429
    %v431 = vrot.slane %v426, %v430
    %v449 = vunpack.c.l.b16 %v410
    %v450 = vunpack.c.l.b16 %v411
    %v451 = vunpack.c.l.b16 %v412
    %v452 = vunpack.c.l.b16 %v413
    %v453 = vunpack.c.l.b16 %v414
    %v454 = vunpack.c.l.b16 %v415
    %v455 = vunpack.c.l.b16 %v416
    %v456 = vunpack.c.l.b16 %v417
    %v457 = vunpack.c.l.b16 %v418
    %v458 = vunpack.c.l.b16 %v419
    %v459 = vunpack.c.l.b16 %v420
    %v460 = vunpack.c.l.b16 %v421
    %v461 = vunpack.c.l.b16 %v422
    %v462 = vunpack.c.l.b16 %v423
    %v463 = vunpack.c.l.b16 %v424
    %v464 = vunpack.c.l.b16 %v425
    %v465 = vpack.c.b16 %v450, %v449
    %v466 = vpack.c.b16 %v452, %v451
    %v467 = vpack.c.b16 %v454, %v453
    %v468 = vpack.c.b16 %v456, %v455
    %v469 = vpack.c.b16 %v458, %v457
    %v470 = vpack.c.b16 %v460, %v459
    %v471 = vpack.c.b16 %v462, %v461
    %v472 = vpack.c.b16 %v464, %v463
    %481 = vmatprep.subr.bf16.mxu0 0
    %482 = vmatpush1.bf16.msra.mxu0 %v465
    %483 = vmatprep.subr.bf16.mxu0 0
    %484 = vmatpush1.bf16.msra.mxu0 %v466
    %485 = vmatprep.subr.bf16.mxu0 0
    %486 = vmatpush1.bf16.msra.mxu0 %v467
    %487 = vmatprep.subr.bf16.mxu0 0
    %488 = vmatpush1.bf16.msra.mxu0 %v468
    %489 = vmatprep.subr.bf16.mxu0 0
    %490 = vmatpush1.bf16.msra.mxu0 %v469
    %491 = vmatprep.subr.bf16.mxu0 0
    %492 = vmatpush1.bf16.msra.mxu0 %v470
    %493 = vmatprep.subr.bf16.mxu0 0
    %494 = vmatpush1.bf16.msra.mxu0 %v471
    %495 = vmatprep.subr.bf16.mxu0 0
    %496 = vmatpush1.bf16.msra.mxu0 %v472
    %497 = vmatprep.subr.bf16.mxu0 0
    %498 = vmatpush1.bf16.msra.mxu0 0
    %499 = vmatprep.subr.bf16.mxu0 0
    %500 = vmatpush1.bf16.msra.mxu0 0
    %501 = vmatprep.subr.bf16.mxu0 0
    %502 = vmatpush1.bf16.msra.mxu0 0
    %503 = vmatprep.subr.bf16.mxu0 0
    %504 = vmatpush1.bf16.msra.mxu0 0
    %505 = vmatprep.subr.bf16.mxu0 0
    %506 = vmatpush1.bf16.msra.mxu0 0
    %507 = vmatprep.subr.bf16.mxu0 0
    %508 = vmatpush1.bf16.msra.mxu0 0
    %509 = vmatprep.subr.bf16.mxu0 0
    %510 = vmatpush1.bf16.msra.mxu0 0
    %511 = vmatprep.subr.bf16.mxu0 0
    %512 = vmatpush1.bf16.msra.mxu0 0
    %513 = vmatprep.mubr.bf16.mxu0 0
    %514 = vmatmul.mubr.bf16.gmra.mrb[0].mxu0 %v409
    %v515 = vpop.f32.mrb[0].mxu0
    %v516 = vadd.f32 %v431, %v515
    %v517 = vpop.f32.mrb[0].mxu0
    %v518 = vpop.f32.mrb[0].mxu0
    %v519 = vpop.f32.mrb[0].mxu0
    %520 = vdwg.mxu0
    %v521 = vmax.f32 %v516, 0.0
    %v522 = vpack.c.bf16 %v521, %v521
    %v523 = vld [vmem:[%s8] sm:$0xf]
    %v524 = vld [vmem:[%s8 + $0x4] sm:$0xf]
    %v525 = vld [vmem:[%s8 + $0x8] sm:$0xf]
    %v526 = vld [vmem:[%s8 + $0xc] sm:$0xf]
    %v527 = vld [vmem:[%s8 + $0x10] sm:$0xf]
    %v528 = vld [vmem:[%s8 + $0x14] sm:$0xf]
    %v529 = vld [vmem:[%s8 + $0x18] sm:$0xf]
    %v530 = vld [vmem:[%s8 + $0x1c] sm:$0xf]
    %v531 = vld [vmem:[%s8 + $0x20] sm:$0xf]
    %v532 = vld [vmem:[%s8 + $0x24] sm:$0xf]
    %v533 = vld [vmem:[%s8 + $0x28] sm:$0xf]
    %v534 = vld [vmem:[%s8 + $0x2c] sm:$0xf]
    %v535 = vld [vmem:[%s8 + $0x30] sm:$0xf]
    %v536 = vld [vmem:[%s8 + $0x34] sm:$0xf]
    %v537 = vld [vmem:[%s8 + $0x38] sm:$0xf]
    %v538 = vld [vmem:[%s8 + $0x3c] sm:$0xf]
    %v539 = vld [vmem:[%s9] sm:$0x1]
    %v541 = vlaneseq
    %v542 = vshrl.u32 %v541, 7
    %v543 = vsub.s32 0, %v542
    %v544 = vrot.slane %v539, %v543
    %v562 = vunpack.c.l.b16 %v523
    %v563 = vunpack.c.l.b16 %v524
    %v564 = vunpack.c.l.b16 %v525
    %v565 = vunpack.c.l.b16 %v526
    %v566 = vunpack.c.l.b16 %v527
    %v567 = vunpack.c.l.b16 %v528
    %v568 = vunpack.c.l.b16 %v529
    %v569 = vunpack.c.l.b16 %v530
    %v570 = vunpack.c.l.b16 %v531
    %v571 = vunpack.c.l.b16 %v532
    %v572 = vunpack.c.l.b16 %v533
    %v573 = vunpack.c.l.b16 %v534
    %v574 = vunpack.c.l.b16 %v535
    %v575 = vunpack.c.l.b16 %v536
    %v576 = vunpack.c.l.b16 %v537
    %v577 = vunpack.c.l.b16 %v538
    %v578 = vpack.c.b16 %v563, %v562
    %v579 = vpack.c.b16 %v565, %v564
    %v580 = vpack.c.b16 %v567, %v566
    %v581 = vpack.c.b16 %v569, %v568
    %v582 = vpack.c.b16 %v571, %v570
    %v583 = vpack.c.b16 %v573, %v572
    %v584 = vpack.c.b16 %v575, %v574
    %v585 = vpack.c.b16 %v577, %v576
    %594 = vmatprep.subr.bf16.mxu0 0
    %595 = vmatpush1.bf16.msra.mxu0 %v578
    %596 = vmatprep.subr.bf16.mxu0 0
    %597 = vmatpush1.bf16.msra.mxu0 %v579
    %598 = vmatprep.subr.bf16.mxu0 0
    %599 = vmatpush1.bf16.msra.mxu0 %v580
    %600 = vmatprep.subr.bf16.mxu0 0
    %601 = vmatpush1.bf16.msra.mxu0 %v581
    %602 = vmatprep.subr.bf16.mxu0 0
    %603 = vmatpush1.bf16.msra.mxu0 %v582
    %604 = vmatprep.subr.bf16.mxu0 0
    %605 = vmatpush1.bf16.msra.mxu0 %v583
    %606 = vmatprep.subr.bf16.mxu0 0
    %607 = vmatpush1.bf16.msra.mxu0 %v584
    %608 = vmatprep.subr.bf16.mxu0 0
    %609 = vmatpush1.bf16.msra.mxu0 %v585
    %610 = vmatprep.subr.bf16.mxu0 0
    %611 = vmatpush1.bf16.msra.mxu0 0
    %612 = vmatprep.subr.bf16.mxu0 0
    %613 = vmatpush1.bf16.msra.mxu0 0
    %614 = vmatprep.subr.bf16.mxu0 0
    %615 = vmatpush1.bf16.msra.mxu0 0
    %616 = vmatprep.subr.bf16.mxu0 0
    %617 = vmatpush1.bf16.msra.mxu0 0
    %618 = vmatprep.subr.bf16.mxu0 0
    %619 = vmatpush1.bf16.msra.mxu0 0
    %620 = vmatprep.subr.bf16.mxu0 0
    %621 = vmatpush1.bf16.msra.mxu0 0
    %622 = vmatprep.subr.bf16.mxu0 0
    %623 = vmatpush1.bf16.msra.mxu0 0
    %624 = vmatprep.subr.bf16.mxu0 0
    %625 = vmatpush1.bf16.msra.mxu0 0
    %626 = vmatprep.mubr.bf16.mxu0 0
    %627 = vmatmul.mubr.bf16.gmra.mrb[0].mxu0 %v522
    %v628 = vpop.f32.mrb[0].mxu0
    %v629 = vadd.f32 %v544, %v628
    %v630 = vpop.f32.mrb[0].mxu0
    %v631 = vpop.f32.mrb[0].mxu0
    %v632 = vpop.f32.mrb[0].mxu0
    %633 = vdwg.mxu0
    %634 = vst [vmem:[#allocation2] sm:$0x3] %v629
    // Predicated region
    $region42: #{pix4point_forward.7} parent=1 // pred_check
      _
    $region43: #{pix4point_forward.7} parent=1 // pred_check_branch
      %636 = sbr.rel (0) target = $region45
    $region44: #{pix4point_forward.7} parent=1 // pred_region
      %s638 = ssub.s32 32, 32
      %639 = vsyncadd [#allocation3], %s638
      %s641 = sshll.u32 [#allocation2], 4
      %s642 = int_to_ptr.vmem [resolvable:$true] %s641
      %644 = dma.vmem_to_hbm [thread:$0]  %s642, 32, %s10, [#allocation3]
    $region45: #{pix4point_forward.7} parent=1 // pred_fallthru
      _
    // Predicated region
    $region46: #{pix4point_forward.7} parent=1 // pred_check
      _
    $region47: #{pix4point_forward.7} parent=1 // pred_check_branch
      %646 = sbr.rel (0) target = $region49
    $region48: #{pix4point_forward.7} parent=1 // pred_region
      %647 = dma.done [#allocation3], 32
    $region49: #{pix4point_forward.7} parent=1 // pred_fallthru
      _
    %648 = vsyncpa [#allocation3], 1

// kernel: pix4point_forward.5
$region0: #{pix4point_forward.5}
  #allocation0 [shape = 'u32[]', space=smem, size = 0x4, offset = 0x4, fixed_abs, tag = 'smem constant byte address 0x4 - core index']
  #allocation1 [shape = 'u32[144,128]{1,0:T(1,128)}', space=vmem, size = 0x12000, scoped, tag = 'internal scratch']
  %s0 = inlined_call_operand.vmem [shape: f32[2,24,64], index: 0, kind: input, shape index: {}]
  %s1 = inlined_call_operand.vmem [shape: f32[2,24,64], index: 1, kind: input, shape index: {}]
  %s2 = inlined_call_operand.vmem [shape: f32[1,64], index: 2, kind: input, shape index: {}]
  %s3 = inlined_call_operand.vmem [shape: f32[1,64], index: 3, kind: input, shape index: {}]
  %s4 = inlined_call_operand.vmem [shape: bf16[12,64,16], index: 4, kind: input, shape index: {}]
  %s5 = inlined_call_operand.vmem [shape: f32[12,1,16], index: 5, kind: input, shape index: {}]
  %s6 = inlined_call_operand.vmem [shape: bf16[4,16,64], index: 6, kind: input, shape index: {}]
  %s7 = inlined_call_operand.vmem [shape: f32[1,64], index: 7, kind: input, shape index: {}]
  %s8 = inlined_call_operand.vmem [shape: f32[1,64], index: 8, kind: input, shape index: {}]
  %s9 = inlined_call_operand.vmem [shape: f32[1,64], index: 9, kind: input, shape index: {}]
  %s10 = inlined_call_operand.vmem [shape: bf16[64,256], index: 10, kind: input, shape index: {}]
  %s11 = inlined_call_operand.vmem [shape: f32[1,256], index: 11, kind: input, shape index: {}]
  %s12 = inlined_call_operand.vmem [shape: bf16[256,64], index: 12, kind: input, shape index: {}]
  %s13 = inlined_call_operand.vmem [shape: f32[1,64], index: 13, kind: input, shape index: {}]
  %s14 = inlined_call_operand.vmem [shape: f32[2,24,64], index: 14, kind: output, shape index: {}]
  %s15 = sld [smem:[#allocation0]]
  $region89: #{pix4point_forward.5} parent=0
    _
  %s17 = ssub.s32 1, %s15
  %s18 = scalar_select 0, %s17, %s15
  loop: start=0, step=1, limit=4
  $region2: #{pix4point_forward.5} parent=0 // loop_pre_header
    _
  $region3: #{pix4point_forward.5} parent=0 // loop_header
    %s20 = sphi 0, %s24
    %p21 = scmp.ge.s32.totalorder %s20, 4
    %s30 = sphi 0, %s32
    %s33 = sphi 0, %s30
    %s34 = sphi 0, %s33
    %s50 = sphi 0, %s34
    %s56 = sphi 0, %s58
    %s59 = sphi 0, %s56
    %s60 = sphi 0, %s59
    %s76 = sphi 0, %s60
    %s80 = sphi 0, %s80
    %s82 = sphi 0, %s80
    %s83 = sphi 0, %s82
    %s97 = sphi 0, %s83
    %s101 = sphi 0, %s101
    %s103 = sphi 0, %s101
    %s104 = sphi 0, %s103
    %s118 = sphi 0, %s104
    %s122 = sphi 0, %s122
    %s124 = sphi 0, %s122
    %s125 = sphi 0, %s124
    %s139 = sphi 0, %s125
    %s143 = sphi 0, %s143
    %s145 = sphi 0, %s143
    %s146 = sphi 0, %s145
    %s160 = sphi 0, %s146
    %s164 = sphi 0, %s164
    %s166 = sphi 0, %s164
    %s167 = sphi 0, %s166
    %s181 = sphi 0, %s167
    %s185 = sphi 0, %s185
    %s187 = sphi 0, %s185
    %s188 = sphi 0, %s187
    %s202 = sphi 0, %s188
    %s206 = sphi 0, %s206
    %s208 = sphi 0, %s206
    %s209 = sphi 0, %s208
    %s223 = sphi 0, %s209
    %s227 = sphi 0, %s227
    %s229 = sphi 0, %s227
    %s230 = sphi 0, %s229
    %s244 = sphi 0, %s230
    %s248 = sphi 0, %s248
    %s250 = sphi 0, %s248
    %s251 = sphi 0, %s250
    %s265 = sphi 0, %s251
    %s269 = sphi 0, %s269
    %s271 = sphi 0, %s269
    %s272 = sphi 0, %s271
    %s286 = sphi 0, %s272
    %s290 = sphi 0, %s290
    %s292 = sphi 0, %s290
    %s293 = sphi 0, %s292
    %s307 = sphi 0, %s293
    %s311 = sphi 0, %s311
    %s313 = sphi 0, %s311
    %s314 = sphi 0, %s313
    %s328 = sphi 0, %s314
    %s334 = sphi 0, %s336
    %s337 = sphi 0, %s334
    %s338 = sphi 0, %s337
    %s354 = sphi 0, %s338
  $region4: #{pix4point_forward.5} parent=0 // loop_header_branch
    %23 = sbr.rel (%p21) target = $region8
  $region5: #{pix4point_forward.5} parent=0 // loop_body
    %s25 = ssub.s32 %s20, 1
    %s26 = ssub.s32 %s20, 2
    %s27 = sadd.s32 %s20, 1
    %s28 = ssub.s32 %s20, %s27
    %p29 = scmp.eq.s32.totalorder %s28, 0
    %s31 = sadd.s32 %s30, 1
    %s32 = scalar_select %p29, %s30, %s31
    %p35 = pneg %p29
    %p36 = scmp.eq.s32.totalorder %s20, 1
    %p37 = por %p35, %p36
    %p38 = scmp.ne.s32.totalorder %s30, %s33
    %p39 = scmp.eq.s32.totalorder %s20, 0
    %p40 = por %p38, %p39
    %p41 = scmp.ne.s32.totalorder %s30, %s33
    %p42 = scmp.eq.s32.totalorder %s25, 1
    %p43 = por %p41, %p42
    %p44 = scmp.ne.s32.totalorder %s33, %s34
    %p45 = scmp.eq.s32.totalorder %s25, 0
    %p46 = por %p44, %p45
    %p47 = scmp.ne.s32.totalorder %s33, %s34
    %p48 = scmp.eq.s32.totalorder %s26, 1
    %p49 = por %p47, %p48
    %p51 = scmp.ne.s32.totalorder %s34, %s50
    %p52 = scmp.eq.s32.totalorder %s26, 0
    %p53 = por %p51, %p52
    %s54 = ssub.s32 %s20, %s27
    %p55 = scmp.eq.s32.totalorder %s54, 0
    %s57 = sadd.s32 %s56, 1
    %s58 = scalar_select %p55, %s56, %s57
    %p61 = pneg %p55
    %p62 = scmp.eq.s32.totalorder %s20, 1
    %p63 = por %p61, %p62
    %p64 = scmp.ne.s32.totalorder %s56, %s59
    %p65 = scmp.eq.s32.totalorder %s20, 0
    %p66 = por %p64, %p65
    %p67 = scmp.ne.s32.totalorder %s56, %s59
    %p68 = scmp.eq.s32.totalorder %s25, 1
    %p69 = por %p67, %p68
    %p70 = scmp.ne.s32.totalorder %s59, %s60
    %p71 = scmp.eq.s32.totalorder %s25, 0
    %p72 = por %p70, %p71
    %p73 = scmp.ne.s32.totalorder %s59, %s60
    %p74 = scmp.eq.s32.totalorder %s26, 1
    %p75 = por %p73, %p74
    %p77 = scmp.ne.s32.totalorder %s60, %s76
    %p78 = scmp.eq.s32.totalorder %s26, 0
    %p79 = por %p77, %p78
    %s81 = sadd.s32 %s80, 1
    %p84 = scmp.eq.s32.totalorder %s20, 1
    %p85 = scmp.ne.s32.totalorder %s80, %s82
    %p86 = scmp.eq.s32.totalorder %s20, 0
    %p87 = por %p85, %p86
    %p88 = scmp.ne.s32.totalorder %s80, %s82
    %p89 = scmp.eq.s32.totalorder %s25, 1
    %p90 = por %p88, %p89
    %p91 = scmp.ne.s32.totalorder %s82, %s83
    %p92 = scmp.eq.s32.totalorder %s25, 0
    %p93 = por %p91, %p92
    %p94 = scmp.ne.s32.totalorder %s82, %s83
    %p95 = scmp.eq.s32.totalorder %s26, 1
    %p96 = por %p94, %p95
    %p98 = scmp.ne.s32.totalorder %s83, %s97
    %p99 = scmp.eq.s32.totalorder %s26, 0
    %p100 = por %p98, %p99
    %s102 = sadd.s32 %s101, 1
    %p105 = scmp.eq.s32.totalorder %s20, 1
    %p106 = scmp.ne.s32.totalorder %s101, %s103
    %p107 = scmp.eq.s32.totalorder %s20, 0
    %p108 = por %p106, %p107
    %p109 = scmp.ne.s32.totalorder %s101, %s103
    %p110 = scmp.eq.s32.totalorder %s25, 1
    %p111 = por %p109, %p110
    %p112 = scmp.ne.s32.totalorder %s103, %s104
    %p113 = scmp.eq.s32.totalorder %s25, 0
    %p114 = por %p112, %p113
    %p115 = scmp.ne.s32.totalorder %s103, %s104
    %p116 = scmp.eq.s32.totalorder %s26, 1
    %p117 = por %p115, %p116
    %p119 = scmp.ne.s32.totalorder %s104, %s118
    %p120 = scmp.eq.s32.totalorder %s26, 0
    %p121 = por %p119, %p120
    %s123 = sadd.s32 %s122, 1
    %p126 = scmp.eq.s32.totalorder %s20, 1
    %p127 = scmp.ne.s32.totalorder %s122, %s124
    %p128 = scmp.eq.s32.totalorder %s20, 0
    %p129 = por %p127, %p128
    %p130 = scmp.ne.s32.totalorder %s122, %s124
    %p131 = scmp.eq.s32.totalorder %s25, 1
    %p132 = por %p130, %p131
    %p133 = scmp.ne.s32.totalorder %s124, %s125
    %p134 = scmp.eq.s32.totalorder %s25, 0
    %p135 = por %p133, %p134
    %p136 = scmp.ne.s32.totalorder %s124, %s125
    %p137 = scmp.eq.s32.totalorder %s26, 1
    %p138 = por %p136, %p137
    %p140 = scmp.ne.s32.totalorder %s125, %s139
    %p141 = scmp.eq.s32.totalorder %s26, 0
    %p142 = por %p140, %p141
    %s144 = sadd.s32 %s143, 1
    %p147 = scmp.eq.s32.totalorder %s20, 1
    %p148 = scmp.ne.s32.totalorder %s143, %s145
    %p149 = scmp.eq.s32.totalorder %s20, 0
    %p150 = por %p148, %p149
    %p151 = scmp.ne.s32.totalorder %s143, %s145
    %p152 = scmp.eq.s32.totalorder %s25, 1
    %p153 = por %p151, %p152
    %p154 = scmp.ne.s32.totalorder %s145, %s146
    %p155 = scmp.eq.s32.totalorder %s25, 0
    %p156 = por %p154, %p155
    %p157 = scmp.ne.s32.totalorder %s145, %s146
    %p158 = scmp.eq.s32.totalorder %s26, 1
    %p159 = por %p157, %p158
    %p161 = scmp.ne.s32.totalorder %s146, %s160
    %p162 = scmp.eq.s32.totalorder %s26, 0
    %p163 = por %p161, %p162
    %s165 = sadd.s32 %s164, 1
    %p168 = scmp.eq.s32.totalorder %s20, 1
    %p169 = scmp.ne.s32.totalorder %s164, %s166
    %p170 = scmp.eq.s32.totalorder %s20, 0
    %p171 = por %p169, %p170
    %p172 = scmp.ne.s32.totalorder %s164, %s166
    %p173 = scmp.eq.s32.totalorder %s25, 1
    %p174 = por %p172, %p173
    %p175 = scmp.ne.s32.totalorder %s166, %s167
    %p176 = scmp.eq.s32.totalorder %s25, 0
    %p177 = por %p175, %p176
    %p178 = scmp.ne.s32.totalorder %s166, %s167
    %p179 = scmp.eq.s32.totalorder %s26, 1
    %p180 = por %p178, %p179
    %p182 = scmp.ne.s32.totalorder %s167, %s181
    %p183 = scmp.eq.s32.totalorder %s26, 0
    %p184 = por %p182, %p183
    %s186 = sadd.s32 %s185, 1
    %p189 = scmp.eq.s32.totalorder %s20, 1
    %p190 = scmp.ne.s32.totalorder %s185, %s187
    %p191 = scmp.eq.s32.totalorder %s20, 0
    %p192 = por %p190, %p191
    %p193 = scmp.ne.s32.totalorder %s185, %s187
    %p194 = scmp.eq.s32.totalorder %s25, 1
    %p195 = por %p193, %p194
    %p196 = scmp.ne.s32.totalorder %s187, %s188
    %p197 = scmp.eq.s32.totalorder %s25, 0
    %p198 = por %p196, %p197
    %p199 = scmp.ne.s32.totalorder %s187, %s188
    %p200 = scmp.eq.s32.totalorder %s26, 1
    %p201 = por %p199, %p200
    %p203 = scmp.ne.s32.totalorder %s188, %s202
    %p204 = scmp.eq.s32.totalorder %s26, 0
    %p205 = por %p203, %p204
    %s207 = sadd.s32 %s206, 1
    %p210 = scmp.eq.s32.totalorder %s20, 1
    %p211 = scmp.ne.s32.totalorder %s206, %s208
    %p212 = scmp.eq.s32.totalorder %s20, 0
    %p213 = por %p211, %p212
    %p214 = scmp.ne.s32.totalorder %s206, %s208
    %p215 = scmp.eq.s32.totalorder %s25, 1
    %p216 = por %p214, %p215
    %p217 = scmp.ne.s32.totalorder %s208, %s209
    %p218 = scmp.eq.s32.totalorder %s25, 0
    %p219 = por %p217, %p218
    %p220 = scmp.ne.s32.totalorder %s208, %s209
    %p221 = scmp.eq.s32.totalorder %s26, 1
    %p222 = por %p220, %p221
    %p224 = scmp.ne.s32.totalorder %s209, %s223
    %p225 = scmp.eq.s32.totalorder %s26, 0
    %p226 = por %p224, %p225
    %s228 = sadd.s32 %s227, 1
    %p231 = scmp.eq.s32.totalorder %s20, 1
    %p232 = scmp.ne.s32.totalorder %s227, %s229
    %p233 = scmp.eq.s32.totalorder %s20, 0
    %p234 = por %p232, %p233
    %p235 = scmp.ne.s32.totalorder %s227, %s229
    %p236 = scmp.eq.s32.totalorder %s25, 1
    %p237 = por %p235, %p236
    %p238 = scmp.ne.s32.totalorder %s229, %s230
    %p239 = scmp.eq.s32.totalorder %s25, 0
    %p240 = por %p238, %p239
    %p241 = scmp.ne.s32.totalorder %s229, %s230
    %p242 = scmp.eq.s32.totalorder %s26, 1
    %p243 = por %p241, %p242
    %p245 = scmp.ne.s32.totalorder %s230, %s244
    %p246 = scmp.eq.s32.totalorder %s26, 0
    %p247 = por %p245, %p246
    %s249 = sadd.s32 %s248, 1
    %p252 = scmp.eq.s32.totalorder %s20, 1
    %p253 = scmp.ne.s32.totalorder %s248, %s250
    %p254 = scmp.eq.s32.totalorder %s20, 0
    %p255 = por %p253, %p254
    %p256 = scmp.ne.s32.totalorder %s248, %s250
    %p257 = scmp.eq.s32.totalorder %s25, 1
    %p258 = por %p256, %p257
    %p259 = scmp.ne.s32.totalorder %s250, %s251
    %p260 = scmp.eq.s32.totalorder %s25, 0
    %p261 = por %p259, %p260
    %p262 = scmp.ne.s32.totalorder %s250, %s251
    %p263 = scmp.eq.s32.totalorder %s26, 1
    %p264 = por %p262, %p263
    %p266 = scmp.ne.s32.totalorder %s251, %s265
    %p267 = scmp.eq.s32.totalorder %s26, 0
    %p268 = por %p266, %p267
    %s270 = sadd.s32 %s269, 1
    %p273 = scmp.eq.s32.totalorder %s20, 1
    %p274 = scmp.ne.s32.totalorder %s269, %s271
    %p275 = scmp.eq.s32.totalorder %s20, 0
    %p276 = por %p274, %p275
    %p277 = scmp.ne.s32.totalorder %s269, %s271
    %p278 = scmp.eq.s32.totalorder %s25, 1
    %p279 = por %p277, %p278
    %p280 = scmp.ne.s32.totalorder %s271, %s272
    %p281 = scmp.eq.s32.totalorder %s25, 0
    %p282 = por %p280, %p281
    %p283 = scmp.ne.s32.totalorder %s271, %s272
    %p284 = scmp.eq.s32.totalorder %s26, 1
    %p285 = por %p283, %p284
    %p287 = scmp.ne.s32.totalorder %s272, %s286
    %p288 = scmp.eq.s32.totalorder %s26, 0
    %p289 = por %p287, %p288
    %s291 = sadd.s32 %s290, 1
    %p294 = scmp.eq.s32.totalorder %s20, 1
    %p295 = scmp.ne.s32.totalorder %s290, %s292
    %p296 = scmp.eq.s32.totalorder %s20, 0
    %p297 = por %p295, %p296
    %p298 = scmp.ne.s32.totalorder %s290, %s292
    %p299 = scmp.eq.s32.totalorder %s25, 1
    %p300 = por %p298, %p299
    %p301 = scmp.ne.s32.totalorder %s292, %s293
    %p302 = scmp.eq.s32.totalorder %s25, 0
    %p303 = por %p301, %p302
    %p304 = scmp.ne.s32.totalorder %s292, %s293
    %p305 = scmp.eq.s32.totalorder %s26, 1
    %p306 = por %p304, %p305
    %p308 = scmp.ne.s32.totalorder %s293, %s307
    %p309 = scmp.eq.s32.totalorder %s26, 0
    %p310 = por %p308, %p309
    %s312 = sadd.s32 %s311, 1
    %p315 = scmp.eq.s32.totalorder %s20, 1
    %p316 = scmp.ne.s32.totalorder %s311, %s313
    %p317 = scmp.eq.s32.totalorder %s20, 0
    %p318 = por %p316, %p317
    %p319 = scmp.ne.s32.totalorder %s311, %s313
    %p320 = scmp.eq.s32.totalorder %s25, 1
    %p321 = por %p319, %p320
    %p322 = scmp.ne.s32.totalorder %s313, %s314
    %p323 = scmp.eq.s32.totalorder %s25, 0
    %p324 = por %p322, %p323
    %p325 = scmp.ne.s32.totalorder %s313, %s314
    %p326 = scmp.eq.s32.totalorder %s26, 1
    %p327 = por %p325, %p326
    %p329 = scmp.ne.s32.totalorder %s314, %s328
    %p330 = scmp.eq.s32.totalorder %s26, 0
    %p331 = por %p329, %p330
    %s332 = ssub.s32 %s20, %s27
    %p333 = scmp.eq.s32.totalorder %s332, 0
    %s335 = sadd.s32 %s334, 1
    %s336 = scalar_select %p333, %s334, %s335
    %p339 = pneg %p333
    %p340 = scmp.eq.s32.totalorder %s20, 1
    %p341 = por %p339, %p340
    %p342 = scmp.ne.s32.totalorder %s334, %s337
    %p343 = scmp.eq.s32.totalorder %s20, 0
    %p344 = por %p342, %p343
    %p345 = scmp.ne.s32.totalorder %s334, %s337
    %p346 = scmp.eq.s32.totalorder %s25, 1
    %p347 = por %p345, %p346
    %p348 = scmp.ne.s32.totalorder %s337, %s338
    %p349 = scmp.eq.s32.totalorder %s25, 0
    %p350 = por %p348, %p349
    %p351 = scmp.ne.s32.totalorder %s337, %s338
    %p352 = scmp.eq.s32.totalorder %s26, 1
    %p353 = por %p351, %p352
    %p355 = scmp.ne.s32.totalorder %s338, %s354
    %p356 = scmp.eq.s32.totalorder %s26, 0
    %p357 = por %p355, %p356
    %p358 = scmp.le.s32.totalorder 1, %s20
    %p359 = scmp.lt.s32.totalorder %s20, 3
    %p360 = pnand %p358, %p359
    %p361 = pneg %p360
    // Predicated region
    $region9: #{pix4point_forward.5} parent=5 // pred_check
      _
    $region10: #{pix4point_forward.5} parent=5 // pred_check_branch
      %363 = sbr.rel (%p360) target = $region12
    $region11: #{pix4point_forward.5} parent=5 // pred_region
      %s364 = ssub.s32 %s20, 1
      // Predicated region
      $region13: #{pix4point_forward.5} parent=11 // pred_check
        %p365 = pneg %p93
      $region14: #{pix4point_forward.5} parent=11 // pred_check_branch
        %367 = sbr.rel (%p365) target = $region16
      $region15: #{pix4point_forward.5} parent=11 // pred_region
        _
      $region16: #{pix4point_forward.5} parent=11 // pred_fallthru
        _
      // Predicated region
      $region17: #{pix4point_forward.5} parent=11 // pred_check
        %p368 = pneg %p114
      $region18: #{pix4point_forward.5} parent=11 // pred_check_branch
        %370 = sbr.rel (%p368) target = $region20
      $region19: #{pix4point_forward.5} parent=11 // pred_region
        _
      $region20: #{pix4point_forward.5} parent=11 // pred_fallthru
        _
      // Predicated region
      $region21: #{pix4point_forward.5} parent=11 // pred_check
        %p371 = pneg %p135
      $region22: #{pix4point_forward.5} parent=11 // pred_check_branch
        %373 = sbr.rel (%p371) target = $region24
      $region23: #{pix4point_forward.5} parent=11 // pred_region
        _
      $region24: #{pix4point_forward.5} parent=11 // pred_fallthru
        _
      // Predicated region
      $region25: #{pix4point_forward.5} parent=11 // pred_check
        %p374 = pneg %p156
      $region26: #{pix4point_forward.5} parent=11 // pred_check_branch
        %376 = sbr.rel (%p374) target = $region28
      $region27: #{pix4point_forward.5} parent=11 // pred_region
        _
      $region28: #{pix4point_forward.5} parent=11 // pred_fallthru
        _
      // Predicated region
      $region29: #{pix4point_forward.5} parent=11 // pred_check
        %p377 = pneg %p177
      $region30: #{pix4point_forward.5} parent=11 // pred_check_branch
        %379 = sbr.rel (%p377) target = $region32
      $region31: #{pix4point_forward.5} parent=11 // pred_region
        _
      $region32: #{pix4point_forward.5} parent=11 // pred_fallthru
        _
      // Predicated region
      $region33: #{pix4point_forward.5} parent=11 // pred_check
        %p380 = pneg %p198
      $region34: #{pix4point_forward.5} parent=11 // pred_check_branch
        %382 = sbr.rel (%p380) target = $region36
      $region35: #{pix4point_forward.5} parent=11 // pred_region
        _
      $region36: #{pix4point_forward.5} parent=11 // pred_fallthru
        _
      // Predicated region
      $region37: #{pix4point_forward.5} parent=11 // pred_check
        %p383 = pneg %p219
      $region38: #{pix4point_forward.5} parent=11 // pred_check_branch
        %385 = sbr.rel (%p383) target = $region40
      $region39: #{pix4point_forward.5} parent=11 // pred_region
        _
      $region40: #{pix4point_forward.5} parent=11 // pred_fallthru
        _
      // Predicated region
      $region41: #{pix4point_forward.5} parent=11 // pred_check
        %p386 = pneg %p240
      $region42: #{pix4point_forward.5} parent=11 // pred_check_branch
        %388 = sbr.rel (%p386) target = $region44
      $region43: #{pix4point_forward.5} parent=11 // pred_region
        _
      $region44: #{pix4point_forward.5} parent=11 // pred_fallthru
        _
      // Predicated region
      $region45: #{pix4point_forward.5} parent=11 // pred_check
        %p389 = pneg %p261
      $region46: #{pix4point_forward.5} parent=11 // pred_check_branch
        %391 = sbr.rel (%p389) target = $region48
      $region47: #{pix4point_forward.5} parent=11 // pred_region
        _
      $region48: #{pix4point_forward.5} parent=11 // pred_fallthru
        _
      // Predicated region
      $region49: #{pix4point_forward.5} parent=11 // pred_check
        %p392 = pneg %p282
      $region50: #{pix4point_forward.5} parent=11 // pred_check_branch
        %394 = sbr.rel (%p392) target = $region52
      $region51: #{pix4point_forward.5} parent=11 // pred_region
        _
      $region52: #{pix4point_forward.5} parent=11 // pred_fallthru
        _
      // Predicated region
      $region53: #{pix4point_forward.5} parent=11 // pred_check
        %p395 = pneg %p303
      $region54: #{pix4point_forward.5} parent=11 // pred_check_branch
        %397 = sbr.rel (%p395) target = $region56
      $region55: #{pix4point_forward.5} parent=11 // pred_region
        _
      $region56: #{pix4point_forward.5} parent=11 // pred_fallthru
        _
      // Predicated region
      $region57: #{pix4point_forward.5} parent=11 // pred_check
        %p398 = pneg %p324
      $region58: #{pix4point_forward.5} parent=11 // pred_check_branch
        %400 = sbr.rel (%p398) target = $region60
      $region59: #{pix4point_forward.5} parent=11 // pred_region
        _
      $region60: #{pix4point_forward.5} parent=11 // pred_fallthru
        _
    $region12: #{pix4point_forward.5} parent=5 // pred_fallthru
      _
    %p401 = scmp.lt.s32.totalorder %s20, 2
    // Predicated region
    $region61: #{pix4point_forward.5} parent=5 // pred_check
      %p402 = pneg %p401
    $region62: #{pix4point_forward.5} parent=5 // pred_check_branch
      %404 = sbr.rel (%p402) target = $region64
    $region63: #{pix4point_forward.5} parent=5 // pred_region
      // Predicated region
      $region65: #{pix4point_forward.5} parent=63 // pred_check
        %p405 = pneg %p40
      $region66: #{pix4point_forward.5} parent=63 // pred_check_branch
        %407 = sbr.rel (%p405) target = $region68
      $region67: #{pix4point_forward.5} parent=63 // pred_region
        %p408 = scmp.lt.s32.totalorder %s20, 1
        %s409 = scalar_select %p408, %s20, 1
        %s410 = smul.addr %s409, 3
        %s411 = smul.addr %s410, 8
        %s412 = scalar_lea.vmem %s0, %s411
      $region68: #{pix4point_forward.5} parent=63 // pred_fallthru
        _
      // Predicated region
      $region69: #{pix4point_forward.5} parent=63 // pred_check
        %p413 = pneg %p66
      $region70: #{pix4point_forward.5} parent=63 // pred_check_branch
        %415 = sbr.rel (%p413) target = $region72
      $region71: #{pix4point_forward.5} parent=63 // pred_region
        %p416 = scmp.lt.s32.totalorder %s20, 1
        %s417 = scalar_select %p416, %s20, 1
        %s418 = smul.addr %s417, 3
        %s419 = smul.addr %s418, 8
        %s420 = scalar_lea.vmem %s1, %s419
      $region72: #{pix4point_forward.5} parent=63 // pred_fallthru
        _
    $region64: #{pix4point_forward.5} parent=5 // pred_fallthru
      _
    %p421 = scmp.le.s32.totalorder 1, %s20
    %p422 = scmp.lt.s32.totalorder %s20, 3
    %p423 = pnand %p421, %p422
    %p424 = pneg %p423
    // Predicated region
    $region73: #{pix4point_forward.5} parent=5 // pred_check
      _
    $region74: #{pix4point_forward.5} parent=5 // pred_check_branch
      %426 = sbr.rel (%p423) target = $region76
    $region75: #{pix4point_forward.5} parent=5 // pred_region
      %s427 = ssub.s32 %s20, 1
      %p428 = scmp.lt.s32.totalorder %s25, 1
      %s429 = scalar_select %p428, %s25, 1
      %s430 = smul.addr %s429, 3
      %s431 = smul.addr %s430, 8
      %s432 = scalar_lea.vmem %s0, %s431
      %p433 = pneg %p46
      %p434 = pneg %p43
      %p435 = scmp.lt.s32.totalorder %s25, 1
      %s436 = scalar_select %p435, %s25, 1
      %s437 = smul.addr %s436, 3
      %s438 = smul.addr %s437, 8
      %s439 = scalar_lea.vmem %s1, %s438
      %p440 = pneg %p72
      %p441 = pneg %p69
      %p442 = pneg %p93
      %p443 = pneg %p90
      %p444 = pneg %p114
      %p445 = pneg %p111
      %p446 = pneg %p135
      %p447 = pneg %p132
      %p448 = pneg %p156
      %p449 = pneg %p153
      %p450 = pneg %p177
      %p451 = pneg %p174
      %p452 = pneg %p198
      %p453 = pneg %p195
      %p454 = pneg %p219
      %p455 = pneg %p216
      %p456 = pneg %p240
      %p457 = pneg %p237
      %p458 = pneg %p261
      %p459 = pneg %p258
      %p460 = pneg %p282
      %p461 = pneg %p279
      %p462 = pneg %p303
      %p463 = pneg %p300
      %p464 = pneg %p324
      %p465 = pneg %p321
      %p466 = pneg %p350
      %p467 = pneg %p347
      %p468 = scmp.lt.s32.totalorder %s25, 1
      %s469 = scalar_select %p468, %s25, 1
      %s470 = smul.addr %s469, 3
      %s471 = smul.addr %s470, 8
      %s472 = scalar_lea.vmem %s14, %s471
      %p473 = scmp.lt.s32.totalorder %s25, 1
      %s474 = scalar_select %p473, %s25, 1
      %s475 = smul.addr %s474, 3
      %s476 = smul.addr %s475, 8
      %s477 = scalar_lea.vmem %s0, %s476
      %p478 = scmp.lt.s32.totalorder %s25, 1
      %s479 = scalar_select %p478, %s25, 1
      %s480 = smul.addr %s479, 3
      %s481 = smul.addr %s480, 8
      %s482 = scalar_lea.vmem %s1, %s481
      %p483 = scmp.lt.s32.totalorder %s25, 1
      %s484 = scalar_select %p483, %s25, 1
      %s485 = smul.addr %s484, 3
      %s486 = smul.addr %s485, 8
      %s487 = scalar_lea.vmem %s14, %s486
      %v489 = vld [vmem:[%s477] sm:$0xff]
      %v490 = vld [vmem:[%s477 + $0x8] sm:$0xff]
      %v491 = vld [vmem:[%s477 + $0x10] sm:$0xff]
      %v492 = vld [vmem:[%s482] sm:$0xff]
      %v493 = vld [vmem:[%s482 + $0x8] sm:$0xff]
      %v494 = vld [vmem:[%s482 + $0x10] sm:$0xff]
      %v495 = vadd.f32 %v489, %v492
      %v496 = vadd.f32 %v490, %v493
      %v497 = vadd.f32 %v491, %v494
      %v498 = vld [vmem:[%s2] sm:$0x1]
      %v499 = vld [vmem:[%s3] sm:$0x1]
      %vm500 = vcmask 523264
      %v501 = vsel %vm500, %v495, 0.0
      %502 = vadd.xlane.f32.xlu0 %v501
      %v503 = vpop.xlane.xlu0 %502
      %v504 = vsel %vm500, %v496, 0.0
      %505 = vadd.xlane.f32.xlu0 %v504
      %v506 = vpop.xlane.xlu0 %505
      %v507 = vsel %vm500, %v497, 0.0
      %508 = vadd.xlane.f32.xlu0 %v507
      %v509 = vpop.xlane.xlu0 %508
      %v510 = vrcp.pop 64.0
      %v511 = vmul.f32 %v503, %v510
      %v512 = vmul.f32 %v506, %v510
      %v513 = vmul.f32 %v509, %v510
      %v514 = vsub.f32 %v495, %v511
      %v515 = vsub.f32 %v496, %v512
      %v516 = vsub.f32 %v497, %v513
      %v517 = vmul.f32 %v514, %v514
      %v518 = vmul.f32 %v515, %v515
      %v519 = vmul.f32 %v516, %v516
      %v520 = vsel %vm500, %v517, 0.0
      %521 = vadd.xlane.f32.xlu0 %v520
      %v522 = vpop.xlane.xlu0 %521
      %v523 = vsel %vm500, %v518, 0.0
      %524 = vadd.xlane.f32.xlu0 %v523
      %v525 = vpop.xlane.xlu0 %524
      %v526 = vsel %vm500, %v519, 0.0
      %527 = vadd.xlane.f32.xlu0 %v526
      %v528 = vpop.xlane.xlu0 %527
      %v529 = vmul.f32 %v522, %v510
      %v530 = vmul.f32 %v525, %v510
      %v531 = vmul.f32 %v528, %v510
      %v532 = vadd.f32 %v529, 1e-06
      %v533 = vadd.f32 %v530, 1e-06
      %v534 = vadd.f32 %v531, 1e-06
      %v535 = vrsqrt.pop %v532
      %v536 = vrsqrt.pop %v533
      %v537 = vrsqrt.pop %v534
      %v538 = vmul.f32 %v514, %v535
      %v539 = vmul.f32 %v515, %v536
      %v540 = vmul.f32 %v516, %v537
      %v542 = vlaneseq
      %v543 = vshrl.u32 %v542, 7
      %v544 = vsub.s32 0, %v543
      %v545 = vrot.slane %v498, %v544
      %v547 = vmul.f32 %v538, %v545
      %v548 = vmul.f32 %v539, %v545
      %v549 = vmul.f32 %v540, %v545
      %v551 = vlaneseq
      %v552 = vshrl.u32 %v551, 7
      %v553 = vsub.s32 0, %v552
      %v554 = vrot.slane %v499, %v553
      %v556 = vadd.f32 %v547, %v554
      %v557 = vadd.f32 %v548, %v554
      %v558 = vadd.f32 %v549, %v554
      %v559 = vpack.c.bf16 %v557, %v556
      %v560 = vpack.c.bf16 %v558, %v558
      %v561 = vlaneseq
      %v562 = vand.u32 %v561, 127
      %vm563 = vcmp.lt.s32.totalorder %v562, 17
      %v564 = vsel %vm563, 0.0, -1e+30
      %v565 = vld [vmem:[%s4] sm:$0xf]
      %v566 = vld [vmem:[%s4 + $0x4] sm:$0xf]
      %v567 = vld [vmem:[%s4 + $0x8] sm:$0xf]
      %v568 = vld [vmem:[%s4 + $0xc] sm:$0xf]
      %v569 = vld [vmem:[%s4 + $0x10] sm:$0xf]
      %v570 = vld [vmem:[%s4 + $0x14] sm:$0xf]
      %v571 = vld [vmem:[%s4 + $0x18] sm:$0xf]
      %v572 = vld [vmem:[%s4 + $0x1c] sm:$0xf]
      %v573 = vld [vmem:[%s5] sm:$0x1]
      %v575 = vlaneseq
      %v576 = vshrl.u32 %v575, 7
      %v577 = vsub.s32 0, %v576
      %v578 = vrot.slane %v573, %v577
      %v588 = vunpack.c.l.b16 %v565
      %v589 = vunpack.c.l.b16 %v566
      %v590 = vunpack.c.l.b16 %v567
      %v591 = vunpack.c.l.b16 %v568
      %v592 = vunpack.c.l.b16 %v569
      %v593 = vunpack.c.l.b16 %v570
      %v594 = vunpack.c.l.b16 %v571
      %v595 = vunpack.c.l.b16 %v572
      %v596 = vpack.c.b16 %v589, %v588
      %v597 = vpack.c.b16 %v591, %v590
      %v598 = vpack.c.b16 %v593, %v592
      %v599 = vpack.c.b16 %v595, %v594
      %v605 = vsel %vm500, %v559, 0
      %v608 = vsel %vm500, %v560, 0
      %610 = vmatprep.subr.bf16.mxu0 0
      %611 = vmatpush1.bf16.msra.mxu0 %v596
      %612 = vmatprep.subr.bf16.mxu0 0
      %613 = vmatpush1.bf16.msra.mxu0 %v597
      %614 = vmatprep.subr.bf16.mxu0 0
      %615 = vmatpush1.bf16.msra.mxu0 %v598
      %616 = vmatprep.subr.bf16.mxu0 0
      %617 = vmatpush1.bf16.msra.mxu0 %v599
      %618 = vmatprep.subr.bf16.mxu0 0
      %619 = vmatpush1.bf16.msra.mxu0 0
      %620 = vmatprep.subr.bf16.mxu0 0
      %621 = vmatpush1.bf16.msra.mxu0 0
      %622 = vmatprep.subr.bf16.mxu0 0
      %623 = vmatpush1.bf16.msra.mxu0 0
      %624 = vmatprep.subr.bf16.mxu0 0
      %625 = vmatpush1.bf16.msra.mxu0 0
      %626 = vmatprep.subr.bf16.mxu0 0
      %627 = vmatpush1.bf16.msra.mxu0 0
      %628 = vmatprep.subr.bf16.mxu0 0
      %629 = vmatpush1.bf16.msra.mxu0 0
      %630 = vmatprep.subr.bf16.mxu0 0
      %631 = vmatpush1.bf16.msra.mxu0 0
      %632 = vmatprep.subr.bf16.mxu0 0
      %633 = vmatpush1.bf16.msra.mxu0 0
      %634 = vmatprep.subr.bf16.mxu0 0
      %635 = vmatpush1.bf16.msra.mxu0 0
      %636 = vmatprep.subr.bf16.mxu0 0
      %637 = vmatpush1.bf16.msra.mxu0 0
      %638 = vmatprep.subr.bf16.mxu0 0
      %639 = vmatpush1.bf16.msra.mxu0 0
      %640 = vmatprep.subr.bf16.mxu0 0
      %641 = vmatpush1.bf16.msra.mxu0 0
      %642 = vmatprep.mubr.bf16.mxu0 0
      %643 = vmatmul.mubr.bf16.gmra.mrb[0].mxu0 %v605
      %v644 = vpop.f32.mrb[0].mxu0
      %v645 = vadd.f32 %v578, %v644
      %v646 = vpop.f32.mrb[0].mxu0
      %v647 = vpop.f32.mrb[0].mxu0
      %v648 = vadd.f32 %v578, %v647
      %v649 = vpop.f32.mrb[0].mxu0
      %650 = vmatprep.mubr.bf16.mxu0 0
      %651 = vmatmul.mubr.bf16.gmra.mrb[0].mxu0 %v608
      %v652 = vpop.f32.mrb[0].mxu0
      %v653 = vadd.f32 %v578, %v652
      %v654 = vpop.f32.mrb[0].mxu0
      %v655 = vpop.f32.mrb[0].mxu0
      %v656 = vpop.f32.mrb[0].mxu0
      %657 = vdwg.mxu0
      %s658 = scalar_lea.vmem %s4, 128
      %v659 = vld [vmem:[%s658] sm:$0xf]
      %v660 = vld [vmem:[%s658 + $0x4] sm:$0xf]
      %v661 = vld [vmem:[%s658 + $0x8] sm:$0xf]
      %v662 = vld [vmem:[%s658 + $0xc] sm:$0xf]
      %v663 = vld [vmem:[%s658 + $0x10] sm:$0xf]
      %v664 = vld [vmem:[%s658 + $0x14] sm:$0xf]
      %v665 = vld [vmem:[%s658 + $0x18] sm:$0xf]
      %v666 = vld [vmem:[%s658 + $0x1c] sm:$0xf]
      %s667 = scalar_lea.vmem %s5, 4
      %v668 = vld [vmem:[%s667] sm:$0x1]
      %v670 = vlaneseq
      %v671 = vshrl.u32 %v670, 7
      %v672 = vsub.s32 0, %v671
      %v673 = vrot.slane %v668, %v672
      %v683 = vunpack.c.l.b16 %v659
      %v684 = vunpack.c.l.b16 %v660
      %v685 = vunpack.c.l.b16 %v661
      %v686 = vunpack.c.l.b16 %v662
      %v687 = vunpack.c.l.b16 %v663
      %v688 = vunpack.c.l.b16 %v664
      %v689 = vunpack.c.l.b16 %v665
      %v690 = vunpack.c.l.b16 %v666
      %v691 = vpack.c.b16 %v684, %v683
      %v692 = vpack.c.b16 %v686, %v685
      %v693 = vpack.c.b16 %v688, %v687
      %v694 = vpack.c.b16 %v690, %v689
      %699 = vmatprep.subr.bf16.mxu0 0
      %700 = vmatpush1.bf16.msra.mxu0 %v691
      %701 = vmatprep.subr.bf16.mxu0 0
      %702 = vmatpush1.bf16.msra.mxu0 %v692
      %703 = vmatprep.subr.bf16.mxu0 0
      %704 = vmatpush1.bf16.msra.mxu0 %v693
      %705 = vmatprep.subr.bf16.mxu0 0
      %706 = vmatpush1.bf16.msra.mxu0 %v694
      %707 = vmatprep.subr.bf16.mxu0 0
      %708 = vmatpush1.bf16.msra.mxu0 0
      %709 = vmatprep.subr.bf16.mxu0 0
      %710 = vmatpush1.bf16.msra.mxu0 0
      %711 = vmatprep.subr.bf16.mxu0 0
      %712 = vmatpush1.bf16.msra.mxu0 0
      %713 = vmatprep.subr.bf16.mxu0 0
      %714 = vmatpush1.bf16.msra.mxu0 0
      %715 = vmatprep.subr.bf16.mxu0 0
      %716 = vmatpush1.bf16.msra.mxu0 0
      %717 = vmatprep.subr.bf16.mxu0 0
      %718 = vmatpush1.bf16.msra.mxu0 0
      %719 = vmatprep.subr.bf16.mxu0 0
      %720 = vmatpush1.bf16.msra.mxu0 0
      %721 = vmatprep.subr.bf16.mxu0 0
      %722 = vmatpush1.bf16.msra.mxu0 0
      %723 = vmatprep.subr.bf16.mxu0 0
      %724 = vmatpush1.bf16.msra.mxu0 0
      %725 = vmatprep.subr.bf16.mxu0 0
      %726 = vmatpush1.bf16.msra.mxu0 0
      %727 = vmatprep.subr.bf16.mxu0 0
      %728 = vmatpush1.bf16.msra.mxu0 0
      %729 = vmatprep.subr.bf16.mxu0 0
      %730 = vmatpush1.bf16.msra.mxu0 0
      %731 = vmatprep.mubr.bf16.mxu0 0
      %732 = vmatmul.mubr.bf16.gmra.mrb[0].mxu0 %v605
      %v733 = vpop.f32.mrb[0].mxu0
      %v734 = vadd.f32 %v673, %v733
      %v735 = vpop.f32.mrb[0].mxu0
      %v736 = vpop.f32.mrb[0].mxu0
      %v737 = vadd.f32 %v673, %v736
      %v738 = vpop.f32.mrb[0].mxu0
      %739 = vmatprep.mubr.bf16.mxu0 0
      %740 = vmatmul.mubr.bf16.gmra.mrb[0].mxu0 %v608
      %v741 = vpop.f32.mrb[0].mxu0
      %v742 = vadd.f32 %v673, %v741
      %v743 = vpop.f32.mrb[0].mxu0
      %v744 = vpop.f32.mrb[0].mxu0
      %v745 = vpop.f32.mrb[0].mxu0
      %746 = vdwg.mxu0
      %s747 = scalar_lea.vmem %s4, 256
      %v748 = vld [vmem:[%s747] sm:$0xf]
      %v749 = vld [vmem:[%s747 + $0x4] sm:$0xf]
      %v750 = vld [vmem:[%s747 + $0x8] sm:$0xf]
      %v751 = vld [vmem:[%s747 + $0xc] sm:$0xf]
      %v752 = vld [vmem:[%s747 + $0x10] sm:$0xf]
      %v753 = vld [vmem:[%s747 + $0x14] sm:$0xf]
      %v754 = vld [vmem:[%s747 + $0x18] sm:$0xf]
      %v755 = vld [vmem:[%s747 + $0x1c] sm:$0xf]
      %s756 = scalar_lea.vmem %s5, 8
      %v757 = vld [vmem:[%s756] sm:$0x1]
      %v759 = vlaneseq
      %v760 = vshrl.u32 %v759, 7
      %v761 = vsub.s32 0, %v760
      %v762 = vrot.slane %v757, %v761
      %v772 = vunpack.c.l.b16 %v748
      %v773 = vunpack.c.l.b16 %v749
      %v774 = vunpack.c.l.b16 %v750
      %v775 = vunpack.c.l.b16 %v751
      %v776 = vunpack.c.l.b16 %v752
      %v777 = vunpack.c.l.b16 %v753
      %v778 = vunpack.c.l.b16 %v754
      %v779 = vunpack.c.l.b16 %v755
      %v780 = vpack.c.b16 %v773, %v772
      %v781 = vpack.c.b16 %v775, %v774
      %v782 = vpack.c.b16 %v777, %v776
      %v783 = vpack.c.b16 %v779, %v778
      %788 = vmatprep.subr.bf16.mxu0 0
      %789 = vmatpush1.bf16.msra.mxu0 %v780
      %790 = vmatprep.subr.bf16.mxu0 0
      %791 = vmatpush1.bf16.msra.mxu0 %v781
      %792 = vmatprep.subr.bf16.mxu0 0
      %793 = vmatpush1.bf16.msra.mxu0 %v782
      %794 = vmatprep.subr.bf16.mxu0 0
      %795 = vmatpush1.bf16.msra.mxu0 %v783
      %796 = vmatprep.subr.bf16.mxu0 0
      %797 = vmatpush1.bf16.msra.mxu0 0
      %798 = vmatprep.subr.bf16.mxu0 0
      %799 = vmatpush1.bf16.msra.mxu0 0
      %800 = vmatprep.subr.bf16.mxu0 0
      %801 = vmatpush1.bf16.msra.mxu0 0
      %802 = vmatprep.subr.bf16.mxu0 0
      %803 = vmatpush1.bf16.msra.mxu0 0
      %804 = vmatprep.subr.bf16.mxu0 0
      %805 = vmatpush1.bf16.msra.mxu0 0
      %806 = vmatprep.subr.bf16.mxu0 0
      %807 = vmatpush1.bf16.msra.mxu0 0
      %808 = vmatprep.subr.bf16.mxu0 0
      %809 = vmatpush1.bf16.msra.mxu0 0
      %810 = vmatprep.subr.bf16.mxu0 0
      %811 = vmatpush1.bf16.msra.mxu0 0
      %812 = vmatprep.subr.bf16.mxu0 0
      %813 = vmatpush1.bf16.msra.mxu0 0
      %814 = vmatprep.subr.bf16.mxu0 0
      %815 = vmatpush1.bf16.msra.mxu0 0
      %816 = vmatprep.subr.bf16.mxu0 0
      %817 = vmatpush1.bf16.msra.mxu0 0
      %818 = vmatprep.subr.bf16.mxu0 0
      %819 = vmatpush1.bf16.msra.mxu0 0
      %820 = vmatprep.mubr.bf16.mxu0 0
      %821 = vmatmul.mubr.bf16.gmra.mrb[0].mxu0 %v605
      %v822 = vpop.f32.mrb[0].mxu0
      %v823 = vadd.f32 %v762, %v822
      %v824 = vpop.f32.mrb[0].mxu0
      %v825 = vpop.f32.mrb[0].mxu0
      %v826 = vadd.f32 %v762, %v825
      %v827 = vpop.f32.mrb[0].mxu0
      %828 = vmatprep.mubr.bf16.mxu0 0
      %829 = vmatmul.mubr.bf16.gmra.mrb[0].mxu0 %v608
      %v830 = vpop.f32.mrb[0].mxu0
      %v831 = vadd.f32 %v762, %v830
      %v832 = vpop.f32.mrb[0].mxu0
      %v833 = vpop.f32.mrb[0].mxu0
      %v834 = vpop.f32.mrb[0].mxu0
      %835 = vdwg.mxu0
      %v836 = vpack.c.bf16 %v648, %v645
      %v837 = vpack.c.bf16 %v653, %v653
      %v838 = vpack.c.bf16 %v737, %v734
      %v839 = vpack.c.bf16 %v742, %v742
      %vm840 = vcmask 130048
      %v842 = vsel %vm840, %v836, 0
      %v845 = vsel %vm840, %v837, 0
      %v848 = vsel %vm840, %v838, 0
      %v851 = vsel %vm840, %v839, 0
      %853 = vmatprep.subr.bf16.mxu0 0
      %854 = vmatpush1.bf16.xpose.msra.mxu0 %v848
      %855 = vmatprep.subr.bf16.mxu0 0
      %856 = vmatpush1.bf16.xpose.msra.mxu0 %v851
      %857 = vmatprep.subr.bf16.mxu0 0
      %858 = vmatpush1.bf16.xpose.msra.mxu0 0
      %859 = vmatprep.subr.bf16.mxu0 0
      %860 = vmatpush1.bf16.xpose.msra.mxu0 0
      %861 = vmatprep.subr.bf16.mxu0 0
      %862 = vmatpush1.bf16.xpose.msra.mxu0 0
      %863 = vmatprep.subr.bf16.mxu0 0
      %864 = vmatpush1.bf16.xpose.msra.mxu0 0
      %865 = vmatprep.subr.bf16.mxu0 0
      %866 = vmatpush1.bf16.xpose.msra.mxu0 0
      %867 = vmatprep.subr.bf16.mxu0 0
      %868 = vmatpush1.bf16.xpose.msra.mxu0 0
      %869 = vmatprep.subr.bf16.mxu0 0
      %870 = vmatpush1.bf16.xpose.msra.mxu0 0
      %871 = vmatprep.subr.bf16.mxu0 0
      %872 = vmatpush1.bf16.xpose.msra.mxu0 0
      %873 = vmatprep.subr.bf16.mxu0 0
      %874 = vmatpush1.bf16.xpose.msra.mxu0 0
      %875 = vmatprep.subr.bf16.mxu0 0
      %876 = vmatpush1.bf16.xpose.msra.mxu0 0
      %877 = vmatprep.subr.bf16.mxu0 0
      %878 = vmatpush1.bf16.xpose.msra.mxu0 0
      %879 = vmatprep.subr.bf16.mxu0 0
      %880 = vmatpush1.bf16.xpose.msra.mxu0 0
      %881 = vmatprep.subr.bf16.mxu0 0
      %882 = vmatpush1.bf16.xpose.msra.mxu0 0
      %883 = vmatprep.subr.bf16.mxu0 0
      %884 = vmatpush1.bf16.xpose.msra.mxu0 0
      %885 = vmatprep.mubr.bf16.mxu0 0
      %886 = vmatmul.mubr.bf16.gmra.mrb[0].mxu0 %v842
      %v887 = vpop.f32.mrb[0].mxu0
      %v888 = vadd.f32 0.0, %v887
      %v889 = vpop.f32.mrb[0].mxu0
      %v890 = vpop.f32.mrb[0].mxu0
      %v891 = vadd.f32 0.0, %v890
      %v892 = vpop.f32.mrb[0].mxu0
      %893 = vmatprep.mubr.bf16.mxu0 0
      %894 = vmatmul.mubr.bf16.gmra.mrb[0].mxu0 %v845
      %v895 = vpop.f32.mrb[0].mxu0
      %v896 = vadd.f32 0.0, %v895
      %v897 = vpop.f32.mrb[0].mxu0
      %v898 = vpop.f32.mrb[0].mxu0
      %v899 = vpop.f32.mrb[0].mxu0
      %900 = vdwg.mxu0
      %v901 = vmul.f32 %v888, 0.25
      %v902 = vmul.f32 %v891, 0.25
      %v903 = vmul.f32 %v896, 0.25
      %v904 = vadd.f32 %v901, %v564
      %v905 = vadd.f32 %v902, %v564
      %v906 = vadd.f32 %v903, %v564
      %vm907 = vcmask 195584
      %v908 = vsel %vm907, %v904, -inf
      %909 = vmax.xlane.f32.xlu0 %v908
      %v910 = vpop.xlane.xlu0 %909
      %v911 = vsel %vm907, %v905, -inf
      %912 = vmax.xlane.f32.xlu0 %v911
      %v913 = vpop.xlane.xlu0 %912
      %v914 = vsel %vm907, %v906, -inf
      %915 = vmax.xlane.f32.xlu0 %v914
      %v916 = vpop.xlane.xlu0 %915
      %v917 = vsub.f32 %v904, %v910
      %v918 = vsub.f32 %v905, %v913
      %v919 = vsub.f32 %v906, %v916
      %v920 = vmul.f32 %v917, 1.442695
      %v921 = vpow.pop %v920
      %v922 = vmul.f32 %v918, 1.442695
      %v923 = vpow.pop %v922
      %v924 = vmul.f32 %v919, 1.442695
      %v925 = vpow.pop %v924
      %v926 = vsel %vm907, %v921, 0.0
      %927 = vadd.xlane.f32.xlu0 %v926
      %v928 = vpop.xlane.xlu0 %927
      %v929 = vsel %vm907, %v923, 0.0
      %930 = vadd.xlane.f32.xlu0 %v929
      %v931 = vpop.xlane.xlu0 %930
      %v932 = vsel %vm907, %v925, 0.0
      %933 = vadd.xlane.f32.xlu0 %v932
      %v934 = vpop.xlane.xlu0 %933
      %v935 = vrcp.pop %v928
      %v936 = vrcp.pop %v931
      %v937 = vrcp.pop %v934
      %v938 = vmul.f32 %v921, %v935
      %v939 = vmul.f32 %v923, %v936
      %v940 = vmul.f32 %v925, %v937
      %v941 = vpack.c.bf16 %v939, %v938
      %v942 = vpack.c.bf16 %v940, %v940
      %v943 = vpack.c.bf16 %v826, %v823
      %v944 = vpack.c.bf16 %v831, %v831
      %v946 = vsel %vm907, %v941, 0
      %v949 = vsel %vm907, %v942, 0
      %vm951 = vcmask 1043456
      %v953 = vsel %vm951, %v944, 0
      %955 = vmatprep.subr.bf16.mxu0 0
      %956 = vmatpush1.bf16.msra.mxu0 %v943
      %957 = vmatprep.subr.bf16.mxu0 0
      %958 = vmatpush1.bf16.msra.mxu0 %v953
      %959 = vmatprep.subr.bf16.mxu0 0
      %960 = vmatpush1.bf16.msra.mxu0 0
      %961 = vmatprep.subr.bf16.mxu0 0
      %962 = vmatpush1.bf16.msra.mxu0 0
      %963 = vmatprep.subr.bf16.mxu0 0
      %964 = vmatpush1.bf16.msra.mxu0 0
      %965 = vmatprep.subr.bf16.mxu0 0
      %966 = vmatpush1.bf16.msra.mxu0 0
      %967 = vmatprep.subr.bf16.mxu0 0
      %968 = vmatpush1.bf16.msra.mxu0 0
      %969 = vmatprep.subr.bf16.mxu0 0
      %970 = vmatpush1.bf16.msra.mxu0 0
      %971 = vmatprep.subr.bf16.mxu0 0
      %972 = vmatpush1.bf16.msra.mxu0 0
      %973 = vmatprep.subr.bf16.mxu0 0
      %974 = vmatpush1.bf16.msra.mxu0 0
      %975 = vmatprep.subr.bf16.mxu0 0
      %976 = vmatpush1.bf16.msra.mxu0 0
      %977 = vmatprep.subr.bf16.mxu0 0
      %978 = vmatpush1.bf16.msra.mxu0 0
      %979 = vmatprep.subr.bf16.mxu0 0
      %980 = vmatpush1.bf16.msra.mxu0 0
      %981 = vmatprep.subr.bf16.mxu0 0
      %982 = vmatpush1.bf16.msra.mxu0 0
      %983 = vmatprep.subr.bf16.mxu0 0
      %984 = vmatpush1.bf16.msra.mxu0 0
      %985 = vmatprep.subr.bf16.mxu0 0
      %986 = vmatpush1.bf16.msra.mxu0 0
      %987 = vmatprep.mubr.bf16.mxu0 0
      %988 = vmatmul.mubr.bf16.gmra.mrb[0].mxu0 %v946
      %v989 = vpop.f32.mrb[0].mxu0
      %v990 = vadd.f32 0.0, %v989
      %v991 = vpop.f32.mrb[0].mxu0
      %v992 = vpop.f32.mrb[0].mxu0
      %v993 = vadd.f32 0.0, %v992
      %v994 = vpop.f32.mrb[0].mxu0
      %995 = vmatprep.mubr.bf16.mxu0 0
      %996 = vmatmul.mubr.bf16.gmra.mrb[0].mxu0 %v949
      %v997 = vpop.f32.mrb[0].mxu0
      %v998 = vadd.f32 0.0, %v997
      %v999 = vpop.f32.mrb[0].mxu0
      %v1000 = vpop.f32.mrb[0].mxu0
      %v1001 = vpop.f32.mrb[0].mxu0
      %1002 = vdwg.mxu0
      %v1003 = vpack.c.bf16 %v993, %v990
      %v1004 = vpack.c.bf16 %v998, %v998
      %v1005 = vld [vmem:[%s6] sm:$0xf]
      %v1006 = vld [vmem:[%s6 + $0x4] sm:$0xf]
      %s1007 = scalar_lea.vmem %s4, 32
      %v1008 = vld [vmem:[%s1007] sm:$0xf]
      %v1009 = vld [vmem:[%s1007 + $0x4] sm:$0xf]
      %v1010 = vld [vmem:[%s1007 + $0x8] sm:$0xf]
      %v1011 = vld [vmem:[%s1007 + $0xc] sm:$0xf]
      %v1012 = vld [vmem:[%s1007 + $0x10] sm:$0xf]
      %v1013 = vld [vmem:[%s1007 + $0x14] sm:$0xf]
      %v1014 = vld [vmem:[%s1007 + $0x18] sm:$0xf]
      %v1015 = vld [vmem:[%s1007 + $0x1c] sm:$0xf]
      %s1016 = scalar_lea.vmem %s5, 1
      %v1017 = vld [vmem:[%s1016] sm:$0x1]
      %v1019 = vlaneseq
      %v1020 = vshrl.u32 %v1019, 7
      %v1021 = vsub.s32 0, %v1020
      %v1022 = vrot.slane %v1017, %v1021
      %v1032 = vunpack.c.l.b16 %v1008
      %v1033 = vunpack.c.l.b16 %v1009
      %v1034 = vunpack.c.l.b16 %v1010
      %v1035 = vunpack.c.l.b16 %v1011
      %v1036 = vunpack.c.l.b16 %v1012
      %v1037 = vunpack.c.l.b16 %v1013
      %v1038 = vunpack.c.l.b16 %v1014
      %v1039 = vunpack.c.l.b16 %v1015
      %v1040 = vpack.c.b16 %v1033, %v1032
      %v1041 = vpack.c.b16 %v1035, %v1034
      %v1042 = vpack.c.b16 %v1037, %v1036
      %v1043 = vpack.c.b16 %v1039, %v1038
      %1048 = vmatprep.subr.bf16.mxu0 0
      %1049 = vmatpush1.bf16.msra.mxu0 %v1040
      %1050 = vmatprep.subr.bf16.mxu0 0
      %1051 = vmatpush1.bf16.msra.mxu0 %v1041
      %1052 = vmatprep.subr.bf16.mxu0 0
      %1053 = vmatpush1.bf16.msra.mxu0 %v1042
      %1054 = vmatprep.subr.bf16.mxu0 0
      %1055 = vmatpush1.bf16.msra.mxu0 %v1043
      %1056 = vmatprep.subr.bf16.mxu0 0
      %1057 = vmatpush1.bf16.msra.mxu0 0
      %1058 = vmatprep.subr.bf16.mxu0 0
      %1059 = vmatpush1.bf16.msra.mxu0 0
      %1060 = vmatprep.subr.bf16.mxu0 0
      %1061 = vmatpush1.bf16.msra.mxu0 0
      %1062 = vmatprep.subr.bf16.mxu0 0
      %1063 = vmatpush1.bf16.msra.mxu0 0
      %1064 = vmatprep.subr.bf16.mxu0 0
      %1065 = vmatpush1.bf16.msra.mxu0 0
      %1066 = vmatprep.subr.bf16.mxu0 0
      %1067 = vmatpush1.bf16.msra.mxu0 0
      %1068 = vmatprep.subr.bf16.mxu0 0
      %1069 = vmatpush1.bf16.msra.mxu0 0
      %1070 = vmatprep.subr.bf16.mxu0 0
      %1071 = vmatpush1.bf16.msra.mxu0 0
      %1072 = vmatprep.subr.bf16.mxu0 0
      %1073 = vmatpush1.bf16.msra.mxu0 0
      %1074 = vmatprep.subr.bf16.mxu0 0
      %1075 = vmatpush1.bf16.msra.mxu0 0
      %1076 = vmatprep.subr.bf16.mxu0 0
      %1077 = vmatpush1.bf16.msra.mxu0 0
      %1078 = vmatprep.subr.bf16.mxu0 0
      %1079 = vmatpush1.bf16.msra.mxu0 0
      %1080 = vmatprep.mubr.bf16.mxu0 0
      %1081 = vmatmul.mubr.bf16.gmra.mrb[0].mxu0 %v605
      %v1082 = vpop.f32.mrb[0].mxu0
      %v1083 = vadd.f32 %v1022, %v1082
      %v1084 = vpop.f32.mrb[0].mxu0
      %v1085 = vpop.f32.mrb[0].mxu0
      %v1086 = vadd.f32 %v1022, %v1085
      %v1087 = vpop.f32.mrb[0].mxu0
      %1088 = vmatprep.mubr.bf16.mxu0 0
      %1089 = vmatmul.mubr.bf16.gmra.mrb[0].mxu0 %v608
      %v1090 = vpop.f32.mrb[0].mxu0
      %v1091 = vadd.f32 %v1022, %v1090
      %v1092 = vpop.f32.mrb[0].mxu0
      %v1093 = vpop.f32.mrb[0].mxu0
      %v1094 = vpop.f32.mrb[0].mxu0
      %1095 = vdwg.mxu0
      %s1096 = scalar_lea.vmem %s4, 160
      %v1097 = vld [vmem:[%s1096] sm:$0xf]
      %v1098 = vld [vmem:[%s1096 + $0x4] sm:$0xf]
      %v1099 = vld [vmem:[%s1096 + $0x8] sm:$0xf]
      %v1100 = vld [vmem:[%s1096 + $0xc] sm:$0xf]
      %v1101 = vld [vmem:[%s1096 + $0x10] sm:$0xf]
      %v1102 = vld [vmem:[%s1096 + $0x14] sm:$0xf]
      %v1103 = vld [vmem:[%s1096 + $0x18] sm:$0xf]
      %v1104 = vld [vmem:[%s1096 + $0x1c] sm:$0xf]
      %s1105 = scalar_lea.vmem %s5, 5
      %v1106 = vld [vmem:[%s1105] sm:$0x1]
      %v1108 = vlaneseq
      %v1109 = vshrl.u32 %v1108, 7
      %v1110 = vsub.s32 0, %v1109
      %v1111 = vrot.slane %v1106, %v1110
      %v1121 = vunpack.c.l.b16 %v1097
      %v1122 = vunpack.c.l.b16 %v1098
      %v1123 = vunpack.c.l.b16 %v1099
      %v1124 = vunpack.c.l.b16 %v1100
      %v1125 = vunpack.c.l.b16 %v1101
      %v1126 = vunpack.c.l.b16 %v1102
      %v1127 = vunpack.c.l.b16 %v1103
      %v1128 = vunpack.c.l.b16 %v1104
      %v1129 = vpack.c.b16 %v1122, %v1121
      %v1130 = vpack.c.b16 %v1124, %v1123
      %v1131 = vpack.c.b16 %v1126, %v1125
      %v1132 = vpack.c.b16 %v1128, %v1127
      %1137 = vmatprep.subr.bf16.mxu0 0
      %1138 = vmatpush1.bf16.msra.mxu0 %v1129
      %1139 = vmatprep.subr.bf16.mxu0 0
      %1140 = vmatpush1.bf16.msra.mxu0 %v1130
      %1141 = vmatprep.subr.bf16.mxu0 0
      %1142 = vmatpush1.bf16.msra.mxu0 %v1131
      %1143 = vmatprep.subr.bf16.mxu0 0
      %1144 = vmatpush1.bf16.msra.mxu0 %v1132
      %1145 = vmatprep.subr.bf16.mxu0 0
      %1146 = vmatpush1.bf16.msra.mxu0 0
      %1147 = vmatprep.subr.bf16.mxu0 0
      %1148 = vmatpush1.bf16.msra.mxu0 0
      %1149 = vmatprep.subr.bf16.mxu0 0
      %1150 = vmatpush1.bf16.msra.mxu0 0
      %1151 = vmatprep.subr.bf16.mxu0 0
      %1152 = vmatpush1.bf16.msra.mxu0 0
      %1153 = vmatprep.subr.bf16.mxu0 0
      %1154 = vmatpush1.bf16.msra.mxu0 0
      %1155 = vmatprep.subr.bf16.mxu0 0
      %1156 = vmatpush1.bf16.msra.mxu0 0
      %1157 = vmatprep.subr.bf16.mxu0 0
      %1158 = vmatpush1.bf16.msra.mxu0 0
      %1159 = vmatprep.subr.bf16.mxu0 0
      %1160 = vmatpush1.bf16.msra.mxu0 0
      %1161 = vmatprep.subr.bf16.mxu0 0
      %1162 = vmatpush1.bf16.msra.mxu0 0
      %1163 = vmatprep.subr.bf16.mxu0 0
      %1164 = vmatpush1.bf16.msra.mxu0 0
      %1165 = vmatprep.subr.bf16.mxu0 0
      %1166 = vmatpush1.bf16.msra.mxu0 0
      %1167 = vmatprep.subr.bf16.mxu0 0
      %1168 = vmatpush1.bf16.msra.mxu0 0
      %1169 = vmatprep.mubr.bf16.mxu0 0
      %1170 = vmatmul.mubr.bf16.gmra.mrb[0].mxu0 %v605
      %v1171 = vpop.f32.mrb[0].mxu0
      %v1172 = vadd.f32 %v1111, %v1171
      %v1173 = vpop.f32.mrb[0].mxu0
      %v1174 = vpop.f32.mrb[0].mxu0
      %v1175 = vadd.f32 %v1111, %v1174
      %v1176 = vpop.f32.mrb[0].mxu0
      %1177 = vmatprep.mubr.bf16.mxu0 0
      %1178 = vmatmul.mubr.bf16.gmra.mrb[0].mxu0 %v608
      %v1179 = vpop.f32.mrb[0].mxu0
      %v1180 = vadd.f32 %v1111, %v1179
      %v1181 = vpop.f32.mrb[0].mxu0
      %v1182 = vpop.f32.mrb[0].mxu0
      %v1183 = vpop.f32.mrb[0].mxu0
      %1184 = vdwg.mxu0
      %s1185 = scalar_lea.vmem %s4, 288
      %v1186 = vld [vmem:[%s1185] sm:$0xf]
      %v1187 = vld [vmem:[%s1185 + $0x4] sm:$0xf]
      %v1188 = vld [vmem:[%s1185 + $0x8] sm:$0xf]
      %v1189 = vld [vmem:[%s1185 + $0xc] sm:$0xf]
      %v1190 = vld [vmem:[%s1185 + $0x10] sm:$0xf]
      %v1191 = vld [vmem:[%s1185 + $0x14] sm:$0xf]
      %v1192 = vld [vmem:[%s1185 + $0x18] sm:$0xf]
      %v1193 = vld [vmem:[%s1185 + $0x1c] sm:$0xf]
      %s1194 = scalar_lea.vmem %s5, 9
      %v1195 = vld [vmem:[%s1194] sm:$0x1]
      %v1197 = vlaneseq
      %v1198 = vshrl.u32 %v1197, 7
      %v1199 = vsub.s32 0, %v1198
      %v1200 = vrot.slane %v1195, %v1199
      %v1210 = vunpack.c.l.b16 %v1186
      %v1211 = vunpack.c.l.b16 %v1187
      %v1212 = vunpack.c.l.b16 %v1188
      %v1213 = vunpack.c.l.b16 %v1189
      %v1214 = vunpack.c.l.b16 %v1190
      %v1215 = vunpack.c.l.b16 %v1191
      %v1216 = vunpack.c.l.b16 %v1192
      %v1217 = vunpack.c.l.b16 %v1193
      %v1218 = vpack.c.b16 %v1211, %v1210
      %v1219 = vpack.c.b16 %v1213, %v1212
      %v1220 = vpack.c.b16 %v1215, %v1214
      %v1221 = vpack.c.b16 %v1217, %v1216
      %1226 = vmatprep.subr.bf16.mxu0 0
      %1227 = vmatpush1.bf16.msra.mxu0 %v1218
      %1228 = vmatprep.subr.bf16.mxu0 0
      %1229 = vmatpush1.bf16.msra.mxu0 %v1219
      %1230 = vmatprep.subr.bf16.mxu0 0
      %1231 = vmatpush1.bf16.msra.mxu0 %v1220
      %1232 = vmatprep.subr.bf16.mxu0 0
      %1233 = vmatpush1.bf16.msra.mxu0 %v1221
      %1234 = vmatprep.subr.bf16.mxu0 0
      %1235 = vmatpush1.bf16.msra.mxu0 0
      %1236 = vmatprep.subr.bf16.mxu0 0
      %1237 = vmatpush1.bf16.msra.mxu0 0
      %1238 = vmatprep.subr.bf16.mxu0 0
      %1239 = vmatpush1.bf16.msra.mxu0 0
      %1240 = vmatprep.subr.bf16.mxu0 0
      %1241 = vmatpush1.bf16.msra.mxu0 0
      %1242 = vmatprep.subr.bf16.mxu0 0
      %1243 = vmatpush1.bf16.msra.mxu0 0
      %1244 = vmatprep.subr.bf16.mxu0 0
      %1245 = vmatpush1.bf16.msra.mxu0 0
      %1246 = vmatprep.subr.bf16.mxu0 0
      %1247 = vmatpush1.bf16.msra.mxu0 0
      %1248 = vmatprep.subr.bf16.mxu0 0
      %1249 = vmatpush1.bf16.msra.mxu0 0
      %1250 = vmatprep.subr.bf16.mxu0 0
      %1251 = vmatpush1.bf16.msra.mxu0 0
      %1252 = vmatprep.subr.bf16.mxu0 0
      %1253 = vmatpush1.bf16.msra.mxu0 0
      %1254 = vmatprep.subr.bf16.mxu0 0
      %1255 = vmatpush1.bf16.msra.mxu0 0
      %1256 = vmatprep.subr.bf16.mxu0 0
      %1257 = vmatpush1.bf16.msra.mxu0 0
      %1258 = vmatprep.mubr.bf16.mxu0 0
      %1259 = vmatmul.mubr.bf16.gmra.mrb[0].mxu0 %v605
      %v1260 = vpop.f32.mrb[0].mxu0
      %v1261 = vadd.f32 %v1200, %v1260
      %v1262 = vpop.f32.mrb[0].mxu0
      %v1263 = vpop.f32.mrb[0].mxu0
      %v1264 = vadd.f32 %v1200, %v1263
      %v1265 = vpop.f32.mrb[0].mxu0
      %1266 = vmatprep.mubr.bf16.mxu0 0
      %1267 = vmatmul.mubr.bf16.gmra.mrb[0].mxu0 %v608
      %v1268 = vpop.f32.mrb[0].mxu0
      %v1269 = vadd.f32 %v1200, %v1268
      %v1270 = vpop.f32.mrb[0].mxu0
      %v1271 = vpop.f32.mrb[0].mxu0
      %v1272 = vpop.f32.mrb[0].mxu0
      %1273 = vdwg.mxu0
      %v1274 = vpack.c.bf16 %v1086, %v1083
      %v1275 = vpack.c.bf16 %v1091, %v1091
      %v1276 = vpack.c.bf16 %v1175, %v1172
      %v1277 = vpack.c.bf16 %v1180, %v1180
      %v1279 = vsel %vm840, %v1274, 0
      %v1282 = vsel %vm840, %v1275, 0
      %v1285 = vsel %vm840, %v1276, 0
      %v1288 = vsel %vm840, %v1277, 0
      %1290 = vmatprep.subr.bf16.mxu0 0
      %1291 = vmatpush1.bf16.xpose.msra.mxu0 %v1285
      %1292 = vmatprep.subr.bf16.mxu0 0
      %1293 = vmatpush1.bf16.xpose.msra.mxu0 %v1288
      %1294 = vmatprep.subr.bf16.mxu0 0
      %1295 = vmatpush1.bf16.xpose.msra.mxu0 0
      %1296 = vmatprep.subr.bf16.mxu0 0
      %1297 = vmatpush1.bf16.xpose.msra.mxu0 0
      %1298 = vmatprep.subr.bf16.mxu0 0
      %1299 = vmatpush1.bf16.xpose.msra.mxu0 0
      %1300 = vmatprep.subr.bf16.mxu0 0
      %1301 = vmatpush1.bf16.xpose.msra.mxu0 0
      %1302 = vmatprep.subr.bf16.mxu0 0
      %1303 = vmatpush1.bf16.xpose.msra.mxu0 0
      %1304 = vmatprep.subr.bf16.mxu0 0
      %1305 = vmatpush1.bf16.xpose.msra.mxu0 0
      %1306 = vmatprep.subr.bf16.mxu0 0
      %1307 = vmatpush1.bf16.xpose.msra.mxu0 0
      %1308 = vmatprep.subr.bf16.mxu0 0
      %1309 = vmatpush1.bf16.xpose.msra.mxu0 0
      %1310 = vmatprep.subr.bf16.mxu0 0
      %1311 = vmatpush1.bf16.xpose.msra.mxu0 0
      %1312 = vmatprep.subr.bf16.mxu0 0
      %1313 = vmatpush1.bf16.xpose.msra.mxu0 0
      %1314 = vmatprep.subr.bf16.mxu0 0
      %1315 = vmatpush1.bf16.xpose.msra.mxu0 0
      %1316 = vmatprep.subr.bf16.mxu0 0
      %1317 = vmatpush1.bf16.xpose.msra.mxu0 0
      %1318 = vmatprep.subr.bf16.mxu0 0
      %1319 = vmatpush1.bf16.xpose.msra.mxu0 0
      %1320 = vmatprep.subr.bf16.mxu0 0
      %1321 = vmatpush1.bf16.xpose.msra.mxu0 0
      %1322 = vmatprep.mubr.bf16.mxu0 0
      %1323 = vmatmul.mubr.bf16.gmra.mrb[0].mxu0 %v1279
      %v1324 = vpop.f32.mrb[0].mxu0
      %v1325 = vadd.f32 0.0, %v1324
      %v1326 = vpop.f32.mrb[0].mxu0
      %v1327 = vpop.f32.mrb[0].mxu0
      %v1328 = vadd.f32 0.0, %v1327
      %v1329 = vpop.f32.mrb[0].mxu0
      %1330 = vmatprep.mubr.bf16.mxu0 0
      %1331 = vmatmul.mubr.bf16.gmra.mrb[0].mxu0 %v1282
      %v1332 = vpop.f32.mrb[0].mxu0
      %v1333 = vadd.f32 0.0, %v1332
      %v1334 = vpop.f32.mrb[0].mxu0
      %v1335 = vpop.f32.mrb[0].mxu0
      %v1336 = vpop.f32.mrb[0].mxu0
      %1337 = vdwg.mxu0
      %v1338 = vmul.f32 %v1325, 0.25
      %v1339 = vmul.f32 %v1328, 0.25
      %v1340 = vmul.f32 %v1333, 0.25
      %v1341 = vadd.f32 %v1338, %v564
      %v1342 = vadd.f32 %v1339, %v564
      %v1343 = vadd.f32 %v1340, %v564
      %v1344 = vsel %vm907, %v1341, -inf
      %1345 = vmax.xlane.f32.xlu0 %v1344
      %v1346 = vpop.xlane.xlu0 %1345
      %v1347 = vsel %vm907, %v1342, -inf
      %1348 = vmax.xlane.f32.xlu0 %v1347
      %v1349 = vpop.xlane.xlu0 %1348
      %v1350 = vsel %vm907, %v1343, -inf
      %1351 = vmax.xlane.f32.xlu0 %v1350
      %v1352 = vpop.xlane.xlu0 %1351
      %v1353 = vsub.f32 %v1341, %v1346
      %v1354 = vsub.f32 %v1342, %v1349
      %v1355 = vsub.f32 %v1343, %v1352
      %v1356 = vmul.f32 %v1353, 1.442695
      %v1357 = vpow.pop %v1356
      %v1358 = vmul.f32 %v1354, 1.442695
      %v1359 = vpow.pop %v1358
      %v1360 = vmul.f32 %v1355, 1.442695
      %v1361 = vpow.pop %v1360
      %v1362 = vsel %vm907, %v1357, 0.0
      %1363 = vadd.xlane.f32.xlu0 %v1362
      %v1364 = vpop.xlane.xlu0 %1363
      %v1365 = vsel %vm907, %v1359, 0.0
      %1366 = vadd.xlane.f32.xlu0 %v1365
      %v1367 = vpop.xlane.xlu0 %1366
      %v1368 = vsel %vm907, %v1361, 0.0
      %1369 = vadd.xlane.f32.xlu0 %v1368
      %v1370 = vpop.xlane.xlu0 %1369
      %v1371 = vrcp.pop %v1364
      %v1372 = vrcp.pop %v1367
      %v1373 = vrcp.pop %v1370
      %v1374 = vmul.f32 %v1357, %v1371
      %v1375 = vmul.f32 %v1359, %v1372
      %v1376 = vmul.f32 %v1361, %v1373
      %v1377 = vpack.c.bf16 %v1375, %v1374
      %v1378 = vpack.c.bf16 %v1376, %v1376
      %v1379 = vpack.c.bf16 %v1264, %v1261
      %v1380 = vpack.c.bf16 %v1269, %v1269
      %v1382 = vsel %vm907, %v1377, 0
      %v1385 = vsel %vm907, %v1378, 0
      %v1388 = vsel %vm951, %v1380, 0
      %1390 = vmatprep.subr.bf16.mxu0 0
      %1391 = vmatpush1.bf16.msra.mxu0 %v1379
      %1392 = vmatprep.subr.bf16.mxu0 0
      %1393 = vmatpush1.bf16.msra.mxu0 %v1388
      %1394 = vmatprep.subr.bf16.mxu0 0
      %1395 = vmatpush1.bf16.msra.mxu0 0
      %1396 = vmatprep.subr.bf16.mxu0 0
      %1397 = vmatpush1.bf16.msra.mxu0 0
      %1398 = vmatprep.subr.bf16.mxu0 0
      %1399 = vmatpush1.bf16.msra.mxu0 0
      %1400 = vmatprep.subr.bf16.mxu0 0
      %1401 = vmatpush1.bf16.msra.mxu0 0
      %1402 = vmatprep.subr.bf16.mxu0 0
      %1403 = vmatpush1.bf16.msra.mxu0 0
      %1404 = vmatprep.subr.bf16.mxu0 0
      %1405 = vmatpush1.bf16.msra.mxu0 0
      %1406 = vmatprep.subr.bf16.mxu0 0
      %1407 = vmatpush1.bf16.msra.mxu0 0
      %1408 = vmatprep.subr.bf16.mxu0 0
      %1409 = vmatpush1.bf16.msra.mxu0 0
      %1410 = vmatprep.subr.bf16.mxu0 0
      %1411 = vmatpush1.bf16.msra.mxu0 0
      %1412 = vmatprep.subr.bf16.mxu0 0
      %1413 = vmatpush1.bf16.msra.mxu0 0
      %1414 = vmatprep.subr.bf16.mxu0 0
      %1415 = vmatpush1.bf16.msra.mxu0 0
      %1416 = vmatprep.subr.bf16.mxu0 0
      %1417 = vmatpush1.bf16.msra.mxu0 0
      %1418 = vmatprep.subr.bf16.mxu0 0
      %1419 = vmatpush1.bf16.msra.mxu0 0
      %1420 = vmatprep.subr.bf16.mxu0 0
      %1421 = vmatpush1.bf16.msra.mxu0 0
      %1422 = vmatprep.mubr.bf16.mxu0 0
      %1423 = vmatmul.mubr.bf16.gmra.mrb[0].mxu0 %v1382
      %v1424 = vpop.f32.mrb[0].mxu0
      %v1425 = vadd.f32 0.0, %v1424
      %v1426 = vpop.f32.mrb[0].mxu0
      %v1427 = vpop.f32.mrb[0].mxu0
      %v1428 = vadd.f32 0.0, %v1427
      %v1429 = vpop.f32.mrb[0].mxu0
      %1430 = vmatprep.mubr.bf16.mxu0 0
      %1431 = vmatmul.mubr.bf16.gmra.mrb[0].mxu0 %v1385
      %v1432 = vpop.f32.mrb[0].mxu0
      %v1433 = vadd.f32 0.0, %v1432
      %v1434 = vpop.f32.mrb[0].mxu0
      %v1435 = vpop.f32.mrb[0].mxu0
      %v1436 = vpop.f32.mrb[0].mxu0
      %1437 = vdwg.mxu0
      %v1438 = vpack.c.bf16 %v1428, %v1425
      %v1439 = vpack.c.bf16 %v1433, %v1433
      %s1440 = scalar_lea.vmem %s6, 8
      %v1441 = vld [vmem:[%s1440] sm:$0xf]
      %v1442 = vld [vmem:[%s1440 + $0x4] sm:$0xf]
      %v1445 = vunpack.c.l.b16 %v1441
      %v1446 = vunpack.c.l.b16 %v1442
      %v1447 = vpack.c.b16 %v1446, %v1445
      %v1450 = vsel %vm840, %v1438, 0
      %v1453 = vsel %vm840, %v1439, 0
      %1455 = vmatprep.subr.bf16.mxu0 0
      %1456 = vmatpush1.bf16.msra.mxu0 %v1447
      %1457 = vmatprep.subr.bf16.mxu0 0
      %1458 = vmatpush1.bf16.msra.mxu0 0
      %1459 = vmatprep.subr.bf16.mxu0 0
      %1460 = vmatpush1.bf16.msra.mxu0 0
      %1461 = vmatprep.subr.bf16.mxu0 0
      %1462 = vmatpush1.bf16.msra.mxu0 0
      %1463 = vmatprep.subr.bf16.mxu0 0
      %1464 = vmatpush1.bf16.msra.mxu0 0
      %1465 = vmatprep.subr.bf16.mxu0 0
      %1466 = vmatpush1.bf16.msra.mxu0 0
      %1467 = vmatprep.subr.bf16.mxu0 0
      %1468 = vmatpush1.bf16.msra.mxu0 0
      %1469 = vmatprep.subr.bf16.mxu0 0
      %1470 = vmatpush1.bf16.msra.mxu0 0
      %1471 = vmatprep.subr.bf16.mxu0 0
      %1472 = vmatpush1.bf16.msra.mxu0 0
      %1473 = vmatprep.subr.bf16.mxu0 0
      %1474 = vmatpush1.bf16.msra.mxu0 0
      %1475 = vmatprep.subr.bf16.mxu0 0
      %1476 = vmatpush1.bf16.msra.mxu0 0
      %1477 = vmatprep.subr.bf16.mxu0 0
      %1478 = vmatpush1.bf16.msra.mxu0 0
      %1479 = vmatprep.subr.bf16.mxu0 0
      %1480 = vmatpush1.bf16.msra.mxu0 0
      %1481 = vmatprep.subr.bf16.mxu0 0
      %1482 = vmatpush1.bf16.msra.mxu0 0
      %1483 = vmatprep.subr.bf16.mxu0 0
      %1484 = vmatpush1.bf16.msra.mxu0 0
      %1485 = vmatprep.subr.bf16.mxu0 0
      %1486 = vmatpush1.bf16.msra.mxu0 0
      %1487 = vmatprep.mubr.bf16.mxu0 0
      %1488 = vmatmul.mubr.bf16.gmra.mrb[0].mxu0 %v1450
      %v1489 = vpop.f32.mrb[0].mxu0
      %v1490 = vadd.f32 0.0, %v1489
      %v1491 = vpop.f32.mrb[0].mxu0
      %v1492 = vpop.f32.mrb[0].mxu0
      %v1493 = vadd.f32 0.0, %v1492
      %v1494 = vpop.f32.mrb[0].mxu0
      %1495 = vmatprep.mubr.bf16.mxu0 0
      %1496 = vmatmul.mubr.bf16.gmra.mrb[0].mxu0 %v1453
      %v1497 = vpop.f32.mrb[0].mxu0
      %v1498 = vadd.f32 0.0, %v1497
      %v1499 = vpop.f32.mrb[0].mxu0
      %v1500 = vpop.f32.mrb[0].mxu0
      %v1501 = vpop.f32.mrb[0].mxu0
      %1502 = vdwg.mxu0
      %v1505 = vunpack.c.l.b16 %v1005
      %v1506 = vunpack.c.l.b16 %v1006
      %v1507 = vpack.c.b16 %v1506, %v1505
      %v1510 = vsel %vm840, %v1003, 0
      %v1513 = vsel %vm840, %v1004, 0
      %1515 = vmatprep.subr.bf16.mxu0 0
      %1516 = vmatpush1.bf16.msra.mxu0 %v1507
      %1517 = vmatprep.subr.bf16.mxu0 0
      %1518 = vmatpush1.bf16.msra.mxu0 0
      %1519 = vmatprep.subr.bf16.mxu0 0
      %1520 = vmatpush1.bf16.msra.mxu0 0
      %1521 = vmatprep.subr.bf16.mxu0 0
      %1522 = vmatpush1.bf16.msra.mxu0 0
      %1523 = vmatprep.subr.bf16.mxu0 0
      %1524 = vmatpush1.bf16.msra.mxu0 0
      %1525 = vmatprep.subr.bf16.mxu0 0
      %1526 = vmatpush1.bf16.msra.mxu0 0
      %1527 = vmatprep.subr.bf16.mxu0 0
      %1528 = vmatpush1.bf16.msra.mxu0 0
      %1529 = vmatprep.subr.bf16.mxu0 0
      %1530 = vmatpush1.bf16.msra.mxu0 0
      %1531 = vmatprep.subr.bf16.mxu0 0
      %1532 = vmatpush1.bf16.msra.mxu0 0
      %1533 = vmatprep.subr.bf16.mxu0 0
      %1534 = vmatpush1.bf16.msra.mxu0 0
      %1535 = vmatprep.subr.bf16.mxu0 0
      %1536 = vmatpush1.bf16.msra.mxu0 0
      %1537 = vmatprep.subr.bf16.mxu0 0
      %1538 = vmatpush1.bf16.msra.mxu0 0
      %1539 = vmatprep.subr.bf16.mxu0 0
      %1540 = vmatpush1.bf16.msra.mxu0 0
      %1541 = vmatprep.subr.bf16.mxu0 0
      %1542 = vmatpush1.bf16.msra.mxu0 0
      %1543 = vmatprep.subr.bf16.mxu0 0
      %1544 = vmatpush1.bf16.msra.mxu0 0
      %1545 = vmatprep.subr.bf16.mxu0 0
      %1546 = vmatpush1.bf16.msra.mxu0 0
      %1547 = vmatprep.mubr.bf16.mxu0 0
      %1548 = vmatmul.mubr.bf16.gmra.mrb[0].mxu0 %v1510
      %v1549 = vpop.f32.mrb[0].mxu0
      %v1550 = vadd.f32 %v1490, %v1549
      %v1551 = vpop.f32.mrb[0].mxu0
      %v1552 = vpop.f32.mrb[0].mxu0
      %v1553 = vadd.f32 %v1493, %v1552
      %v1554 = vpop.f32.mrb[0].mxu0
      %1555 = vmatprep.mubr.bf16.mxu0 0
      %1556 = vmatmul.mubr.bf16.gmra.mrb[0].mxu0 %v1513
      %v1557 = vpop.f32.mrb[0].mxu0
      %v1558 = vadd.f32 %v1498, %v1557
      %v1559 = vpop.f32.mrb[0].mxu0
      %v1560 = vpop.f32.mrb[0].mxu0
      %v1561 = vpop.f32.mrb[0].mxu0
      %1562 = vdwg.mxu0
      %s1563 = scalar_lea.vmem %s4, 64
      %v1564 = vld [vmem:[%s1563] sm:$0xf]
      %v1565 = vld [vmem:[%s1563 + $0x4] sm:$0xf]
      %v1566 = vld [vmem:[%s1563 + $0x8] sm:$0xf]
      %v1567 = vld [vmem:[%s1563 + $0xc] sm:$0xf]
      %v1568 = vld [vmem:[%s1563 + $0x10] sm:$0xf]
      %v1569 = vld [vmem:[%s1563 + $0x14] sm:$0xf]
      %v1570 = vld [vmem:[%s1563 + $0x18] sm:$0xf]
      %v1571 = vld [vmem:[%s1563 + $0x1c] sm:$0xf]
      %s1572 = scalar_lea.vmem %s5, 2
      %v1573 = vld [vmem:[%s1572] sm:$0x1]
      %v1575 = vlaneseq
      %v1576 = vshrl.u32 %v1575, 7
      %v1577 = vsub.s32 0, %v1576
      %v1578 = vrot.slane %v1573, %v1577
      %v1588 = vunpack.c.l.b16 %v1564
      %v1589 = vunpack.c.l.b16 %v1565
      %v1590 = vunpack.c.l.b16 %v1566
      %v1591 = vunpack.c.l.b16 %v1567
      %v1592 = vunpack.c.l.b16 %v1568
      %v1593 = vunpack.c.l.b16 %v1569
      %v1594 = vunpack.c.l.b16 %v1570
      %v1595 = vunpack.c.l.b16 %v1571
      %v1596 = vpack.c.b16 %v1589, %v1588
      %v1597 = vpack.c.b16 %v1591, %v1590
      %v1598 = vpack.c.b16 %v1593, %v1592
      %v1599 = vpack.c.b16 %v1595, %v1594
      %1604 = vmatprep.subr.bf16.mxu0 0
      %1605 = vmatpush1.bf16.msra.mxu0 %v1596
      %1606 = vmatprep.subr.bf16.mxu0 0
      %1607 = vmatpush1.bf16.msra.mxu0 %v1597
      %1608 = vmatprep.subr.bf16.mxu0 0
      %1609 = vmatpush1.bf16.msra.mxu0 %v1598
      %1610 = vmatprep.subr.bf16.mxu0 0
      %1611 = vmatpush1.bf16.msra.mxu0 %v1599
      %1612 = vmatprep.subr.bf16.mxu0 0
      %1613 = vmatpush1.bf16.msra.mxu0 0
      %1614 = vmatprep.subr.bf16.mxu0 0
      %1615 = vmatpush1.bf16.msra.mxu0 0
      %1616 = vmatprep.subr.bf16.mxu0 0
      %1617 = vmatpush1.bf16.msra.mxu0 0
      %1618 = vmatprep.subr.bf16.mxu0 0
      %1619 = vmatpush1.bf16.msra.mxu0 0
      %1620 = vmatprep.subr.bf16.mxu0 0
      %1621 = vmatpush1.bf16.msra.mxu0 0
      %1622 = vmatprep.subr.bf16.mxu0 0
      %1623 = vmatpush1.bf16.msra.mxu0 0
      %1624 = vmatprep.subr.bf16.mxu0 0
      %1625 = vmatpush1.bf16.msra.mxu0 0
      %1626 = vmatprep.subr.bf16.mxu0 0
      %1627 = vmatpush1.bf16.msra.mxu0 0
      %1628 = vmatprep.subr.bf16.mxu0 0
      %1629 = vmatpush1.bf16.msra.mxu0 0
      %1630 = vmatprep.subr.bf16.mxu0 0
      %1631 = vmatpush1.bf16.msra.mxu0 0
      %1632 = vmatprep.subr.bf16.mxu0 0
      %1633 = vmatpush1.bf16.msra.mxu0 0
      %1634 = vmatprep.subr.bf16.mxu0 0
      %1635 = vmatpush1.bf16.msra.mxu0 0
      %1636 = vmatprep.mubr.bf16.mxu0 0
      %1637 = vmatmul.mubr.bf16.gmra.mrb[0].mxu0 %v605
      %v1638 = vpop.f32.mrb[0].mxu0
      %v1639 = vadd.f32 %v1578, %v1638
      %v1640 = vpop.f32.mrb[0].mxu0
      %v1641 = vpop.f32.mrb[0].mxu0
      %v1642 = vadd.f32 %v1578, %v1641
      %v1643 = vpop.f32.mrb[0].mxu0
      %1644 = vmatprep.mubr.bf16.mxu0 0
      %1645 = vmatmul.mubr.bf16.gmra.mrb[0].mxu0 %v608
      %v1646 = vpop.f32.mrb[0].mxu0
      %v1647 = vadd.f32 %v1578, %v1646
      %v1648 = vpop.f32.mrb[0].mxu0
      %v1649 = vpop.f32.mrb[0].mxu0
      %v1650 = vpop.f32.mrb[0].mxu0
      %1651 = vdwg.mxu0
      %s1652 = scalar_lea.vmem %s4, 192
      %v1653 = vld [vmem:[%s1652] sm:$0xf]
      %v1654 = vld [vmem:[%s1652 + $0x4] sm:$0xf]
      %v1655 = vld [vmem:[%s1652 + $0x8] sm:$0xf]
      %v1656 = vld [vmem:[%s1652 + $0xc] sm:$0xf]
      %v1657 = vld [vmem:[%s1652 + $0x10] sm:$0xf]
      %v1658 = vld [vmem:[%s1652 + $0x14] sm:$0xf]
      %v1659 = vld [vmem:[%s1652 + $0x18] sm:$0xf]
      %v1660 = vld [vmem:[%s1652 + $0x1c] sm:$0xf]
      %s1661 = scalar_lea.vmem %s5, 6
      %v1662 = vld [vmem:[%s1661] sm:$0x1]
      %v1664 = vlaneseq
      %v1665 = vshrl.u32 %v1664, 7
      %v1666 = vsub.s32 0, %v1665
      %v1667 = vrot.slane %v1662, %v1666
      %v1677 = vunpack.c.l.b16 %v1653
      %v1678 = vunpack.c.l.b16 %v1654
      %v1679 = vunpack.c.l.b16 %v1655
      %v1680 = vunpack.c.l.b16 %v1656
      %v1681 = vunpack.c.l.b16 %v1657
      %v1682 = vunpack.c.l.b16 %v1658
      %v1683 = vunpack.c.l.b16 %v1659
      %v1684 = vunpack.c.l.b16 %v1660
      %v1685 = vpack.c.b16 %v1678, %v1677
      %v1686 = vpack.c.b16 %v1680, %v1679
      %v1687 = vpack.c.b16 %v1682, %v1681
      %v1688 = vpack.c.b16 %v1684, %v1683
      %1693 = vmatprep.subr.bf16.mxu0 0
      %1694 = vmatpush1.bf16.msra.mxu0 %v1685
      %1695 = vmatprep.subr.bf16.mxu0 0
      %1696 = vmatpush1.bf16.msra.mxu0 %v1686
      %1697 = vmatprep.subr.bf16.mxu0 0
      %1698 = vmatpush1.bf16.msra.mxu0 %v1687
      %1699 = vmatprep.subr.bf16.mxu0 0
      %1700 = vmatpush1.bf16.msra.mxu0 %v1688
      %1701 = vmatprep.subr.bf16.mxu0 0
      %1702 = vmatpush1.bf16.msra.mxu0 0
      %1703 = vmatprep.subr.bf16.mxu0 0
      %1704 = vmatpush1.bf16.msra.mxu0 0
      %1705 = vmatprep.subr.bf16.mxu0 0
      %1706 = vmatpush1.bf16.msra.mxu0 0
      %1707 = vmatprep.subr.bf16.mxu0 0
      %1708 = vmatpush1.bf16.msra.mxu0 0
      %1709 = vmatprep.subr.bf16.mxu0 0
      %1710 = vmatpush1.bf16.msra.mxu0 0
      %1711 = vmatprep.subr.bf16.mxu0 0
      %1712 = vmatpush1.bf16.msra.mxu0 0
      %1713 = vmatprep.subr.bf16.mxu0 0
      %1714 = vmatpush1.bf16.msra.mxu0 0
      %1715 = vmatprep.subr.bf16.mxu0 0
      %1716 = vmatpush1.bf16.msra.mxu0 0
      %1717 = vmatprep.subr.bf16.mxu0 0
      %1718 = vmatpush1.bf16.msra.mxu0 0
      %1719 = vmatprep.subr.bf16.mxu0 0
      %1720 = vmatpush1.bf16.msra.mxu0 0
      %1721 = vmatprep.subr.bf16.mxu0 0
      %1722 = vmatpush1.bf16.msra.mxu0 0
      %1723 = vmatprep.subr.bf16.mxu0 0
      %1724 = vmatpush1.bf16.msra.mxu0 0
      %1725 = vmatprep.mubr.bf16.mxu0 0
      %1726 = vmatmul.mubr.bf16.gmra.mrb[0].mxu0 %v605
      %v1727 = vpop.f32.mrb[0].mxu0
      %v1728 = vadd.f32 %v1667, %v1727
      %v1729 = vpop.f32.mrb[0].mxu0
      %v1730 = vpop.f32.mrb[0].mxu0
      %v1731 = vadd.f32 %v1667, %v1730
      %v1732 = vpop.f32.mrb[0].mxu0
      %1733 = vmatprep.mubr.bf16.mxu0 0
      %1734 = vmatmul.mubr.bf16.gmra.mrb[0].mxu0 %v608
      %v1735 = vpop.f32.mrb[0].mxu0
      %v1736 = vadd.f32 %v1667, %v1735
      %v1737 = vpop.f32.mrb[0].mxu0
      %v1738 = vpop.f32.mrb[0].mxu0
      %v1739 = vpop.f32.mrb[0].mxu0
      %1740 = vdwg.mxu0
      %s1741 = scalar_lea.vmem %s4, 320
      %v1742 = vld [vmem:[%s1741] sm:$0xf]
      %v1743 = vld [vmem:[%s1741 + $0x4] sm:$0xf]
      %v1744 = vld [vmem:[%s1741 + $0x8] sm:$0xf]
      %v1745 = vld [vmem:[%s1741 + $0xc] sm:$0xf]
      %v1746 = vld [vmem:[%s1741 + $0x10] sm:$0xf]
      %v1747 = vld [vmem:[%s1741 + $0x14] sm:$0xf]
      %v1748 = vld [vmem:[%s1741 + $0x18] sm:$0xf]
      %v1749 = vld [vmem:[%s1741 + $0x1c] sm:$0xf]
      %s1750 = scalar_lea.vmem %s5, 10
      %v1751 = vld [vmem:[%s1750] sm:$0x1]
      %v1753 = vlaneseq
      %v1754 = vshrl.u32 %v1753, 7
      %v1755 = vsub.s32 0, %v1754
      %v1756 = vrot.slane %v1751, %v1755
      %v1766 = vunpack.c.l.b16 %v1742
      %v1767 = vunpack.c.l.b16 %v1743
      %v1768 = vunpack.c.l.b16 %v1744
      %v1769 = vunpack.c.l.b16 %v1745
      %v1770 = vunpack.c.l.b16 %v1746
      %v1771 = vunpack.c.l.b16 %v1747
      %v1772 = vunpack.c.l.b16 %v1748
      %v1773 = vunpack.c.l.b16 %v1749
      %v1774 = vpack.c.b16 %v1767, %v1766
      %v1775 = vpack.c.b16 %v1769, %v1768
      %v1776 = vpack.c.b16 %v1771, %v1770
      %v1777 = vpack.c.b16 %v1773, %v1772
      %1782 = vmatprep.subr.bf16.mxu0 0
      %1783 = vmatpush1.bf16.msra.mxu0 %v1774
      %1784 = vmatprep.subr.bf16.mxu0 0
      %1785 = vmatpush1.bf16.msra.mxu0 %v1775
      %1786 = vmatprep.subr.bf16.mxu0 0
      %1787 = vmatpush1.bf16.msra.mxu0 %v1776
      %1788 = vmatprep.subr.bf16.mxu0 0
      %1789 = vmatpush1.bf16.msra.mxu0 %v1777
      %1790 = vmatprep.subr.bf16.mxu0 0
      %1791 = vmatpush1.bf16.msra.mxu0 0
      %1792 = vmatprep.subr.bf16.mxu0 0
      %1793 = vmatpush1.bf16.msra.mxu0 0
      %1794 = vmatprep.subr.bf16.mxu0 0
      %1795 = vmatpush1.bf16.msra.mxu0 0
      %1796 = vmatprep.subr.bf16.mxu0 0
      %1797 = vmatpush1.bf16.msra.mxu0 0
      %1798 = vmatprep.subr.bf16.mxu0 0
      %1799 = vmatpush1.bf16.msra.mxu0 0
      %1800 = vmatprep.subr.bf16.mxu0 0
      %1801 = vmatpush1.bf16.msra.mxu0 0
      %1802 = vmatprep.subr.bf16.mxu0 0
      %1803 = vmatpush1.bf16.msra.mxu0 0
      %1804 = vmatprep.subr.bf16.mxu0 0
      %1805 = vmatpush1.bf16.msra.mxu0 0
      %1806 = vmatprep.subr.bf16.mxu0 0
      %1807 = vmatpush1.bf16.msra.mxu0 0
      %1808 = vmatprep.subr.bf16.mxu0 0
      %1809 = vmatpush1.bf16.msra.mxu0 0
      %1810 = vmatprep.subr.bf16.mxu0 0
      %1811 = vmatpush1.bf16.msra.mxu0 0
      %1812 = vmatprep.subr.bf16.mxu0 0
      %1813 = vmatpush1.bf16.msra.mxu0 0
      %1814 = vmatprep.mubr.bf16.mxu0 0
      %1815 = vmatmul.mubr.bf16.gmra.mrb[0].mxu0 %v605
      %v1816 = vpop.f32.mrb[0].mxu0
      %v1817 = vadd.f32 %v1756, %v1816
      %v1818 = vpop.f32.mrb[0].mxu0
      %v1819 = vpop.f32.mrb[0].mxu0
      %v1820 = vadd.f32 %v1756, %v1819
      %v1821 = vpop.f32.mrb[0].mxu0
      %1822 = vmatprep.mubr.bf16.mxu0 0
      %1823 = vmatmul.mubr.bf16.gmra.mrb[0].mxu0 %v608
      %v1824 = vpop.f32.mrb[0].mxu0
      %v1825 = vadd.f32 %v1756, %v1824
      %v1826 = vpop.f32.mrb[0].mxu0
      %v1827 = vpop.f32.mrb[0].mxu0
      %v1828 = vpop.f32.mrb[0].mxu0
      %1829 = vdwg.mxu0
      %v1830 = vpack.c.bf16 %v1642, %v1639
      %v1831 = vpack.c.bf16 %v1647, %v1647
      %v1832 = vpack.c.bf16 %v1731, %v1728
      %v1833 = vpack.c.bf16 %v1736, %v1736
      %v1835 = vsel %vm840, %v1830, 0
      %v1838 = vsel %vm840, %v1831, 0
      %v1841 = vsel %vm840, %v1832, 0
      %v1844 = vsel %vm840, %v1833, 0
      %1846 = vmatprep.subr.bf16.mxu0 0
      %1847 = vmatpush1.bf16.xpose.msra.mxu0 %v1841
      %1848 = vmatprep.subr.bf16.mxu0 0
      %1849 = vmatpush1.bf16.xpose.msra.mxu0 %v1844
      %1850 = vmatprep.subr.bf16.mxu0 0
      %1851 = vmatpush1.bf16.xpose.msra.mxu0 0
      %1852 = vmatprep.subr.bf16.mxu0 0
      %1853 = vmatpush1.bf16.xpose.msra.mxu0 0
      %1854 = vmatprep.subr.bf16.mxu0 0
      %1855 = vmatpush1.bf16.xpose.msra.mxu0 0
      %1856 = vmatprep.subr.bf16.mxu0 0
      %1857 = vmatpush1.bf16.xpose.msra.mxu0 0
      %1858 = vmatprep.subr.bf16.mxu0 0
      %1859 = vmatpush1.bf16.xpose.msra.mxu0 0
      %1860 = vmatprep.subr.bf16.mxu0 0
      %1861 = vmatpush1.bf16.xpose.msra.mxu0 0
      %1862 = vmatprep.subr.bf16.mxu0 0
      %1863 = vmatpush1.bf16.xpose.msra.mxu0 0
      %1864 = vmatprep.subr.bf16.mxu0 0
      %1865 = vmatpush1.bf16.xpose.msra.mxu0 0
      %1866 = vmatprep.subr.bf16.mxu0 0
      %1867 = vmatpush1.bf16.xpose.msra.mxu0 0
      %1868 = vmatprep.subr.bf16.mxu0 0
      %1869 = vmatpush1.bf16.xpose.msra.mxu0 0
      %1870 = vmatprep.subr.bf16.mxu0 0
      %1871 = vmatpush1.bf16.xpose.msra.mxu0 0
      %1872 = vmatprep.subr.bf16.mxu0 0
      %1873 = vmatpush1.bf16.xpose.msra.mxu0 0
      %1874 = vmatprep.subr.bf16.mxu0 0
      %1875 = vmatpush1.bf16.xpose.msra.mxu0 0
      %1876 = vmatprep.subr.bf16.mxu0 0
      %1877 = vmatpush1.bf16.xpose.msra.mxu0 0
      %1878 = vmatprep.mubr.bf16.mxu0 0
      %1879 = vmatmul.mubr.bf16.gmra.mrb[0].mxu0 %v1835
      %v1880 = vpop.f32.mrb[0].mxu0
      %v1881 = vadd.f32 0.0, %v1880
      %v1882 = vpop.f32.mrb[0].mxu0
      %v1883 = vpop.f32.mrb[0].mxu0
      %v1884 = vadd.f32 0.0, %v1883
      %v1885 = vpop.f32.mrb[0].mxu0
      %1886 = vmatprep.mubr.bf16.mxu0 0
      %1887 = vmatmul.mubr.bf16.gmra.mrb[0].mxu0 %v1838
      %v1888 = vpop.f32.mrb[0].mxu0
      %v1889 = vadd.f32 0.0, %v1888
      %v1890 = vpop.f32.mrb[0].mxu0
      %v1891 = vpop.f32.mrb[0].mxu0
      %v1892 = vpop.f32.mrb[0].mxu0
      %1893 = vdwg.mxu0
      %v1894 = vmul.f32 %v1881, 0.25
      %v1895 = vmul.f32 %v1884, 0.25
      %v1896 = vmul.f32 %v1889, 0.25
      %v1897 = vadd.f32 %v1894, %v564
      %v1898 = vadd.f32 %v1895, %v564
      %v1899 = vadd.f32 %v1896, %v564
      %v1900 = vsel %vm907, %v1897, -inf
      %1901 = vmax.xlane.f32.xlu0 %v1900
      %v1902 = vpop.xlane.xlu0 %1901
      %v1903 = vsel %vm907, %v1898, -inf
      %1904 = vmax.xlane.f32.xlu0 %v1903
      %v1905 = vpop.xlane.xlu0 %1904
      %v1906 = vsel %vm907, %v1899, -inf
      %1907 = vmax.xlane.f32.xlu0 %v1906
      %v1908 = vpop.xlane.xlu0 %1907
      %v1909 = vsub.f32 %v1897, %v1902
      %v1910 = vsub.f32 %v1898, %v1905
      %v1911 = vsub.f32 %v1899, %v1908
      %v1912 = vmul.f32 %v1909, 1.442695
      %v1913 = vpow.pop %v1912
      %v1914 = vmul.f32 %v1910, 1.442695
      %v1915 = vpow.pop %v1914
      %v1916 = vmul.f32 %v1911, 1.442695
      %v1917 = vpow.pop %v1916
      %v1918 = vsel %vm907, %v1913, 0.0
      %1919 = vadd.xlane.f32.xlu0 %v1918
      %v1920 = vpop.xlane.xlu0 %1919
      %v1921 = vsel %vm907, %v1915, 0.0
      %1922 = vadd.xlane.f32.xlu0 %v1921
      %v1923 = vpop.xlane.xlu0 %1922
      %v1924 = vsel %vm907, %v1917, 0.0
      %1925 = vadd.xlane.f32.xlu0 %v1924
      %v1926 = vpop.xlane.xlu0 %1925
      %v1927 = vrcp.pop %v1920
      %v1928 = vrcp.pop %v1923
      %v1929 = vrcp.pop %v1926
      %v1930 = vmul.f32 %v1913, %v1927
      %v1931 = vmul.f32 %v1915, %v1928
      %v1932 = vmul.f32 %v1917, %v1929
      %v1933 = vpack.c.bf16 %v1931, %v1930
      %v1934 = vpack.c.bf16 %v1932, %v1932
      %v1935 = vpack.c.bf16 %v1820, %v1817
      %v1936 = vpack.c.bf16 %v1825, %v1825
      %v1938 = vsel %vm907, %v1933, 0
      %v1941 = vsel %vm907, %v1934, 0
      %v1944 = vsel %vm951, %v1936, 0
      %1946 = vmatprep.subr.bf16.mxu0 0
      %1947 = vmatpush1.bf16.msra.mxu0 %v1935
      %1948 = vmatprep.subr.bf16.mxu0 0
      %1949 = vmatpush1.bf16.msra.mxu0 %v1944
      %1950 = vmatprep.subr.bf16.mxu0 0
      %1951 = vmatpush1.bf16.msra.mxu0 0
      %1952 = vmatprep.subr.bf16.mxu0 0
      %1953 = vmatpush1.bf16.msra.mxu0 0
      %1954 = vmatprep.subr.bf16.mxu0 0
      %1955 = vmatpush1.bf16.msra.mxu0 0
      %1956 = vmatprep.subr.bf16.mxu0 0
      %1957 = vmatpush1.bf16.msra.mxu0 0
      %1958 = vmatprep.subr.bf16.mxu0 0
      %1959 = vmatpush1.bf16.msra.mxu0 0
      %1960 = vmatprep.subr.bf16.mxu0 0
      %1961 = vmatpush1.bf16.msra.mxu0 0
      %1962 = vmatprep.subr.bf16.mxu0 0
      %1963 = vmatpush1.bf16.msra.mxu0 0
      %1964 = vmatprep.subr.bf16.mxu0 0
      %1965 = vmatpush1.bf16.msra.mxu0 0
      %1966 = vmatprep.subr.bf16.mxu0 0
      %1967 = vmatpush1.bf16.msra.mxu0 0
      %1968 = vmatprep.subr.bf16.mxu0 0
      %1969 = vmatpush1.bf16.msra.mxu0 0
      %1970 = vmatprep.subr.bf16.mxu0 0
      %1971 = vmatpush1.bf16.msra.mxu0 0
      %1972 = vmatprep.subr.bf16.mxu0 0
      %1973 = vmatpush1.bf16.msra.mxu0 0
      %1974 = vmatprep.subr.bf16.mxu0 0
      %1975 = vmatpush1.bf16.msra.mxu0 0
      %1976 = vmatprep.subr.bf16.mxu0 0
      %1977 = vmatpush1.bf16.msra.mxu0 0
      %1978 = vmatprep.mubr.bf16.mxu0 0
      %1979 = vmatmul.mubr.bf16.gmra.mrb[0].mxu0 %v1938
      %v1980 = vpop.f32.mrb[0].mxu0
      %v1981 = vadd.f32 0.0, %v1980
      %v1982 = vpop.f32.mrb[0].mxu0
      %v1983 = vpop.f32.mrb[0].mxu0
      %v1984 = vadd.f32 0.0, %v1983
      %v1985 = vpop.f32.mrb[0].mxu0
      %1986 = vmatprep.mubr.bf16.mxu0 0
      %1987 = vmatmul.mubr.bf16.gmra.mrb[0].mxu0 %v1941
      %v1988 = vpop.f32.mrb[0].mxu0
      %v1989 = vadd.f32 0.0, %v1988
      %v1990 = vpop.f32.mrb[0].mxu0
      %v1991 = vpop.f32.mrb[0].mxu0
      %v1992 = vpop.f32.mrb[0].mxu0
      %1993 = vdwg.mxu0
      %v1994 = vpack.c.bf16 %v1984, %v1981
      %v1995 = vpack.c.bf16 %v1989, %v1989
      %s1996 = scalar_lea.vmem %s6, 16
      %v1997 = vld [vmem:[%s1996] sm:$0xf]
      %v1998 = vld [vmem:[%s1996 + $0x4] sm:$0xf]
      %v2001 = vunpack.c.l.b16 %v1997
      %v2002 = vunpack.c.l.b16 %v1998
      %v2003 = vpack.c.b16 %v2002, %v2001
      %v2006 = vsel %vm840, %v1994, 0
      %v2009 = vsel %vm840, %v1995, 0
      %2011 = vmatprep.subr.bf16.mxu0 0
      %2012 = vmatpush1.bf16.msra.mxu0 %v2003
      %2013 = vmatprep.subr.bf16.mxu0 0
      %2014 = vmatpush1.bf16.msra.mxu0 0
      %2015 = vmatprep.subr.bf16.mxu0 0
      %2016 = vmatpush1.bf16.msra.mxu0 0
      %2017 = vmatprep.subr.bf16.mxu0 0
      %2018 = vmatpush1.bf16.msra.mxu0 0
      %2019 = vmatprep.subr.bf16.mxu0 0
      %2020 = vmatpush1.bf16.msra.mxu0 0
      %2021 = vmatprep.subr.bf16.mxu0 0
      %2022 = vmatpush1.bf16.msra.mxu0 0
      %2023 = vmatprep.subr.bf16.mxu0 0
      %2024 = vmatpush1.bf16.msra.mxu0 0
      %2025 = vmatprep.subr.bf16.mxu0 0
      %2026 = vmatpush1.bf16.msra.mxu0 0
      %2027 = vmatprep.subr.bf16.mxu0 0
      %2028 = vmatpush1.bf16.msra.mxu0 0
      %2029 = vmatprep.subr.bf16.mxu0 0
      %2030 = vmatpush1.bf16.msra.mxu0 0
      %2031 = vmatprep.subr.bf16.mxu0 0
      %2032 = vmatpush1.bf16.msra.mxu0 0
      %2033 = vmatprep.subr.bf16.mxu0 0
      %2034 = vmatpush1.bf16.msra.mxu0 0
      %2035 = vmatprep.subr.bf16.mxu0 0
      %2036 = vmatpush1.bf16.msra.mxu0 0
      %2037 = vmatprep.subr.bf16.mxu0 0
      %2038 = vmatpush1.bf16.msra.mxu0 0
      %2039 = vmatprep.subr.bf16.mxu0 0
      %2040 = vmatpush1.bf16.msra.mxu0 0
      %2041 = vmatprep.subr.bf16.mxu0 0
      %2042 = vmatpush1.bf16.msra.mxu0 0
      %2043 = vmatprep.mubr.bf16.mxu0 0
      %2044 = vmatmul.mubr.bf16.gmra.mrb[0].mxu0 %v2006
      %v2045 = vpop.f32.mrb[0].mxu0
      %v2046 = vadd.f32 0.0, %v2045
      %v2047 = vpop.f32.mrb[0].mxu0
      %v2048 = vpop.f32.mrb[0].mxu0
      %v2049 = vadd.f32 0.0, %v2048
      %v2050 = vpop.f32.mrb[0].mxu0
      %2051 = vmatprep.mubr.bf16.mxu0 0
      %2052 = vmatmul.mubr.bf16.gmra.mrb[0].mxu0 %v2009
      %v2053 = vpop.f32.mrb[0].mxu0
      %v2054 = vadd.f32 0.0, %v2053
      %v2055 = vpop.f32.mrb[0].mxu0
      %v2056 = vpop.f32.mrb[0].mxu0
      %v2057 = vpop.f32.mrb[0].mxu0
      %2058 = vdwg.mxu0
      %v2059 = vadd.f32 %v1550, %v2046
      %v2060 = vadd.f32 %v1553, %v2049
      %v2061 = vadd.f32 %v1558, %v2054
      %s2062 = scalar_lea.vmem %s4, 96
      %v2063 = vld [vmem:[%s2062] sm:$0xf]
      %v2064 = vld [vmem:[%s2062 + $0x4] sm:$0xf]
      %v2065 = vld [vmem:[%s2062 + $0x8] sm:$0xf]
      %v2066 = vld [vmem:[%s2062 + $0xc] sm:$0xf]
      %v2067 = vld [vmem:[%s2062 + $0x10] sm:$0xf]
      %v2068 = vld [vmem:[%s2062 + $0x14] sm:$0xf]
      %v2069 = vld [vmem:[%s2062 + $0x18] sm:$0xf]
      %v2070 = vld [vmem:[%s2062 + $0x1c] sm:$0xf]
      %s2071 = scalar_lea.vmem %s5, 3
      %v2072 = vld [vmem:[%s2071] sm:$0x1]
      %v2074 = vlaneseq
      %v2075 = vshrl.u32 %v2074, 7
      %v2076 = vsub.s32 0, %v2075
      %v2077 = vrot.slane %v2072, %v2076
      %v2087 = vunpack.c.l.b16 %v2063
      %v2088 = vunpack.c.l.b16 %v2064
      %v2089 = vunpack.c.l.b16 %v2065
      %v2090 = vunpack.c.l.b16 %v2066
      %v2091 = vunpack.c.l.b16 %v2067
      %v2092 = vunpack.c.l.b16 %v2068
      %v2093 = vunpack.c.l.b16 %v2069
      %v2094 = vunpack.c.l.b16 %v2070
      %v2095 = vpack.c.b16 %v2088, %v2087
      %v2096 = vpack.c.b16 %v2090, %v2089
      %v2097 = vpack.c.b16 %v2092, %v2091
      %v2098 = vpack.c.b16 %v2094, %v2093
      %2103 = vmatprep.subr.bf16.mxu0 0
      %2104 = vmatpush1.bf16.msra.mxu0 %v2095
      %2105 = vmatprep.subr.bf16.mxu0 0
      %2106 = vmatpush1.bf16.msra.mxu0 %v2096
      %2107 = vmatprep.subr.bf16.mxu0 0
      %2108 = vmatpush1.bf16.msra.mxu0 %v2097
      %2109 = vmatprep.subr.bf16.mxu0 0
      %2110 = vmatpush1.bf16.msra.mxu0 %v2098
      %2111 = vmatprep.subr.bf16.mxu0 0
      %2112 = vmatpush1.bf16.msra.mxu0 0
      %2113 = vmatprep.subr.bf16.mxu0 0
      %2114 = vmatpush1.bf16.msra.mxu0 0
      %2115 = vmatprep.subr.bf16.mxu0 0
      %2116 = vmatpush1.bf16.msra.mxu0 0
      %2117 = vmatprep.subr.bf16.mxu0 0
      %2118 = vmatpush1.bf16.msra.mxu0 0
      %2119 = vmatprep.subr.bf16.mxu0 0
      %2120 = vmatpush1.bf16.msra.mxu0 0
      %2121 = vmatprep.subr.bf16.mxu0 0
      %2122 = vmatpush1.bf16.msra.mxu0 0
      %2123 = vmatprep.subr.bf16.mxu0 0
      %2124 = vmatpush1.bf16.msra.mxu0 0
      %2125 = vmatprep.subr.bf16.mxu0 0
      %2126 = vmatpush1.bf16.msra.mxu0 0
      %2127 = vmatprep.subr.bf16.mxu0 0
      %2128 = vmatpush1.bf16.msra.mxu0 0
      %2129 = vmatprep.subr.bf16.mxu0 0
      %2130 = vmatpush1.bf16.msra.mxu0 0
      %2131 = vmatprep.subr.bf16.mxu0 0
      %2132 = vmatpush1.bf16.msra.mxu0 0
      %2133 = vmatprep.subr.bf16.mxu0 0
      %2134 = vmatpush1.bf16.msra.mxu0 0
      %2135 = vmatprep.mubr.bf16.mxu0 0
      %2136 = vmatmul.mubr.bf16.gmra.mrb[0].mxu0 %v605
      %v2137 = vpop.f32.mrb[0].mxu0
      %v2138 = vadd.f32 %v2077, %v2137
      %v2139 = vpop.f32.mrb[0].mxu0
      %v2140 = vpop.f32.mrb[0].mxu0
      %v2141 = vadd.f32 %v2077, %v2140
      %v2142 = vpop.f32.mrb[0].mxu0
      %2143 = vmatprep.mubr.bf16.mxu0 0
      %2144 = vmatmul.mubr.bf16.gmra.mrb[0].mxu0 %v608
      %v2145 = vpop.f32.mrb[0].mxu0
      %v2146 = vadd.f32 %v2077, %v2145
      %v2147 = vpop.f32.mrb[0].mxu0
      %v2148 = vpop.f32.mrb[0].mxu0
      %v2149 = vpop.f32.mrb[0].mxu0
      %2150 = vdwg.mxu0
      %s2151 = scalar_lea.vmem %s4, 224
      %v2152 = vld [vmem:[%s2151] sm:$0xf]
      %v2153 = vld [vmem:[%s2151 + $0x4] sm:$0xf]
      %v2154 = vld [vmem:[%s2151 + $0x8] sm:$0xf]
      %v2155 = vld [vmem:[%s2151 + $0xc] sm:$0xf]
      %v2156 = vld [vmem:[%s2151 + $0x10] sm:$0xf]
      %v2157 = vld [vmem:[%s2151 + $0x14] sm:$0xf]
      %v2158 = vld [vmem:[%s2151 + $0x18] sm:$0xf]
      %v2159 = vld [vmem:[%s2151 + $0x1c] sm:$0xf]
      %s2160 = scalar_lea.vmem %s5, 7
      %v2161 = vld [vmem:[%s2160] sm:$0x1]
      %v2163 = vlaneseq
      %v2164 = vshrl.u32 %v2163, 7
      %v2165 = vsub.s32 0, %v2164
      %v2166 = vrot.slane %v2161, %v2165
      %v2176 = vunpack.c.l.b16 %v2152
      %v2177 = vunpack.c.l.b16 %v2153
      %v2178 = vunpack.c.l.b16 %v2154
      %v2179 = vunpack.c.l.b16 %v2155
      %v2180 = vunpack.c.l.b16 %v2156
      %v2181 = vunpack.c.l.b16 %v2157
      %v2182 = vunpack.c.l.b16 %v2158
      %v2183 = vunpack.c.l.b16 %v2159
      %v2184 = vpack.c.b16 %v2177, %v2176
      %v2185 = vpack.c.b16 %v2179, %v2178
      %v2186 = vpack.c.b16 %v2181, %v2180
      %v2187 = vpack.c.b16 %v2183, %v2182
      %2192 = vmatprep.subr.bf16.mxu0 0
      %2193 = vmatpush1.bf16.msra.mxu0 %v2184
      %2194 = vmatprep.subr.bf16.mxu0 0
      %2195 = vmatpush1.bf16.msra.mxu0 %v2185
      %2196 = vmatprep.subr.bf16.mxu0 0
      %2197 = vmatpush1.bf16.msra.mxu0 %v2186
      %2198 = vmatprep.subr.bf16.mxu0 0
      %2199 = vmatpush1.bf16.msra.mxu0 %v2187
      %2200 = vmatprep.subr.bf16.mxu0 0
      %2201 = vmatpush1.bf16.msra.mxu0 0
      %2202 = vmatprep.subr.bf16.mxu0 0
      %2203 = vmatpush1.bf16.msra.mxu0 0
      %2204 = vmatprep.subr.bf16.mxu0 0
      %2205 = vmatpush1.bf16.msra.mxu0 0
      %2206 = vmatprep.subr.bf16.mxu0 0
      %2207 = vmatpush1.bf16.msra.mxu0 0
      %2208 = vmatprep.subr.bf16.mxu0 0
      %2209 = vmatpush1.bf16.msra.mxu0 0
      %2210 = vmatprep.subr.bf16.mxu0 0
      %2211 = vmatpush1.bf16.msra.mxu0 0
      %2212 = vmatprep.subr.bf16.mxu0 0
      %2213 = vmatpush1.bf16.msra.mxu0 0
      %2214 = vmatprep.subr.bf16.mxu0 0
      %2215 = vmatpush1.bf16.msra.mxu0 0
      %2216 = vmatprep.subr.bf16.mxu0 0
      %2217 = vmatpush1.bf16.msra.mxu0 0
      %2218 = vmatprep.subr.bf16.mxu0 0
      %2219 = vmatpush1.bf16.msra.mxu0 0
      %2220 = vmatprep.subr.bf16.mxu0 0
      %2221 = vmatpush1.bf16.msra.mxu0 0
      %2222 = vmatprep.subr.bf16.mxu0 0
      %2223 = vmatpush1.bf16.msra.mxu0 0
      %2224 = vmatprep.mubr.bf16.mxu0 0
      %2225 = vmatmul.mubr.bf16.gmra.mrb[0].mxu0 %v605
      %v2226 = vpop.f32.mrb[0].mxu0
      %v2227 = vadd.f32 %v2166, %v2226
      %v2228 = vpop.f32.mrb[0].mxu0
      %v2229 = vpop.f32.mrb[0].mxu0
      %v2230 = vadd.f32 %v2166, %v2229
      %v2231 = vpop.f32.mrb[0].mxu0
      %2232 = vmatprep.mubr.bf16.mxu0 0
      %2233 = vmatmul.mubr.bf16.gmra.mrb[0].mxu0 %v608
      %v2234 = vpop.f32.mrb[0].mxu0
      %v2235 = vadd.f32 %v2166, %v2234
      %v2236 = vpop.f32.mrb[0].mxu0
      %v2237 = vpop.f32.mrb[0].mxu0
      %v2238 = vpop.f32.mrb[0].mxu0
      %2239 = vdwg.mxu0
      %s2240 = scalar_lea.vmem %s4, 352
      %v2241 = vld [vmem:[%s2240] sm:$0xf]
      %v2242 = vld [vmem:[%s2240 + $0x4] sm:$0xf]
      %v2243 = vld [vmem:[%s2240 + $0x8] sm:$0xf]
      %v2244 = vld [vmem:[%s2240 + $0xc] sm:$0xf]
      %v2245 = vld [vmem:[%s2240 + $0x10] sm:$0xf]
      %v2246 = vld [vmem:[%s2240 + $0x14] sm:$0xf]
      %v2247 = vld [vmem:[%s2240 + $0x18] sm:$0xf]
      %v2248 = vld [vmem:[%s2240 + $0x1c] sm:$0xf]
      %s2249 = scalar_lea.vmem %s5, 11
      %v2250 = vld [vmem:[%s2249] sm:$0x1]
      %v2252 = vlaneseq
      %v2253 = vshrl.u32 %v2252, 7
      %v2254 = vsub.s32 0, %v2253
      %v2255 = vrot.slane %v2250, %v2254
      %v2265 = vunpack.c.l.b16 %v2241
      %v2266 = vunpack.c.l.b16 %v2242
      %v2267 = vunpack.c.l.b16 %v2243
      %v2268 = vunpack.c.l.b16 %v2244
      %v2269 = vunpack.c.l.b16 %v2245
      %v2270 = vunpack.c.l.b16 %v2246
      %v2271 = vunpack.c.l.b16 %v2247
      %v2272 = vunpack.c.l.b16 %v2248
      %v2273 = vpack.c.b16 %v2266, %v2265
      %v2274 = vpack.c.b16 %v2268, %v2267
      %v2275 = vpack.c.b16 %v2270, %v2269
      %v2276 = vpack.c.b16 %v2272, %v2271
      %2281 = vmatprep.subr.bf16.mxu0 0
      %2282 = vmatpush1.bf16.msra.mxu0 %v2273
      %2283 = vmatprep.subr.bf16.mxu0 0
      %2284 = vmatpush1.bf16.msra.mxu0 %v2274
      %2285 = vmatprep.subr.bf16.mxu0 0
      %2286 = vmatpush1.bf16.msra.mxu0 %v2275
      %2287 = vmatprep.subr.bf16.mxu0 0
      %2288 = vmatpush1.bf16.msra.mxu0 %v2276
      %2289 = vmatprep.subr.bf16.mxu0 0
      %2290 = vmatpush1.bf16.msra.mxu0 0
      %2291 = vmatprep.subr.bf16.mxu0 0
      %2292 = vmatpush1.bf16.msra.mxu0 0
      %2293 = vmatprep.subr.bf16.mxu0 0
      %2294 = vmatpush1.bf16.msra.mxu0 0
      %2295 = vmatprep.subr.bf16.mxu0 0
      %2296 = vmatpush1.bf16.msra.mxu0 0
      %2297 = vmatprep.subr.bf16.mxu0 0
      %2298 = vmatpush1.bf16.msra.mxu0 0
      %2299 = vmatprep.subr.bf16.mxu0 0
      %2300 = vmatpush1.bf16.msra.mxu0 0
      %2301 = vmatprep.subr.bf16.mxu0 0
      %2302 = vmatpush1.bf16.msra.mxu0 0
      %2303 = vmatprep.subr.bf16.mxu0 0
      %2304 = vmatpush1.bf16.msra.mxu0 0
      %2305 = vmatprep.subr.bf16.mxu0 0
      %2306 = vmatpush1.bf16.msra.mxu0 0
      %2307 = vmatprep.subr.bf16.mxu0 0
      %2308 = vmatpush1.bf16.msra.mxu0 0
      %2309 = vmatprep.subr.bf16.mxu0 0
      %2310 = vmatpush1.bf16.msra.mxu0 0
      %2311 = vmatprep.subr.bf16.mxu0 0
      %2312 = vmatpush1.bf16.msra.mxu0 0
      %2313 = vmatprep.mubr.bf16.mxu0 0
      %2314 = vmatmul.mubr.bf16.gmra.mrb[0].mxu0 %v605
      %v2315 = vpop.f32.mrb[0].mxu0
      %v2316 = vadd.f32 %v2255, %v2315
      %v2317 = vpop.f32.mrb[0].mxu0
      %v2318 = vpop.f32.mrb[0].mxu0
      %v2319 = vadd.f32 %v2255, %v2318
      %v2320 = vpop.f32.mrb[0].mxu0
      %2321 = vmatprep.mubr.bf16.mxu0 0
      %2322 = vmatmul.mubr.bf16.gmra.mrb[0].mxu0 %v608
      %v2323 = vpop.f32.mrb[0].mxu0
      %v2324 = vadd.f32 %v2255, %v2323
      %v2325 = vpop.f32.mrb[0].mxu0
      %v2326 = vpop.f32.mrb[0].mxu0
      %v2327 = vpop.f32.mrb[0].mxu0
      %2328 = vdwg.mxu0
      %v2329 = vpack.c.bf16 %v2141, %v2138
      %v2330 = vpack.c.bf16 %v2146, %v2146
      %v2331 = vpack.c.bf16 %v2230, %v2227
      %v2332 = vpack.c.bf16 %v2235, %v2235
      %v2334 = vsel %vm840, %v2329, 0
      %v2337 = vsel %vm840, %v2330, 0
      %v2340 = vsel %vm840, %v2331, 0
      %v2343 = vsel %vm840, %v2332, 0
      %2345 = vmatprep.subr.bf16.mxu0 0
      %2346 = vmatpush1.bf16.xpose.msra.mxu0 %v2340
      %2347 = vmatprep.subr.bf16.mxu0 0
      %2348 = vmatpush1.bf16.xpose.msra.mxu0 %v2343
      %2349 = vmatprep.subr.bf16.mxu0 0
      %2350 = vmatpush1.bf16.xpose.msra.mxu0 0
      %2351 = vmatprep.subr.bf16.mxu0 0
      %2352 = vmatpush1.bf16.xpose.msra.mxu0 0
      %2353 = vmatprep.subr.bf16.mxu0 0
      %2354 = vmatpush1.bf16.xpose.msra.mxu0 0
      %2355 = vmatprep.subr.bf16.mxu0 0
      %2356 = vmatpush1.bf16.xpose.msra.mxu0 0
      %2357 = vmatprep.subr.bf16.mxu0 0
      %2358 = vmatpush1.bf16.xpose.msra.mxu0 0
      %2359 = vmatprep.subr.bf16.mxu0 0
      %2360 = vmatpush1.bf16.xpose.msra.mxu0 0
      %2361 = vmatprep.subr.bf16.mxu0 0
      %2362 = vmatpush1.bf16.xpose.msra.mxu0 0
      %2363 = vmatprep.subr.bf16.mxu0 0
      %2364 = vmatpush1.bf16.xpose.msra.mxu0 0
      %2365 = vmatprep.subr.bf16.mxu0 0
      %2366 = vmatpush1.bf16.xpose.msra.mxu0 0
      %2367 = vmatprep.subr.bf16.mxu0 0
      %2368 = vmatpush1.bf16.xpose.msra.mxu0 0
      %2369 = vmatprep.subr.bf16.mxu0 0
      %2370 = vmatpush1.bf16.xpose.msra.mxu0 0
      %2371 = vmatprep.subr.bf16.mxu0 0
      %2372 = vmatpush1.bf16.xpose.msra.mxu0 0
      %2373 = vmatprep.subr.bf16.mxu0 0
      %2374 = vmatpush1.bf16.xpose.msra.mxu0 0
      %2375 = vmatprep.subr.bf16.mxu0 0
      %2376 = vmatpush1.bf16.xpose.msra.mxu0 0
      %2377 = vmatprep.mubr.bf16.mxu0 0
      %2378 = vmatmul.mubr.bf16.gmra.mrb[0].mxu0 %v2334
      %v2379 = vpop.f32.mrb[0].mxu0
      %v2380 = vadd.f32 0.0, %v2379
      %v2381 = vpop.f32.mrb[0].mxu0
      %v2382 = vpop.f32.mrb[0].mxu0
      %v2383 = vadd.f32 0.0, %v2382
      %v2384 = vpop.f32.mrb[0].mxu0
      %2385 = vmatprep.mubr.bf16.mxu0 0
      %2386 = vmatmul.mubr.bf16.gmra.mrb[0].mxu0 %v2337
      %v2387 = vpop.f32.mrb[0].mxu0
      %v2388 = vadd.f32 0.0, %v2387
      %v2389 = vpop.f32.mrb[0].mxu0
      %v2390 = vpop.f32.mrb[0].mxu0
      %v2391 = vpop.f32.mrb[0].mxu0
      %2392 = vdwg.mxu0
      %v2393 = vmul.f32 %v2380, 0.25
      %v2394 = vmul.f32 %v2383, 0.25
      %v2395 = vmul.f32 %v2388, 0.25
      %v2396 = vadd.f32 %v2393, %v564
      %v2397 = vadd.f32 %v2394, %v564
      %v2398 = vadd.f32 %v2395, %v564
      %v2399 = vsel %vm907, %v2396, -inf
      %2400 = vmax.xlane.f32.xlu0 %v2399
      %v2401 = vpop.xlane.xlu0 %2400
      %v2402 = vsel %vm907, %v2397, -inf
      %2403 = vmax.xlane.f32.xlu0 %v2402
      %v2404 = vpop.xlane.xlu0 %2403
      %v2405 = vsel %vm907, %v2398, -inf
      %2406 = vmax.xlane.f32.xlu0 %v2405
      %v2407 = vpop.xlane.xlu0 %2406
      %v2408 = vsub.f32 %v2396, %v2401
      %v2409 = vsub.f32 %v2397, %v2404
      %v2410 = vsub.f32 %v2398, %v2407
      %v2411 = vmul.f32 %v2408, 1.442695
      %v2412 = vpow.pop %v2411
      %v2413 = vmul.f32 %v2409, 1.442695
      %v2414 = vpow.pop %v2413
      %v2415 = vmul.f32 %v2410, 1.442695
      %v2416 = vpow.pop %v2415
      %v2417 = vsel %vm907, %v2412, 0.0
      %2418 = vadd.xlane.f32.xlu0 %v2417
      %v2419 = vpop.xlane.xlu0 %2418
      %v2420 = vsel %vm907, %v2414, 0.0
      %2421 = vadd.xlane.f32.xlu0 %v2420
      %v2422 = vpop.xlane.xlu0 %2421
      %v2423 = vsel %vm907, %v2416, 0.0
      %2424 = vadd.xlane.f32.xlu0 %v2423
      %v2425 = vpop.xlane.xlu0 %2424
      %v2426 = vrcp.pop %v2419
      %v2427 = vrcp.pop %v2422
      %v2428 = vrcp.pop %v2425
      %v2429 = vmul.f32 %v2412, %v2426
      %v2430 = vmul.f32 %v2414, %v2427
      %v2431 = vmul.f32 %v2416, %v2428
      %v2432 = vpack.c.bf16 %v2430, %v2429
      %v2433 = vpack.c.bf16 %v2431, %v2431
      %v2434 = vpack.c.bf16 %v2319, %v2316
      %v2435 = vpack.c.bf16 %v2324, %v2324
      %v2437 = vsel %vm907, %v2432, 0
      %v2440 = vsel %vm907, %v2433, 0
      %v2443 = vsel %vm951, %v2435, 0
      %2445 = vmatprep.subr.bf16.mxu0 0
      %2446 = vmatpush1.bf16.msra.mxu0 %v2434
      %2447 = vmatprep.subr.bf16.mxu0 0
      %2448 = vmatpush1.bf16.msra.mxu0 %v2443
      %2449 = vmatprep.subr.bf16.mxu0 0
      %2450 = vmatpush1.bf16.msra.mxu0 0
      %2451 = vmatprep.subr.bf16.mxu0 0
      %2452 = vmatpush1.bf16.msra.mxu0 0
      %2453 = vmatprep.subr.bf16.mxu0 0
      %2454 = vmatpush1.bf16.msra.mxu0 0
      %2455 = vmatprep.subr.bf16.mxu0 0
      %2456 = vmatpush1.bf16.msra.mxu0 0
      %2457 = vmatprep.subr.bf16.mxu0 0
      %2458 = vmatpush1.bf16.msra.mxu0 0
      %2459 = vmatprep.subr.bf16.mxu0 0
      %2460 = vmatpush1.bf16.msra.mxu0 0
      %2461 = vmatprep.subr.bf16.mxu0 0
      %2462 = vmatpush1.bf16.msra.mxu0 0
      %2463 = vmatprep.subr.bf16.mxu0 0
      %2464 = vmatpush1.bf16.msra.mxu0 0
      %2465 = vmatprep.subr.bf16.mxu0 0
      %2466 = vmatpush1.bf16.msra.mxu0 0
      %2467 = vmatprep.subr.bf16.mxu0 0
      %2468 = vmatpush1.bf16.msra.mxu0 0
      %2469 = vmatprep.subr.bf16.mxu0 0
      %2470 = vmatpush1.bf16.msra.mxu0 0
      %2471 = vmatprep.subr.bf16.mxu0 0
      %2472 = vmatpush1.bf16.msra.mxu0 0
      %2473 = vmatprep.subr.bf16.mxu0 0
      %2474 = vmatpush1.bf16.msra.mxu0 0
      %2475 = vmatprep.subr.bf16.mxu0 0
      %2476 = vmatpush1.bf16.msra.mxu0 0
      %2477 = vmatprep.mubr.bf16.mxu0 0
      %2478 = vmatmul.mubr.bf16.gmra.mrb[0].mxu0 %v2437
      %v2479 = vpop.f32.mrb[0].mxu0
      %v2480 = vadd.f32 0.0, %v2479
      %v2481 = vpop.f32.mrb[0].mxu0
      %v2482 = vpop.f32.mrb[0].mxu0
      %v2483 = vadd.f32 0.0, %v2482
      %v2484 = vpop.f32.mrb[0].mxu0
      %2485 = vmatprep.mubr.bf16.mxu0 0
      %2486 = vmatmul.mubr.bf16.gmra.mrb[0].mxu0 %v2440
      %v2487 = vpop.f32.mrb[0].mxu0
      %v2488 = vadd.f32 0.0, %v2487
      %v2489 = vpop.f32.mrb[0].mxu0
      %v2490 = vpop.f32.mrb[0].mxu0
      %v2491 = vpop.f32.mrb[0].mxu0
      %2492 = vdwg.mxu0
      %v2493 = vpack.c.bf16 %v2483, %v2480
      %v2494 = vpack.c.bf16 %v2488, %v2488
      %s2495 = scalar_lea.vmem %s6, 24
      %v2496 = vld [vmem:[%s2495] sm:$0xf]
      %v2497 = vld [vmem:[%s2495 + $0x4] sm:$0xf]
      %v2500 = vunpack.c.l.b16 %v2496
      %v2501 = vunpack.c.l.b16 %v2497
      %v2502 = vpack.c.b16 %v2501, %v2500
      %v2505 = vsel %vm840, %v2493, 0
      %v2508 = vsel %vm840, %v2494, 0
      %2510 = vmatprep.subr.bf16.mxu0 0
      %2511 = vmatpush1.bf16.msra.mxu0 %v2502
      %2512 = vmatprep.subr.bf16.mxu0 0
      %2513 = vmatpush1.bf16.msra.mxu0 0
      %2514 = vmatprep.subr.bf16.mxu0 0
      %2515 = vmatpush1.bf16.msra.mxu0 0
      %2516 = vmatprep.subr.bf16.mxu0 0
      %2517 = vmatpush1.bf16.msra.mxu0 0
      %2518 = vmatprep.subr.bf16.mxu0 0
      %2519 = vmatpush1.bf16.msra.mxu0 0
      %2520 = vmatprep.subr.bf16.mxu0 0
      %2521 = vmatpush1.bf16.msra.mxu0 0
      %2522 = vmatprep.subr.bf16.mxu0 0
      %2523 = vmatpush1.bf16.msra.mxu0 0
      %2524 = vmatprep.subr.bf16.mxu0 0
      %2525 = vmatpush1.bf16.msra.mxu0 0
      %2526 = vmatprep.subr.bf16.mxu0 0
      %2527 = vmatpush1.bf16.msra.mxu0 0
      %2528 = vmatprep.subr.bf16.mxu0 0
      %2529 = vmatpush1.bf16.msra.mxu0 0
      %2530 = vmatprep.subr.bf16.mxu0 0
      %2531 = vmatpush1.bf16.msra.mxu0 0
      %2532 = vmatprep.subr.bf16.mxu0 0
      %2533 = vmatpush1.bf16.msra.mxu0 0
      %2534 = vmatprep.subr.bf16.mxu0 0
      %2535 = vmatpush1.bf16.msra.mxu0 0
      %2536 = vmatprep.subr.bf16.mxu0 0
      %2537 = vmatpush1.bf16.msra.mxu0 0
      %2538 = vmatprep.subr.bf16.mxu0 0
      %2539 = vmatpush1.bf16.msra.mxu0 0
      %2540 = vmatprep.subr.bf16.mxu0 0
      %2541 = vmatpush1.bf16.msra.mxu0 0
      %2542 = vmatprep.mubr.bf16.mxu0 0
      %2543 = vmatmul.mubr.bf16.gmra.mrb[0].mxu0 %v2505
      %v2544 = vpop.f32.mrb[0].mxu0
      %v2545 = vadd.f32 0.0, %v2544
      %v2546 = vpop.f32.mrb[0].mxu0
      %v2547 = vpop.f32.mrb[0].mxu0
      %v2548 = vadd.f32 0.0, %v2547
      %v2549 = vpop.f32.mrb[0].mxu0
      %2550 = vmatprep.mubr.bf16.mxu0 0
      %2551 = vmatmul.mubr.bf16.gmra.mrb[0].mxu0 %v2508
      %v2552 = vpop.f32.mrb[0].mxu0
      %v2553 = vadd.f32 0.0, %v2552
      %v2554 = vpop.f32.mrb[0].mxu0
      %v2555 = vpop.f32.mrb[0].mxu0
      %v2556 = vpop.f32.mrb[0].mxu0
      %2557 = vdwg.mxu0
      %v2558 = vadd.f32 %v2059, %v2545
      %v2559 = vadd.f32 %v2060, %v2548
      %v2560 = vadd.f32 %v2061, %v2553
      %v2561 = vadd.f32 %v495, %v2558
      %v2562 = vadd.f32 %v496, %v2559
      %v2563 = vadd.f32 %v497, %v2560
      %v2564 = vld [vmem:[%s7] sm:$0x1]
      %v2566 = vlaneseq
      %v2567 = vshrl.u32 %v2566, 7
      %v2568 = vsub.s32 0, %v2567
      %v2569 = vrot.slane %v2564, %v2568
      %v2571 = vadd.f32 %v2561, %v2569
      %v2572 = vadd.f32 %v2562, %v2569
      %v2573 = vadd.f32 %v2563, %v2569
      %v2574 = vld [vmem:[%s8] sm:$0x1]
      %v2575 = vld [vmem:[%s9] sm:$0x1]
      %v2576 = vsel %vm500, %v2571, 0.0
      %2577 = vadd.xlane.f32.xlu0 %v2576
      %v2578 = vpop.xlane.xlu0 %2577
      %v2579 = vsel %vm500, %v2572, 0.0
      %2580 = vadd.xlane.f32.xlu0 %v2579
      %v2581 = vpop.xlane.xlu0 %2580
      %v2582 = vsel %vm500, %v2573, 0.0
      %2583 = vadd.xlane.f32.xlu0 %v2582
      %v2584 = vpop.xlane.xlu0 %2583
      %v2585 = vmul.f32 %v2578, %v510
      %v2586 = vmul.f32 %v2581, %v510
      %v2587 = vmul.f32 %v2584, %v510
      %v2588 = vsub.f32 %v2571, %v2585
      %v2589 = vsub.f32 %v2572, %v2586
      %v2590 = vsub.f32 %v2573, %v2587
      %v2591 = vmul.f32 %v2588, %v2588
      %v2592 = vmul.f32 %v2589, %v2589
      %v2593 = vmul.f32 %v2590, %v2590
      %v2594 = vsel %vm500, %v2591, 0.0
      %2595 = vadd.xlane.f32.xlu0 %v2594
      %v2596 = vpop.xlane.xlu0 %2595
      %v2597 = vsel %vm500, %v2592, 0.0
      %2598 = vadd.xlane.f32.xlu0 %v2597
      %v2599 = vpop.xlane.xlu0 %2598
      %v2600 = vsel %vm500, %v2593, 0.0
      %2601 = vadd.xlane.f32.xlu0 %v2600
      %v2602 = vpop.xlane.xlu0 %2601
      %v2603 = vmul.f32 %v2596, %v510
      %v2604 = vmul.f32 %v2599, %v510
      %v2605 = vmul.f32 %v2602, %v510
      %v2606 = vadd.f32 %v2603, 1e-06
      %v2607 = vadd.f32 %v2604, 1e-06
      %v2608 = vadd.f32 %v2605, 1e-06
      %v2609 = vrsqrt.pop %v2606
      %v2610 = vrsqrt.pop %v2607
      %v2611 = vrsqrt.pop %v2608
      %v2612 = vmul.f32 %v2588, %v2609
      %v2613 = vmul.f32 %v2589, %v2610
      %v2614 = vmul.f32 %v2590, %v2611
      %v2616 = vlaneseq
      %v2617 = vshrl.u32 %v2616, 7
      %v2618 = vsub.s32 0, %v2617
      %v2619 = vrot.slane %v2574, %v2618
      %v2621 = vmul.f32 %v2612, %v2619
      %v2622 = vmul.f32 %v2613, %v2619
      %v2623 = vmul.f32 %v2614, %v2619
      %v2625 = vlaneseq
      %v2626 = vshrl.u32 %v2625, 7
      %v2627 = vsub.s32 0, %v2626
      %v2628 = vrot.slane %v2575, %v2627
      %v2630 = vadd.f32 %v2621, %v2628
      %v2631 = vadd.f32 %v2622, %v2628
      %v2632 = vadd.f32 %v2623, %v2628
      %v2633 = vpack.c.bf16 %v2631, %v2630
      %v2634 = vpack.c.bf16 %v2632, %v2632
      %v2635 = vld [vmem:[%s10] sm:$0xff]
      %v2636 = vld [vmem:[%s10 + $0x8] sm:$0xff]
      %v2637 = vld [vmem:[%s10 + $0x10] sm:$0xff]
      %v2638 = vld [vmem:[%s10 + $0x18] sm:$0xff]
      %v2639 = vld [vmem:[%s10 + $0x20] sm:$0xff]
      %v2640 = vld [vmem:[%s10 + $0x28] sm:$0xff]
      %v2641 = vld [vmem:[%s10 + $0x30] sm:$0xff]
      %v2642 = vld [vmem:[%s10 + $0x38] sm:$0xff]
      %v2643 = vld [vmem:[%s11] sm:$0x3]
      %v2645 = vlaneseq
      %v2646 = vshrl.u32 %v2645, 7
      %v2647 = vsub.s32 0, %v2646
      %v2648 = vrot.slane %v2643, %v2647
      %v2649 = vlaneseq
      %v2650 = vshrl.u32 %v2649, 7
      %v2651 = vsub.s32 1, %v2650
      %v2652 = vrot.slane %v2643, %v2651
      %v2663 = vunpack.c.l.b16 %v2635
      %v2664 = vunpack.c.h.b16 %v2635
      %v2665 = vunpack.c.l.b16 %v2636
      %v2666 = vunpack.c.h.b16 %v2636
      %v2667 = vunpack.c.l.b16 %v2637
      %v2668 = vunpack.c.h.b16 %v2637
      %v2669 = vunpack.c.l.b16 %v2638
      %v2670 = vunpack.c.h.b16 %v2638
      %v2671 = vunpack.c.l.b16 %v2639
      %v2672 = vunpack.c.h.b16 %v2639
      %v2673 = vunpack.c.l.b16 %v2640
      %v2674 = vunpack.c.h.b16 %v2640
      %v2675 = vunpack.c.l.b16 %v2641
      %v2676 = vunpack.c.h.b16 %v2641
      %v2677 = vunpack.c.l.b16 %v2642
      %v2678 = vunpack.c.h.b16 %v2642
      %v2679 = vpack.c.b16 %v2665, %v2663
      %v2680 = vpack.c.b16 %v2666, %v2664
      %v2681 = vpack.c.b16 %v2669, %v2667
      %v2682 = vpack.c.b16 %v2670, %v2668
      %v2683 = vpack.c.b16 %v2673, %v2671
      %v2684 = vpack.c.b16 %v2674, %v2672
      %v2685 = vpack.c.b16 %v2677, %v2675
      %v2686 = vpack.c.b16 %v2678, %v2676
      %v2696 = vsel %vm500, %v2633, 0
      %v2699 = vsel %vm500, %v2634, 0
      %2701 = vmatprep.subr.bf16.mxu0 %v2680
      %2702 = vmatpush1.bf16.msra.mxu0 %v2679
      %2703 = vmatprep.subr.bf16.mxu0 %v2682
      %2704 = vmatpush1.bf16.msra.mxu0 %v2681
      %2705 = vmatprep.subr.bf16.mxu0 %v2684
      %2706 = vmatpush1.bf16.msra.mxu0 %v2683
      %2707 = vmatprep.subr.bf16.mxu0 %v2686
      %2708 = vmatpush1.bf16.msra.mxu0 %v2685
      %2709 = vmatprep.subr.bf16.mxu0 0
      %2710 = vmatpush1.bf16.msra.mxu0 0
      %2711 = vmatprep.subr.bf16.mxu0 0
      %2712 = vmatpush1.bf16.msra.mxu0 0
      %2713 = vmatprep.subr.bf16.mxu0 0
      %2714 = vmatpush1.bf16.msra.mxu0 0
      %2715 = vmatprep.subr.bf16.mxu0 0
      %2716 = vmatpush1.bf16.msra.mxu0 0
      %2717 = vmatprep.subr.bf16.mxu0 0
      %2718 = vmatpush1.bf16.msra.mxu0 0
      %2719 = vmatprep.subr.bf16.mxu0 0
      %2720 = vmatpush1.bf16.msra.mxu0 0
      %2721 = vmatprep.subr.bf16.mxu0 0
      %2722 = vmatpush1.bf16.msra.mxu0 0
      %2723 = vmatprep.subr.bf16.mxu0 0
      %2724 = vmatpush1.bf16.msra.mxu0 0
      %2725 = vmatprep.subr.bf16.mxu0 0
      %2726 = vmatpush1.bf16.msra.mxu0 0
      %2727 = vmatprep.subr.bf16.mxu0 0
      %2728 = vmatpush1.bf16.msra.mxu0 0
      %2729 = vmatprep.subr.bf16.mxu0 0
      %2730 = vmatpush1.bf16.msra.mxu0 0
      %2731 = vmatprep.subr.bf16.mxu0 0
      %2732 = vmatpush1.bf16.msra.mxu0 0
      %2733 = vmatprep.mubr.bf16.mxu0 0
      %2734 = vmatmul.mubr.bf16.gmra.mrb[0].mxu0 %v2696
      %v2735 = vpop.f32.mrb[0].mxu0
      %v2736 = vadd.f32 %v2648, %v2735
      %v2737 = vpop.f32.mrb[0].mxu0
      %v2738 = vadd.f32 %v2652, %v2737
      %v2739 = vpop.f32.mrb[0].mxu0
      %v2740 = vadd.f32 %v2648, %v2739
      %v2741 = vpop.f32.mrb[0].mxu0
      %v2742 = vadd.f32 %v2652, %v2741
      %2743 = vmatprep.mubr.bf16.mxu0 0
      %2744 = vmatmul.mubr.bf16.gmra.mrb[0].mxu0 %v2699
      %v2745 = vpop.f32.mrb[0].mxu0
      %v2746 = vadd.f32 %v2648, %v2745
      %v2747 = vpop.f32.mrb[0].mxu0
      %v2748 = vadd.f32 %v2652, %v2747
      %v2749 = vpop.f32.mrb[0].mxu0
      %v2750 = vpop.f32.mrb[0].mxu0
      %2751 = vdwg.mxu0
      %v2752 = vmul.f32 %v2736, %v2736
      %v2753 = vmul.f32 %v2738, %v2738
      %v2754 = vmul.f32 %v2740, %v2740
      %v2755 = vmul.f32 %v2742, %v2742
      %v2756 = vmul.f32 %v2746, %v2746
      %v2757 = vmul.f32 %v2748, %v2748
      %v2758 = vmul.f32 %v2736, %v2752
      %v2759 = vmul.f32 %v2738, %v2753
      %v2760 = vmul.f32 %v2740, %v2754
      %v2761 = vmul.f32 %v2742, %v2755
      %v2762 = vmul.f32 %v2746, %v2756
      %v2763 = vmul.f32 %v2748, %v2757
      %v2764 = vmul.f32 %v2758, 0.044715
      %v2765 = vmul.f32 %v2759, 0.044715
      %v2766 = vmul.f32 %v2760, 0.044715
      %v2767 = vmul.f32 %v2761, 0.044715
      %v2768 = vmul.f32 %v2762, 0.044715
      %v2769 = vmul.f32 %v2763, 0.044715
      %v2770 = vadd.f32 %v2736, %v2764
      %v2771 = vadd.f32 %v2738, %v2765
      %v2772 = vadd.f32 %v2740, %v2766
      %v2773 = vadd.f32 %v2742, %v2767
      %v2774 = vadd.f32 %v2746, %v2768
      %v2775 = vadd.f32 %v2748, %v2769
      %v2776 = vmul.f32 %v2770, 0.7978846
      %v2777 = vmul.f32 %v2771, 0.7978846
      %v2778 = vmul.f32 %v2772, 0.7978846
      %v2779 = vmul.f32 %v2773, 0.7978846
      %v2780 = vmul.f32 %v2774, 0.7978846
      %v2781 = vmul.f32 %v2775, 0.7978846
      %v2782 = vtanh.pop %v2776
      %v2783 = vtanh.pop %v2777
      %v2784 = vtanh.pop %v2778
      %v2785 = vtanh.pop %v2779
      %v2786 = vtanh.pop %v2780
      %v2787 = vtanh.pop %v2781
      %v2788 = vadd.f32 %v2782, 1.0
      %v2789 = vadd.f32 %v2783, 1.0
      %v2790 = vadd.f32 %v2784, 1.0
      %v2791 = vadd.f32 %v2785, 1.0
      %v2792 = vadd.f32 %v2786, 1.0
      %v2793 = vadd.f32 %v2787, 1.0
      %v2794 = vmul.f32 %v2788, 0.5
      %v2795 = vmul.f32 %v2789, 0.5
      %v2796 = vmul.f32 %v2790, 0.5
      %v2797 = vmul.f32 %v2791, 0.5
      %v2798 = vmul.f32 %v2792, 0.5
      %v2799 = vmul.f32 %v2793, 0.5
      %v2800 = vmul.f32 %v2736, %v2794
      %v2801 = vmul.f32 %v2738, %v2795
      %v2802 = vmul.f32 %v2740, %v2796
      %v2803 = vmul.f32 %v2742, %v2797
      %v2804 = vmul.f32 %v2746, %v2798
      %v2805 = vmul.f32 %v2748, %v2799
      %v2806 = vpack.c.bf16 %v2802, %v2800
      %v2807 = vpack.c.bf16 %v2803, %v2801
      %v2808 = vpack.c.bf16 %v2804, %v2804
      %v2809 = vpack.c.bf16 %v2805, %v2805
      %v2810 = vld [vmem:[%s12] sm:$0xf]
      %v2811 = vld [vmem:[%s12 + $0x4] sm:$0xf]
      %v2812 = vld [vmem:[%s12 + $0x8] sm:$0xf]
      %v2813 = vld [vmem:[%s12 + $0xc] sm:$0xf]
      %v2814 = vld [vmem:[%s12 + $0x10] sm:$0xf]
      %v2815 = vld [vmem:[%s12 + $0x14] sm:$0xf]
      %v2816 = vld [vmem:[%s12 + $0x18] sm:$0xf]
      %v2817 = vld [vmem:[%s12 + $0x1c] sm:$0xf]
      %v2818 = vld [vmem:[%s12 + $0x20] sm:$0xf]
      %v2819 = vld [vmem:[%s12 + $0x24] sm:$0xf]
      %v2820 = vld [vmem:[%s12 + $0x28] sm:$0xf]
      %v2821 = vld [vmem:[%s12 + $0x2c] sm:$0xf]
      %v2822 = vld [vmem:[%s12 + $0x30] sm:$0xf]
      %v2823 = vld [vmem:[%s12 + $0x34] sm:$0xf]
      %v2824 = vld [vmem:[%s12 + $0x38] sm:$0xf]
      %v2825 = vld [vmem:[%s12 + $0x3c] sm:$0xf]
      %v2826 = vld [vmem:[%s12 + $0x40] sm:$0xf]
      %v2827 = vld [vmem:[%s12 + $0x44] sm:$0xf]
      %v2828 = vld [vmem:[%s12 + $0x48] sm:$0xf]
      %v2829 = vld [vmem:[%s12 + $0x4c] sm:$0xf]
      %v2830 = vld [vmem:[%s12 + $0x50] sm:$0xf]
      %v2831 = vld [vmem:[%s12 + $0x54] sm:$0xf]
      %v2832 = vld [vmem:[%s12 + $0x58] sm:$0xf]
      %v2833 = vld [vmem:[%s12 + $0x5c] sm:$0xf]
      %v2834 = vld [vmem:[%s12 + $0x60] sm:$0xf]
      %v2835 = vld [vmem:[%s12 + $0x64] sm:$0xf]
      %v2836 = vld [vmem:[%s12 + $0x68] sm:$0xf]
      %v2837 = vld [vmem:[%s12 + $0x6c] sm:$0xf]
      %v2838 = vld [vmem:[%s12 + $0x70] sm:$0xf]
      %v2839 = vld [vmem:[%s12 + $0x74] sm:$0xf]
      %v2840 = vld [vmem:[%s12 + $0x78] sm:$0xf]
      %v2841 = vld [vmem:[%s12 + $0x7c] sm:$0xf]
      %v2874 = vunpack.c.l.b16 %v2810
      %v2875 = vunpack.c.l.b16 %v2811
      %v2876 = vunpack.c.l.b16 %v2812
      %v2877 = vunpack.c.l.b16 %v2813
      %v2878 = vunpack.c.l.b16 %v2814
      %v2879 = vunpack.c.l.b16 %v2815
      %v2880 = vunpack.c.l.b16 %v2816
      %v2881 = vunpack.c.l.b16 %v2817
      %v2882 = vunpack.c.l.b16 %v2818
      %v2883 = vunpack.c.l.b16 %v2819
      %v2884 = vunpack.c.l.b16 %v2820
      %v2885 = vunpack.c.l.b16 %v2821
      %v2886 = vunpack.c.l.b16 %v2822
      %v2887 = vunpack.c.l.b16 %v2823
      %v2888 = vunpack.c.l.b16 %v2824
      %v2889 = vunpack.c.l.b16 %v2825
      %v2890 = vunpack.c.l.b16 %v2826
      %v2891 = vunpack.c.l.b16 %v2827
      %v2892 = vunpack.c.l.b16 %v2828
      %v2893 = vunpack.c.l.b16 %v2829
      %v2894 = vunpack.c.l.b16 %v2830
      %v2895 = vunpack.c.l.b16 %v2831
      %v2896 = vunpack.c.l.b16 %v2832
      %v2897 = vunpack.c.l.b16 %v2833
      %v2898 = vunpack.c.l.b16 %v2834
      %v2899 = vunpack.c.l.b16 %v2835
      %v2900 = vunpack.c.l.b16 %v2836
      %v2901 = vunpack.c.l.b16 %v2837
      %v2902 = vunpack.c.l.b16 %v2838
      %v2903 = vunpack.c.l.b16 %v2839
      %v2904 = vunpack.c.l.b16 %v2840
      %v2905 = vunpack.c.l.b16 %v2841
      %v2906 = vpack.c.b16 %v2875, %v2874
      %v2907 = vpack.c.b16 %v2877, %v2876
      %v2908 = vpack.c.b16 %v2879, %v2878
      %v2909 = vpack.c.b16 %v2881, %v2880
      %v2910 = vpack.c.b16 %v2883, %v2882
      %v2911 = vpack.c.b16 %v2885, %v2884
      %v2912 = vpack.c.b16 %v2887, %v2886
      %v2913 = vpack.c.b16 %v2889, %v2888
      %v2914 = vpack.c.b16 %v2891, %v2890
      %v2915 = vpack.c.b16 %v2893, %v2892
      %v2916 = vpack.c.b16 %v2895, %v2894
      %v2917 = vpack.c.b16 %v2897, %v2896
      %v2918 = vpack.c.b16 %v2899, %v2898
      %v2919 = vpack.c.b16 %v2901, %v2900
      %v2920 = vpack.c.b16 %v2903, %v2902
      %v2921 = vpack.c.b16 %v2905, %v2904
      %2938 = vmatprep.subr.bf16.mxu0 0
      %2939 = vmatpush1.bf16.msra.mxu0 %v2906
      %2940 = vmatprep.subr.bf16.mxu0 0
      %2941 = vmatpush1.bf16.msra.mxu0 %v2907
      %2942 = vmatprep.subr.bf16.mxu0 0
      %2943 = vmatpush1.bf16.msra.mxu0 %v2908
      %2944 = vmatprep.subr.bf16.mxu0 0
      %2945 = vmatpush1.bf16.msra.mxu0 %v2909
      %2946 = vmatprep.subr.bf16.mxu0 0
      %2947 = vmatpush1.bf16.msra.mxu0 %v2910
      %2948 = vmatprep.subr.bf16.mxu0 0
      %2949 = vmatpush1.bf16.msra.mxu0 %v2911
      %2950 = vmatprep.subr.bf16.mxu0 0
      %2951 = vmatpush1.bf16.msra.mxu0 %v2912
      %2952 = vmatprep.subr.bf16.mxu0 0
      %2953 = vmatpush1.bf16.msra.mxu0 %v2913
      %2954 = vmatprep.subr.bf16.mxu0 0
      %2955 = vmatpush1.bf16.msra.mxu0 %v2914
      %2956 = vmatprep.subr.bf16.mxu0 0
      %2957 = vmatpush1.bf16.msra.mxu0 %v2915
      %2958 = vmatprep.subr.bf16.mxu0 0
      %2959 = vmatpush1.bf16.msra.mxu0 %v2916
      %2960 = vmatprep.subr.bf16.mxu0 0
      %2961 = vmatpush1.bf16.msra.mxu0 %v2917
      %2962 = vmatprep.subr.bf16.mxu0 0
      %2963 = vmatpush1.bf16.msra.mxu0 %v2918
      %2964 = vmatprep.subr.bf16.mxu0 0
      %2965 = vmatpush1.bf16.msra.mxu0 %v2919
      %2966 = vmatprep.subr.bf16.mxu0 0
      %2967 = vmatpush1.bf16.msra.mxu0 %v2920
      %2968 = vmatprep.subr.bf16.mxu0 0
      %2969 = vmatpush1.bf16.msra.mxu0 %v2921
      %2970 = vmatprep.mubr.bf16.mxu0 %v2807
      %2971 = vmatmul.mubr.bf16.gmra.mrb[0].mxu0 %v2806
      %v2972 = vpop.f32.mrb[0].mxu0
      %v2973 = vadd.f32 0.0, %v2972
      %v2974 = vpop.f32.mrb[0].mxu0
      %v2975 = vpop.f32.mrb[0].mxu0
      %v2976 = vadd.f32 0.0, %v2975
      %v2977 = vpop.f32.mrb[0].mxu0
      %2978 = vmatprep.mubr.bf16.mxu0 %v2809
      %2979 = vmatmul.mubr.bf16.gmra.mrb[0].mxu0 %v2808
      %v2980 = vpop.f32.mrb[0].mxu0
      %v2981 = vadd.f32 0.0, %v2980
      %v2982 = vpop.f32.mrb[0].mxu0
      %v2983 = vpop.f32.mrb[0].mxu0
      %v2984 = vpop.f32.mrb[0].mxu0
      %2985 = vdwg.mxu0
      %v2986 = vadd.f32 %v2571, %v2973
      %v2987 = vadd.f32 %v2572, %v2976
      %v2988 = vadd.f32 %v2573, %v2981
      %v2989 = vld [vmem:[%s13] sm:$0x1]
      %v2991 = vlaneseq
      %v2992 = vshrl.u32 %v2991, 7
      %v2993 = vsub.s32 0, %v2992
      %v2994 = vrot.slane %v2989, %v2993
      %v2996 = vadd.f32 %v2986, %v2994
      %v2997 = vadd.f32 %v2987, %v2994
      %v2998 = vadd.f32 %v2988, %v2994
      %2999 = vst.msk [vmem:[%s487] sm:$0xff] %vm500, %v2996
      %3000 = vst.msk [vmem:[%s487 + $0x8] sm:$0xff] %vm500, %v2997
      %3001 = vst.msk [vmem:[%s487 + $0x10] sm:$0xff] %vm500, %v2998
      %p3002 = scmp.lt.s32.totalorder %s25, 1
      %s3003 = scalar_select %p3002, %s25, 1
      %s3004 = smul.addr %s3003, 3
      %s3005 = smul.addr %s3004, 8
      %s3006 = scalar_lea.vmem %s14, %s3005
      // Predicated region
      $region77: #{pix4point_forward.5} parent=75 // pred_check
        %p3007 = pneg %p347
      $region78: #{pix4point_forward.5} parent=75 // pred_check_branch
        %3009 = sbr.rel (%p3007) target = $region80
      $region79: #{pix4point_forward.5} parent=75 // pred_region
        _
      $region80: #{pix4point_forward.5} parent=75 // pred_fallthru
        _
    $region76: #{pix4point_forward.5} parent=5 // pred_fallthru
      _
    %p3010 = scmp.le.s32.totalorder 2, %s20
    // Predicated region
    $region81: #{pix4point_forward.5} parent=5 // pred_check
      %p3011 = pneg %p3010
    $region82: #{pix4point_forward.5} parent=5 // pred_check_branch
      %3013 = sbr.rel (%p3011) target = $region84
    $region83: #{pix4point_forward.5} parent=5 // pred_region
      %s3014 = ssub.s32 %s20, 2
      // Predicated region
      $region85: #{pix4point_forward.5} parent=83 // pred_check
        %p3015 = pneg %p353
      $region86: #{pix4point_forward.5} parent=83 // pred_check_branch
        %3017 = sbr.rel (%p3015) target = $region88
      $region87: #{pix4point_forward.5} parent=83 // pred_region
        %p3018 = scmp.lt.s32.totalorder %s26, 1
        %s3019 = scalar_select %p3018, %s26, 1
        %s3020 = smul.addr %s3019, 3
        %s3021 = smul.addr %s3020, 8
        %s3022 = scalar_lea.vmem %s14, %s3021
      $region88: #{pix4point_forward.5} parent=83 // pred_fallthru
        _
    $region84: #{pix4point_forward.5} parent=5 // pred_fallthru
      _
  $region6: #{pix4point_forward.5} parent=0 // loop_footer
    %s24 = sadd.s32 1, %s20
  $region7: #{pix4point_forward.5} parent=0 // loop_footer_branch
    %19 = sbr.rel target = $region3
  $region8: #{pix4point_forward.5} parent=0 // loop_exit
    _

</llo_original>
